<compile_context>
chip_gen: v7x
topology: tpu7x:2x2x1
jax: 0.10.0
libtpu: 0.0.40
codegen_flags: <defaults>
</compile_context>

<pallas_src>
import functools

import jax
import jax.numpy as jnp
from jax import lax
from jax.experimental import pallas as pl
from jax.experimental.pallas import tpu as pltpu


# -----------------------------------------------------------------------------
# Fused kernel: qkv 1x1 conv + depthwise 3x3 conv (both streams), channel
# attention, Linear(2*dim->dim) with project_out folded in.  Layout is
# (channels, HW) with HW on lanes (multiple of 128).
# -----------------------------------------------------------------------------
def _embedding_kernel(x_ref, m_ref, wq_ref, wdw_ref, tvec_ref, hbias_ref,
                      w1_ref, w2_ref, bp_ref, o_ref,
                      t_scr, qx_scr, qm_scr, *, dim, h, w):
    hw = h * w

    # Lane masks that kill the width-edge wraparound of the two horizontal
    # dwconv taps (the staged input is only height-padded so the dwconv output
    # stays compact / lane-dense).  Computed once per grid step.
    col = lax.broadcasted_iota(jnp.int32, (1, hw), 1) % w
    m_left = (col != 0).astype(jnp.float32)        # tap kx=0 invalid at x == 0
    m_right = (col != w - 1).astype(jnp.float32)   # tap kx=2 invalid at x == W-1

    def qkv_path(in_ref, out_scr):
        # 1x1 conv == one channel matmul (bf16 operands, f32 acc), staged in VMEM.
        t_scr[...] = jnp.dot(wq_ref[...], in_ref[0].astype(jnp.bfloat16),
                             preferred_element_type=jnp.float32)       # (3C, LP)

        # Depthwise 3x3 (stride 1, pad 1): nine lane-shifted tap reads from the
        # VMEM stage, per-channel weighted, accumulated in f32 on the VPU.
        def taps(kx):
            s = wdw_ref[kx] * t_scr[:, pl.ds(kx, hw)]
            for ky in (1, 2):
                s = s + wdw_ref[3 * ky + kx] * t_scr[:, pl.ds(ky * w + kx, hw)]
            return s

        out_scr[...] = taps(1) + m_left * taps(0) + m_right * taps(2)  # (3C, HW)

    qkv_path(x_ref, qx_scr)    # qkv of the image stream
    qkv_path(m_ref, qm_scr)    # qkv of the message stream

    # ---- channel attention: full-dim matmuls + block-diagonal head bias -----
    def l2norm(v):  # rowwise F.normalize(v, dim=-1); rsqrt on the EUP
        ss = jnp.sum(v * v, axis=-1, keepdims=True)
        return v * lax.rsqrt(jnp.maximum(ss, 1e-24))

    q1 = l2norm(qx_scr[0:dim, :]).astype(jnp.bfloat16)                 # (dim, HW)
    q2 = l2norm(qm_scr[0:dim, :]).astype(jnp.bfloat16)
    kc = jnp.concatenate([l2norm(qx_scr[dim:2 * dim, :]),
                          l2norm(qm_scr[dim:2 * dim, :])],
                         axis=0).astype(jnp.bfloat16)                  # (2dim, HW)
    vc = jnp.concatenate([qx_scr[2 * dim:3 * dim, :],
                          qm_scr[2 * dim:3 * dim, :]],
                         axis=0).astype(jnp.bfloat16)                  # (2dim, HW)

    nt = (((1,), (1,)), ((), ()))        # contract over HW:  q @ kc^T
    tvec = tvec_ref[...]                 # (dim, 1)    per-row temperature
    hbias = hbias_ref[...]               # (dim, 2dim) additive head mask (0 / -1e9)

    def attend(q):
        a = lax.dot_general(q, kc, nt, preferred_element_type=jnp.float32)
        a = a * tvec + hbias                                           # (dim, 2dim)
        a = a - jnp.max(a, axis=-1, keepdims=True)
        e = jnp.exp(a)
        p = e * pl.reciprocal(jnp.sum(e, axis=-1, keepdims=True), approx=True)
        return jnp.dot(p.astype(jnp.bfloat16), vc,
                       preferred_element_type=jnp.float32)             # (dim, HW)

    o1 = attend(q1)
    o2 = attend(q2)

    # Linear(2*dim -> dim) with project_out folded in (exact, all linear maps):
    #   out = (Wpo @ Wl[:, :dim]) @ o1 + (Wpo @ Wl[:, dim:]) @ o2 + Wpo @ b
    out = (jnp.dot(w1_ref[...], o1.astype(jnp.bfloat16),
                   preferred_element_type=jnp.float32)
           + jnp.dot(w2_ref[...], o2.astype(jnp.bfloat16),
                     preferred_element_type=jnp.float32)
           + bp_ref[...])
    o_ref[0] = out.astype(o_ref.dtype)


# -----------------------------------------------------------------------------
# Wrapper (PyTorch-compatible NCHW interface; only pad / reshape / matmul prep).
# -----------------------------------------------------------------------------
def embedding_forward(x, message, params, *, num_heads):
    """x, message: (B, dim, H, W) float32 -> (B, dim, H, W)."""
    B, C, H, W = x.shape
    C3, HW = 3 * C, H * W
    assert C % num_heads == 0
    ch = C // num_heads
    # Lane staging length: 1 leading zero + (H+2)*W height-padded pixels,
    # rounded up so every dwconv tap slice [off, off+HW) stays inside zeros.
    LP = ((max((H + 2) * W + 1, HW + 2 * W + 2) + 127) // 128) * 128
    assert LP >= HW + 2 * W + 2 and LP >= (H + 2) * W + 1, "lane staging too small"

    # ---- parameter prep (offline, exact) ------------------------------------
    w_qkv = params["qkv_w"].reshape(C3, C).astype(jnp.bfloat16)
    w_dw = params["dw_w"].reshape(C3, 9).T.reshape(9, C3, 1)         # tap-major f32
    w_po = params["po_w"].reshape(C, C)
    w_lin = params["lin_w"]
    w1p = (w_po @ w_lin[:, :C]).astype(jnp.bfloat16)                 # project_out folded
    w2p = (w_po @ w_lin[:, C:]).astype(jnp.bfloat16)
    bp = (w_po @ params["lin_b"].reshape(C, 1)).astype(jnp.float32)
    tvec = jnp.repeat(params["temperature"].reshape(num_heads), ch).reshape(C, 1)
    row_h = jnp.arange(C)[:, None] // ch
    col_h = (jnp.arange(2 * C)[None, :] % C) // ch
    hbias = jnp.where(row_h == col_h, 0.0, -1e9).astype(jnp.float32)

    # ---- glue: height-pad, flatten, lane-pad (one leading zero) -------------
    def stage(t):
        tp = jnp.pad(t, ((0, 0), (0, 0), (1, 1), (0, 0)))            # (B, C, H+2, W)
        tf = tp.reshape(B, C, (H + 2) * W)
        return jnp.pad(tf, ((0, 0), (0, 0), (1, LP - 1 - (H + 2) * W)))

    xpf = stage(x)
    mpf = stage(message)

    const = lambda i: (0, 0)
    out = pl.pallas_call(
        functools.partial(_embedding_kernel, dim=C, h=H, w=W),
        out_shape=jax.ShapeDtypeStruct((B, C, HW), x.dtype),
        grid=(B,),
        in_specs=[
            pl.BlockSpec((1, C, LP), lambda i: (i, 0, 0)),           # x (staged)
            pl.BlockSpec((1, C, LP), lambda i: (i, 0, 0)),           # message (staged)
            pl.BlockSpec((C3, C), const),                            # qkv 1x1 (bf16)
            pl.BlockSpec((9, C3, 1), lambda i: (0, 0, 0)),           # dwconv taps
            pl.BlockSpec((C, 1), const),                             # per-row temperature
            pl.BlockSpec((C, 2 * C), const),                         # head mask bias
            pl.BlockSpec((C, C), const),                             # Wpo @ Wlin[:, :C]
            pl.BlockSpec((C, C), const),                             # Wpo @ Wlin[:, C:]
            pl.BlockSpec((C, 1), const),                             # Wpo @ b_lin
        ],
        out_specs=pl.BlockSpec((1, C, HW), lambda i: (i, 0, 0)),
        scratch_shapes=[
            pltpu.VMEM((C3, LP), jnp.float32),    # 1x1-conv staging
            pltpu.VMEM((C3, HW), jnp.float32),    # qkv(x)
            pltpu.VMEM((C3, HW), jnp.float32),    # qkv(message)
        ],
        compiler_params=pltpu.CompilerParams(dimension_semantics=("parallel",)),
    )(xpf, mpf, w_qkv, w_dw, tvec, hbias, w1p, w2p, bp)

    return out.reshape(B, C, H, W)


# -----------------------------------------------------------------------------
# Pure-JAX reference (mirrors the PyTorch forward with bias=False convs).
# -----------------------------------------------------------------------------
def embedding_reference(x, message, params, *, num_heads):
    B, C, H, W = x.shape
    HW, ch = H * W, C // num_heads

    def conv1x1(t, w):
        return lax.conv_general_dilated(t, w, (1, 1), ((0, 0), (0, 0)),
                                        dimension_numbers=("NCHW", "OIHW", "NCHW"))

    def dwconv3(t, w):
        return lax.conv_general_dilated(t, w, (1, 1), ((1, 1), (1, 1)),
                                        dimension_numbers=("NCHW", "OIHW", "NCHW"),
                                        feature_group_count=t.shape[1])

    def heads4(t):
        return t.reshape(B, num_heads, ch, HW)

    def l2norm(v):
        n = jnp.sqrt(jnp.sum(v * v, axis=-1, keepdims=True))
        return v / jnp.maximum(n, 1e-12)

    def qkv_path(t):
        z = dwconv3(conv1x1(t, params["qkv_w"]), params["dw_w"])
        q, k, v = jnp.split(z, 3, axis=1)
        return heads4(q), heads4(k), heads4(v)

    temp = params["temperature"]
    q, k, v = qkv_path(x)
    qm, km, vm = qkv_path(message)
    kc = l2norm(jnp.concatenate([k, km], axis=2))
    vc = jnp.concatenate([v, vm], axis=2)
    q, qm = l2norm(q), l2norm(qm)

    a1 = jax.nn.softmax(jnp.einsum("bhcd,bhed->bhce", q, kc) * temp[None], axis=-1)
    a2 = jax.nn.softmax(jnp.einsum("bhcd,bhed->bhce", qm, kc) * temp[None], axis=-1)
    out1 = jnp.einsum("bhce,bhed->bhcd", a1, vc).reshape(B, C, HW)
    out2 = jnp.einsum("bhce,bhed->bhcd", a2, vc).reshape(B, C, HW)

    cat = jnp.concatenate([out1.transpose(0, 2, 1), out2.transpose(0, 2, 1)], axis=2)
    lin = cat @ params["lin_w"].T + params["lin_b"]                  # (B, HW, C)
    lin_nchw = lin.transpose(0, 2, 1).reshape(B, C, H, W)
    return conv1x1(lin_nchw, params["po_w"])


if __name__ == "__main__":
    DIM, HEADS, B, H, W = 32, 4, 2, 16, 16

    key = jax.random.PRNGKey(0)
    ks = jax.random.split(key, 8)
    x = jax.random.normal(ks[0], (B, DIM, H, W), dtype=jnp.float32)
    message = jax.random.normal(ks[1], (B, DIM, H, W), dtype=jnp.float32)

    def init(k, shape, fan_in):
        return jax.random.normal(k, shape, dtype=jnp.float32) * (1.0 / fan_in) ** 0.5

    params = {
        "qkv_w": init(ks[2], (3 * DIM, DIM, 1, 1), DIM),
        "dw_w": init(ks[3], (3 * DIM, 1, 3, 3), 9),
        "lin_w": init(ks[4], (DIM, 2 * DIM), 2 * DIM),
        "lin_b": init(ks[5], (DIM,), 2 * DIM),
        "po_w": init(ks[6], (DIM, DIM, 1, 1), DIM),
        # nn.Parameter init is ones(heads,1,1); perturb slightly to exercise it.
        "temperature": 1.0 + 0.1 * jax.random.normal(ks[7], (HEADS, 1, 1), jnp.float32),
    }

    fwd = jax.jit(functools.partial(embedding_forward, num_heads=HEADS))
    out = fwd(x, message, params)
    jax.block_until_ready(out)

    ref = embedding_reference(x, message, params, num_heads=HEADS)
    assert out.shape == (B, DIM, H, W)
    # bf16 MXU operands (f32 accumulation) -> slightly looser tolerance than f32.
    err = float(jnp.max(jnp.abs(out - ref)))
    assert jnp.allclose(out, ref, atol=2e-2, rtol=2e-2), err

    print("KERNEL_OK")
</pallas_src>

<mosaic_0001>
module attributes {stable_mosaic.version = 11 : i64} {
  func.func @_embedding_kernel(%arg0: i32, %arg1: memref<1x32x384xf32, #tpu.memory_space<vmem>>, %arg2: memref<1x32x384xf32, #tpu.memory_space<vmem>>, %arg3: memref<96x32xbf16, #tpu.memory_space<vmem>>, %arg4: memref<9x96x1xf32, #tpu.memory_space<vmem>>, %arg5: memref<32x1xf32, #tpu.memory_space<vmem>>, %arg6: memref<32x64xf32, #tpu.memory_space<vmem>>, %arg7: memref<32x32xbf16, #tpu.memory_space<vmem>>, %arg8: memref<32x32xbf16, #tpu.memory_space<vmem>>, %arg9: memref<32x1xf32, #tpu.memory_space<vmem>>, %arg10: memref<1x32x256xf32, #tpu.memory_space<vmem>>, %arg11: memref<96x384xf32, #tpu.memory_space<vmem>>, %arg12: memref<96x256xf32, #tpu.memory_space<vmem>>, %arg13: memref<96x256xf32, #tpu.memory_space<vmem>>) attributes {dimension_semantics = [#tpu.dimension_semantics<parallel>], iteration_bounds = array<i64: 2>, scalar_prefetch = 0 : i64, scratch_operands = 3 : i64, tpu.core_type = #tpu.core_type<tc>, window_params = [{transform_indices = @transform_0, window_bounds = array<i64: 1, 32, 384>}, {transform_indices = @transform_1, window_bounds = array<i64: 1, 32, 384>}, {pipeline_mode = #tpu.pipeline_mode<synchronous>, transform_indices = @transform_2, window_bounds = array<i64: 96, 32>}, {pipeline_mode = #tpu.pipeline_mode<synchronous>, transform_indices = @transform_3, window_bounds = array<i64: 9, 96, 1>}, {pipeline_mode = #tpu.pipeline_mode<synchronous>, transform_indices = @transform_4, window_bounds = array<i64: 32, 1>}, {pipeline_mode = #tpu.pipeline_mode<synchronous>, transform_indices = @transform_5, window_bounds = array<i64: 32, 64>}, {pipeline_mode = #tpu.pipeline_mode<synchronous>, transform_indices = @transform_6, window_bounds = array<i64: 32, 32>}, {pipeline_mode = #tpu.pipeline_mode<synchronous>, transform_indices = @transform_7, window_bounds = array<i64: 32, 32>}, {pipeline_mode = #tpu.pipeline_mode<synchronous>, transform_indices = @transform_8, window_bounds = array<i64: 32, 1>}, {transform_indices = @transform_9, window_bounds = array<i64: 1, 32, 256>}]} {
    %0 = tpu.iota {dimensions = array<i32: 1>} : vector<1x256xi32>
    %c16_i32 = arith.constant 16 : i32
    %c0_i32 = arith.constant 0 : i32
    %1 = arith.cmpi eq, %c16_i32, %c0_i32 : i32
    %c1_i32 = arith.constant 1 : i32
    %2 = arith.select %1, %c1_i32, %c16_i32 : i32
    %3 = vector.broadcast %2 : i32 to vector<1x256xi32>
    %4 = arith.remsi %0, %3 : vector<1x256xi32>
    %c0_i32_0 = arith.constant 0 : i32
    %5 = vector.broadcast %c0_i32_0 : i32 to vector<1x256xi32>
    %6 = arith.cmpi ne, %4, %5 : vector<1x256xi32>
    %c0_i32_1 = arith.constant 0 : i32
    %7 = vector.broadcast %c0_i32_1 : i32 to vector<1x256xi32>
    %8 = arith.cmpi slt, %4, %7 : vector<1x256xi32>
    %c0_i32_2 = arith.constant 0 : i32
    %9 = arith.cmpi slt, %2, %c0_i32_2 : i32
    %10 = vector.broadcast %9 : i1 to vector<1x256xi1>
    %11 = vector.broadcast %10 : vector<1x256xi1> to vector<1x256xi1>
    %12 = arith.xori %8, %11 : vector<1x256xi1>
    %13 = arith.andi %12, %6 : vector<1x256xi1>
    %14 = vector.broadcast %2 : i32 to vector<1x256xi32>
    %15 = arith.addi %4, %14 : vector<1x256xi32>
    %16 = arith.select %13, %15, %4 : vector<1x256xi1>, vector<1x256xi32>
    %c0_i32_3 = arith.constant 0 : i32
    %17 = vector.broadcast %c0_i32_3 : i32 to vector<1x256xi32>
    %18 = arith.cmpi ne, %16, %17 : vector<1x256xi32>
    %19 = arith.extui %18 : vector<1x256xi1> to vector<1x256xi32>
    %20 = arith.sitofp %19 : vector<1x256xi32> to vector<1x256xf32>
    %c15_i32 = arith.constant 15 : i32
    %21 = vector.broadcast %c15_i32 : i32 to vector<1x256xi32>
    %22 = arith.cmpi ne, %16, %21 : vector<1x256xi32>
    %23 = arith.extui %22 : vector<1x256xi1> to vector<1x256xi32>
    %24 = arith.sitofp %23 : vector<1x256xi32> to vector<1x256xf32>
    %c0 = arith.constant 0 : index
    %c0_4 = arith.constant 0 : index
    %25 = vector.load %arg3[%c0, %c0_4] : memref<96x32xbf16, #tpu.memory_space<vmem>>, vector<96x32xbf16>
    %c0_5 = arith.constant 0 : index
    %c0_6 = arith.constant 0 : index
    %c0_7 = arith.constant 0 : index
    %26 = vector.load %arg1[%c0_5, %c0_6, %c0_7] : memref<1x32x384xf32, #tpu.memory_space<vmem>>, vector<1x32x384xf32>
    %27 = vector.shape_cast %26 : vector<1x32x384xf32> to vector<32x384xf32>
    %28 = arith.truncf %27 : vector<32x384xf32> to vector<32x384xbf16>
    %cst = arith.constant dense<0.000000e+00> : vector<96x384xf32>
    %29 = tpu.matmul %25, %28, %cst {dimension_numbers = #tpu.dot_dimension_numbers<[1], [0], [0], [1], [0, 0, 1, 1], [], []>} : vector<96x32xbf16>, vector<32x384xbf16>, vector<96x384xf32> -> vector<96x384xf32>
    %c0_8 = arith.constant 0 : index
    %c0_9 = arith.constant 0 : index
    %30 = vector.load %arg11[%c0_8, %c0_9] : memref<96x384xf32, #tpu.memory_space<vmem>>, vector<96x384xf32>
    tpu.vector_store %arg11[%c0_8, %c0_9], %29 {strides = array<i32>} : memref<96x384xf32, #tpu.memory_space<vmem>>, vector<96x384xf32>,
    %c1 = arith.constant 1 : index
    %c0_10 = arith.constant 0 : index
    %c0_11 = arith.constant 0 : index
    %31 = vector.load %arg4[%c1, %c0_10, %c0_11] : memref<9x96x1xf32, #tpu.memory_space<vmem>>, vector<1x96x1xf32>
    %32 = vector.shape_cast %31 : vector<1x96x1xf32> to vector<96x1xf32>
    %c0_12 = arith.constant 0 : index
    %c1_13 = arith.constant 1 : index
    %33 = vector.load %arg11[%c0_12, %c1_13] : memref<96x384xf32, #tpu.memory_space<vmem>>, vector<96x256xf32>
    %34 = vector.broadcast %32 : vector<96x1xf32> to vector<96x256xf32>
    %35 = arith.mulf %34, %33 : vector<96x256xf32>
    %c4 = arith.constant 4 : index
    %c0_14 = arith.constant 0 : index
    %c0_15 = arith.constant 0 : index
    %36 = vector.load %arg4[%c4, %c0_14, %c0_15] : memref<9x96x1xf32, #tpu.memory_space<vmem>>, vector<1x96x1xf32>
    %37 = vector.shape_cast %36 : vector<1x96x1xf32> to vector<96x1xf32>
    %c0_16 = arith.constant 0 : index
    %c17 = arith.constant 17 : index
    %38 = vector.load %arg11[%c0_16, %c17] : memref<96x384xf32, #tpu.memory_space<vmem>>, vector<96x256xf32>
    %39 = vector.broadcast %37 : vector<96x1xf32> to vector<96x256xf32>
    %40 = arith.mulf %39, %38 : vector<96x256xf32>
    %41 = arith.addf %35, %40 : vector<96x256xf32>
    %c7 = arith.constant 7 : index
    %c0_17 = arith.constant 0 : index
    %c0_18 = arith.constant 0 : index
    %42 = vector.load %arg4[%c7, %c0_17, %c0_18] : memref<9x96x1xf32, #tpu.memory_space<vmem>>, vector<1x96x1xf32>
    %43 = vector.shape_cast %42 : vector<1x96x1xf32> to vector<96x1xf32>
    %c0_19 = arith.constant 0 : index
    %c33 = arith.constant 33 : index
    %44 = vector.load %arg11[%c0_19, %c33] : memref<96x384xf32, #tpu.memory_space<vmem>>, vector<96x256xf32>
    %45 = vector.broadcast %43 : vector<96x1xf32> to vector<96x256xf32>
    %46 = arith.mulf %45, %44 : vector<96x256xf32>
    %47 = arith.addf %41, %46 : vector<96x256xf32>
    %c0_20 = arith.constant 0 : index
    %c0_21 = arith.constant 0 : index
    %c0_22 = arith.constant 0 : index
    %48 = vector.load %arg4[%c0_20, %c0_21, %c0_22] : memref<9x96x1xf32, #tpu.memory_space<vmem>>, vector<1x96x1xf32>
    %49 = vector.shape_cast %48 : vector<1x96x1xf32> to vector<96x1xf32>
    %c0_23 = arith.constant 0 : index
    %c0_24 = arith.constant 0 : index
    %50 = vector.load %arg11[%c0_23, %c0_24] : memref<96x384xf32, #tpu.memory_space<vmem>>, vector<96x256xf32>
    %51 = vector.broadcast %49 : vector<96x1xf32> to vector<96x256xf32>
    %52 = arith.mulf %51, %50 : vector<96x256xf32>
    %c3 = arith.constant 3 : index
    %c0_25 = arith.constant 0 : index
    %c0_26 = arith.constant 0 : index
    %53 = vector.load %arg4[%c3, %c0_25, %c0_26] : memref<9x96x1xf32, #tpu.memory_space<vmem>>, vector<1x96x1xf32>
    %54 = vector.shape_cast %53 : vector<1x96x1xf32> to vector<96x1xf32>
    %c0_27 = arith.constant 0 : index
    %c16 = arith.constant 16 : index
    %55 = vector.load %arg11[%c0_27, %c16] : memref<96x384xf32, #tpu.memory_space<vmem>>, vector<96x256xf32>
    %56 = vector.broadcast %54 : vector<96x1xf32> to vector<96x256xf32>
    %57 = arith.mulf %56, %55 : vector<96x256xf32>
    %58 = arith.addf %52, %57 : vector<96x256xf32>
    %c6 = arith.constant 6 : index
    %c0_28 = arith.constant 0 : index
    %c0_29 = arith.constant 0 : index
    %59 = vector.load %arg4[%c6, %c0_28, %c0_29] : memref<9x96x1xf32, #tpu.memory_space<vmem>>, vector<1x96x1xf32>
    %60 = vector.shape_cast %59 : vector<1x96x1xf32> to vector<96x1xf32>
    %c0_30 = arith.constant 0 : index
    %c32 = arith.constant 32 : index
    %61 = vector.load %arg11[%c0_30, %c32] : memref<96x384xf32, #tpu.memory_space<vmem>>, vector<96x256xf32>
    %62 = vector.broadcast %60 : vector<96x1xf32> to vector<96x256xf32>
    %63 = arith.mulf %62, %61 : vector<96x256xf32>
    %64 = arith.addf %58, %63 : vector<96x256xf32>
    %65 = vector.broadcast %20 : vector<1x256xf32> to vector<96x256xf32>
    %66 = arith.mulf %65, %64 : vector<96x256xf32>
    %67 = arith.addf %47, %66 : vector<96x256xf32>
    %c2 = arith.constant 2 : index
    %c0_31 = arith.constant 0 : index
    %c0_32 = arith.constant 0 : index
    %68 = vector.load %arg4[%c2, %c0_31, %c0_32] : memref<9x96x1xf32, #tpu.memory_space<vmem>>, vector<1x96x1xf32>
    %69 = vector.shape_cast %68 : vector<1x96x1xf32> to vector<96x1xf32>
    %c0_33 = arith.constant 0 : index
    %c2_34 = arith.constant 2 : index
    %70 = vector.load %arg11[%c0_33, %c2_34] : memref<96x384xf32, #tpu.memory_space<vmem>>, vector<96x256xf32>
    %71 = vector.broadcast %69 : vector<96x1xf32> to vector<96x256xf32>
    %72 = arith.mulf %71, %70 : vector<96x256xf32>
    %c5 = arith.constant 5 : index
    %c0_35 = arith.constant 0 : index
    %c0_36 = arith.constant 0 : index
    %73 = vector.load %arg4[%c5, %c0_35, %c0_36] : memref<9x96x1xf32, #tpu.memory_space<vmem>>, vector<1x96x1xf32>
    %74 = vector.shape_cast %73 : vector<1x96x1xf32> to vector<96x1xf32>
    %c0_37 = arith.constant 0 : index
    %c18 = arith.constant 18 : index
    %75 = vector.load %arg11[%c0_37, %c18] : memref<96x384xf32, #tpu.memory_space<vmem>>, vector<96x256xf32>
    %76 = vector.broadcast %74 : vector<96x1xf32> to vector<96x256xf32>
    %77 = arith.mulf %76, %75 : vector<96x256xf32>
    %78 = arith.addf %72, %77 : vector<96x256xf32>
    %c8 = arith.constant 8 : index
    %c0_38 = arith.constant 0 : index
    %c0_39 = arith.constant 0 : index
    %79 = vector.load %arg4[%c8, %c0_38, %c0_39] : memref<9x96x1xf32, #tpu.memory_space<vmem>>, vector<1x96x1xf32>
    %80 = vector.shape_cast %79 : vector<1x96x1xf32> to vector<96x1xf32>
    %c0_40 = arith.constant 0 : index
    %c34 = arith.constant 34 : index
    %81 = vector.load %arg11[%c0_40, %c34] : memref<96x384xf32, #tpu.memory_space<vmem>>, vector<96x256xf32>
    %82 = vector.broadcast %80 : vector<96x1xf32> to vector<96x256xf32>
    %83 = arith.mulf %82, %81 : vector<96x256xf32>
    %84 = arith.addf %78, %83 : vector<96x256xf32>
    %85 = vector.broadcast %24 : vector<1x256xf32> to vector<96x256xf32>
    %86 = arith.mulf %85, %84 : vector<96x256xf32>
    %87 = arith.addf %67, %86 : vector<96x256xf32>
    %c0_41 = arith.constant 0 : index
    %c0_42 = arith.constant 0 : index
    %88 = vector.load %arg12[%c0_41, %c0_42] : memref<96x256xf32, #tpu.memory_space<vmem>>, vector<96x256xf32>
    tpu.vector_store %arg12[%c0_41, %c0_42], %87 {strides = array<i32>} : memref<96x256xf32, #tpu.memory_space<vmem>>, vector<96x256xf32>,
    %c0_43 = arith.constant 0 : index
    %c0_44 = arith.constant 0 : index
    %89 = vector.load %arg3[%c0_43, %c0_44] : memref<96x32xbf16, #tpu.memory_space<vmem>>, vector<96x32xbf16>
    %c0_45 = arith.constant 0 : index
    %c0_46 = arith.constant 0 : index
    %c0_47 = arith.constant 0 : index
    %90 = vector.load %arg2[%c0_45, %c0_46, %c0_47] : memref<1x32x384xf32, #tpu.memory_space<vmem>>, vector<1x32x384xf32>
    %91 = vector.shape_cast %90 : vector<1x32x384xf32> to vector<32x384xf32>
    %92 = arith.truncf %91 : vector<32x384xf32> to vector<32x384xbf16>
    %cst_48 = arith.constant dense<0.000000e+00> : vector<96x384xf32>
    %93 = tpu.matmul %89, %92, %cst_48 {dimension_numbers = #tpu.dot_dimension_numbers<[1], [0], [0], [1], [0, 0, 1, 1], [], []>} : vector<96x32xbf16>, vector<32x384xbf16>, vector<96x384xf32> -> vector<96x384xf32>
    %c0_49 = arith.constant 0 : index
    %c0_50 = arith.constant 0 : index
    %94 = vector.load %arg11[%c0_49, %c0_50] : memref<96x384xf32, #tpu.memory_space<vmem>>, vector<96x384xf32>
    tpu.vector_store %arg11[%c0_49, %c0_50], %93 {strides = array<i32>} : memref<96x384xf32, #tpu.memory_space<vmem>>, vector<96x384xf32>,
    %c1_51 = arith.constant 1 : index
    %c0_52 = arith.constant 0 : index
    %c0_53 = arith.constant 0 : index
    %95 = vector.load %arg4[%c1_51, %c0_52, %c0_53] : memref<9x96x1xf32, #tpu.memory_space<vmem>>, vector<1x96x1xf32>
    %96 = vector.shape_cast %95 : vector<1x96x1xf32> to vector<96x1xf32>
    %c0_54 = arith.constant 0 : index
    %c1_55 = arith.constant 1 : index
    %97 = vector.load %arg11[%c0_54, %c1_55] : memref<96x384xf32, #tpu.memory_space<vmem>>, vector<96x256xf32>
    %98 = vector.broadcast %96 : vector<96x1xf32> to vector<96x256xf32>
    %99 = arith.mulf %98, %97 : vector<96x256xf32>
    %c4_56 = arith.constant 4 : index
    %c0_57 = arith.constant 0 : index
    %c0_58 = arith.constant 0 : index
    %100 = vector.load %arg4[%c4_56, %c0_57, %c0_58] : memref<9x96x1xf32, #tpu.memory_space<vmem>>, vector<1x96x1xf32>
    %101 = vector.shape_cast %100 : vector<1x96x1xf32> to vector<96x1xf32>
    %c0_59 = arith.constant 0 : index
    %c17_60 = arith.constant 17 : index
    %102 = vector.load %arg11[%c0_59, %c17_60] : memref<96x384xf32, #tpu.memory_space<vmem>>, vector<96x256xf32>
    %103 = vector.broadcast %101 : vector<96x1xf32> to vector<96x256xf32>
    %104 = arith.mulf %103, %102 : vector<96x256xf32>
    %105 = arith.addf %99, %104 : vector<96x256xf32>
    %c7_61 = arith.constant 7 : index
    %c0_62 = arith.constant 0 : index
    %c0_63 = arith.constant 0 : index
    %106 = vector.load %arg4[%c7_61, %c0_62, %c0_63] : memref<9x96x1xf32, #tpu.memory_space<vmem>>, vector<1x96x1xf32>
    %107 = vector.shape_cast %106 : vector<1x96x1xf32> to vector<96x1xf32>
    %c0_64 = arith.constant 0 : index
    %c33_65 = arith.constant 33 : index
    %108 = vector.load %arg11[%c0_64, %c33_65] : memref<96x384xf32, #tpu.memory_space<vmem>>, vector<96x256xf32>
    %109 = vector.broadcast %107 : vector<96x1xf32> to vector<96x256xf32>
    %110 = arith.mulf %109, %108 : vector<96x256xf32>
    %111 = arith.addf %105, %110 : vector<96x256xf32>
    %c0_66 = arith.constant 0 : index
    %c0_67 = arith.constant 0 : index
    %c0_68 = arith.constant 0 : index
    %112 = vector.load %arg4[%c0_66, %c0_67, %c0_68] : memref<9x96x1xf32, #tpu.memory_space<vmem>>, vector<1x96x1xf32>
    %113 = vector.shape_cast %112 : vector<1x96x1xf32> to vector<96x1xf32>
    %c0_69 = arith.constant 0 : index
    %c0_70 = arith.constant 0 : index
    %114 = vector.load %arg11[%c0_69, %c0_70] : memref<96x384xf32, #tpu.memory_space<vmem>>, vector<96x256xf32>
    %115 = vector.broadcast %113 : vector<96x1xf32> to vector<96x256xf32>
    %116 = arith.mulf %115, %114 : vector<96x256xf32>
    %c3_71 = arith.constant 3 : index
    %c0_72 = arith.constant 0 : index
    %c0_73 = arith.constant 0 : index
    %117 = vector.load %arg4[%c3_71, %c0_72, %c0_73] : memref<9x96x1xf32, #tpu.memory_space<vmem>>, vector<1x96x1xf32>
    %118 = vector.shape_cast %117 : vector<1x96x1xf32> to vector<96x1xf32>
    %c0_74 = arith.constant 0 : index
    %c16_75 = arith.constant 16 : index
    %119 = vector.load %arg11[%c0_74, %c16_75] : memref<96x384xf32, #tpu.memory_space<vmem>>, vector<96x256xf32>
    %120 = vector.broadcast %118 : vector<96x1xf32> to vector<96x256xf32>
    %121 = arith.mulf %120, %119 : vector<96x256xf32>
    %122 = arith.addf %116, %121 : vector<96x256xf32>
    %c6_76 = arith.constant 6 : index
    %c0_77 = arith.constant 0 : index
    %c0_78 = arith.constant 0 : index
    %123 = vector.load %arg4[%c6_76, %c0_77, %c0_78] : memref<9x96x1xf32, #tpu.memory_space<vmem>>, vector<1x96x1xf32>
    %124 = vector.shape_cast %123 : vector<1x96x1xf32> to vector<96x1xf32>
    %c0_79 = arith.constant 0 : index
    %c32_80 = arith.constant 32 : index
    %125 = vector.load %arg11[%c0_79, %c32_80] : memref<96x384xf32, #tpu.memory_space<vmem>>, vector<96x256xf32>
    %126 = vector.broadcast %124 : vector<96x1xf32> to vector<96x256xf32>
    %127 = arith.mulf %126, %125 : vector<96x256xf32>
    %128 = arith.addf %122, %127 : vector<96x256xf32>
    %129 = vector.broadcast %20 : vector<1x256xf32> to vector<96x256xf32>
    %130 = arith.mulf %129, %128 : vector<96x256xf32>
    %131 = arith.addf %111, %130 : vector<96x256xf32>
    %c2_81 = arith.constant 2 : index
    %c0_82 = arith.constant 0 : index
    %c0_83 = arith.constant 0 : index
    %132 = vector.load %arg4[%c2_81, %c0_82, %c0_83] : memref<9x96x1xf32, #tpu.memory_space<vmem>>, vector<1x96x1xf32>
    %133 = vector.shape_cast %132 : vector<1x96x1xf32> to vector<96x1xf32>
    %c0_84 = arith.constant 0 : index
    %c2_85 = arith.constant 2 : index
    %134 = vector.load %arg11[%c0_84, %c2_85] : memref<96x384xf32, #tpu.memory_space<vmem>>, vector<96x256xf32>
    %135 = vector.broadcast %133 : vector<96x1xf32> to vector<96x256xf32>
    %136 = arith.mulf %135, %134 : vector<96x256xf32>
    %c5_86 = arith.constant 5 : index
    %c0_87 = arith.constant 0 : index
    %c0_88 = arith.constant 0 : index
    %137 = vector.load %arg4[%c5_86, %c0_87, %c0_88] : memref<9x96x1xf32, #tpu.memory_space<vmem>>, vector<1x96x1xf32>
    %138 = vector.shape_cast %137 : vector<1x96x1xf32> to vector<96x1xf32>
    %c0_89 = arith.constant 0 : index
    %c18_90 = arith.constant 18 : index
    %139 = vector.load %arg11[%c0_89, %c18_90] : memref<96x384xf32, #tpu.memory_space<vmem>>, vector<96x256xf32>
    %140 = vector.broadcast %138 : vector<96x1xf32> to vector<96x256xf32>
    %141 = arith.mulf %140, %139 : vector<96x256xf32>
    %142 = arith.addf %136, %141 : vector<96x256xf32>
    %c8_91 = arith.constant 8 : index
    %c0_92 = arith.constant 0 : index
    %c0_93 = arith.constant 0 : index
    %143 = vector.load %arg4[%c8_91, %c0_92, %c0_93] : memref<9x96x1xf32, #tpu.memory_space<vmem>>, vector<1x96x1xf32>
    %144 = vector.shape_cast %143 : vector<1x96x1xf32> to vector<96x1xf32>
    %c0_94 = arith.constant 0 : index
    %c34_95 = arith.constant 34 : index
    %145 = vector.load %arg11[%c0_94, %c34_95] : memref<96x384xf32, #tpu.memory_space<vmem>>, vector<96x256xf32>
    %146 = vector.broadcast %144 : vector<96x1xf32> to vector<96x256xf32>
    %147 = arith.mulf %146, %145 : vector<96x256xf32>
    %148 = arith.addf %142, %147 : vector<96x256xf32>
    %149 = vector.broadcast %24 : vector<1x256xf32> to vector<96x256xf32>
    %150 = arith.mulf %149, %148 : vector<96x256xf32>
    %151 = arith.addf %131, %150 : vector<96x256xf32>
    %c0_96 = arith.constant 0 : index
    %c0_97 = arith.constant 0 : index
    %152 = vector.load %arg13[%c0_96, %c0_97] : memref<96x256xf32, #tpu.memory_space<vmem>>, vector<96x256xf32>
    tpu.vector_store %arg13[%c0_96, %c0_97], %151 {strides = array<i32>} : memref<96x256xf32, #tpu.memory_space<vmem>>, vector<96x256xf32>,
    %c0_98 = arith.constant 0 : index
    %c0_99 = arith.constant 0 : index
    %153 = vector.load %arg12[%c0_98, %c0_99] : memref<96x256xf32, #tpu.memory_space<vmem>>, vector<32x256xf32>
    %154 = arith.mulf %153, %153 : vector<32x256xf32>
    %cst_100 = arith.constant dense<0.000000e+00> : vector<32xf32>
    %155 = vector.multi_reduction <add>, %154, %cst_100 [1] : vector<32x256xf32> to vector<32xf32>
    %156 = vector.shape_cast %155 : vector<32xf32> to vector<32x1xf32>
    %cst_101 = arith.constant 1.000000e-24 : f32
    %157 = vector.broadcast %cst_101 : f32 to vector<32x1xf32>
    %158 = arith.maximumf %156, %157 : vector<32x1xf32>
    %159 = math.rsqrt %158 : vector<32x1xf32>
    %160 = vector.broadcast %159 : vector<32x1xf32> to vector<32x256xf32>
    %161 = arith.mulf %153, %160 : vector<32x256xf32>
    %162 = arith.truncf %161 : vector<32x256xf32> to vector<32x256xbf16>
    %c0_102 = arith.constant 0 : index
    %c0_103 = arith.constant 0 : index
    %163 = vector.load %arg13[%c0_102, %c0_103] : memref<96x256xf32, #tpu.memory_space<vmem>>, vector<32x256xf32>
    %164 = arith.mulf %163, %163 : vector<32x256xf32>
    %cst_104 = arith.constant dense<0.000000e+00> : vector<32xf32>
    %165 = vector.multi_reduction <add>, %164, %cst_104 [1] : vector<32x256xf32> to vector<32xf32>
    %166 = vector.shape_cast %165 : vector<32xf32> to vector<32x1xf32>
    %cst_105 = arith.constant 1.000000e-24 : f32
    %167 = vector.broadcast %cst_105 : f32 to vector<32x1xf32>
    %168 = arith.maximumf %166, %167 : vector<32x1xf32>
    %169 = math.rsqrt %168 : vector<32x1xf32>
    %170 = vector.broadcast %169 : vector<32x1xf32> to vector<32x256xf32>
    %171 = arith.mulf %163, %170 : vector<32x256xf32>
    %172 = arith.truncf %171 : vector<32x256xf32> to vector<32x256xbf16>
    %c32_106 = arith.constant 32 : index
    %c0_107 = arith.constant 0 : index
    %173 = vector.load %arg12[%c32_106, %c0_107] : memref<96x256xf32, #tpu.memory_space<vmem>>, vector<32x256xf32>
    %174 = arith.mulf %173, %173 : vector<32x256xf32>
    %cst_108 = arith.constant dense<0.000000e+00> : vector<32xf32>
    %175 = vector.multi_reduction <add>, %174, %cst_108 [1] : vector<32x256xf32> to vector<32xf32>
    %176 = vector.shape_cast %175 : vector<32xf32> to vector<32x1xf32>
    %cst_109 = arith.constant 1.000000e-24 : f32
    %177 = vector.broadcast %cst_109 : f32 to vector<32x1xf32>
    %178 = arith.maximumf %176, %177 : vector<32x1xf32>
    %179 = math.rsqrt %178 : vector<32x1xf32>
    %180 = vector.broadcast %179 : vector<32x1xf32> to vector<32x256xf32>
    %181 = arith.mulf %173, %180 : vector<32x256xf32>
    %c32_110 = arith.constant 32 : index
    %c0_111 = arith.constant 0 : index
    %182 = vector.load %arg13[%c32_110, %c0_111] : memref<96x256xf32, #tpu.memory_space<vmem>>, vector<32x256xf32>
    %183 = arith.mulf %182, %182 : vector<32x256xf32>
    %cst_112 = arith.constant dense<0.000000e+00> : vector<32xf32>
    %184 = vector.multi_reduction <add>, %183, %cst_112 [1] : vector<32x256xf32> to vector<32xf32>
    %185 = vector.shape_cast %184 : vector<32xf32> to vector<32x1xf32>
    %cst_113 = arith.constant 1.000000e-24 : f32
    %186 = vector.broadcast %cst_113 : f32 to vector<32x1xf32>
    %187 = arith.maximumf %185, %186 : vector<32x1xf32>
    %188 = math.rsqrt %187 : vector<32x1xf32>
    %189 = vector.broadcast %188 : vector<32x1xf32> to vector<32x256xf32>
    %190 = arith.mulf %182, %189 : vector<32x256xf32>
    %191 = tpu.concatenate %181, %190 in 0 : vector<32x256xf32>, vector<32x256xf32> -> vector<64x256xf32>
    %192 = arith.truncf %191 : vector<64x256xf32> to vector<64x256xbf16>
    %c64 = arith.constant 64 : index
    %c0_114 = arith.constant 0 : index
    %193 = vector.load %arg12[%c64, %c0_114] : memref<96x256xf32, #tpu.memory_space<vmem>>, vector<32x256xf32>
    %c64_115 = arith.constant 64 : index
    %c0_116 = arith.constant 0 : index
    %194 = vector.load %arg13[%c64_115, %c0_116] : memref<96x256xf32, #tpu.memory_space<vmem>>, vector<32x256xf32>
    %195 = tpu.concatenate %193, %194 in 0 : vector<32x256xf32>, vector<32x256xf32> -> vector<64x256xf32>
    %196 = arith.truncf %195 : vector<64x256xf32> to vector<64x256xbf16>
    %c0_117 = arith.constant 0 : index
    %c0_118 = arith.constant 0 : index
    %197 = vector.load %arg5[%c0_117, %c0_118] : memref<32x1xf32, #tpu.memory_space<vmem>>, vector<32x1xf32>
    %c0_119 = arith.constant 0 : index
    %c0_120 = arith.constant 0 : index
    %198 = vector.load %arg6[%c0_119, %c0_120] : memref<32x64xf32, #tpu.memory_space<vmem>>, vector<32x64xf32>
    %cst_121 = arith.constant dense<0.000000e+00> : vector<32x64xf32>
    %199 = tpu.matmul %162, %192, %cst_121 {dimension_numbers = #tpu.dot_dimension_numbers<[1], [1], [0], [0], [0, 0, 1, 0], [], []>} : vector<32x256xbf16>, vector<64x256xbf16>, vector<32x64xf32> -> vector<32x64xf32>
    %200 = vector.broadcast %197 : vector<32x1xf32> to vector<32x64xf32>
    %201 = arith.mulf %199, %200 : vector<32x64xf32>
    %202 = arith.addf %201, %198 : vector<32x64xf32>
    %cst_122 = arith.constant dense<0xFF800000> : vector<32xf32>
    %203 = vector.multi_reduction <maximumf>, %202, %cst_122 [1] : vector<32x64xf32> to vector<32xf32>
    %204 = vector.shape_cast %203 : vector<32xf32> to vector<32x1xf32>
    %205 = vector.broadcast %204 : vector<32x1xf32> to vector<32x64xf32>
    %206 = arith.subf %202, %205 : vector<32x64xf32>
    %207 = math.exp %206 : vector<32x64xf32>
    %cst_123 = arith.constant dense<0.000000e+00> : vector<32xf32>
    %208 = vector.multi_reduction <add>, %207, %cst_123 [1] : vector<32x64xf32> to vector<32xf32>
    %209 = vector.shape_cast %208 : vector<32xf32> to vector<32x1xf32>
    %210 = tpu.reciprocal %209 {approx = true} : vector<32x1xf32> -> vector<32x1xf32>
    %211 = vector.broadcast %210 : vector<32x1xf32> to vector<32x64xf32>
    %212 = arith.mulf %207, %211 : vector<32x64xf32>
    %213 = arith.truncf %212 : vector<32x64xf32> to vector<32x64xbf16>
    %cst_124 = arith.constant dense<0.000000e+00> : vector<32x256xf32>
    %214 = tpu.matmul %213, %196, %cst_124 {dimension_numbers = #tpu.dot_dimension_numbers<[1], [0], [0], [1], [0, 0, 1, 1], [], []>} : vector<32x64xbf16>, vector<64x256xbf16>, vector<32x256xf32> -> vector<32x256xf32>
    %cst_125 = arith.constant dense<0.000000e+00> : vector<32x64xf32>
    %215 = tpu.matmul %172, %192, %cst_125 {dimension_numbers = #tpu.dot_dimension_numbers<[1], [1], [0], [0], [0, 0, 1, 0], [], []>} : vector<32x256xbf16>, vector<64x256xbf16>, vector<32x64xf32> -> vector<32x64xf32>
    %216 = vector.broadcast %197 : vector<32x1xf32> to vector<32x64xf32>
    %217 = arith.mulf %215, %216 : vector<32x64xf32>
    %218 = arith.addf %217, %198 : vector<32x64xf32>
    %cst_126 = arith.constant dense<0xFF800000> : vector<32xf32>
    %219 = vector.multi_reduction <maximumf>, %218, %cst_126 [1] : vector<32x64xf32> to vector<32xf32>
    %220 = vector.shape_cast %219 : vector<32xf32> to vector<32x1xf32>
    %221 = vector.broadcast %220 : vector<32x1xf32> to vector<32x64xf32>
    %222 = arith.subf %218, %221 : vector<32x64xf32>
    %223 = math.exp %222 : vector<32x64xf32>
    %cst_127 = arith.constant dense<0.000000e+00> : vector<32xf32>
    %224 = vector.multi_reduction <add>, %223, %cst_127 [1] : vector<32x64xf32> to vector<32xf32>
    %225 = vector.shape_cast %224 : vector<32xf32> to vector<32x1xf32>
    %226 = tpu.reciprocal %225 {approx = true} : vector<32x1xf32> -> vector<32x1xf32>
    %227 = vector.broadcast %226 : vector<32x1xf32> to vector<32x64xf32>
    %228 = arith.mulf %223, %227 : vector<32x64xf32>
    %229 = arith.truncf %228 : vector<32x64xf32> to vector<32x64xbf16>
    %cst_128 = arith.constant dense<0.000000e+00> : vector<32x256xf32>
    %230 = tpu.matmul %229, %196, %cst_128 {dimension_numbers = #tpu.dot_dimension_numbers<[1], [0], [0], [1], [0, 0, 1, 1], [], []>} : vector<32x64xbf16>, vector<64x256xbf16>, vector<32x256xf32> -> vector<32x256xf32>
    %c0_129 = arith.constant 0 : index
    %c0_130 = arith.constant 0 : index
    %231 = vector.load %arg7[%c0_129, %c0_130] : memref<32x32xbf16, #tpu.memory_space<vmem>>, vector<32x32xbf16>
    %232 = arith.truncf %214 : vector<32x256xf32> to vector<32x256xbf16>
    %cst_131 = arith.constant dense<0.000000e+00> : vector<32x256xf32>
    %233 = tpu.matmul %231, %232, %cst_131 {dimension_numbers = #tpu.dot_dimension_numbers<[1], [0], [0], [1], [0, 0, 1, 1], [], []>} : vector<32x32xbf16>, vector<32x256xbf16>, vector<32x256xf32> -> vector<32x256xf32>
    %c0_132 = arith.constant 0 : index
    %c0_133 = arith.constant 0 : index
    %234 = vector.load %arg8[%c0_132, %c0_133] : memref<32x32xbf16, #tpu.memory_space<vmem>>, vector<32x32xbf16>
    %235 = arith.truncf %230 : vector<32x256xf32> to vector<32x256xbf16>
    %cst_134 = arith.constant dense<0.000000e+00> : vector<32x256xf32>
    %236 = tpu.matmul %234, %235, %cst_134 {dimension_numbers = #tpu.dot_dimension_numbers<[1], [0], [0], [1], [0, 0, 1, 1], [], []>} : vector<32x32xbf16>, vector<32x256xbf16>, vector<32x256xf32> -> vector<32x256xf32>
    %237 = arith.addf %233, %236 : vector<32x256xf32>
    %c0_135 = arith.constant 0 : index
    %c0_136 = arith.constant 0 : index
    %238 = vector.load %arg9[%c0_135, %c0_136] : memref<32x1xf32, #tpu.memory_space<vmem>>, vector<32x1xf32>
    %239 = vector.broadcast %238 : vector<32x1xf32> to vector<32x256xf32>
    %240 = arith.addf %237, %239 : vector<32x256xf32>
    %c0_137 = arith.constant 0 : index
    %c0_138 = arith.constant 0 : index
    %c0_139 = arith.constant 0 : index
    %241 = vector.load %arg10[%c0_137, %c0_138, %c0_139] : memref<1x32x256xf32, #tpu.memory_space<vmem>>, vector<1x32x256xf32>
    %242 = vector.shape_cast %241 : vector<1x32x256xf32> to vector<32x256xf32>
    %243 = vector.shape_cast %240 : vector<32x256xf32> to vector<1x32x256xf32>
    tpu.vector_store %arg10[%c0_137, %c0_138, %c0_139], %243 {strides = array<i32>} : memref<1x32x256xf32, #tpu.memory_space<vmem>>, vector<1x32x256xf32>,
    return
  }
  func.func @transform_0(%arg0: i32) -> (i32, i32, i32) {
    %c0_i32 = arith.constant 0 : i32
    %c0_i32_0 = arith.constant 0 : i32
    %c0_i32_1 = arith.constant 0 : i32
    return %arg0, %c0_i32, %c0_i32_0 : i32, i32, i32
  }
  func.func @transform_1(%arg0: i32) -> (i32, i32, i32) {
    %c0_i32 = arith.constant 0 : i32
    %c0_i32_0 = arith.constant 0 : i32
    %c0_i32_1 = arith.constant 0 : i32
    return %arg0, %c0_i32, %c0_i32_0 : i32, i32, i32
  }
  func.func @transform_2(%arg0: i32) -> (i32, i32) {
    %c0_i32 = arith.constant 0 : i32
    %c0_i32_0 = arith.constant 0 : i32
    %c0_i32_1 = arith.constant 0 : i32
    return %c0_i32, %c0_i32_0 : i32, i32
  }
  func.func @transform_3(%arg0: i32) -> (i32, i32, i32) {
    %c0_i32 = arith.constant 0 : i32
    %c0_i32_0 = arith.constant 0 : i32
    %c0_i32_1 = arith.constant 0 : i32
    %c0_i32_2 = arith.constant 0 : i32
    return %c0_i32, %c0_i32_0, %c0_i32_1 : i32, i32, i32
  }
  func.func @transform_4(%arg0: i32) -> (i32, i32) {
    %c0_i32 = arith.constant 0 : i32
    %c0_i32_0 = arith.constant 0 : i32
    %c0_i32_1 = arith.constant 0 : i32
    return %c0_i32, %c0_i32_0 : i32, i32
  }
  func.func @transform_5(%arg0: i32) -> (i32, i32) {
    %c0_i32 = arith.constant 0 : i32
    %c0_i32_0 = arith.constant 0 : i32
    %c0_i32_1 = arith.constant 0 : i32
    return %c0_i32, %c0_i32_0 : i32, i32
  }
  func.func @transform_6(%arg0: i32) -> (i32, i32) {
    %c0_i32 = arith.constant 0 : i32
    %c0_i32_0 = arith.constant 0 : i32
    %c0_i32_1 = arith.constant 0 : i32
    return %c0_i32, %c0_i32_0 : i32, i32
  }
  func.func @transform_7(%arg0: i32) -> (i32, i32) {
    %c0_i32 = arith.constant 0 : i32
    %c0_i32_0 = arith.constant 0 : i32
    %c0_i32_1 = arith.constant 0 : i32
    return %c0_i32, %c0_i32_0 : i32, i32
  }
  func.func @transform_8(%arg0: i32) -> (i32, i32) {
    %c0_i32 = arith.constant 0 : i32
    %c0_i32_0 = arith.constant 0 : i32
    %c0_i32_1 = arith.constant 0 : i32
    return %c0_i32, %c0_i32_0 : i32, i32
  }
  func.func @transform_9(%arg0: i32) -> (i32, i32, i32) {
    %c0_i32 = arith.constant 0 : i32
    %c0_i32_0 = arith.constant 0 : i32
    %c0_i32_1 = arith.constant 0 : i32
    return %arg0, %c0_i32, %c0_i32_0 : i32, i32, i32
  }
}

</mosaic_0001>

<llo_original>
// kernel: embedding_forward.1
$region0: #{embedding_forward.1}
  #allocation0 [shape = 'u32[]', space=smem, size = 0x4, offset = 0x4, fixed_abs, tag = 'smem constant byte address 0x4 - core index']
  #allocation1 [shape = 'u32[144,128]{1,0:T(1,128)}', space=vmem, size = 0x12000, scoped, tag = 'internal scratch']
  #allocation2 [shape = 'f32[96,384]{1,0:T(8,128)}', space=vmem, size = 0x24000, scoped, tag = 'scratch operand']
  #allocation3 [shape = 'f32[96,256]{1,0:T(8,128)}', space=vmem, size = 0x18000, scoped, tag = 'scratch operand']
  #allocation4 [shape = 'f32[96,256]{1,0:T(8,128)}', space=vmem, size = 0x18000, scoped, tag = 'scratch operand']
  %s0 = inlined_call_operand.vmem [shape: f32[2,32,384], index: 0, kind: input, shape index: {}]
  %s1 = inlined_call_operand.vmem [shape: f32[2,32,384], index: 1, kind: input, shape index: {}]
  %s2 = inlined_call_operand.vmem [shape: bf16[96,32], index: 2, kind: input, shape index: {}]
  %s3 = inlined_call_operand.vmem [shape: f32[9,96,1], index: 3, kind: input, shape index: {}]
  %s4 = inlined_call_operand.vmem [shape: f32[32,1], index: 4, kind: input, shape index: {}]
  %s5 = inlined_call_operand.vmem [shape: f32[32,64], index: 5, kind: input, shape index: {}]
  %s6 = inlined_call_operand.vmem [shape: bf16[32,32], index: 6, kind: input, shape index: {}]
  %s7 = inlined_call_operand.vmem [shape: bf16[32,32], index: 7, kind: input, shape index: {}]
  %s8 = inlined_call_operand.vmem [shape: f32[32,1], index: 8, kind: input, shape index: {}]
  %s9 = inlined_call_operand.vmem [shape: f32[2,32,256], index: 9, kind: output, shape index: {}]
  %s10 = sld [smem:[#allocation0]]
  $region69: #{embedding_forward.1} parent=0
    _
  %s12 = ssub.s32 1, %s10
  %s13 = scalar_select 0, %s12, %s10
  loop: start=0, step=1, limit=4
  $region2: #{embedding_forward.1} parent=0 // loop_pre_header
    _
  $region3: #{embedding_forward.1} parent=0 // loop_header
    %s15 = sphi 0, %s19
    %p16 = scmp.ge.s32.totalorder %s15, 4
    %s25 = sphi 0, %s27
    %s28 = sphi 0, %s25
    %s29 = sphi 0, %s28
    %s45 = sphi 0, %s29
    %s51 = sphi 0, %s53
    %s54 = sphi 0, %s51
    %s55 = sphi 0, %s54
    %s71 = sphi 0, %s55
    %s75 = sphi 0, %s75
    %s77 = sphi 0, %s75
    %s78 = sphi 0, %s77
    %s92 = sphi 0, %s78
    %s96 = sphi 0, %s96
    %s98 = sphi 0, %s96
    %s99 = sphi 0, %s98
    %s113 = sphi 0, %s99
    %s117 = sphi 0, %s117
    %s119 = sphi 0, %s117
    %s120 = sphi 0, %s119
    %s134 = sphi 0, %s120
    %s138 = sphi 0, %s138
    %s140 = sphi 0, %s138
    %s141 = sphi 0, %s140
    %s155 = sphi 0, %s141
    %s159 = sphi 0, %s159
    %s161 = sphi 0, %s159
    %s162 = sphi 0, %s161
    %s176 = sphi 0, %s162
    %s180 = sphi 0, %s180
    %s182 = sphi 0, %s180
    %s183 = sphi 0, %s182
    %s197 = sphi 0, %s183
    %s201 = sphi 0, %s201
    %s203 = sphi 0, %s201
    %s204 = sphi 0, %s203
    %s218 = sphi 0, %s204
    %s224 = sphi 0, %s226
    %s227 = sphi 0, %s224
    %s228 = sphi 0, %s227
    %s244 = sphi 0, %s228
  $region4: #{embedding_forward.1} parent=0 // loop_header_branch
    %18 = sbr.rel (%p16) target = $region8
  $region5: #{embedding_forward.1} parent=0 // loop_body
    %s20 = ssub.s32 %s15, 1
    %s21 = ssub.s32 %s15, 2
    %s22 = sadd.s32 %s15, 1
    %s23 = ssub.s32 %s15, %s22
    %p24 = scmp.eq.s32.totalorder %s23, 0
    %s26 = sadd.s32 %s25, 1
    %s27 = scalar_select %p24, %s25, %s26
    %p30 = pneg %p24
    %p31 = scmp.eq.s32.totalorder %s15, 1
    %p32 = por %p30, %p31
    %p33 = scmp.ne.s32.totalorder %s25, %s28
    %p34 = scmp.eq.s32.totalorder %s15, 0
    %p35 = por %p33, %p34
    %p36 = scmp.ne.s32.totalorder %s25, %s28
    %p37 = scmp.eq.s32.totalorder %s20, 1
    %p38 = por %p36, %p37
    %p39 = scmp.ne.s32.totalorder %s28, %s29
    %p40 = scmp.eq.s32.totalorder %s20, 0
    %p41 = por %p39, %p40
    %p42 = scmp.ne.s32.totalorder %s28, %s29
    %p43 = scmp.eq.s32.totalorder %s21, 1
    %p44 = por %p42, %p43
    %p46 = scmp.ne.s32.totalorder %s29, %s45
    %p47 = scmp.eq.s32.totalorder %s21, 0
    %p48 = por %p46, %p47
    %s49 = ssub.s32 %s15, %s22
    %p50 = scmp.eq.s32.totalorder %s49, 0
    %s52 = sadd.s32 %s51, 1
    %s53 = scalar_select %p50, %s51, %s52
    %p56 = pneg %p50
    %p57 = scmp.eq.s32.totalorder %s15, 1
    %p58 = por %p56, %p57
    %p59 = scmp.ne.s32.totalorder %s51, %s54
    %p60 = scmp.eq.s32.totalorder %s15, 0
    %p61 = por %p59, %p60
    %p62 = scmp.ne.s32.totalorder %s51, %s54
    %p63 = scmp.eq.s32.totalorder %s20, 1
    %p64 = por %p62, %p63
    %p65 = scmp.ne.s32.totalorder %s54, %s55
    %p66 = scmp.eq.s32.totalorder %s20, 0
    %p67 = por %p65, %p66
    %p68 = scmp.ne.s32.totalorder %s54, %s55
    %p69 = scmp.eq.s32.totalorder %s21, 1
    %p70 = por %p68, %p69
    %p72 = scmp.ne.s32.totalorder %s55, %s71
    %p73 = scmp.eq.s32.totalorder %s21, 0
    %p74 = por %p72, %p73
    %s76 = sadd.s32 %s75, 1
    %p79 = scmp.eq.s32.totalorder %s15, 1
    %p80 = scmp.ne.s32.totalorder %s75, %s77
    %p81 = scmp.eq.s32.totalorder %s15, 0
    %p82 = por %p80, %p81
    %p83 = scmp.ne.s32.totalorder %s75, %s77
    %p84 = scmp.eq.s32.totalorder %s20, 1
    %p85 = por %p83, %p84
    %p86 = scmp.ne.s32.totalorder %s77, %s78
    %p87 = scmp.eq.s32.totalorder %s20, 0
    %p88 = por %p86, %p87
    %p89 = scmp.ne.s32.totalorder %s77, %s78
    %p90 = scmp.eq.s32.totalorder %s21, 1
    %p91 = por %p89, %p90
    %p93 = scmp.ne.s32.totalorder %s78, %s92
    %p94 = scmp.eq.s32.totalorder %s21, 0
    %p95 = por %p93, %p94
    %s97 = sadd.s32 %s96, 1
    %p100 = scmp.eq.s32.totalorder %s15, 1
    %p101 = scmp.ne.s32.totalorder %s96, %s98
    %p102 = scmp.eq.s32.totalorder %s15, 0
    %p103 = por %p101, %p102
    %p104 = scmp.ne.s32.totalorder %s96, %s98
    %p105 = scmp.eq.s32.totalorder %s20, 1
    %p106 = por %p104, %p105
    %p107 = scmp.ne.s32.totalorder %s98, %s99
    %p108 = scmp.eq.s32.totalorder %s20, 0
    %p109 = por %p107, %p108
    %p110 = scmp.ne.s32.totalorder %s98, %s99
    %p111 = scmp.eq.s32.totalorder %s21, 1
    %p112 = por %p110, %p111
    %p114 = scmp.ne.s32.totalorder %s99, %s113
    %p115 = scmp.eq.s32.totalorder %s21, 0
    %p116 = por %p114, %p115
    %s118 = sadd.s32 %s117, 1
    %p121 = scmp.eq.s32.totalorder %s15, 1
    %p122 = scmp.ne.s32.totalorder %s117, %s119
    %p123 = scmp.eq.s32.totalorder %s15, 0
    %p124 = por %p122, %p123
    %p125 = scmp.ne.s32.totalorder %s117, %s119
    %p126 = scmp.eq.s32.totalorder %s20, 1
    %p127 = por %p125, %p126
    %p128 = scmp.ne.s32.totalorder %s119, %s120
    %p129 = scmp.eq.s32.totalorder %s20, 0
    %p130 = por %p128, %p129
    %p131 = scmp.ne.s32.totalorder %s119, %s120
    %p132 = scmp.eq.s32.totalorder %s21, 1
    %p133 = por %p131, %p132
    %p135 = scmp.ne.s32.totalorder %s120, %s134
    %p136 = scmp.eq.s32.totalorder %s21, 0
    %p137 = por %p135, %p136
    %s139 = sadd.s32 %s138, 1
    %p142 = scmp.eq.s32.totalorder %s15, 1
    %p143 = scmp.ne.s32.totalorder %s138, %s140
    %p144 = scmp.eq.s32.totalorder %s15, 0
    %p145 = por %p143, %p144
    %p146 = scmp.ne.s32.totalorder %s138, %s140
    %p147 = scmp.eq.s32.totalorder %s20, 1
    %p148 = por %p146, %p147
    %p149 = scmp.ne.s32.totalorder %s140, %s141
    %p150 = scmp.eq.s32.totalorder %s20, 0
    %p151 = por %p149, %p150
    %p152 = scmp.ne.s32.totalorder %s140, %s141
    %p153 = scmp.eq.s32.totalorder %s21, 1
    %p154 = por %p152, %p153
    %p156 = scmp.ne.s32.totalorder %s141, %s155
    %p157 = scmp.eq.s32.totalorder %s21, 0
    %p158 = por %p156, %p157
    %s160 = sadd.s32 %s159, 1
    %p163 = scmp.eq.s32.totalorder %s15, 1
    %p164 = scmp.ne.s32.totalorder %s159, %s161
    %p165 = scmp.eq.s32.totalorder %s15, 0
    %p166 = por %p164, %p165
    %p167 = scmp.ne.s32.totalorder %s159, %s161
    %p168 = scmp.eq.s32.totalorder %s20, 1
    %p169 = por %p167, %p168
    %p170 = scmp.ne.s32.totalorder %s161, %s162
    %p171 = scmp.eq.s32.totalorder %s20, 0
    %p172 = por %p170, %p171
    %p173 = scmp.ne.s32.totalorder %s161, %s162
    %p174 = scmp.eq.s32.totalorder %s21, 1
    %p175 = por %p173, %p174
    %p177 = scmp.ne.s32.totalorder %s162, %s176
    %p178 = scmp.eq.s32.totalorder %s21, 0
    %p179 = por %p177, %p178
    %s181 = sadd.s32 %s180, 1
    %p184 = scmp.eq.s32.totalorder %s15, 1
    %p185 = scmp.ne.s32.totalorder %s180, %s182
    %p186 = scmp.eq.s32.totalorder %s15, 0
    %p187 = por %p185, %p186
    %p188 = scmp.ne.s32.totalorder %s180, %s182
    %p189 = scmp.eq.s32.totalorder %s20, 1
    %p190 = por %p188, %p189
    %p191 = scmp.ne.s32.totalorder %s182, %s183
    %p192 = scmp.eq.s32.totalorder %s20, 0
    %p193 = por %p191, %p192
    %p194 = scmp.ne.s32.totalorder %s182, %s183
    %p195 = scmp.eq.s32.totalorder %s21, 1
    %p196 = por %p194, %p195
    %p198 = scmp.ne.s32.totalorder %s183, %s197
    %p199 = scmp.eq.s32.totalorder %s21, 0
    %p200 = por %p198, %p199
    %s202 = sadd.s32 %s201, 1
    %p205 = scmp.eq.s32.totalorder %s15, 1
    %p206 = scmp.ne.s32.totalorder %s201, %s203
    %p207 = scmp.eq.s32.totalorder %s15, 0
    %p208 = por %p206, %p207
    %p209 = scmp.ne.s32.totalorder %s201, %s203
    %p210 = scmp.eq.s32.totalorder %s20, 1
    %p211 = por %p209, %p210
    %p212 = scmp.ne.s32.totalorder %s203, %s204
    %p213 = scmp.eq.s32.totalorder %s20, 0
    %p214 = por %p212, %p213
    %p215 = scmp.ne.s32.totalorder %s203, %s204
    %p216 = scmp.eq.s32.totalorder %s21, 1
    %p217 = por %p215, %p216
    %p219 = scmp.ne.s32.totalorder %s204, %s218
    %p220 = scmp.eq.s32.totalorder %s21, 0
    %p221 = por %p219, %p220
    %s222 = ssub.s32 %s15, %s22
    %p223 = scmp.eq.s32.totalorder %s222, 0
    %s225 = sadd.s32 %s224, 1
    %s226 = scalar_select %p223, %s224, %s225
    %p229 = pneg %p223
    %p230 = scmp.eq.s32.totalorder %s15, 1
    %p231 = por %p229, %p230
    %p232 = scmp.ne.s32.totalorder %s224, %s227
    %p233 = scmp.eq.s32.totalorder %s15, 0
    %p234 = por %p232, %p233
    %p235 = scmp.ne.s32.totalorder %s224, %s227
    %p236 = scmp.eq.s32.totalorder %s20, 1
    %p237 = por %p235, %p236
    %p238 = scmp.ne.s32.totalorder %s227, %s228
    %p239 = scmp.eq.s32.totalorder %s20, 0
    %p240 = por %p238, %p239
    %p241 = scmp.ne.s32.totalorder %s227, %s228
    %p242 = scmp.eq.s32.totalorder %s21, 1
    %p243 = por %p241, %p242
    %p245 = scmp.ne.s32.totalorder %s228, %s244
    %p246 = scmp.eq.s32.totalorder %s21, 0
    %p247 = por %p245, %p246
    %p248 = scmp.le.s32.totalorder 1, %s15
    %p249 = scmp.lt.s32.totalorder %s15, 3
    %p250 = pnand %p248, %p249
    %p251 = pneg %p250
    // Predicated region
    $region9: #{embedding_forward.1} parent=5 // pred_check
      _
    $region10: #{embedding_forward.1} parent=5 // pred_check_branch
      %253 = sbr.rel (%p250) target = $region12
    $region11: #{embedding_forward.1} parent=5 // pred_region
      %s254 = ssub.s32 %s15, 1
      // Predicated region
      $region13: #{embedding_forward.1} parent=11 // pred_check
        %p255 = pneg %p88
      $region14: #{embedding_forward.1} parent=11 // pred_check_branch
        %257 = sbr.rel (%p255) target = $region16
      $region15: #{embedding_forward.1} parent=11 // pred_region
        _
      $region16: #{embedding_forward.1} parent=11 // pred_fallthru
        _
      // Predicated region
      $region17: #{embedding_forward.1} parent=11 // pred_check
        %p258 = pneg %p109
      $region18: #{embedding_forward.1} parent=11 // pred_check_branch
        %260 = sbr.rel (%p258) target = $region20
      $region19: #{embedding_forward.1} parent=11 // pred_region
        _
      $region20: #{embedding_forward.1} parent=11 // pred_fallthru
        _
      // Predicated region
      $region21: #{embedding_forward.1} parent=11 // pred_check
        %p261 = pneg %p130
      $region22: #{embedding_forward.1} parent=11 // pred_check_branch
        %263 = sbr.rel (%p261) target = $region24
      $region23: #{embedding_forward.1} parent=11 // pred_region
        _
      $region24: #{embedding_forward.1} parent=11 // pred_fallthru
        _
      // Predicated region
      $region25: #{embedding_forward.1} parent=11 // pred_check
        %p264 = pneg %p151
      $region26: #{embedding_forward.1} parent=11 // pred_check_branch
        %266 = sbr.rel (%p264) target = $region28
      $region27: #{embedding_forward.1} parent=11 // pred_region
        _
      $region28: #{embedding_forward.1} parent=11 // pred_fallthru
        _
      // Predicated region
      $region29: #{embedding_forward.1} parent=11 // pred_check
        %p267 = pneg %p172
      $region30: #{embedding_forward.1} parent=11 // pred_check_branch
        %269 = sbr.rel (%p267) target = $region32
      $region31: #{embedding_forward.1} parent=11 // pred_region
        _
      $region32: #{embedding_forward.1} parent=11 // pred_fallthru
        _
      // Predicated region
      $region33: #{embedding_forward.1} parent=11 // pred_check
        %p270 = pneg %p193
      $region34: #{embedding_forward.1} parent=11 // pred_check_branch
        %272 = sbr.rel (%p270) target = $region36
      $region35: #{embedding_forward.1} parent=11 // pred_region
        _
      $region36: #{embedding_forward.1} parent=11 // pred_fallthru
        _
      // Predicated region
      $region37: #{embedding_forward.1} parent=11 // pred_check
        %p273 = pneg %p214
      $region38: #{embedding_forward.1} parent=11 // pred_check_branch
        %275 = sbr.rel (%p273) target = $region40
      $region39: #{embedding_forward.1} parent=11 // pred_region
        _
      $region40: #{embedding_forward.1} parent=11 // pred_fallthru
        _
    $region12: #{embedding_forward.1} parent=5 // pred_fallthru
      _
    %p276 = scmp.lt.s32.totalorder %s15, 2
    // Predicated region
    $region41: #{embedding_forward.1} parent=5 // pred_check
      %p277 = pneg %p276
    $region42: #{embedding_forward.1} parent=5 // pred_check_branch
      %279 = sbr.rel (%p277) target = $region44
    $region43: #{embedding_forward.1} parent=5 // pred_region
      // Predicated region
      $region45: #{embedding_forward.1} parent=43 // pred_check
        %p280 = pneg %p35
      $region46: #{embedding_forward.1} parent=43 // pred_check_branch
        %282 = sbr.rel (%p280) target = $region48
      $region47: #{embedding_forward.1} parent=43 // pred_region
        %p283 = scmp.lt.s32.totalorder %s15, 1
        %s284 = scalar_select %p283, %s15, 1
        %s285 = smul.addr %s284, 12
        %s286 = smul.addr %s285, 8
        %s287 = scalar_lea.vmem %s0, %s286
      $region48: #{embedding_forward.1} parent=43 // pred_fallthru
        _
      // Predicated region
      $region49: #{embedding_forward.1} parent=43 // pred_check
        %p288 = pneg %p61
      $region50: #{embedding_forward.1} parent=43 // pred_check_branch
        %290 = sbr.rel (%p288) target = $region52
      $region51: #{embedding_forward.1} parent=43 // pred_region
        %p291 = scmp.lt.s32.totalorder %s15, 1
        %s292 = scalar_select %p291, %s15, 1
        %s293 = smul.addr %s292, 12
        %s294 = smul.addr %s293, 8
        %s295 = scalar_lea.vmem %s1, %s294
      $region52: #{embedding_forward.1} parent=43 // pred_fallthru
        _
    $region44: #{embedding_forward.1} parent=5 // pred_fallthru
      _
    %p296 = scmp.le.s32.totalorder 1, %s15
    %p297 = scmp.lt.s32.totalorder %s15, 3
    %p298 = pnand %p296, %p297
    %p299 = pneg %p298
    // Predicated region
    $region53: #{embedding_forward.1} parent=5 // pred_check
      _
    $region54: #{embedding_forward.1} parent=5 // pred_check_branch
      %301 = sbr.rel (%p298) target = $region56
    $region55: #{embedding_forward.1} parent=5 // pred_region
      %s302 = ssub.s32 %s15, 1
      %p303 = scmp.lt.s32.totalorder %s20, 1
      %s304 = scalar_select %p303, %s20, 1
      %s305 = smul.addr %s304, 12
      %s306 = smul.addr %s305, 8
      %s307 = scalar_lea.vmem %s0, %s306
      %p308 = pneg %p41
      %p309 = pneg %p38
      %p310 = scmp.lt.s32.totalorder %s20, 1
      %s311 = scalar_select %p310, %s20, 1
      %s312 = smul.addr %s311, 12
      %s313 = smul.addr %s312, 8
      %s314 = scalar_lea.vmem %s1, %s313
      %p315 = pneg %p67
      %p316 = pneg %p64
      %p317 = pneg %p88
      %p318 = pneg %p85
      %p319 = pneg %p109
      %p320 = pneg %p106
      %p321 = pneg %p130
      %p322 = pneg %p127
      %p323 = pneg %p151
      %p324 = pneg %p148
      %p325 = pneg %p172
      %p326 = pneg %p169
      %p327 = pneg %p193
      %p328 = pneg %p190
      %p329 = pneg %p214
      %p330 = pneg %p211
      %p331 = pneg %p240
      %p332 = pneg %p237
      %p333 = scmp.lt.s32.totalorder %s20, 1
      %s334 = scalar_select %p333, %s20, 1
      %s335 = smul.addr %s334, 8
      %s336 = smul.addr %s335, 8
      %s337 = scalar_lea.vmem %s9, %s336
      %p338 = scmp.lt.s32.totalorder %s20, 1
      %s339 = scalar_select %p338, %s20, 1
      %s340 = smul.addr %s339, 12
      %s341 = smul.addr %s340, 8
      %s342 = scalar_lea.vmem %s0, %s341
      %p343 = scmp.lt.s32.totalorder %s20, 1
      %s344 = scalar_select %p343, %s20, 1
      %s345 = smul.addr %s344, 12
      %s346 = smul.addr %s345, 8
      %s347 = scalar_lea.vmem %s1, %s346
      %p348 = scmp.lt.s32.totalorder %s20, 1
      %s349 = scalar_select %p348, %s20, 1
      %s350 = smul.addr %s349, 8
      %s351 = smul.addr %s350, 8
      %s352 = scalar_lea.vmem %s9, %s351
      %v354 = vlaneseq
      %v355 = vand.u32 %v354, 127
      %v356 = vadd.s32 %v355, 128
      %vm357 = vcmp.lt.s32.totalorder %v355, 0
      %v358 = vsub.s32 0, %v355
      %v359 = vsel %vm357, %v358, %v355
      %v360 = vshrl.u32 %v359, 4
      %v361 = vand.u32 %v359, 15
      %v362 = vsub.s32 0, %v361
      %v363 = vsel %vm357, %v362, %v361
      %vm364 = vcmp.lt.s32.totalorder %v356, 0
      %v365 = vsub.s32 0, %v356
      %v366 = vsel %vm364, %v365, %v356
      %v367 = vshrl.u32 %v366, 4
      %v368 = vand.u32 %v366, 15
      %v369 = vsub.s32 0, %v368
      %v370 = vsel %vm364, %v369, %v368
      %vm371 = vcmp.ne.s32.totalorder %v363, 0
      %vm372 = vcmp.ne.s32.totalorder %v370, 0
      %vm373 = vcmp.lt.s32.totalorder %v363, 0
      %vm374 = vcmp.lt.s32.totalorder %v370, 0
      %vm375 = vmand %vm373, %vm371
      %vm376 = vmand %vm374, %vm372
      %v377 = vadd.s32 %v363, 16
      %v378 = vadd.s32 %v370, 16
      %v379 = vsel %vm375, %v377, %v363
      %v380 = vsel %vm376, %v378, %v370
      %vm381 = vcmp.ne.s32.totalorder %v379, 0
      %vm382 = vcmp.ne.s32.totalorder %v380, 0
      %v383 = vsel %vm381, 1, 0
      %v384 = vsel %vm382, 1, 0
      %v385 = vcvt.s32.f32 %v383
      %v386 = vcvt.s32.f32 %v384
      %vm387 = vcmp.ne.s32.totalorder %v379, 15
      %vm388 = vcmp.ne.s32.totalorder %v380, 15
      %v389 = vsel %vm387, 1, 0
      %v390 = vsel %vm388, 1, 0
      %v391 = vcvt.s32.f32 %v389
      %v392 = vcvt.s32.f32 %v390
      %v393 = vld [vmem:[%s2] sm:$0xf]
      %v394 = vld [vmem:[%s2 + $0x4] sm:$0xf]
      %v395 = vld [vmem:[%s2 + $0x8] sm:$0xf]
      %v396 = vld [vmem:[%s2 + $0xc] sm:$0xf]
      %v397 = vld [vmem:[%s2 + $0x10] sm:$0xf]
      %v398 = vld [vmem:[%s2 + $0x14] sm:$0xf]
      %v399 = vld [vmem:[%s2 + $0x18] sm:$0xf]
      %v400 = vld [vmem:[%s2 + $0x1c] sm:$0xf]
      %v401 = vld [vmem:[%s2 + $0x20] sm:$0xf]
      %v402 = vld [vmem:[%s2 + $0x24] sm:$0xf]
      %v403 = vld [vmem:[%s2 + $0x28] sm:$0xf]
      %v404 = vld [vmem:[%s2 + $0x2c] sm:$0xf]
      %v405 = vld [vmem:[%s342] sm:$0xff]
      %v406 = vld [vmem:[%s342 + $0x8] sm:$0xff]
      %v407 = vld [vmem:[%s342 + $0x10] sm:$0xff]
      %v408 = vld [vmem:[%s342 + $0x18] sm:$0xff]
      %v409 = vld [vmem:[%s342 + $0x20] sm:$0xff]
      %v410 = vld [vmem:[%s342 + $0x28] sm:$0xff]
      %v411 = vld [vmem:[%s342 + $0x30] sm:$0xff]
      %v412 = vld [vmem:[%s342 + $0x38] sm:$0xff]
      %v413 = vld [vmem:[%s342 + $0x40] sm:$0xff]
      %v414 = vld [vmem:[%s342 + $0x48] sm:$0xff]
      %v415 = vld [vmem:[%s342 + $0x50] sm:$0xff]
      %v416 = vld [vmem:[%s342 + $0x58] sm:$0xff]
      %v417 = vpack.c.bf16 %v408, %v405
      %v418 = vpack.c.bf16 %v409, %v406
      %v419 = vpack.c.bf16 %v410, %v407
      %v420 = vpack.c.bf16 %v414, %v411
      %v421 = vpack.c.bf16 %v415, %v412
      %v422 = vpack.c.bf16 %v416, %v413
      %v435 = vunpack.c.l.b16 %v393
      %v436 = vunpack.c.l.b16 %v394
      %v437 = vunpack.c.l.b16 %v395
      %v438 = vunpack.c.l.b16 %v396
      %v439 = vunpack.c.l.b16 %v397
      %v440 = vunpack.c.l.b16 %v398
      %v441 = vunpack.c.l.b16 %v399
      %v442 = vunpack.c.l.b16 %v400
      %v443 = vunpack.c.l.b16 %v401
      %v444 = vunpack.c.l.b16 %v402
      %v445 = vunpack.c.l.b16 %v403
      %v446 = vunpack.c.l.b16 %v404
      %v447 = vpack.c.b16 %v436, %v435
      %v448 = vpack.c.b16 %v438, %v437
      %v449 = vpack.c.b16 %v440, %v439
      %v450 = vpack.c.b16 %v442, %v441
      %v451 = vpack.c.b16 %v444, %v443
      %v452 = vpack.c.b16 %v446, %v445
      %vm453 = vcmask 261120
      %v455 = vsel %vm453, %v447, 0
      %v458 = vsel %vm453, %v448, 0
      %v461 = vsel %vm453, %v449, 0
      %v464 = vsel %vm453, %v450, 0
      %v467 = vsel %vm453, %v451, 0
      %v470 = vsel %vm453, %v452, 0
      %472 = vmatprep.subr.bf16.mxu0 %v418
      %473 = vmatpush1.bf16.msra.mxu0 %v417
      %474 = vmatprep.subr.bf16.mxu0 %v421
      %475 = vmatpush1.bf16.msra.mxu0 %v420
      %476 = vmatprep.subr.bf16.mxu0 0
      %477 = vmatpush1.bf16.msra.mxu0 0
      %478 = vmatprep.subr.bf16.mxu0 0
      %479 = vmatpush1.bf16.msra.mxu0 0
      %480 = vmatprep.subr.bf16.mxu0 0
      %481 = vmatpush1.bf16.msra.mxu0 0
      %482 = vmatprep.subr.bf16.mxu0 0
      %483 = vmatpush1.bf16.msra.mxu0 0
      %484 = vmatprep.subr.bf16.mxu0 0
      %485 = vmatpush1.bf16.msra.mxu0 0
      %486 = vmatprep.subr.bf16.mxu0 0
      %487 = vmatpush1.bf16.msra.mxu0 0
      %488 = vmatprep.subr.bf16.mxu0 0
      %489 = vmatpush1.bf16.msra.mxu0 0
      %490 = vmatprep.subr.bf16.mxu0 0
      %491 = vmatpush1.bf16.msra.mxu0 0
      %492 = vmatprep.subr.bf16.mxu0 0
      %493 = vmatpush1.bf16.msra.mxu0 0
      %494 = vmatprep.subr.bf16.mxu0 0
      %495 = vmatpush1.bf16.msra.mxu0 0
      %496 = vmatprep.subr.bf16.mxu0 0
      %497 = vmatpush1.bf16.msra.mxu0 0
      %498 = vmatprep.subr.bf16.mxu0 0
      %499 = vmatpush1.bf16.msra.mxu0 0
      %500 = vmatprep.subr.bf16.mxu0 0
      %501 = vmatpush1.bf16.msra.mxu0 0
      %502 = vmatprep.subr.bf16.mxu0 0
      %503 = vmatpush1.bf16.msra.mxu0 0
      %504 = vmatprep.mubr.bf16.mxu0 0
      %505 = vmatmul.mubr.bf16.gmra.mrb[0].mxu0 %v455
      %v506 = vpop.f32.mrb[0].mxu0
      %v507 = vadd.f32 0.0, %v506
      %v508 = vpop.f32.mrb[0].mxu0
      %v509 = vadd.f32 0.0, %v508
      %v510 = vpop.f32.mrb[0].mxu0
      %v511 = vadd.f32 0.0, %v510
      %v512 = vpop.f32.mrb[0].mxu0
      %v513 = vadd.f32 0.0, %v512
      %514 = vmatprep.mubr.bf16.mxu0 0
      %515 = vmatmul.mubr.bf16.gmra.mrb[0].mxu0 %v458
      %v516 = vpop.f32.mrb[0].mxu0
      %v517 = vadd.f32 0.0, %v516
      %v518 = vpop.f32.mrb[0].mxu0
      %v519 = vadd.f32 0.0, %v518
      %v520 = vpop.f32.mrb[0].mxu0
      %v521 = vadd.f32 0.0, %v520
      %v522 = vpop.f32.mrb[0].mxu0
      %v523 = vadd.f32 0.0, %v522
      %524 = vmatprep.mubr.bf16.mxu0 0
      %525 = vmatmul.mubr.bf16.gmra.mrb[0].mxu0 %v461
      %v526 = vpop.f32.mrb[0].mxu0
      %v527 = vadd.f32 0.0, %v526
      %v528 = vpop.f32.mrb[0].mxu0
      %v529 = vadd.f32 0.0, %v528
      %v530 = vpop.f32.mrb[0].mxu0
      %v531 = vadd.f32 0.0, %v530
      %v532 = vpop.f32.mrb[0].mxu0
      %v533 = vadd.f32 0.0, %v532
      %534 = vmatprep.mubr.bf16.mxu0 0
      %535 = vmatmul.mubr.bf16.gmra.mrb[0].mxu0 %v464
      %v536 = vpop.f32.mrb[0].mxu0
      %v537 = vadd.f32 0.0, %v536
      %v538 = vpop.f32.mrb[0].mxu0
      %v539 = vadd.f32 0.0, %v538
      %v540 = vpop.f32.mrb[0].mxu0
      %v541 = vadd.f32 0.0, %v540
      %v542 = vpop.f32.mrb[0].mxu0
      %v543 = vadd.f32 0.0, %v542
      %544 = vmatprep.mubr.bf16.mxu0 0
      %545 = vmatmul.mubr.bf16.gmra.mrb[0].mxu0 %v467
      %v546 = vpop.f32.mrb[0].mxu0
      %v547 = vadd.f32 0.0, %v546
      %v548 = vpop.f32.mrb[0].mxu0
      %v549 = vadd.f32 0.0, %v548
      %v550 = vpop.f32.mrb[0].mxu0
      %v551 = vadd.f32 0.0, %v550
      %v552 = vpop.f32.mrb[0].mxu0
      %v553 = vadd.f32 0.0, %v552
      %554 = vmatprep.mubr.bf16.mxu0 0
      %555 = vmatmul.mubr.bf16.gmra.mrb[0].mxu0 %v470
      %v556 = vpop.f32.mrb[0].mxu0
      %v557 = vadd.f32 0.0, %v556
      %v558 = vpop.f32.mrb[0].mxu0
      %v559 = vadd.f32 0.0, %v558
      %v560 = vpop.f32.mrb[0].mxu0
      %v561 = vadd.f32 0.0, %v560
      %v562 = vpop.f32.mrb[0].mxu0
      %v563 = vadd.f32 0.0, %v562
      %564 = vdwg.mxu0
      %565 = vmatprep.subr.bf16.mxu0 0
      %566 = vmatpush1.bf16.msra.mxu0 %v419
      %567 = vmatprep.subr.bf16.mxu0 0
      %568 = vmatpush1.bf16.msra.mxu0 %v422
      %569 = vmatprep.subr.bf16.mxu0 0
      %570 = vmatpush1.bf16.msra.mxu0 0
      %571 = vmatprep.subr.bf16.mxu0 0
      %572 = vmatpush1.bf16.msra.mxu0 0
      %573 = vmatprep.subr.bf16.mxu0 0
      %574 = vmatpush1.bf16.msra.mxu0 0
      %575 = vmatprep.subr.bf16.mxu0 0
      %576 = vmatpush1.bf16.msra.mxu0 0
      %577 = vmatprep.subr.bf16.mxu0 0
      %578 = vmatpush1.bf16.msra.mxu0 0
      %579 = vmatprep.subr.bf16.mxu0 0
      %580 = vmatpush1.bf16.msra.mxu0 0
      %581 = vmatprep.subr.bf16.mxu0 0
      %582 = vmatpush1.bf16.msra.mxu0 0
      %583 = vmatprep.subr.bf16.mxu0 0
      %584 = vmatpush1.bf16.msra.mxu0 0
      %585 = vmatprep.subr.bf16.mxu0 0
      %586 = vmatpush1.bf16.msra.mxu0 0
      %587 = vmatprep.subr.bf16.mxu0 0
      %588 = vmatpush1.bf16.msra.mxu0 0
      %589 = vmatprep.subr.bf16.mxu0 0
      %590 = vmatpush1.bf16.msra.mxu0 0
      %591 = vmatprep.subr.bf16.mxu0 0
      %592 = vmatpush1.bf16.msra.mxu0 0
      %593 = vmatprep.subr.bf16.mxu0 0
      %594 = vmatpush1.bf16.msra.mxu0 0
      %595 = vmatprep.subr.bf16.mxu0 0
      %596 = vmatpush1.bf16.msra.mxu0 0
      %597 = vmatprep.mubr.bf16.mxu0 0
      %598 = vmatmul.mubr.bf16.gmra.mrb[0].mxu0 %v455
      %v599 = vpop.f32.mrb[0].mxu0
      %v600 = vadd.f32 0.0, %v599
      %v601 = vpop.f32.mrb[0].mxu0
      %v602 = vpop.f32.mrb[0].mxu0
      %v603 = vadd.f32 0.0, %v602
      %v604 = vpop.f32.mrb[0].mxu0
      %605 = vmatprep.mubr.bf16.mxu0 0
      %606 = vmatmul.mubr.bf16.gmra.mrb[0].mxu0 %v458
      %v607 = vpop.f32.mrb[0].mxu0
      %v608 = vadd.f32 0.0, %v607
      %v609 = vpop.f32.mrb[0].mxu0
      %v610 = vpop.f32.mrb[0].mxu0
      %v611 = vadd.f32 0.0, %v610
      %v612 = vpop.f32.mrb[0].mxu0
      %613 = vmatprep.mubr.bf16.mxu0 0
      %614 = vmatmul.mubr.bf16.gmra.mrb[0].mxu0 %v461
      %v615 = vpop.f32.mrb[0].mxu0
      %v616 = vadd.f32 0.0, %v615
      %v617 = vpop.f32.mrb[0].mxu0
      %v618 = vpop.f32.mrb[0].mxu0
      %v619 = vadd.f32 0.0, %v618
      %v620 = vpop.f32.mrb[0].mxu0
      %621 = vmatprep.mubr.bf16.mxu0 0
      %622 = vmatmul.mubr.bf16.gmra.mrb[0].mxu0 %v464
      %v623 = vpop.f32.mrb[0].mxu0
      %v624 = vadd.f32 0.0, %v623
      %v625 = vpop.f32.mrb[0].mxu0
      %v626 = vpop.f32.mrb[0].mxu0
      %v627 = vadd.f32 0.0, %v626
      %v628 = vpop.f32.mrb[0].mxu0
      %629 = vmatprep.mubr.bf16.mxu0 0
      %630 = vmatmul.mubr.bf16.gmra.mrb[0].mxu0 %v467
      %v631 = vpop.f32.mrb[0].mxu0
      %v632 = vadd.f32 0.0, %v631
      %v633 = vpop.f32.mrb[0].mxu0
      %v634 = vpop.f32.mrb[0].mxu0
      %v635 = vadd.f32 0.0, %v634
      %v636 = vpop.f32.mrb[0].mxu0
      %637 = vmatprep.mubr.bf16.mxu0 0
      %638 = vmatmul.mubr.bf16.gmra.mrb[0].mxu0 %v470
      %v639 = vpop.f32.mrb[0].mxu0
      %v640 = vadd.f32 0.0, %v639
      %v641 = vpop.f32.mrb[0].mxu0
      %v642 = vpop.f32.mrb[0].mxu0
      %v643 = vadd.f32 0.0, %v642
      %v644 = vpop.f32.mrb[0].mxu0
      %645 = vdwg.mxu0
      %646 = vst [vmem:[#allocation2] sm:$0xff] %v507
      %647 = vst [vmem:[#allocation2 + $0x8] sm:$0xff] %v509
      %648 = vst [vmem:[#allocation2 + $0x10] sm:$0xff] %v600
      %649 = vst [vmem:[#allocation2 + $0x18] sm:$0xff] %v511
      %650 = vst [vmem:[#allocation2 + $0x20] sm:$0xff] %v513
      %651 = vst [vmem:[#allocation2 + $0x28] sm:$0xff] %v603
      %652 = vst [vmem:[#allocation2 + $0x30] sm:$0xff] %v517
      %653 = vst [vmem:[#allocation2 + $0x38] sm:$0xff] %v519
      %654 = vst [vmem:[#allocation2 + $0x40] sm:$0xff] %v608
      %655 = vst [vmem:[#allocation2 + $0x48] sm:$0xff] %v521
      %656 = vst [vmem:[#allocation2 + $0x50] sm:$0xff] %v523
      %657 = vst [vmem:[#allocation2 + $0x58] sm:$0xff] %v611
      %658 = vst [vmem:[#allocation2 + $0x60] sm:$0xff] %v527
      %659 = vst [vmem:[#allocation2 + $0x68] sm:$0xff] %v529
      %660 = vst [vmem:[#allocation2 + $0x70] sm:$0xff] %v616
      %661 = vst [vmem:[#allocation2 + $0x78] sm:$0xff] %v531
      %662 = vst [vmem:[#allocation2 + $0x80] sm:$0xff] %v533
      %663 = vst [vmem:[#allocation2 + $0x88] sm:$0xff] %v619
      %664 = vst [vmem:[#allocation2 + $0x90] sm:$0xff] %v537
      %665 = vst [vmem:[#allocation2 + $0x98] sm:$0xff] %v539
      %666 = vst [vmem:[#allocation2 + $0xa0] sm:$0xff] %v624
      %667 = vst [vmem:[#allocation2 + $0xa8] sm:$0xff] %v541
      %668 = vst [vmem:[#allocation2 + $0xb0] sm:$0xff] %v543
      %669 = vst [vmem:[#allocation2 + $0xb8] sm:$0xff] %v627
      %670 = vst [vmem:[#allocation2 + $0xc0] sm:$0xff] %v547
      %671 = vst [vmem:[#allocation2 + $0xc8] sm:$0xff] %v549
      %672 = vst [vmem:[#allocation2 + $0xd0] sm:$0xff] %v632
      %673 = vst [vmem:[#allocation2 + $0xd8] sm:$0xff] %v551
      %674 = vst [vmem:[#allocation2 + $0xe0] sm:$0xff] %v553
      %675 = vst [vmem:[#allocation2 + $0xe8] sm:$0xff] %v635
      %676 = vst [vmem:[#allocation2 + $0xf0] sm:$0xff] %v557
      %677 = vst [vmem:[#allocation2 + $0xf8] sm:$0xff] %v559
      %678 = vst [vmem:[#allocation2 + $0x100] sm:$0xff] %v640
      %679 = vst [vmem:[#allocation2 + $0x108] sm:$0xff] %v561
      %680 = vst [vmem:[#allocation2 + $0x110] sm:$0xff] %v563
      %681 = vst [vmem:[#allocation2 + $0x118] sm:$0xff] %v643
      %s682 = scalar_lea.vmem %s3, 96
      %v683 = vld [vmem:[%s682] sm:$0xff]
      %v684 = vld [vmem:[%s682 + $0x8] sm:$0xff]
      %v685 = vld [vmem:[%s682 + $0x10] sm:$0xff]
      %v686 = vld [vmem:[%s682 + $0x18] sm:$0xff]
      %v687 = vld [vmem:[%s682 + $0x20] sm:$0xff]
      %v688 = vld [vmem:[%s682 + $0x28] sm:$0xff]
      %v689 = vld [vmem:[%s682 + $0x30] sm:$0xff]
      %v690 = vld [vmem:[%s682 + $0x38] sm:$0xff]
      %v691 = vld [vmem:[%s682 + $0x40] sm:$0xff]
      %v692 = vld [vmem:[%s682 + $0x48] sm:$0xff]
      %v693 = vld [vmem:[%s682 + $0x50] sm:$0xff]
      %v694 = vld [vmem:[%s682 + $0x58] sm:$0xff]
      %v695 = vld [vmem:[#allocation2] sm:$0xff]
      %v696 = vld [vmem:[#allocation2 + $0x8] sm:$0xff]
      %v697 = vld [vmem:[#allocation2 + $0x10] sm:$0xff]
      %v698 = vld [vmem:[#allocation2 + $0x18] sm:$0xff]
      %v699 = vld [vmem:[#allocation2 + $0x20] sm:$0xff]
      %v700 = vld [vmem:[#allocation2 + $0x28] sm:$0xff]
      %v701 = vld [vmem:[#allocation2 + $0x30] sm:$0xff]
      %v702 = vld [vmem:[#allocation2 + $0x38] sm:$0xff]
      %v703 = vld [vmem:[#allocation2 + $0x40] sm:$0xff]
      %v704 = vld [vmem:[#allocation2 + $0x48] sm:$0xff]
      %v705 = vld [vmem:[#allocation2 + $0x50] sm:$0xff]
      %v706 = vld [vmem:[#allocation2 + $0x58] sm:$0xff]
      %v707 = vld [vmem:[#allocation2 + $0x60] sm:$0xff]
      %v708 = vld [vmem:[#allocation2 + $0x68] sm:$0xff]
      %v709 = vld [vmem:[#allocation2 + $0x70] sm:$0xff]
      %v710 = vld [vmem:[#allocation2 + $0x78] sm:$0xff]
      %v711 = vld [vmem:[#allocation2 + $0x80] sm:$0xff]
      %v712 = vld [vmem:[#allocation2 + $0x88] sm:$0xff]
      %v713 = vld [vmem:[#allocation2 + $0x90] sm:$0xff]
      %v714 = vld [vmem:[#allocation2 + $0x98] sm:$0xff]
      %v715 = vld [vmem:[#allocation2 + $0xa0] sm:$0xff]
      %v716 = vld [vmem:[#allocation2 + $0xa8] sm:$0xff]
      %v717 = vld [vmem:[#allocation2 + $0xb0] sm:$0xff]
      %v718 = vld [vmem:[#allocation2 + $0xb8] sm:$0xff]
      %v719 = vld [vmem:[#allocation2 + $0xc0] sm:$0xff]
      %v720 = vld [vmem:[#allocation2 + $0xc8] sm:$0xff]
      %v721 = vld [vmem:[#allocation2 + $0xd0] sm:$0xff]
      %v722 = vld [vmem:[#allocation2 + $0xd8] sm:$0xff]
      %v723 = vld [vmem:[#allocation2 + $0xe0] sm:$0xff]
      %v724 = vld [vmem:[#allocation2 + $0xe8] sm:$0xff]
      %v725 = vld [vmem:[#allocation2 + $0xf0] sm:$0xff]
      %v726 = vld [vmem:[#allocation2 + $0xf8] sm:$0xff]
      %v727 = vld [vmem:[#allocation2 + $0x100] sm:$0xff]
      %v728 = vld [vmem:[#allocation2 + $0x108] sm:$0xff]
      %v729 = vld [vmem:[#allocation2 + $0x110] sm:$0xff]
      %v730 = vld [vmem:[#allocation2 + $0x118] sm:$0xff]
      %732 = vset.pattern.permute.xlu0 0
      %733 = vperm.xlu0 %732, %v683
      %v734 = vpop.permute.xlu0 %733
      %737 = vset.pattern.permute.xlu0 0
      %738 = vperm.xlu0 %737, %v684
      %v739 = vpop.permute.xlu0 %738
      %742 = vset.pattern.permute.xlu0 0
      %743 = vperm.xlu0 %742, %v685
      %v744 = vpop.permute.xlu0 %743
      %747 = vset.pattern.permute.xlu0 0
      %748 = vperm.xlu0 %747, %v686
      %v749 = vpop.permute.xlu0 %748
      %752 = vset.pattern.permute.xlu0 0
      %753 = vperm.xlu0 %752, %v687
      %v754 = vpop.permute.xlu0 %753
      %757 = vset.pattern.permute.xlu0 0
      %758 = vperm.xlu0 %757, %v688
      %v759 = vpop.permute.xlu0 %758
      %762 = vset.pattern.permute.xlu0 0
      %763 = vperm.xlu0 %762, %v689
      %v764 = vpop.permute.xlu0 %763
      %767 = vset.pattern.permute.xlu0 0
      %768 = vperm.xlu0 %767, %v690
      %v769 = vpop.permute.xlu0 %768
      %772 = vset.pattern.permute.xlu0 0
      %773 = vperm.xlu0 %772, %v691
      %v774 = vpop.permute.xlu0 %773
      %777 = vset.pattern.permute.xlu0 0
      %778 = vperm.xlu0 %777, %v692
      %v779 = vpop.permute.xlu0 %778
      %782 = vset.pattern.permute.xlu0 0
      %783 = vperm.xlu0 %782, %v693
      %v784 = vpop.permute.xlu0 %783
      %787 = vset.pattern.permute.xlu0 0
      %788 = vperm.xlu0 %787, %v694
      %v789 = vpop.permute.xlu0 %788
      %v791 = vmul.f32 %v734, %v695
      %v792 = vmul.f32 %v734, %v696
      %v793 = vmul.f32 %v734, %v697
      %v794 = vmul.f32 %v739, %v698
      %v795 = vmul.f32 %v739, %v699
      %v796 = vmul.f32 %v739, %v700
      %v797 = vmul.f32 %v744, %v701
      %v798 = vmul.f32 %v744, %v702
      %v799 = vmul.f32 %v744, %v703
      %v800 = vmul.f32 %v749, %v704
      %v801 = vmul.f32 %v749, %v705
      %v802 = vmul.f32 %v749, %v706
      %v803 = vmul.f32 %v754, %v707
      %v804 = vmul.f32 %v754, %v708
      %v805 = vmul.f32 %v754, %v709
      %v806 = vmul.f32 %v759, %v710
      %v807 = vmul.f32 %v759, %v711
      %v808 = vmul.f32 %v759, %v712
      %v809 = vmul.f32 %v764, %v713
      %v810 = vmul.f32 %v764, %v714
      %v811 = vmul.f32 %v764, %v715
      %v812 = vmul.f32 %v769, %v716
      %v813 = vmul.f32 %v769, %v717
      %v814 = vmul.f32 %v769, %v718
      %v815 = vmul.f32 %v774, %v719
      %v816 = vmul.f32 %v774, %v720
      %v817 = vmul.f32 %v774, %v721
      %v818 = vmul.f32 %v779, %v722
      %v819 = vmul.f32 %v779, %v723
      %v820 = vmul.f32 %v779, %v724
      %v821 = vmul.f32 %v784, %v725
      %v822 = vmul.f32 %v784, %v726
      %v823 = vmul.f32 %v784, %v727
      %v824 = vmul.f32 %v789, %v728
      %v825 = vmul.f32 %v789, %v729
      %v826 = vmul.f32 %v789, %v730
      %s827 = scalar_lea.vmem %s3, 384
      %v828 = vld [vmem:[%s827] sm:$0xff]
      %v829 = vld [vmem:[%s827 + $0x8] sm:$0xff]
      %v830 = vld [vmem:[%s827 + $0x10] sm:$0xff]
      %v831 = vld [vmem:[%s827 + $0x18] sm:$0xff]
      %v832 = vld [vmem:[%s827 + $0x20] sm:$0xff]
      %v833 = vld [vmem:[%s827 + $0x28] sm:$0xff]
      %v834 = vld [vmem:[%s827 + $0x30] sm:$0xff]
      %v835 = vld [vmem:[%s827 + $0x38] sm:$0xff]
      %v836 = vld [vmem:[%s827 + $0x40] sm:$0xff]
      %v837 = vld [vmem:[%s827 + $0x48] sm:$0xff]
      %v838 = vld [vmem:[%s827 + $0x50] sm:$0xff]
      %v839 = vld [vmem:[%s827 + $0x58] sm:$0xff]
      %841 = vset.pattern.permute.xlu0 0
      %842 = vperm.xlu0 %841, %v828
      %v843 = vpop.permute.xlu0 %842
      %846 = vset.pattern.permute.xlu0 0
      %847 = vperm.xlu0 %846, %v829
      %v848 = vpop.permute.xlu0 %847
      %851 = vset.pattern.permute.xlu0 0
      %852 = vperm.xlu0 %851, %v830
      %v853 = vpop.permute.xlu0 %852
      %856 = vset.pattern.permute.xlu0 0
      %857 = vperm.xlu0 %856, %v831
      %v858 = vpop.permute.xlu0 %857
      %861 = vset.pattern.permute.xlu0 0
      %862 = vperm.xlu0 %861, %v832
      %v863 = vpop.permute.xlu0 %862
      %866 = vset.pattern.permute.xlu0 0
      %867 = vperm.xlu0 %866, %v833
      %v868 = vpop.permute.xlu0 %867
      %871 = vset.pattern.permute.xlu0 0
      %872 = vperm.xlu0 %871, %v834
      %v873 = vpop.permute.xlu0 %872
      %876 = vset.pattern.permute.xlu0 0
      %877 = vperm.xlu0 %876, %v835
      %v878 = vpop.permute.xlu0 %877
      %881 = vset.pattern.permute.xlu0 0
      %882 = vperm.xlu0 %881, %v836
      %v883 = vpop.permute.xlu0 %882
      %886 = vset.pattern.permute.xlu0 0
      %887 = vperm.xlu0 %886, %v837
      %v888 = vpop.permute.xlu0 %887
      %891 = vset.pattern.permute.xlu0 0
      %892 = vperm.xlu0 %891, %v838
      %v893 = vpop.permute.xlu0 %892
      %896 = vset.pattern.permute.xlu0 0
      %897 = vperm.xlu0 %896, %v839
      %v898 = vpop.permute.xlu0 %897
      %v900 = vmul.f32 %v843, %v695
      %v901 = vmul.f32 %v843, %v696
      %v902 = vmul.f32 %v843, %v697
      %v903 = vmul.f32 %v848, %v698
      %v904 = vmul.f32 %v848, %v699
      %v905 = vmul.f32 %v848, %v700
      %v906 = vmul.f32 %v853, %v701
      %v907 = vmul.f32 %v853, %v702
      %v908 = vmul.f32 %v853, %v703
      %v909 = vmul.f32 %v858, %v704
      %v910 = vmul.f32 %v858, %v705
      %v911 = vmul.f32 %v858, %v706
      %v912 = vmul.f32 %v863, %v707
      %v913 = vmul.f32 %v863, %v708
      %v914 = vmul.f32 %v863, %v709
      %v915 = vmul.f32 %v868, %v710
      %v916 = vmul.f32 %v868, %v711
      %v917 = vmul.f32 %v868, %v712
      %v918 = vmul.f32 %v873, %v713
      %v919 = vmul.f32 %v873, %v714
      %v920 = vmul.f32 %v873, %v715
      %v921 = vmul.f32 %v878, %v716
      %v922 = vmul.f32 %v878, %v717
      %v923 = vmul.f32 %v878, %v718
      %v924 = vmul.f32 %v883, %v719
      %v925 = vmul.f32 %v883, %v720
      %v926 = vmul.f32 %v883, %v721
      %v927 = vmul.f32 %v888, %v722
      %v928 = vmul.f32 %v888, %v723
      %v929 = vmul.f32 %v888, %v724
      %v930 = vmul.f32 %v893, %v725
      %v931 = vmul.f32 %v893, %v726
      %v932 = vmul.f32 %v893, %v727
      %v933 = vmul.f32 %v898, %v728
      %v934 = vmul.f32 %v898, %v729
      %v935 = vmul.f32 %v898, %v730
      %972 = vrot.lane.b32.xlu0 %v900, 112
      %v973 = vpop.permute.xlu0 %972
      %974 = vrot.lane.b32.xlu0 %v901, 112
      %v975 = vpop.permute.xlu0 %974
      %976 = vrot.lane.b32.xlu0 %v902, 112
      %v977 = vpop.permute.xlu0 %976
      %978 = vrot.lane.b32.xlu0 %v903, 112
      %v979 = vpop.permute.xlu0 %978
      %980 = vrot.lane.b32.xlu0 %v904, 112
      %v981 = vpop.permute.xlu0 %980
      %982 = vrot.lane.b32.xlu0 %v905, 112
      %v983 = vpop.permute.xlu0 %982
      %984 = vrot.lane.b32.xlu0 %v906, 112
      %v985 = vpop.permute.xlu0 %984
      %986 = vrot.lane.b32.xlu0 %v907, 112
      %v987 = vpop.permute.xlu0 %986
      %988 = vrot.lane.b32.xlu0 %v908, 112
      %v989 = vpop.permute.xlu0 %988
      %990 = vrot.lane.b32.xlu0 %v909, 112
      %v991 = vpop.permute.xlu0 %990
      %992 = vrot.lane.b32.xlu0 %v910, 112
      %v993 = vpop.permute.xlu0 %992
      %994 = vrot.lane.b32.xlu0 %v911, 112
      %v995 = vpop.permute.xlu0 %994
      %996 = vrot.lane.b32.xlu0 %v912, 112
      %v997 = vpop.permute.xlu0 %996
      %998 = vrot.lane.b32.xlu0 %v913, 112
      %v999 = vpop.permute.xlu0 %998
      %1000 = vrot.lane.b32.xlu0 %v914, 112
      %v1001 = vpop.permute.xlu0 %1000
      %1002 = vrot.lane.b32.xlu0 %v915, 112
      %v1003 = vpop.permute.xlu0 %1002
      %1004 = vrot.lane.b32.xlu0 %v916, 112
      %v1005 = vpop.permute.xlu0 %1004
      %1006 = vrot.lane.b32.xlu0 %v917, 112
      %v1007 = vpop.permute.xlu0 %1006
      %1008 = vrot.lane.b32.xlu0 %v918, 112
      %v1009 = vpop.permute.xlu0 %1008
      %1010 = vrot.lane.b32.xlu0 %v919, 112
      %v1011 = vpop.permute.xlu0 %1010
      %1012 = vrot.lane.b32.xlu0 %v920, 112
      %v1013 = vpop.permute.xlu0 %1012
      %1014 = vrot.lane.b32.xlu0 %v921, 112
      %v1015 = vpop.permute.xlu0 %1014
      %1016 = vrot.lane.b32.xlu0 %v922, 112
      %v1017 = vpop.permute.xlu0 %1016
      %1018 = vrot.lane.b32.xlu0 %v923, 112
      %v1019 = vpop.permute.xlu0 %1018
      %1020 = vrot.lane.b32.xlu0 %v924, 112
      %v1021 = vpop.permute.xlu0 %1020
      %1022 = vrot.lane.b32.xlu0 %v925, 112
      %v1023 = vpop.permute.xlu0 %1022
      %1024 = vrot.lane.b32.xlu0 %v926, 112
      %v1025 = vpop.permute.xlu0 %1024
      %1026 = vrot.lane.b32.xlu0 %v927, 112
      %v1027 = vpop.permute.xlu0 %1026
      %1028 = vrot.lane.b32.xlu0 %v928, 112
      %v1029 = vpop.permute.xlu0 %1028
      %1030 = vrot.lane.b32.xlu0 %v929, 112
      %v1031 = vpop.permute.xlu0 %1030
      %1032 = vrot.lane.b32.xlu0 %v930, 112
      %v1033 = vpop.permute.xlu0 %1032
      %1034 = vrot.lane.b32.xlu0 %v931, 112
      %v1035 = vpop.permute.xlu0 %1034
      %1036 = vrot.lane.b32.xlu0 %v932, 112
      %v1037 = vpop.permute.xlu0 %1036
      %1038 = vrot.lane.b32.xlu0 %v933, 112
      %v1039 = vpop.permute.xlu0 %1038
      %1040 = vrot.lane.b32.xlu0 %v934, 112
      %v1041 = vpop.permute.xlu0 %1040
      %1042 = vrot.lane.b32.xlu0 %v935, 112
      %v1043 = vpop.permute.xlu0 %1042
      %vm1044 = vcmask 916480
      %v1045 = vsel %vm1044, %v973, %v975
      %v1046 = vsel %vm1044, %v975, %v977
      %v1047 = vsel %vm1044, %v979, %v981
      %v1048 = vsel %vm1044, %v981, %v983
      %v1049 = vsel %vm1044, %v985, %v987
      %v1050 = vsel %vm1044, %v987, %v989
      %v1051 = vsel %vm1044, %v991, %v993
      %v1052 = vsel %vm1044, %v993, %v995
      %v1053 = vsel %vm1044, %v997, %v999
      %v1054 = vsel %vm1044, %v999, %v1001
      %v1055 = vsel %vm1044, %v1003, %v1005
      %v1056 = vsel %vm1044, %v1005, %v1007
      %v1057 = vsel %vm1044, %v1009, %v1011
      %v1058 = vsel %vm1044, %v1011, %v1013
      %v1059 = vsel %vm1044, %v1015, %v1017
      %v1060 = vsel %vm1044, %v1017, %v1019
      %v1061 = vsel %vm1044, %v1021, %v1023
      %v1062 = vsel %vm1044, %v1023, %v1025
      %v1063 = vsel %vm1044, %v1027, %v1029
      %v1064 = vsel %vm1044, %v1029, %v1031
      %v1065 = vsel %vm1044, %v1033, %v1035
      %v1066 = vsel %vm1044, %v1035, %v1037
      %v1067 = vsel %vm1044, %v1039, %v1041
      %v1068 = vsel %vm1044, %v1041, %v1043
      %v1105 = vadd.f32 %v791, %v1045
      %v1106 = vadd.f32 %v792, %v1046
      %v1107 = vadd.f32 %v793, %v977
      %v1108 = vadd.f32 %v794, %v1047
      %v1109 = vadd.f32 %v795, %v1048
      %v1110 = vadd.f32 %v796, %v983
      %v1111 = vadd.f32 %v797, %v1049
      %v1112 = vadd.f32 %v798, %v1050
      %v1113 = vadd.f32 %v799, %v989
      %v1114 = vadd.f32 %v800, %v1051
      %v1115 = vadd.f32 %v801, %v1052
      %v1116 = vadd.f32 %v802, %v995
      %v1117 = vadd.f32 %v803, %v1053
      %v1118 = vadd.f32 %v804, %v1054
      %v1119 = vadd.f32 %v805, %v1001
      %v1120 = vadd.f32 %v806, %v1055
      %v1121 = vadd.f32 %v807, %v1056
      %v1122 = vadd.f32 %v808, %v1007
      %v1123 = vadd.f32 %v809, %v1057
      %v1124 = vadd.f32 %v810, %v1058
      %v1125 = vadd.f32 %v811, %v1013
      %v1126 = vadd.f32 %v812, %v1059
      %v1127 = vadd.f32 %v813, %v1060
      %v1128 = vadd.f32 %v814, %v1019
      %v1129 = vadd.f32 %v815, %v1061
      %v1130 = vadd.f32 %v816, %v1062
      %v1131 = vadd.f32 %v817, %v1025
      %v1132 = vadd.f32 %v818, %v1063
      %v1133 = vadd.f32 %v819, %v1064
      %v1134 = vadd.f32 %v820, %v1031
      %v1135 = vadd.f32 %v821, %v1065
      %v1136 = vadd.f32 %v822, %v1066
      %v1137 = vadd.f32 %v823, %v1037
      %v1138 = vadd.f32 %v824, %v1067
      %v1139 = vadd.f32 %v825, %v1068
      %v1140 = vadd.f32 %v826, %v1043
      %s1141 = scalar_lea.vmem %s3, 672
      %v1142 = vld [vmem:[%s1141] sm:$0xff]
      %v1143 = vld [vmem:[%s1141 + $0x8] sm:$0xff]
      %v1144 = vld [vmem:[%s1141 + $0x10] sm:$0xff]
      %v1145 = vld [vmem:[%s1141 + $0x18] sm:$0xff]
      %v1146 = vld [vmem:[%s1141 + $0x20] sm:$0xff]
      %v1147 = vld [vmem:[%s1141 + $0x28] sm:$0xff]
      %v1148 = vld [vmem:[%s1141 + $0x30] sm:$0xff]
      %v1149 = vld [vmem:[%s1141 + $0x38] sm:$0xff]
      %v1150 = vld [vmem:[%s1141 + $0x40] sm:$0xff]
      %v1151 = vld [vmem:[%s1141 + $0x48] sm:$0xff]
      %v1152 = vld [vmem:[%s1141 + $0x50] sm:$0xff]
      %v1153 = vld [vmem:[%s1141 + $0x58] sm:$0xff]
      %1155 = vset.pattern.permute.xlu0 0
      %1156 = vperm.xlu0 %1155, %v1142
      %v1157 = vpop.permute.xlu0 %1156
      %1160 = vset.pattern.permute.xlu0 0
      %1161 = vperm.xlu0 %1160, %v1143
      %v1162 = vpop.permute.xlu0 %1161
      %1165 = vset.pattern.permute.xlu0 0
      %1166 = vperm.xlu0 %1165, %v1144
      %v1167 = vpop.permute.xlu0 %1166
      %1170 = vset.pattern.permute.xlu0 0
      %1171 = vperm.xlu0 %1170, %v1145
      %v1172 = vpop.permute.xlu0 %1171
      %1175 = vset.pattern.permute.xlu0 0
      %1176 = vperm.xlu0 %1175, %v1146
      %v1177 = vpop.permute.xlu0 %1176
      %1180 = vset.pattern.permute.xlu0 0
      %1181 = vperm.xlu0 %1180, %v1147
      %v1182 = vpop.permute.xlu0 %1181
      %1185 = vset.pattern.permute.xlu0 0
      %1186 = vperm.xlu0 %1185, %v1148
      %v1187 = vpop.permute.xlu0 %1186
      %1190 = vset.pattern.permute.xlu0 0
      %1191 = vperm.xlu0 %1190, %v1149
      %v1192 = vpop.permute.xlu0 %1191
      %1195 = vset.pattern.permute.xlu0 0
      %1196 = vperm.xlu0 %1195, %v1150
      %v1197 = vpop.permute.xlu0 %1196
      %1200 = vset.pattern.permute.xlu0 0
      %1201 = vperm.xlu0 %1200, %v1151
      %v1202 = vpop.permute.xlu0 %1201
      %1205 = vset.pattern.permute.xlu0 0
      %1206 = vperm.xlu0 %1205, %v1152
      %v1207 = vpop.permute.xlu0 %1206
      %1210 = vset.pattern.permute.xlu0 0
      %1211 = vperm.xlu0 %1210, %v1153
      %v1212 = vpop.permute.xlu0 %1211
      %v1214 = vmul.f32 %v1157, %v695
      %v1215 = vmul.f32 %v1157, %v696
      %v1216 = vmul.f32 %v1157, %v697
      %v1217 = vmul.f32 %v1162, %v698
      %v1218 = vmul.f32 %v1162, %v699
      %v1219 = vmul.f32 %v1162, %v700
      %v1220 = vmul.f32 %v1167, %v701
      %v1221 = vmul.f32 %v1167, %v702
      %v1222 = vmul.f32 %v1167, %v703
      %v1223 = vmul.f32 %v1172, %v704
      %v1224 = vmul.f32 %v1172, %v705
      %v1225 = vmul.f32 %v1172, %v706
      %v1226 = vmul.f32 %v1177, %v707
      %v1227 = vmul.f32 %v1177, %v708
      %v1228 = vmul.f32 %v1177, %v709
      %v1229 = vmul.f32 %v1182, %v710
      %v1230 = vmul.f32 %v1182, %v711
      %v1231 = vmul.f32 %v1182, %v712
      %v1232 = vmul.f32 %v1187, %v713
      %v1233 = vmul.f32 %v1187, %v714
      %v1234 = vmul.f32 %v1187, %v715
      %v1235 = vmul.f32 %v1192, %v716
      %v1236 = vmul.f32 %v1192, %v717
      %v1237 = vmul.f32 %v1192, %v718
      %v1238 = vmul.f32 %v1197, %v719
      %v1239 = vmul.f32 %v1197, %v720
      %v1240 = vmul.f32 %v1197, %v721
      %v1241 = vmul.f32 %v1202, %v722
      %v1242 = vmul.f32 %v1202, %v723
      %v1243 = vmul.f32 %v1202, %v724
      %v1244 = vmul.f32 %v1207, %v725
      %v1245 = vmul.f32 %v1207, %v726
      %v1246 = vmul.f32 %v1207, %v727
      %v1247 = vmul.f32 %v1212, %v728
      %v1248 = vmul.f32 %v1212, %v729
      %v1249 = vmul.f32 %v1212, %v730
      %1286 = vrot.lane.b32.xlu0 %v1214, 96
      %v1287 = vpop.permute.xlu0 %1286
      %1288 = vrot.lane.b32.xlu0 %v1215, 96
      %v1289 = vpop.permute.xlu0 %1288
      %1290 = vrot.lane.b32.xlu0 %v1216, 96
      %v1291 = vpop.permute.xlu0 %1290
      %1292 = vrot.lane.b32.xlu0 %v1217, 96
      %v1293 = vpop.permute.xlu0 %1292
      %1294 = vrot.lane.b32.xlu0 %v1218, 96
      %v1295 = vpop.permute.xlu0 %1294
      %1296 = vrot.lane.b32.xlu0 %v1219, 96
      %v1297 = vpop.permute.xlu0 %1296
      %1298 = vrot.lane.b32.xlu0 %v1220, 96
      %v1299 = vpop.permute.xlu0 %1298
      %1300 = vrot.lane.b32.xlu0 %v1221, 96
      %v1301 = vpop.permute.xlu0 %1300
      %1302 = vrot.lane.b32.xlu0 %v1222, 96
      %v1303 = vpop.permute.xlu0 %1302
      %1304 = vrot.lane.b32.xlu0 %v1223, 96
      %v1305 = vpop.permute.xlu0 %1304
      %1306 = vrot.lane.b32.xlu0 %v1224, 96
      %v1307 = vpop.permute.xlu0 %1306
      %1308 = vrot.lane.b32.xlu0 %v1225, 96
      %v1309 = vpop.permute.xlu0 %1308
      %1310 = vrot.lane.b32.xlu0 %v1226, 96
      %v1311 = vpop.permute.xlu0 %1310
      %1312 = vrot.lane.b32.xlu0 %v1227, 96
      %v1313 = vpop.permute.xlu0 %1312
      %1314 = vrot.lane.b32.xlu0 %v1228, 96
      %v1315 = vpop.permute.xlu0 %1314
      %1316 = vrot.lane.b32.xlu0 %v1229, 96
      %v1317 = vpop.permute.xlu0 %1316
      %1318 = vrot.lane.b32.xlu0 %v1230, 96
      %v1319 = vpop.permute.xlu0 %1318
      %1320 = vrot.lane.b32.xlu0 %v1231, 96
      %v1321 = vpop.permute.xlu0 %1320
      %1322 = vrot.lane.b32.xlu0 %v1232, 96
      %v1323 = vpop.permute.xlu0 %1322
      %1324 = vrot.lane.b32.xlu0 %v1233, 96
      %v1325 = vpop.permute.xlu0 %1324
      %1326 = vrot.lane.b32.xlu0 %v1234, 96
      %v1327 = vpop.permute.xlu0 %1326
      %1328 = vrot.lane.b32.xlu0 %v1235, 96
      %v1329 = vpop.permute.xlu0 %1328
      %1330 = vrot.lane.b32.xlu0 %v1236, 96
      %v1331 = vpop.permute.xlu0 %1330
      %1332 = vrot.lane.b32.xlu0 %v1237, 96
      %v1333 = vpop.permute.xlu0 %1332
      %1334 = vrot.lane.b32.xlu0 %v1238, 96
      %v1335 = vpop.permute.xlu0 %1334
      %1336 = vrot.lane.b32.xlu0 %v1239, 96
      %v1337 = vpop.permute.xlu0 %1336
      %1338 = vrot.lane.b32.xlu0 %v1240, 96
      %v1339 = vpop.permute.xlu0 %1338
      %1340 = vrot.lane.b32.xlu0 %v1241, 96
      %v1341 = vpop.permute.xlu0 %1340
      %1342 = vrot.lane.b32.xlu0 %v1242, 96
      %v1343 = vpop.permute.xlu0 %1342
      %1344 = vrot.lane.b32.xlu0 %v1243, 96
      %v1345 = vpop.permute.xlu0 %1344
      %1346 = vrot.lane.b32.xlu0 %v1244, 96
      %v1347 = vpop.permute.xlu0 %1346
      %1348 = vrot.lane.b32.xlu0 %v1245, 96
      %v1349 = vpop.permute.xlu0 %1348
      %1350 = vrot.lane.b32.xlu0 %v1246, 96
      %v1351 = vpop.permute.xlu0 %1350
      %1352 = vrot.lane.b32.xlu0 %v1247, 96
      %v1353 = vpop.permute.xlu0 %1352
      %1354 = vrot.lane.b32.xlu0 %v1248, 96
      %v1355 = vpop.permute.xlu0 %1354
      %1356 = vrot.lane.b32.xlu0 %v1249, 96
      %v1357 = vpop.permute.xlu0 %1356
      %vm1358 = vcmask 785408
      %v1359 = vsel %vm1358, %v1287, %v1289
      %v1360 = vsel %vm1358, %v1289, %v1291
      %v1361 = vsel %vm1358, %v1293, %v1295
      %v1362 = vsel %vm1358, %v1295, %v1297
      %v1363 = vsel %vm1358, %v1299, %v1301
      %v1364 = vsel %vm1358, %v1301, %v1303
      %v1365 = vsel %vm1358, %v1305, %v1307
      %v1366 = vsel %vm1358, %v1307, %v1309
      %v1367 = vsel %vm1358, %v1311, %v1313
      %v1368 = vsel %vm1358, %v1313, %v1315
      %v1369 = vsel %vm1358, %v1317, %v1319
      %v1370 = vsel %vm1358, %v1319, %v1321
      %v1371 = vsel %vm1358, %v1323, %v1325
      %v1372 = vsel %vm1358, %v1325, %v1327
      %v1373 = vsel %vm1358, %v1329, %v1331
      %v1374 = vsel %vm1358, %v1331, %v1333
      %v1375 = vsel %vm1358, %v1335, %v1337
      %v1376 = vsel %vm1358, %v1337, %v1339
      %v1377 = vsel %vm1358, %v1341, %v1343
      %v1378 = vsel %vm1358, %v1343, %v1345
      %v1379 = vsel %vm1358, %v1347, %v1349
      %v1380 = vsel %vm1358, %v1349, %v1351
      %v1381 = vsel %vm1358, %v1353, %v1355
      %v1382 = vsel %vm1358, %v1355, %v1357
      %v1419 = vadd.f32 %v1105, %v1359
      %v1420 = vadd.f32 %v1106, %v1360
      %v1421 = vadd.f32 %v1107, %v1291
      %v1422 = vadd.f32 %v1108, %v1361
      %v1423 = vadd.f32 %v1109, %v1362
      %v1424 = vadd.f32 %v1110, %v1297
      %v1425 = vadd.f32 %v1111, %v1363
      %v1426 = vadd.f32 %v1112, %v1364
      %v1427 = vadd.f32 %v1113, %v1303
      %v1428 = vadd.f32 %v1114, %v1365
      %v1429 = vadd.f32 %v1115, %v1366
      %v1430 = vadd.f32 %v1116, %v1309
      %v1431 = vadd.f32 %v1117, %v1367
      %v1432 = vadd.f32 %v1118, %v1368
      %v1433 = vadd.f32 %v1119, %v1315
      %v1434 = vadd.f32 %v1120, %v1369
      %v1435 = vadd.f32 %v1121, %v1370
      %v1436 = vadd.f32 %v1122, %v1321
      %v1437 = vadd.f32 %v1123, %v1371
      %v1438 = vadd.f32 %v1124, %v1372
      %v1439 = vadd.f32 %v1125, %v1327
      %v1440 = vadd.f32 %v1126, %v1373
      %v1441 = vadd.f32 %v1127, %v1374
      %v1442 = vadd.f32 %v1128, %v1333
      %v1443 = vadd.f32 %v1129, %v1375
      %v1444 = vadd.f32 %v1130, %v1376
      %v1445 = vadd.f32 %v1131, %v1339
      %v1446 = vadd.f32 %v1132, %v1377
      %v1447 = vadd.f32 %v1133, %v1378
      %v1448 = vadd.f32 %v1134, %v1345
      %v1449 = vadd.f32 %v1135, %v1379
      %v1450 = vadd.f32 %v1136, %v1380
      %v1451 = vadd.f32 %v1137, %v1351
      %v1452 = vadd.f32 %v1138, %v1381
      %v1453 = vadd.f32 %v1139, %v1382
      %v1454 = vadd.f32 %v1140, %v1357
      %v1455 = vld [vmem:[%s3] sm:$0xff]
      %v1456 = vld [vmem:[%s3 + $0x8] sm:$0xff]
      %v1457 = vld [vmem:[%s3 + $0x10] sm:$0xff]
      %v1458 = vld [vmem:[%s3 + $0x18] sm:$0xff]
      %v1459 = vld [vmem:[%s3 + $0x20] sm:$0xff]
      %v1460 = vld [vmem:[%s3 + $0x28] sm:$0xff]
      %v1461 = vld [vmem:[%s3 + $0x30] sm:$0xff]
      %v1462 = vld [vmem:[%s3 + $0x38] sm:$0xff]
      %v1463 = vld [vmem:[%s3 + $0x40] sm:$0xff]
      %v1464 = vld [vmem:[%s3 + $0x48] sm:$0xff]
      %v1465 = vld [vmem:[%s3 + $0x50] sm:$0xff]
      %v1466 = vld [vmem:[%s3 + $0x58] sm:$0xff]
      %v1467 = vld [vmem:[#allocation2] sm:$0xff]
      %v1468 = vld [vmem:[#allocation2 + $0x8] sm:$0xff]
      %v1469 = vld [vmem:[#allocation2 + $0x18] sm:$0xff]
      %v1470 = vld [vmem:[#allocation2 + $0x20] sm:$0xff]
      %v1471 = vld [vmem:[#allocation2 + $0x30] sm:$0xff]
      %v1472 = vld [vmem:[#allocation2 + $0x38] sm:$0xff]
      %v1473 = vld [vmem:[#allocation2 + $0x48] sm:$0xff]
      %v1474 = vld [vmem:[#allocation2 + $0x50] sm:$0xff]
      %v1475 = vld [vmem:[#allocation2 + $0x60] sm:$0xff]
      %v1476 = vld [vmem:[#allocation2 + $0x68] sm:$0xff]
      %v1477 = vld [vmem:[#allocation2 + $0x78] sm:$0xff]
      %v1478 = vld [vmem:[#allocation2 + $0x80] sm:$0xff]
      %v1479 = vld [vmem:[#allocation2 + $0x90] sm:$0xff]
      %v1480 = vld [vmem:[#allocation2 + $0x98] sm:$0xff]
      %v1481 = vld [vmem:[#allocation2 + $0xa8] sm:$0xff]
      %v1482 = vld [vmem:[#allocation2 + $0xb0] sm:$0xff]
      %v1483 = vld [vmem:[#allocation2 + $0xc0] sm:$0xff]
      %v1484 = vld [vmem:[#allocation2 + $0xc8] sm:$0xff]
      %v1485 = vld [vmem:[#allocation2 + $0xd8] sm:$0xff]
      %v1486 = vld [vmem:[#allocation2 + $0xe0] sm:$0xff]
      %v1487 = vld [vmem:[#allocation2 + $0xf0] sm:$0xff]
      %v1488 = vld [vmem:[#allocation2 + $0xf8] sm:$0xff]
      %v1489 = vld [vmem:[#allocation2 + $0x108] sm:$0xff]
      %v1490 = vld [vmem:[#allocation2 + $0x110] sm:$0xff]
      %1492 = vset.pattern.permute.xlu0 0
      %1493 = vperm.xlu0 %1492, %v1455
      %v1494 = vpop.permute.xlu0 %1493
      %1497 = vset.pattern.permute.xlu0 0
      %1498 = vperm.xlu0 %1497, %v1456
      %v1499 = vpop.permute.xlu0 %1498
      %1502 = vset.pattern.permute.xlu0 0
      %1503 = vperm.xlu0 %1502, %v1457
      %v1504 = vpop.permute.xlu0 %1503
      %1507 = vset.pattern.permute.xlu0 0
      %1508 = vperm.xlu0 %1507, %v1458
      %v1509 = vpop.permute.xlu0 %1508
      %1512 = vset.pattern.permute.xlu0 0
      %1513 = vperm.xlu0 %1512, %v1459
      %v1514 = vpop.permute.xlu0 %1513
      %1517 = vset.pattern.permute.xlu0 0
      %1518 = vperm.xlu0 %1517, %v1460
      %v1519 = vpop.permute.xlu0 %1518
      %1522 = vset.pattern.permute.xlu0 0
      %1523 = vperm.xlu0 %1522, %v1461
      %v1524 = vpop.permute.xlu0 %1523
      %1527 = vset.pattern.permute.xlu0 0
      %1528 = vperm.xlu0 %1527, %v1462
      %v1529 = vpop.permute.xlu0 %1528
      %1532 = vset.pattern.permute.xlu0 0
      %1533 = vperm.xlu0 %1532, %v1463
      %v1534 = vpop.permute.xlu0 %1533
      %1537 = vset.pattern.permute.xlu0 0
      %1538 = vperm.xlu0 %1537, %v1464
      %v1539 = vpop.permute.xlu0 %1538
      %1542 = vset.pattern.permute.xlu0 0
      %1543 = vperm.xlu0 %1542, %v1465
      %v1544 = vpop.permute.xlu0 %1543
      %1547 = vset.pattern.permute.xlu0 0
      %1548 = vperm.xlu0 %1547, %v1466
      %v1549 = vpop.permute.xlu0 %1548
      %v1551 = vmul.f32 %v1494, %v1467
      %v1552 = vmul.f32 %v1494, %v1468
      %v1553 = vmul.f32 %v1499, %v1469
      %v1554 = vmul.f32 %v1499, %v1470
      %v1555 = vmul.f32 %v1504, %v1471
      %v1556 = vmul.f32 %v1504, %v1472
      %v1557 = vmul.f32 %v1509, %v1473
      %v1558 = vmul.f32 %v1509, %v1474
      %v1559 = vmul.f32 %v1514, %v1475
      %v1560 = vmul.f32 %v1514, %v1476
      %v1561 = vmul.f32 %v1519, %v1477
      %v1562 = vmul.f32 %v1519, %v1478
      %v1563 = vmul.f32 %v1524, %v1479
      %v1564 = vmul.f32 %v1524, %v1480
      %v1565 = vmul.f32 %v1529, %v1481
      %v1566 = vmul.f32 %v1529, %v1482
      %v1567 = vmul.f32 %v1534, %v1483
      %v1568 = vmul.f32 %v1534, %v1484
      %v1569 = vmul.f32 %v1539, %v1485
      %v1570 = vmul.f32 %v1539, %v1486
      %v1571 = vmul.f32 %v1544, %v1487
      %v1572 = vmul.f32 %v1544, %v1488
      %v1573 = vmul.f32 %v1549, %v1489
      %v1574 = vmul.f32 %v1549, %v1490
      %s1575 = scalar_lea.vmem %s3, 288
      %v1576 = vld [vmem:[%s1575] sm:$0xff]
      %v1577 = vld [vmem:[%s1575 + $0x8] sm:$0xff]
      %v1578 = vld [vmem:[%s1575 + $0x10] sm:$0xff]
      %v1579 = vld [vmem:[%s1575 + $0x18] sm:$0xff]
      %v1580 = vld [vmem:[%s1575 + $0x20] sm:$0xff]
      %v1581 = vld [vmem:[%s1575 + $0x28] sm:$0xff]
      %v1582 = vld [vmem:[%s1575 + $0x30] sm:$0xff]
      %v1583 = vld [vmem:[%s1575 + $0x38] sm:$0xff]
      %v1584 = vld [vmem:[%s1575 + $0x40] sm:$0xff]
      %v1585 = vld [vmem:[%s1575 + $0x48] sm:$0xff]
      %v1586 = vld [vmem:[%s1575 + $0x50] sm:$0xff]
      %v1587 = vld [vmem:[%s1575 + $0x58] sm:$0xff]
      %1589 = vset.pattern.permute.xlu0 0
      %1590 = vperm.xlu0 %1589, %v1576
      %v1591 = vpop.permute.xlu0 %1590
      %1594 = vset.pattern.permute.xlu0 0
      %1595 = vperm.xlu0 %1594, %v1577
      %v1596 = vpop.permute.xlu0 %1595
      %1599 = vset.pattern.permute.xlu0 0
      %1600 = vperm.xlu0 %1599, %v1578
      %v1601 = vpop.permute.xlu0 %1600
      %1604 = vset.pattern.permute.xlu0 0
      %1605 = vperm.xlu0 %1604, %v1579
      %v1606 = vpop.permute.xlu0 %1605
      %1609 = vset.pattern.permute.xlu0 0
      %1610 = vperm.xlu0 %1609, %v1580
      %v1611 = vpop.permute.xlu0 %1610
      %1614 = vset.pattern.permute.xlu0 0
      %1615 = vperm.xlu0 %1614, %v1581
      %v1616 = vpop.permute.xlu0 %1615
      %1619 = vset.pattern.permute.xlu0 0
      %1620 = vperm.xlu0 %1619, %v1582
      %v1621 = vpop.permute.xlu0 %1620
      %1624 = vset.pattern.permute.xlu0 0
      %1625 = vperm.xlu0 %1624, %v1583
      %v1626 = vpop.permute.xlu0 %1625
      %1629 = vset.pattern.permute.xlu0 0
      %1630 = vperm.xlu0 %1629, %v1584
      %v1631 = vpop.permute.xlu0 %1630
      %1634 = vset.pattern.permute.xlu0 0
      %1635 = vperm.xlu0 %1634, %v1585
      %v1636 = vpop.permute.xlu0 %1635
      %1639 = vset.pattern.permute.xlu0 0
      %1640 = vperm.xlu0 %1639, %v1586
      %v1641 = vpop.permute.xlu0 %1640
      %1644 = vset.pattern.permute.xlu0 0
      %1645 = vperm.xlu0 %1644, %v1587
      %v1646 = vpop.permute.xlu0 %1645
      %v1648 = vmul.f32 %v1591, %v695
      %v1649 = vmul.f32 %v1591, %v696
      %v1650 = vmul.f32 %v1591, %v697
      %v1651 = vmul.f32 %v1596, %v698
      %v1652 = vmul.f32 %v1596, %v699
      %v1653 = vmul.f32 %v1596, %v700
      %v1654 = vmul.f32 %v1601, %v701
      %v1655 = vmul.f32 %v1601, %v702
      %v1656 = vmul.f32 %v1601, %v703
      %v1657 = vmul.f32 %v1606, %v704
      %v1658 = vmul.f32 %v1606, %v705
      %v1659 = vmul.f32 %v1606, %v706
      %v1660 = vmul.f32 %v1611, %v707
      %v1661 = vmul.f32 %v1611, %v708
      %v1662 = vmul.f32 %v1611, %v709
      %v1663 = vmul.f32 %v1616, %v710
      %v1664 = vmul.f32 %v1616, %v711
      %v1665 = vmul.f32 %v1616, %v712
      %v1666 = vmul.f32 %v1621, %v713
      %v1667 = vmul.f32 %v1621, %v714
      %v1668 = vmul.f32 %v1621, %v715
      %v1669 = vmul.f32 %v1626, %v716
      %v1670 = vmul.f32 %v1626, %v717
      %v1671 = vmul.f32 %v1626, %v718
      %v1672 = vmul.f32 %v1631, %v719
      %v1673 = vmul.f32 %v1631, %v720
      %v1674 = vmul.f32 %v1631, %v721
      %v1675 = vmul.f32 %v1636, %v722
      %v1676 = vmul.f32 %v1636, %v723
      %v1677 = vmul.f32 %v1636, %v724
      %v1678 = vmul.f32 %v1641, %v725
      %v1679 = vmul.f32 %v1641, %v726
      %v1680 = vmul.f32 %v1641, %v727
      %v1681 = vmul.f32 %v1646, %v728
      %v1682 = vmul.f32 %v1646, %v729
      %v1683 = vmul.f32 %v1646, %v730
      %1720 = vrot.lane.b32.xlu0 %v1648, 112
      %v1721 = vpop.permute.xlu0 %1720
      %1722 = vrot.lane.b32.xlu0 %v1649, 112
      %v1723 = vpop.permute.xlu0 %1722
      %1724 = vrot.lane.b32.xlu0 %v1650, 112
      %v1725 = vpop.permute.xlu0 %1724
      %1726 = vrot.lane.b32.xlu0 %v1651, 112
      %v1727 = vpop.permute.xlu0 %1726
      %1728 = vrot.lane.b32.xlu0 %v1652, 112
      %v1729 = vpop.permute.xlu0 %1728
      %1730 = vrot.lane.b32.xlu0 %v1653, 112
      %v1731 = vpop.permute.xlu0 %1730
      %1732 = vrot.lane.b32.xlu0 %v1654, 112
      %v1733 = vpop.permute.xlu0 %1732
      %1734 = vrot.lane.b32.xlu0 %v1655, 112
      %v1735 = vpop.permute.xlu0 %1734
      %1736 = vrot.lane.b32.xlu0 %v1656, 112
      %v1737 = vpop.permute.xlu0 %1736
      %1738 = vrot.lane.b32.xlu0 %v1657, 112
      %v1739 = vpop.permute.xlu0 %1738
      %1740 = vrot.lane.b32.xlu0 %v1658, 112
      %v1741 = vpop.permute.xlu0 %1740
      %1742 = vrot.lane.b32.xlu0 %v1659, 112
      %v1743 = vpop.permute.xlu0 %1742
      %1744 = vrot.lane.b32.xlu0 %v1660, 112
      %v1745 = vpop.permute.xlu0 %1744
      %1746 = vrot.lane.b32.xlu0 %v1661, 112
      %v1747 = vpop.permute.xlu0 %1746
      %1748 = vrot.lane.b32.xlu0 %v1662, 112
      %v1749 = vpop.permute.xlu0 %1748
      %1750 = vrot.lane.b32.xlu0 %v1663, 112
      %v1751 = vpop.permute.xlu0 %1750
      %1752 = vrot.lane.b32.xlu0 %v1664, 112
      %v1753 = vpop.permute.xlu0 %1752
      %1754 = vrot.lane.b32.xlu0 %v1665, 112
      %v1755 = vpop.permute.xlu0 %1754
      %1756 = vrot.lane.b32.xlu0 %v1666, 112
      %v1757 = vpop.permute.xlu0 %1756
      %1758 = vrot.lane.b32.xlu0 %v1667, 112
      %v1759 = vpop.permute.xlu0 %1758
      %1760 = vrot.lane.b32.xlu0 %v1668, 112
      %v1761 = vpop.permute.xlu0 %1760
      %1762 = vrot.lane.b32.xlu0 %v1669, 112
      %v1763 = vpop.permute.xlu0 %1762
      %1764 = vrot.lane.b32.xlu0 %v1670, 112
      %v1765 = vpop.permute.xlu0 %1764
      %1766 = vrot.lane.b32.xlu0 %v1671, 112
      %v1767 = vpop.permute.xlu0 %1766
      %1768 = vrot.lane.b32.xlu0 %v1672, 112
      %v1769 = vpop.permute.xlu0 %1768
      %1770 = vrot.lane.b32.xlu0 %v1673, 112
      %v1771 = vpop.permute.xlu0 %1770
      %1772 = vrot.lane.b32.xlu0 %v1674, 112
      %v1773 = vpop.permute.xlu0 %1772
      %1774 = vrot.lane.b32.xlu0 %v1675, 112
      %v1775 = vpop.permute.xlu0 %1774
      %1776 = vrot.lane.b32.xlu0 %v1676, 112
      %v1777 = vpop.permute.xlu0 %1776
      %1778 = vrot.lane.b32.xlu0 %v1677, 112
      %v1779 = vpop.permute.xlu0 %1778
      %1780 = vrot.lane.b32.xlu0 %v1678, 112
      %v1781 = vpop.permute.xlu0 %1780
      %1782 = vrot.lane.b32.xlu0 %v1679, 112
      %v1783 = vpop.permute.xlu0 %1782
      %1784 = vrot.lane.b32.xlu0 %v1680, 112
      %v1785 = vpop.permute.xlu0 %1784
      %1786 = vrot.lane.b32.xlu0 %v1681, 112
      %v1787 = vpop.permute.xlu0 %1786
      %1788 = vrot.lane.b32.xlu0 %v1682, 112
      %v1789 = vpop.permute.xlu0 %1788
      %1790 = vrot.lane.b32.xlu0 %v1683, 112
      %v1791 = vpop.permute.xlu0 %1790
      %v1792 = vsel %vm1044, %v1721, %v1723
      %v1793 = vsel %vm1044, %v1723, %v1725
      %v1794 = vsel %vm1044, %v1727, %v1729
      %v1795 = vsel %vm1044, %v1729, %v1731
      %v1796 = vsel %vm1044, %v1733, %v1735
      %v1797 = vsel %vm1044, %v1735, %v1737
      %v1798 = vsel %vm1044, %v1739, %v1741
      %v1799 = vsel %vm1044, %v1741, %v1743
      %v1800 = vsel %vm1044, %v1745, %v1747
      %v1801 = vsel %vm1044, %v1747, %v1749
      %v1802 = vsel %vm1044, %v1751, %v1753
      %v1803 = vsel %vm1044, %v1753, %v1755
      %v1804 = vsel %vm1044, %v1757, %v1759
      %v1805 = vsel %vm1044, %v1759, %v1761
      %v1806 = vsel %vm1044, %v1763, %v1765
      %v1807 = vsel %vm1044, %v1765, %v1767
      %v1808 = vsel %vm1044, %v1769, %v1771
      %v1809 = vsel %vm1044, %v1771, %v1773
      %v1810 = vsel %vm1044, %v1775, %v1777
      %v1811 = vsel %vm1044, %v1777, %v1779
      %v1812 = vsel %vm1044, %v1781, %v1783
      %v1813 = vsel %vm1044, %v1783, %v1785
      %v1814 = vsel %vm1044, %v1787, %v1789
      %v1815 = vsel %vm1044, %v1789, %v1791
      %v1840 = vadd.f32 %v1551, %v1792
      %v1841 = vadd.f32 %v1552, %v1793
      %v1842 = vadd.f32 %v1553, %v1794
      %v1843 = vadd.f32 %v1554, %v1795
      %v1844 = vadd.f32 %v1555, %v1796
      %v1845 = vadd.f32 %v1556, %v1797
      %v1846 = vadd.f32 %v1557, %v1798
      %v1847 = vadd.f32 %v1558, %v1799
      %v1848 = vadd.f32 %v1559, %v1800
      %v1849 = vadd.f32 %v1560, %v1801
      %v1850 = vadd.f32 %v1561, %v1802
      %v1851 = vadd.f32 %v1562, %v1803
      %v1852 = vadd.f32 %v1563, %v1804
      %v1853 = vadd.f32 %v1564, %v1805
      %v1854 = vadd.f32 %v1565, %v1806
      %v1855 = vadd.f32 %v1566, %v1807
      %v1856 = vadd.f32 %v1567, %v1808
      %v1857 = vadd.f32 %v1568, %v1809
      %v1858 = vadd.f32 %v1569, %v1810
      %v1859 = vadd.f32 %v1570, %v1811
      %v1860 = vadd.f32 %v1571, %v1812
      %v1861 = vadd.f32 %v1572, %v1813
      %v1862 = vadd.f32 %v1573, %v1814
      %v1863 = vadd.f32 %v1574, %v1815
      %s1864 = scalar_lea.vmem %s3, 576
      %v1865 = vld [vmem:[%s1864] sm:$0xff]
      %v1866 = vld [vmem:[%s1864 + $0x8] sm:$0xff]
      %v1867 = vld [vmem:[%s1864 + $0x10] sm:$0xff]
      %v1868 = vld [vmem:[%s1864 + $0x18] sm:$0xff]
      %v1869 = vld [vmem:[%s1864 + $0x20] sm:$0xff]
      %v1870 = vld [vmem:[%s1864 + $0x28] sm:$0xff]
      %v1871 = vld [vmem:[%s1864 + $0x30] sm:$0xff]
      %v1872 = vld [vmem:[%s1864 + $0x38] sm:$0xff]
      %v1873 = vld [vmem:[%s1864 + $0x40] sm:$0xff]
      %v1874 = vld [vmem:[%s1864 + $0x48] sm:$0xff]
      %v1875 = vld [vmem:[%s1864 + $0x50] sm:$0xff]
      %v1876 = vld [vmem:[%s1864 + $0x58] sm:$0xff]
      %1878 = vset.pattern.permute.xlu0 0
      %1879 = vperm.xlu0 %1878, %v1865
      %v1880 = vpop.permute.xlu0 %1879
      %1883 = vset.pattern.permute.xlu0 0
      %1884 = vperm.xlu0 %1883, %v1866
      %v1885 = vpop.permute.xlu0 %1884
      %1888 = vset.pattern.permute.xlu0 0
      %1889 = vperm.xlu0 %1888, %v1867
      %v1890 = vpop.permute.xlu0 %1889
      %1893 = vset.pattern.permute.xlu0 0
      %1894 = vperm.xlu0 %1893, %v1868
      %v1895 = vpop.permute.xlu0 %1894
      %1898 = vset.pattern.permute.xlu0 0
      %1899 = vperm.xlu0 %1898, %v1869
      %v1900 = vpop.permute.xlu0 %1899
      %1903 = vset.pattern.permute.xlu0 0
      %1904 = vperm.xlu0 %1903, %v1870
      %v1905 = vpop.permute.xlu0 %1904
      %1908 = vset.pattern.permute.xlu0 0
      %1909 = vperm.xlu0 %1908, %v1871
      %v1910 = vpop.permute.xlu0 %1909
      %1913 = vset.pattern.permute.xlu0 0
      %1914 = vperm.xlu0 %1913, %v1872
      %v1915 = vpop.permute.xlu0 %1914
      %1918 = vset.pattern.permute.xlu0 0
      %1919 = vperm.xlu0 %1918, %v1873
      %v1920 = vpop.permute.xlu0 %1919
      %1923 = vset.pattern.permute.xlu0 0
      %1924 = vperm.xlu0 %1923, %v1874
      %v1925 = vpop.permute.xlu0 %1924
      %1928 = vset.pattern.permute.xlu0 0
      %1929 = vperm.xlu0 %1928, %v1875
      %v1930 = vpop.permute.xlu0 %1929
      %1933 = vset.pattern.permute.xlu0 0
      %1934 = vperm.xlu0 %1933, %v1876
      %v1935 = vpop.permute.xlu0 %1934
      %v1937 = vmul.f32 %v1880, %v695
      %v1938 = vmul.f32 %v1880, %v696
      %v1939 = vmul.f32 %v1880, %v697
      %v1940 = vmul.f32 %v1885, %v698
      %v1941 = vmul.f32 %v1885, %v699
      %v1942 = vmul.f32 %v1885, %v700
      %v1943 = vmul.f32 %v1890, %v701
      %v1944 = vmul.f32 %v1890, %v702
      %v1945 = vmul.f32 %v1890, %v703
      %v1946 = vmul.f32 %v1895, %v704
      %v1947 = vmul.f32 %v1895, %v705
      %v1948 = vmul.f32 %v1895, %v706
      %v1949 = vmul.f32 %v1900, %v707
      %v1950 = vmul.f32 %v1900, %v708
      %v1951 = vmul.f32 %v1900, %v709
      %v1952 = vmul.f32 %v1905, %v710
      %v1953 = vmul.f32 %v1905, %v711
      %v1954 = vmul.f32 %v1905, %v712
      %v1955 = vmul.f32 %v1910, %v713
      %v1956 = vmul.f32 %v1910, %v714
      %v1957 = vmul.f32 %v1910, %v715
      %v1958 = vmul.f32 %v1915, %v716
      %v1959 = vmul.f32 %v1915, %v717
      %v1960 = vmul.f32 %v1915, %v718
      %v1961 = vmul.f32 %v1920, %v719
      %v1962 = vmul.f32 %v1920, %v720
      %v1963 = vmul.f32 %v1920, %v721
      %v1964 = vmul.f32 %v1925, %v722
      %v1965 = vmul.f32 %v1925, %v723
      %v1966 = vmul.f32 %v1925, %v724
      %v1967 = vmul.f32 %v1930, %v725
      %v1968 = vmul.f32 %v1930, %v726
      %v1969 = vmul.f32 %v1930, %v727
      %v1970 = vmul.f32 %v1935, %v728
      %v1971 = vmul.f32 %v1935, %v729
      %v1972 = vmul.f32 %v1935, %v730
      %2009 = vrot.lane.b32.xlu0 %v1937, 96
      %v2010 = vpop.permute.xlu0 %2009
      %2011 = vrot.lane.b32.xlu0 %v1938, 96
      %v2012 = vpop.permute.xlu0 %2011
      %2013 = vrot.lane.b32.xlu0 %v1939, 96
      %v2014 = vpop.permute.xlu0 %2013
      %2015 = vrot.lane.b32.xlu0 %v1940, 96
      %v2016 = vpop.permute.xlu0 %2015
      %2017 = vrot.lane.b32.xlu0 %v1941, 96
      %v2018 = vpop.permute.xlu0 %2017
      %2019 = vrot.lane.b32.xlu0 %v1942, 96
      %v2020 = vpop.permute.xlu0 %2019
      %2021 = vrot.lane.b32.xlu0 %v1943, 96
      %v2022 = vpop.permute.xlu0 %2021
      %2023 = vrot.lane.b32.xlu0 %v1944, 96
      %v2024 = vpop.permute.xlu0 %2023
      %2025 = vrot.lane.b32.xlu0 %v1945, 96
      %v2026 = vpop.permute.xlu0 %2025
      %2027 = vrot.lane.b32.xlu0 %v1946, 96
      %v2028 = vpop.permute.xlu0 %2027
      %2029 = vrot.lane.b32.xlu0 %v1947, 96
      %v2030 = vpop.permute.xlu0 %2029
      %2031 = vrot.lane.b32.xlu0 %v1948, 96
      %v2032 = vpop.permute.xlu0 %2031
      %2033 = vrot.lane.b32.xlu0 %v1949, 96
      %v2034 = vpop.permute.xlu0 %2033
      %2035 = vrot.lane.b32.xlu0 %v1950, 96
      %v2036 = vpop.permute.xlu0 %2035
      %2037 = vrot.lane.b32.xlu0 %v1951, 96
      %v2038 = vpop.permute.xlu0 %2037
      %2039 = vrot.lane.b32.xlu0 %v1952, 96
      %v2040 = vpop.permute.xlu0 %2039
      %2041 = vrot.lane.b32.xlu0 %v1953, 96
      %v2042 = vpop.permute.xlu0 %2041
      %2043 = vrot.lane.b32.xlu0 %v1954, 96
      %v2044 = vpop.permute.xlu0 %2043
      %2045 = vrot.lane.b32.xlu0 %v1955, 96
      %v2046 = vpop.permute.xlu0 %2045
      %2047 = vrot.lane.b32.xlu0 %v1956, 96
      %v2048 = vpop.permute.xlu0 %2047
      %2049 = vrot.lane.b32.xlu0 %v1957, 96
      %v2050 = vpop.permute.xlu0 %2049
      %2051 = vrot.lane.b32.xlu0 %v1958, 96
      %v2052 = vpop.permute.xlu0 %2051
      %2053 = vrot.lane.b32.xlu0 %v1959, 96
      %v2054 = vpop.permute.xlu0 %2053
      %2055 = vrot.lane.b32.xlu0 %v1960, 96
      %v2056 = vpop.permute.xlu0 %2055
      %2057 = vrot.lane.b32.xlu0 %v1961, 96
      %v2058 = vpop.permute.xlu0 %2057
      %2059 = vrot.lane.b32.xlu0 %v1962, 96
      %v2060 = vpop.permute.xlu0 %2059
      %2061 = vrot.lane.b32.xlu0 %v1963, 96
      %v2062 = vpop.permute.xlu0 %2061
      %2063 = vrot.lane.b32.xlu0 %v1964, 96
      %v2064 = vpop.permute.xlu0 %2063
      %2065 = vrot.lane.b32.xlu0 %v1965, 96
      %v2066 = vpop.permute.xlu0 %2065
      %2067 = vrot.lane.b32.xlu0 %v1966, 96
      %v2068 = vpop.permute.xlu0 %2067
      %2069 = vrot.lane.b32.xlu0 %v1967, 96
      %v2070 = vpop.permute.xlu0 %2069
      %2071 = vrot.lane.b32.xlu0 %v1968, 96
      %v2072 = vpop.permute.xlu0 %2071
      %2073 = vrot.lane.b32.xlu0 %v1969, 96
      %v2074 = vpop.permute.xlu0 %2073
      %2075 = vrot.lane.b32.xlu0 %v1970, 96
      %v2076 = vpop.permute.xlu0 %2075
      %2077 = vrot.lane.b32.xlu0 %v1971, 96
      %v2078 = vpop.permute.xlu0 %2077
      %2079 = vrot.lane.b32.xlu0 %v1972, 96
      %v2080 = vpop.permute.xlu0 %2079
      %v2081 = vsel %vm1358, %v2010, %v2012
      %v2082 = vsel %vm1358, %v2012, %v2014
      %v2083 = vsel %vm1358, %v2016, %v2018
      %v2084 = vsel %vm1358, %v2018, %v2020
      %v2085 = vsel %vm1358, %v2022, %v2024
      %v2086 = vsel %vm1358, %v2024, %v2026
      %v2087 = vsel %vm1358, %v2028, %v2030
      %v2088 = vsel %vm1358, %v2030, %v2032
      %v2089 = vsel %vm1358, %v2034, %v2036
      %v2090 = vsel %vm1358, %v2036, %v2038
      %v2091 = vsel %vm1358, %v2040, %v2042
      %v2092 = vsel %vm1358, %v2042, %v2044
      %v2093 = vsel %vm1358, %v2046, %v2048
      %v2094 = vsel %vm1358, %v2048, %v2050
      %v2095 = vsel %vm1358, %v2052, %v2054
      %v2096 = vsel %vm1358, %v2054, %v2056
      %v2097 = vsel %vm1358, %v2058, %v2060
      %v2098 = vsel %vm1358, %v2060, %v2062
      %v2099 = vsel %vm1358, %v2064, %v2066
      %v2100 = vsel %vm1358, %v2066, %v2068
      %v2101 = vsel %vm1358, %v2070, %v2072
      %v2102 = vsel %vm1358, %v2072, %v2074
      %v2103 = vsel %vm1358, %v2076, %v2078
      %v2104 = vsel %vm1358, %v2078, %v2080
      %v2129 = vadd.f32 %v1840, %v2081
      %v2130 = vadd.f32 %v1841, %v2082
      %v2131 = vadd.f32 %v1842, %v2083
      %v2132 = vadd.f32 %v1843, %v2084
      %v2133 = vadd.f32 %v1844, %v2085
      %v2134 = vadd.f32 %v1845, %v2086
      %v2135 = vadd.f32 %v1846, %v2087
      %v2136 = vadd.f32 %v1847, %v2088
      %v2137 = vadd.f32 %v1848, %v2089
      %v2138 = vadd.f32 %v1849, %v2090
      %v2139 = vadd.f32 %v1850, %v2091
      %v2140 = vadd.f32 %v1851, %v2092
      %v2141 = vadd.f32 %v1852, %v2093
      %v2142 = vadd.f32 %v1853, %v2094
      %v2143 = vadd.f32 %v1854, %v2095
      %v2144 = vadd.f32 %v1855, %v2096
      %v2145 = vadd.f32 %v1856, %v2097
      %v2146 = vadd.f32 %v1857, %v2098
      %v2147 = vadd.f32 %v1858, %v2099
      %v2148 = vadd.f32 %v1859, %v2100
      %v2149 = vadd.f32 %v1860, %v2101
      %v2150 = vadd.f32 %v1861, %v2102
      %v2151 = vadd.f32 %v1862, %v2103
      %v2152 = vadd.f32 %v1863, %v2104
      %v2153 = vmul.f32 %v385, %v2129
      %v2154 = vmul.f32 %v386, %v2130
      %v2155 = vmul.f32 %v385, %v2131
      %v2156 = vmul.f32 %v386, %v2132
      %v2157 = vmul.f32 %v385, %v2133
      %v2158 = vmul.f32 %v386, %v2134
      %v2159 = vmul.f32 %v385, %v2135
      %v2160 = vmul.f32 %v386, %v2136
      %v2161 = vmul.f32 %v385, %v2137
      %v2162 = vmul.f32 %v386, %v2138
      %v2163 = vmul.f32 %v385, %v2139
      %v2164 = vmul.f32 %v386, %v2140
      %v2165 = vmul.f32 %v385, %v2141
      %v2166 = vmul.f32 %v386, %v2142
      %v2167 = vmul.f32 %v385, %v2143
      %v2168 = vmul.f32 %v386, %v2144
      %v2169 = vmul.f32 %v385, %v2145
      %v2170 = vmul.f32 %v386, %v2146
      %v2171 = vmul.f32 %v385, %v2147
      %v2172 = vmul.f32 %v386, %v2148
      %v2173 = vmul.f32 %v385, %v2149
      %v2174 = vmul.f32 %v386, %v2150
      %v2175 = vmul.f32 %v385, %v2151
      %v2176 = vmul.f32 %v386, %v2152
      %2201 = vrot.lane.b32.xlu0 %v2153, 1
      %v2202 = vpop.permute.xlu0 %2201
      %2203 = vrot.lane.b32.xlu0 %v2154, 1
      %v2204 = vpop.permute.xlu0 %2203
      %2205 = vrot.lane.b32.xlu0 %v2155, 1
      %v2206 = vpop.permute.xlu0 %2205
      %2207 = vrot.lane.b32.xlu0 %v2156, 1
      %v2208 = vpop.permute.xlu0 %2207
      %2209 = vrot.lane.b32.xlu0 %v2157, 1
      %v2210 = vpop.permute.xlu0 %2209
      %2211 = vrot.lane.b32.xlu0 %v2158, 1
      %v2212 = vpop.permute.xlu0 %2211
      %2213 = vrot.lane.b32.xlu0 %v2159, 1
      %v2214 = vpop.permute.xlu0 %2213
      %2215 = vrot.lane.b32.xlu0 %v2160, 1
      %v2216 = vpop.permute.xlu0 %2215
      %2217 = vrot.lane.b32.xlu0 %v2161, 1
      %v2218 = vpop.permute.xlu0 %2217
      %2219 = vrot.lane.b32.xlu0 %v2162, 1
      %v2220 = vpop.permute.xlu0 %2219
      %2221 = vrot.lane.b32.xlu0 %v2163, 1
      %v2222 = vpop.permute.xlu0 %2221
      %2223 = vrot.lane.b32.xlu0 %v2164, 1
      %v2224 = vpop.permute.xlu0 %2223
      %2225 = vrot.lane.b32.xlu0 %v2165, 1
      %v2226 = vpop.permute.xlu0 %2225
      %2227 = vrot.lane.b32.xlu0 %v2166, 1
      %v2228 = vpop.permute.xlu0 %2227
      %2229 = vrot.lane.b32.xlu0 %v2167, 1
      %v2230 = vpop.permute.xlu0 %2229
      %2231 = vrot.lane.b32.xlu0 %v2168, 1
      %v2232 = vpop.permute.xlu0 %2231
      %2233 = vrot.lane.b32.xlu0 %v2169, 1
      %v2234 = vpop.permute.xlu0 %2233
      %2235 = vrot.lane.b32.xlu0 %v2170, 1
      %v2236 = vpop.permute.xlu0 %2235
      %2237 = vrot.lane.b32.xlu0 %v2171, 1
      %v2238 = vpop.permute.xlu0 %2237
      %2239 = vrot.lane.b32.xlu0 %v2172, 1
      %v2240 = vpop.permute.xlu0 %2239
      %2241 = vrot.lane.b32.xlu0 %v2173, 1
      %v2242 = vpop.permute.xlu0 %2241
      %2243 = vrot.lane.b32.xlu0 %v2174, 1
      %v2244 = vpop.permute.xlu0 %2243
      %2245 = vrot.lane.b32.xlu0 %v2175, 1
      %v2246 = vpop.permute.xlu0 %2245
      %2247 = vrot.lane.b32.xlu0 %v2176, 1
      %v2248 = vpop.permute.xlu0 %2247
      %vm2249 = vcmask 7168
      %v2250 = vsel %vm2249, %v2202, %v2204
      %v2251 = vsel %vm2249, %v2206, %v2208
      %v2252 = vsel %vm2249, %v2210, %v2212
      %v2253 = vsel %vm2249, %v2214, %v2216
      %v2254 = vsel %vm2249, %v2218, %v2220
      %v2255 = vsel %vm2249, %v2222, %v2224
      %v2256 = vsel %vm2249, %v2226, %v2228
      %v2257 = vsel %vm2249, %v2230, %v2232
      %v2258 = vsel %vm2249, %v2234, %v2236
      %v2259 = vsel %vm2249, %v2238, %v2240
      %v2260 = vsel %vm2249, %v2242, %v2244
      %v2261 = vsel %vm2249, %v2246, %v2248
      %v2298 = vadd.f32 %v1419, %v2202
      %v2299 = vadd.f32 %v1420, %v2250
      %v2300 = vadd.f32 %v1421, %v2204
      %v2301 = vadd.f32 %v1422, %v2206
      %v2302 = vadd.f32 %v1423, %v2251
      %v2303 = vadd.f32 %v1424, %v2208
      %v2304 = vadd.f32 %v1425, %v2210
      %v2305 = vadd.f32 %v1426, %v2252
      %v2306 = vadd.f32 %v1427, %v2212
      %v2307 = vadd.f32 %v1428, %v2214
      %v2308 = vadd.f32 %v1429, %v2253
      %v2309 = vadd.f32 %v1430, %v2216
      %v2310 = vadd.f32 %v1431, %v2218
      %v2311 = vadd.f32 %v1432, %v2254
      %v2312 = vadd.f32 %v1433, %v2220
      %v2313 = vadd.f32 %v1434, %v2222
      %v2314 = vadd.f32 %v1435, %v2255
      %v2315 = vadd.f32 %v1436, %v2224
      %v2316 = vadd.f32 %v1437, %v2226
      %v2317 = vadd.f32 %v1438, %v2256
      %v2318 = vadd.f32 %v1439, %v2228
      %v2319 = vadd.f32 %v1440, %v2230
      %v2320 = vadd.f32 %v1441, %v2257
      %v2321 = vadd.f32 %v1442, %v2232
      %v2322 = vadd.f32 %v1443, %v2234
      %v2323 = vadd.f32 %v1444, %v2258
      %v2324 = vadd.f32 %v1445, %v2236
      %v2325 = vadd.f32 %v1446, %v2238
      %v2326 = vadd.f32 %v1447, %v2259
      %v2327 = vadd.f32 %v1448, %v2240
      %v2328 = vadd.f32 %v1449, %v2242
      %v2329 = vadd.f32 %v1450, %v2260
      %v2330 = vadd.f32 %v1451, %v2244
      %v2331 = vadd.f32 %v1452, %v2246
      %v2332 = vadd.f32 %v1453, %v2261
      %v2333 = vadd.f32 %v1454, %v2248
      %s2334 = scalar_lea.vmem %s3, 192
      %v2335 = vld [vmem:[%s2334] sm:$0xff]
      %v2336 = vld [vmem:[%s2334 + $0x8] sm:$0xff]
      %v2337 = vld [vmem:[%s2334 + $0x10] sm:$0xff]
      %v2338 = vld [vmem:[%s2334 + $0x18] sm:$0xff]
      %v2339 = vld [vmem:[%s2334 + $0x20] sm:$0xff]
      %v2340 = vld [vmem:[%s2334 + $0x28] sm:$0xff]
      %v2341 = vld [vmem:[%s2334 + $0x30] sm:$0xff]
      %v2342 = vld [vmem:[%s2334 + $0x38] sm:$0xff]
      %v2343 = vld [vmem:[%s2334 + $0x40] sm:$0xff]
      %v2344 = vld [vmem:[%s2334 + $0x48] sm:$0xff]
      %v2345 = vld [vmem:[%s2334 + $0x50] sm:$0xff]
      %v2346 = vld [vmem:[%s2334 + $0x58] sm:$0xff]
      %2348 = vset.pattern.permute.xlu0 0
      %2349 = vperm.xlu0 %2348, %v2335
      %v2350 = vpop.permute.xlu0 %2349
      %2353 = vset.pattern.permute.xlu0 0
      %2354 = vperm.xlu0 %2353, %v2336
      %v2355 = vpop.permute.xlu0 %2354
      %2358 = vset.pattern.permute.xlu0 0
      %2359 = vperm.xlu0 %2358, %v2337
      %v2360 = vpop.permute.xlu0 %2359
      %2363 = vset.pattern.permute.xlu0 0
      %2364 = vperm.xlu0 %2363, %v2338
      %v2365 = vpop.permute.xlu0 %2364
      %2368 = vset.pattern.permute.xlu0 0
      %2369 = vperm.xlu0 %2368, %v2339
      %v2370 = vpop.permute.xlu0 %2369
      %2373 = vset.pattern.permute.xlu0 0
      %2374 = vperm.xlu0 %2373, %v2340
      %v2375 = vpop.permute.xlu0 %2374
      %2378 = vset.pattern.permute.xlu0 0
      %2379 = vperm.xlu0 %2378, %v2341
      %v2380 = vpop.permute.xlu0 %2379
      %2383 = vset.pattern.permute.xlu0 0
      %2384 = vperm.xlu0 %2383, %v2342
      %v2385 = vpop.permute.xlu0 %2384
      %2388 = vset.pattern.permute.xlu0 0
      %2389 = vperm.xlu0 %2388, %v2343
      %v2390 = vpop.permute.xlu0 %2389
      %2393 = vset.pattern.permute.xlu0 0
      %2394 = vperm.xlu0 %2393, %v2344
      %v2395 = vpop.permute.xlu0 %2394
      %2398 = vset.pattern.permute.xlu0 0
      %2399 = vperm.xlu0 %2398, %v2345
      %v2400 = vpop.permute.xlu0 %2399
      %2403 = vset.pattern.permute.xlu0 0
      %2404 = vperm.xlu0 %2403, %v2346
      %v2405 = vpop.permute.xlu0 %2404
      %v2407 = vmul.f32 %v2350, %v695
      %v2408 = vmul.f32 %v2350, %v696
      %v2409 = vmul.f32 %v2350, %v697
      %v2410 = vmul.f32 %v2355, %v698
      %v2411 = vmul.f32 %v2355, %v699
      %v2412 = vmul.f32 %v2355, %v700
      %v2413 = vmul.f32 %v2360, %v701
      %v2414 = vmul.f32 %v2360, %v702
      %v2415 = vmul.f32 %v2360, %v703
      %v2416 = vmul.f32 %v2365, %v704
      %v2417 = vmul.f32 %v2365, %v705
      %v2418 = vmul.f32 %v2365, %v706
      %v2419 = vmul.f32 %v2370, %v707
      %v2420 = vmul.f32 %v2370, %v708
      %v2421 = vmul.f32 %v2370, %v709
      %v2422 = vmul.f32 %v2375, %v710
      %v2423 = vmul.f32 %v2375, %v711
      %v2424 = vmul.f32 %v2375, %v712
      %v2425 = vmul.f32 %v2380, %v713
      %v2426 = vmul.f32 %v2380, %v714
      %v2427 = vmul.f32 %v2380, %v715
      %v2428 = vmul.f32 %v2385, %v716
      %v2429 = vmul.f32 %v2385, %v717
      %v2430 = vmul.f32 %v2385, %v718
      %v2431 = vmul.f32 %v2390, %v719
      %v2432 = vmul.f32 %v2390, %v720
      %v2433 = vmul.f32 %v2390, %v721
      %v2434 = vmul.f32 %v2395, %v722
      %v2435 = vmul.f32 %v2395, %v723
      %v2436 = vmul.f32 %v2395, %v724
      %v2437 = vmul.f32 %v2400, %v725
      %v2438 = vmul.f32 %v2400, %v726
      %v2439 = vmul.f32 %v2400, %v727
      %v2440 = vmul.f32 %v2405, %v728
      %v2441 = vmul.f32 %v2405, %v729
      %v2442 = vmul.f32 %v2405, %v730
      %s2443 = scalar_lea.vmem %s3, 480
      %v2444 = vld [vmem:[%s2443] sm:$0xff]
      %v2445 = vld [vmem:[%s2443 + $0x8] sm:$0xff]
      %v2446 = vld [vmem:[%s2443 + $0x10] sm:$0xff]
      %v2447 = vld [vmem:[%s2443 + $0x18] sm:$0xff]
      %v2448 = vld [vmem:[%s2443 + $0x20] sm:$0xff]
      %v2449 = vld [vmem:[%s2443 + $0x28] sm:$0xff]
      %v2450 = vld [vmem:[%s2443 + $0x30] sm:$0xff]
      %v2451 = vld [vmem:[%s2443 + $0x38] sm:$0xff]
      %v2452 = vld [vmem:[%s2443 + $0x40] sm:$0xff]
      %v2453 = vld [vmem:[%s2443 + $0x48] sm:$0xff]
      %v2454 = vld [vmem:[%s2443 + $0x50] sm:$0xff]
      %v2455 = vld [vmem:[%s2443 + $0x58] sm:$0xff]
      %2457 = vset.pattern.permute.xlu0 0
      %2458 = vperm.xlu0 %2457, %v2444
      %v2459 = vpop.permute.xlu0 %2458
      %2462 = vset.pattern.permute.xlu0 0
      %2463 = vperm.xlu0 %2462, %v2445
      %v2464 = vpop.permute.xlu0 %2463
      %2467 = vset.pattern.permute.xlu0 0
      %2468 = vperm.xlu0 %2467, %v2446
      %v2469 = vpop.permute.xlu0 %2468
      %2472 = vset.pattern.permute.xlu0 0
      %2473 = vperm.xlu0 %2472, %v2447
      %v2474 = vpop.permute.xlu0 %2473
      %2477 = vset.pattern.permute.xlu0 0
      %2478 = vperm.xlu0 %2477, %v2448
      %v2479 = vpop.permute.xlu0 %2478
      %2482 = vset.pattern.permute.xlu0 0
      %2483 = vperm.xlu0 %2482, %v2449
      %v2484 = vpop.permute.xlu0 %2483
      %2487 = vset.pattern.permute.xlu0 0
      %2488 = vperm.xlu0 %2487, %v2450
      %v2489 = vpop.permute.xlu0 %2488
      %2492 = vset.pattern.permute.xlu0 0
      %2493 = vperm.xlu0 %2492, %v2451
      %v2494 = vpop.permute.xlu0 %2493
      %2497 = vset.pattern.permute.xlu0 0
      %2498 = vperm.xlu0 %2497, %v2452
      %v2499 = vpop.permute.xlu0 %2498
      %2502 = vset.pattern.permute.xlu0 0
      %2503 = vperm.xlu0 %2502, %v2453
      %v2504 = vpop.permute.xlu0 %2503
      %2507 = vset.pattern.permute.xlu0 0
      %2508 = vperm.xlu0 %2507, %v2454
      %v2509 = vpop.permute.xlu0 %2508
      %2512 = vset.pattern.permute.xlu0 0
      %2513 = vperm.xlu0 %2512, %v2455
      %v2514 = vpop.permute.xlu0 %2513
      %v2516 = vmul.f32 %v2459, %v695
      %v2517 = vmul.f32 %v2459, %v696
      %v2518 = vmul.f32 %v2459, %v697
      %v2519 = vmul.f32 %v2464, %v698
      %v2520 = vmul.f32 %v2464, %v699
      %v2521 = vmul.f32 %v2464, %v700
      %v2522 = vmul.f32 %v2469, %v701
      %v2523 = vmul.f32 %v2469, %v702
      %v2524 = vmul.f32 %v2469, %v703
      %v2525 = vmul.f32 %v2474, %v704
      %v2526 = vmul.f32 %v2474, %v705
      %v2527 = vmul.f32 %v2474, %v706
      %v2528 = vmul.f32 %v2479, %v707
      %v2529 = vmul.f32 %v2479, %v708
      %v2530 = vmul.f32 %v2479, %v709
      %v2531 = vmul.f32 %v2484, %v710
      %v2532 = vmul.f32 %v2484, %v711
      %v2533 = vmul.f32 %v2484, %v712
      %v2534 = vmul.f32 %v2489, %v713
      %v2535 = vmul.f32 %v2489, %v714
      %v2536 = vmul.f32 %v2489, %v715
      %v2537 = vmul.f32 %v2494, %v716
      %v2538 = vmul.f32 %v2494, %v717
      %v2539 = vmul.f32 %v2494, %v718
      %v2540 = vmul.f32 %v2499, %v719
      %v2541 = vmul.f32 %v2499, %v720
      %v2542 = vmul.f32 %v2499, %v721
      %v2543 = vmul.f32 %v2504, %v722
      %v2544 = vmul.f32 %v2504, %v723
      %v2545 = vmul.f32 %v2504, %v724
      %v2546 = vmul.f32 %v2509, %v725
      %v2547 = vmul.f32 %v2509, %v726
      %v2548 = vmul.f32 %v2509, %v727
      %v2549 = vmul.f32 %v2514, %v728
      %v2550 = vmul.f32 %v2514, %v729
      %v2551 = vmul.f32 %v2514, %v730
      %2588 = vrot.lane.b32.xlu0 %v2516, 112
      %v2589 = vpop.permute.xlu0 %2588
      %2590 = vrot.lane.b32.xlu0 %v2517, 112
      %v2591 = vpop.permute.xlu0 %2590
      %2592 = vrot.lane.b32.xlu0 %v2518, 112
      %v2593 = vpop.permute.xlu0 %2592
      %2594 = vrot.lane.b32.xlu0 %v2519, 112
      %v2595 = vpop.permute.xlu0 %2594
      %2596 = vrot.lane.b32.xlu0 %v2520, 112
      %v2597 = vpop.permute.xlu0 %2596
      %2598 = vrot.lane.b32.xlu0 %v2521, 112
      %v2599 = vpop.permute.xlu0 %2598
      %2600 = vrot.lane.b32.xlu0 %v2522, 112
      %v2601 = vpop.permute.xlu0 %2600
      %2602 = vrot.lane.b32.xlu0 %v2523, 112
      %v2603 = vpop.permute.xlu0 %2602
      %2604 = vrot.lane.b32.xlu0 %v2524, 112
      %v2605 = vpop.permute.xlu0 %2604
      %2606 = vrot.lane.b32.xlu0 %v2525, 112
      %v2607 = vpop.permute.xlu0 %2606
      %2608 = vrot.lane.b32.xlu0 %v2526, 112
      %v2609 = vpop.permute.xlu0 %2608
      %2610 = vrot.lane.b32.xlu0 %v2527, 112
      %v2611 = vpop.permute.xlu0 %2610
      %2612 = vrot.lane.b32.xlu0 %v2528, 112
      %v2613 = vpop.permute.xlu0 %2612
      %2614 = vrot.lane.b32.xlu0 %v2529, 112
      %v2615 = vpop.permute.xlu0 %2614
      %2616 = vrot.lane.b32.xlu0 %v2530, 112
      %v2617 = vpop.permute.xlu0 %2616
      %2618 = vrot.lane.b32.xlu0 %v2531, 112
      %v2619 = vpop.permute.xlu0 %2618
      %2620 = vrot.lane.b32.xlu0 %v2532, 112
      %v2621 = vpop.permute.xlu0 %2620
      %2622 = vrot.lane.b32.xlu0 %v2533, 112
      %v2623 = vpop.permute.xlu0 %2622
      %2624 = vrot.lane.b32.xlu0 %v2534, 112
      %v2625 = vpop.permute.xlu0 %2624
      %2626 = vrot.lane.b32.xlu0 %v2535, 112
      %v2627 = vpop.permute.xlu0 %2626
      %2628 = vrot.lane.b32.xlu0 %v2536, 112
      %v2629 = vpop.permute.xlu0 %2628
      %2630 = vrot.lane.b32.xlu0 %v2537, 112
      %v2631 = vpop.permute.xlu0 %2630
      %2632 = vrot.lane.b32.xlu0 %v2538, 112
      %v2633 = vpop.permute.xlu0 %2632
      %2634 = vrot.lane.b32.xlu0 %v2539, 112
      %v2635 = vpop.permute.xlu0 %2634
      %2636 = vrot.lane.b32.xlu0 %v2540, 112
      %v2637 = vpop.permute.xlu0 %2636
      %2638 = vrot.lane.b32.xlu0 %v2541, 112
      %v2639 = vpop.permute.xlu0 %2638
      %2640 = vrot.lane.b32.xlu0 %v2542, 112
      %v2641 = vpop.permute.xlu0 %2640
      %2642 = vrot.lane.b32.xlu0 %v2543, 112
      %v2643 = vpop.permute.xlu0 %2642
      %2644 = vrot.lane.b32.xlu0 %v2544, 112
      %v2645 = vpop.permute.xlu0 %2644
      %2646 = vrot.lane.b32.xlu0 %v2545, 112
      %v2647 = vpop.permute.xlu0 %2646
      %2648 = vrot.lane.b32.xlu0 %v2546, 112
      %v2649 = vpop.permute.xlu0 %2648
      %2650 = vrot.lane.b32.xlu0 %v2547, 112
      %v2651 = vpop.permute.xlu0 %2650
      %2652 = vrot.lane.b32.xlu0 %v2548, 112
      %v2653 = vpop.permute.xlu0 %2652
      %2654 = vrot.lane.b32.xlu0 %v2549, 112
      %v2655 = vpop.permute.xlu0 %2654
      %2656 = vrot.lane.b32.xlu0 %v2550, 112
      %v2657 = vpop.permute.xlu0 %2656
      %2658 = vrot.lane.b32.xlu0 %v2551, 112
      %v2659 = vpop.permute.xlu0 %2658
      %v2660 = vsel %vm1044, %v2589, %v2591
      %v2661 = vsel %vm1044, %v2591, %v2593
      %v2662 = vsel %vm1044, %v2595, %v2597
      %v2663 = vsel %vm1044, %v2597, %v2599
      %v2664 = vsel %vm1044, %v2601, %v2603
      %v2665 = vsel %vm1044, %v2603, %v2605
      %v2666 = vsel %vm1044, %v2607, %v2609
      %v2667 = vsel %vm1044, %v2609, %v2611
      %v2668 = vsel %vm1044, %v2613, %v2615
      %v2669 = vsel %vm1044, %v2615, %v2617
      %v2670 = vsel %vm1044, %v2619, %v2621
      %v2671 = vsel %vm1044, %v2621, %v2623
      %v2672 = vsel %vm1044, %v2625, %v2627
      %v2673 = vsel %vm1044, %v2627, %v2629
      %v2674 = vsel %vm1044, %v2631, %v2633
      %v2675 = vsel %vm1044, %v2633, %v2635
      %v2676 = vsel %vm1044, %v2637, %v2639
      %v2677 = vsel %vm1044, %v2639, %v2641
      %v2678 = vsel %vm1044, %v2643, %v2645
      %v2679 = vsel %vm1044, %v2645, %v2647
      %v2680 = vsel %vm1044, %v2649, %v2651
      %v2681 = vsel %vm1044, %v2651, %v2653
      %v2682 = vsel %vm1044, %v2655, %v2657
      %v2683 = vsel %vm1044, %v2657, %v2659
      %v2720 = vadd.f32 %v2407, %v2660
      %v2721 = vadd.f32 %v2408, %v2661
      %v2722 = vadd.f32 %v2409, %v2593
      %v2723 = vadd.f32 %v2410, %v2662
      %v2724 = vadd.f32 %v2411, %v2663
      %v2725 = vadd.f32 %v2412, %v2599
      %v2726 = vadd.f32 %v2413, %v2664
      %v2727 = vadd.f32 %v2414, %v2665
      %v2728 = vadd.f32 %v2415, %v2605
      %v2729 = vadd.f32 %v2416, %v2666
      %v2730 = vadd.f32 %v2417, %v2667
      %v2731 = vadd.f32 %v2418, %v2611
      %v2732 = vadd.f32 %v2419, %v2668
      %v2733 = vadd.f32 %v2420, %v2669
      %v2734 = vadd.f32 %v2421, %v2617
      %v2735 = vadd.f32 %v2422, %v2670
      %v2736 = vadd.f32 %v2423, %v2671
      %v2737 = vadd.f32 %v2424, %v2623
      %v2738 = vadd.f32 %v2425, %v2672
      %v2739 = vadd.f32 %v2426, %v2673
      %v2740 = vadd.f32 %v2427, %v2629
      %v2741 = vadd.f32 %v2428, %v2674
      %v2742 = vadd.f32 %v2429, %v2675
      %v2743 = vadd.f32 %v2430, %v2635
      %v2744 = vadd.f32 %v2431, %v2676
      %v2745 = vadd.f32 %v2432, %v2677
      %v2746 = vadd.f32 %v2433, %v2641
      %v2747 = vadd.f32 %v2434, %v2678
      %v2748 = vadd.f32 %v2435, %v2679
      %v2749 = vadd.f32 %v2436, %v2647
      %v2750 = vadd.f32 %v2437, %v2680
      %v2751 = vadd.f32 %v2438, %v2681
      %v2752 = vadd.f32 %v2439, %v2653
      %v2753 = vadd.f32 %v2440, %v2682
      %v2754 = vadd.f32 %v2441, %v2683
      %v2755 = vadd.f32 %v2442, %v2659
      %s2756 = scalar_lea.vmem %s3, 768
      %v2757 = vld [vmem:[%s2756] sm:$0xff]
      %v2758 = vld [vmem:[%s2756 + $0x8] sm:$0xff]
      %v2759 = vld [vmem:[%s2756 + $0x10] sm:$0xff]
      %v2760 = vld [vmem:[%s2756 + $0x18] sm:$0xff]
      %v2761 = vld [vmem:[%s2756 + $0x20] sm:$0xff]
      %v2762 = vld [vmem:[%s2756 + $0x28] sm:$0xff]
      %v2763 = vld [vmem:[%s2756 + $0x30] sm:$0xff]
      %v2764 = vld [vmem:[%s2756 + $0x38] sm:$0xff]
      %v2765 = vld [vmem:[%s2756 + $0x40] sm:$0xff]
      %v2766 = vld [vmem:[%s2756 + $0x48] sm:$0xff]
      %v2767 = vld [vmem:[%s2756 + $0x50] sm:$0xff]
      %v2768 = vld [vmem:[%s2756 + $0x58] sm:$0xff]
      %2770 = vset.pattern.permute.xlu0 0
      %2771 = vperm.xlu0 %2770, %v2757
      %v2772 = vpop.permute.xlu0 %2771
      %2775 = vset.pattern.permute.xlu0 0
      %2776 = vperm.xlu0 %2775, %v2758
      %v2777 = vpop.permute.xlu0 %2776
      %2780 = vset.pattern.permute.xlu0 0
      %2781 = vperm.xlu0 %2780, %v2759
      %v2782 = vpop.permute.xlu0 %2781
      %2785 = vset.pattern.permute.xlu0 0
      %2786 = vperm.xlu0 %2785, %v2760
      %v2787 = vpop.permute.xlu0 %2786
      %2790 = vset.pattern.permute.xlu0 0
      %2791 = vperm.xlu0 %2790, %v2761
      %v2792 = vpop.permute.xlu0 %2791
      %2795 = vset.pattern.permute.xlu0 0
      %2796 = vperm.xlu0 %2795, %v2762
      %v2797 = vpop.permute.xlu0 %2796
      %2800 = vset.pattern.permute.xlu0 0
      %2801 = vperm.xlu0 %2800, %v2763
      %v2802 = vpop.permute.xlu0 %2801
      %2805 = vset.pattern.permute.xlu0 0
      %2806 = vperm.xlu0 %2805, %v2764
      %v2807 = vpop.permute.xlu0 %2806
      %2810 = vset.pattern.permute.xlu0 0
      %2811 = vperm.xlu0 %2810, %v2765
      %v2812 = vpop.permute.xlu0 %2811
      %2815 = vset.pattern.permute.xlu0 0
      %2816 = vperm.xlu0 %2815, %v2766
      %v2817 = vpop.permute.xlu0 %2816
      %2820 = vset.pattern.permute.xlu0 0
      %2821 = vperm.xlu0 %2820, %v2767
      %v2822 = vpop.permute.xlu0 %2821
      %2825 = vset.pattern.permute.xlu0 0
      %2826 = vperm.xlu0 %2825, %v2768
      %v2827 = vpop.permute.xlu0 %2826
      %v2829 = vmul.f32 %v2772, %v695
      %v2830 = vmul.f32 %v2772, %v696
      %v2831 = vmul.f32 %v2772, %v697
      %v2832 = vmul.f32 %v2777, %v698
      %v2833 = vmul.f32 %v2777, %v699
      %v2834 = vmul.f32 %v2777, %v700
      %v2835 = vmul.f32 %v2782, %v701
      %v2836 = vmul.f32 %v2782, %v702
      %v2837 = vmul.f32 %v2782, %v703
      %v2838 = vmul.f32 %v2787, %v704
      %v2839 = vmul.f32 %v2787, %v705
      %v2840 = vmul.f32 %v2787, %v706
      %v2841 = vmul.f32 %v2792, %v707
      %v2842 = vmul.f32 %v2792, %v708
      %v2843 = vmul.f32 %v2792, %v709
      %v2844 = vmul.f32 %v2797, %v710
      %v2845 = vmul.f32 %v2797, %v711
      %v2846 = vmul.f32 %v2797, %v712
      %v2847 = vmul.f32 %v2802, %v713
      %v2848 = vmul.f32 %v2802, %v714
      %v2849 = vmul.f32 %v2802, %v715
      %v2850 = vmul.f32 %v2807, %v716
      %v2851 = vmul.f32 %v2807, %v717
      %v2852 = vmul.f32 %v2807, %v718
      %v2853 = vmul.f32 %v2812, %v719
      %v2854 = vmul.f32 %v2812, %v720
      %v2855 = vmul.f32 %v2812, %v721
      %v2856 = vmul.f32 %v2817, %v722
      %v2857 = vmul.f32 %v2817, %v723
      %v2858 = vmul.f32 %v2817, %v724
      %v2859 = vmul.f32 %v2822, %v725
      %v2860 = vmul.f32 %v2822, %v726
      %v2861 = vmul.f32 %v2822, %v727
      %v2862 = vmul.f32 %v2827, %v728
      %v2863 = vmul.f32 %v2827, %v729
      %v2864 = vmul.f32 %v2827, %v730
      %2901 = vrot.lane.b32.xlu0 %v2829, 96
      %v2902 = vpop.permute.xlu0 %2901
      %2903 = vrot.lane.b32.xlu0 %v2830, 96
      %v2904 = vpop.permute.xlu0 %2903
      %2905 = vrot.lane.b32.xlu0 %v2831, 96
      %v2906 = vpop.permute.xlu0 %2905
      %2907 = vrot.lane.b32.xlu0 %v2832, 96
      %v2908 = vpop.permute.xlu0 %2907
      %2909 = vrot.lane.b32.xlu0 %v2833, 96
      %v2910 = vpop.permute.xlu0 %2909
      %2911 = vrot.lane.b32.xlu0 %v2834, 96
      %v2912 = vpop.permute.xlu0 %2911
      %2913 = vrot.lane.b32.xlu0 %v2835, 96
      %v2914 = vpop.permute.xlu0 %2913
      %2915 = vrot.lane.b32.xlu0 %v2836, 96
      %v2916 = vpop.permute.xlu0 %2915
      %2917 = vrot.lane.b32.xlu0 %v2837, 96
      %v2918 = vpop.permute.xlu0 %2917
      %2919 = vrot.lane.b32.xlu0 %v2838, 96
      %v2920 = vpop.permute.xlu0 %2919
      %2921 = vrot.lane.b32.xlu0 %v2839, 96
      %v2922 = vpop.permute.xlu0 %2921
      %2923 = vrot.lane.b32.xlu0 %v2840, 96
      %v2924 = vpop.permute.xlu0 %2923
      %2925 = vrot.lane.b32.xlu0 %v2841, 96
      %v2926 = vpop.permute.xlu0 %2925
      %2927 = vrot.lane.b32.xlu0 %v2842, 96
      %v2928 = vpop.permute.xlu0 %2927
      %2929 = vrot.lane.b32.xlu0 %v2843, 96
      %v2930 = vpop.permute.xlu0 %2929
      %2931 = vrot.lane.b32.xlu0 %v2844, 96
      %v2932 = vpop.permute.xlu0 %2931
      %2933 = vrot.lane.b32.xlu0 %v2845, 96
      %v2934 = vpop.permute.xlu0 %2933
      %2935 = vrot.lane.b32.xlu0 %v2846, 96
      %v2936 = vpop.permute.xlu0 %2935
      %2937 = vrot.lane.b32.xlu0 %v2847, 96
      %v2938 = vpop.permute.xlu0 %2937
      %2939 = vrot.lane.b32.xlu0 %v2848, 96
      %v2940 = vpop.permute.xlu0 %2939
      %2941 = vrot.lane.b32.xlu0 %v2849, 96
      %v2942 = vpop.permute.xlu0 %2941
      %2943 = vrot.lane.b32.xlu0 %v2850, 96
      %v2944 = vpop.permute.xlu0 %2943
      %2945 = vrot.lane.b32.xlu0 %v2851, 96
      %v2946 = vpop.permute.xlu0 %2945
      %2947 = vrot.lane.b32.xlu0 %v2852, 96
      %v2948 = vpop.permute.xlu0 %2947
      %2949 = vrot.lane.b32.xlu0 %v2853, 96
      %v2950 = vpop.permute.xlu0 %2949
      %2951 = vrot.lane.b32.xlu0 %v2854, 96
      %v2952 = vpop.permute.xlu0 %2951
      %2953 = vrot.lane.b32.xlu0 %v2855, 96
      %v2954 = vpop.permute.xlu0 %2953
      %2955 = vrot.lane.b32.xlu0 %v2856, 96
      %v2956 = vpop.permute.xlu0 %2955
      %2957 = vrot.lane.b32.xlu0 %v2857, 96
      %v2958 = vpop.permute.xlu0 %2957
      %2959 = vrot.lane.b32.xlu0 %v2858, 96
      %v2960 = vpop.permute.xlu0 %2959
      %2961 = vrot.lane.b32.xlu0 %v2859, 96
      %v2962 = vpop.permute.xlu0 %2961
      %2963 = vrot.lane.b32.xlu0 %v2860, 96
      %v2964 = vpop.permute.xlu0 %2963
      %2965 = vrot.lane.b32.xlu0 %v2861, 96
      %v2966 = vpop.permute.xlu0 %2965
      %2967 = vrot.lane.b32.xlu0 %v2862, 96
      %v2968 = vpop.permute.xlu0 %2967
      %2969 = vrot.lane.b32.xlu0 %v2863, 96
      %v2970 = vpop.permute.xlu0 %2969
      %2971 = vrot.lane.b32.xlu0 %v2864, 96
      %v2972 = vpop.permute.xlu0 %2971
      %v2973 = vsel %vm1358, %v2902, %v2904
      %v2974 = vsel %vm1358, %v2904, %v2906
      %v2975 = vsel %vm1358, %v2908, %v2910
      %v2976 = vsel %vm1358, %v2910, %v2912
      %v2977 = vsel %vm1358, %v2914, %v2916
      %v2978 = vsel %vm1358, %v2916, %v2918
      %v2979 = vsel %vm1358, %v2920, %v2922
      %v2980 = vsel %vm1358, %v2922, %v2924
      %v2981 = vsel %vm1358, %v2926, %v2928
      %v2982 = vsel %vm1358, %v2928, %v2930
      %v2983 = vsel %vm1358, %v2932, %v2934
      %v2984 = vsel %vm1358, %v2934, %v2936
      %v2985 = vsel %vm1358, %v2938, %v2940
      %v2986 = vsel %vm1358, %v2940, %v2942
      %v2987 = vsel %vm1358, %v2944, %v2946
      %v2988 = vsel %vm1358, %v2946, %v2948
      %v2989 = vsel %vm1358, %v2950, %v2952
      %v2990 = vsel %vm1358, %v2952, %v2954
      %v2991 = vsel %vm1358, %v2956, %v2958
      %v2992 = vsel %vm1358, %v2958, %v2960
      %v2993 = vsel %vm1358, %v2962, %v2964
      %v2994 = vsel %vm1358, %v2964, %v2966
      %v2995 = vsel %vm1358, %v2968, %v2970
      %v2996 = vsel %vm1358, %v2970, %v2972
      %v3033 = vadd.f32 %v2720, %v2973
      %v3034 = vadd.f32 %v2721, %v2974
      %v3035 = vadd.f32 %v2722, %v2906
      %v3036 = vadd.f32 %v2723, %v2975
      %v3037 = vadd.f32 %v2724, %v2976
      %v3038 = vadd.f32 %v2725, %v2912
      %v3039 = vadd.f32 %v2726, %v2977
      %v3040 = vadd.f32 %v2727, %v2978
      %v3041 = vadd.f32 %v2728, %v2918
      %v3042 = vadd.f32 %v2729, %v2979
      %v3043 = vadd.f32 %v2730, %v2980
      %v3044 = vadd.f32 %v2731, %v2924
      %v3045 = vadd.f32 %v2732, %v2981
      %v3046 = vadd.f32 %v2733, %v2982
      %v3047 = vadd.f32 %v2734, %v2930
      %v3048 = vadd.f32 %v2735, %v2983
      %v3049 = vadd.f32 %v2736, %v2984
      %v3050 = vadd.f32 %v2737, %v2936
      %v3051 = vadd.f32 %v2738, %v2985
      %v3052 = vadd.f32 %v2739, %v2986
      %v3053 = vadd.f32 %v2740, %v2942
      %v3054 = vadd.f32 %v2741, %v2987
      %v3055 = vadd.f32 %v2742, %v2988
      %v3056 = vadd.f32 %v2743, %v2948
      %v3057 = vadd.f32 %v2744, %v2989
      %v3058 = vadd.f32 %v2745, %v2990
      %v3059 = vadd.f32 %v2746, %v2954
      %v3060 = vadd.f32 %v2747, %v2991
      %v3061 = vadd.f32 %v2748, %v2992
      %v3062 = vadd.f32 %v2749, %v2960
      %v3063 = vadd.f32 %v2750, %v2993
      %v3064 = vadd.f32 %v2751, %v2994
      %v3065 = vadd.f32 %v2752, %v2966
      %v3066 = vadd.f32 %v2753, %v2995
      %v3067 = vadd.f32 %v2754, %v2996
      %v3068 = vadd.f32 %v2755, %v2972
      %3105 = vrot.lane.b32.xlu0 %v3033, 126
      %v3106 = vpop.permute.xlu0 %3105
      %3107 = vrot.lane.b32.xlu0 %v3034, 126
      %v3108 = vpop.permute.xlu0 %3107
      %3109 = vrot.lane.b32.xlu0 %v3035, 126
      %v3110 = vpop.permute.xlu0 %3109
      %3111 = vrot.lane.b32.xlu0 %v3036, 126
      %v3112 = vpop.permute.xlu0 %3111
      %3113 = vrot.lane.b32.xlu0 %v3037, 126
      %v3114 = vpop.permute.xlu0 %3113
      %3115 = vrot.lane.b32.xlu0 %v3038, 126
      %v3116 = vpop.permute.xlu0 %3115
      %3117 = vrot.lane.b32.xlu0 %v3039, 126
      %v3118 = vpop.permute.xlu0 %3117
      %3119 = vrot.lane.b32.xlu0 %v3040, 126
      %v3120 = vpop.permute.xlu0 %3119
      %3121 = vrot.lane.b32.xlu0 %v3041, 126
      %v3122 = vpop.permute.xlu0 %3121
      %3123 = vrot.lane.b32.xlu0 %v3042, 126
      %v3124 = vpop.permute.xlu0 %3123
      %3125 = vrot.lane.b32.xlu0 %v3043, 126
      %v3126 = vpop.permute.xlu0 %3125
      %3127 = vrot.lane.b32.xlu0 %v3044, 126
      %v3128 = vpop.permute.xlu0 %3127
      %3129 = vrot.lane.b32.xlu0 %v3045, 126
      %v3130 = vpop.permute.xlu0 %3129
      %3131 = vrot.lane.b32.xlu0 %v3046, 126
      %v3132 = vpop.permute.xlu0 %3131
      %3133 = vrot.lane.b32.xlu0 %v3047, 126
      %v3134 = vpop.permute.xlu0 %3133
      %3135 = vrot.lane.b32.xlu0 %v3048, 126
      %v3136 = vpop.permute.xlu0 %3135
      %3137 = vrot.lane.b32.xlu0 %v3049, 126
      %v3138 = vpop.permute.xlu0 %3137
      %3139 = vrot.lane.b32.xlu0 %v3050, 126
      %v3140 = vpop.permute.xlu0 %3139
      %3141 = vrot.lane.b32.xlu0 %v3051, 126
      %v3142 = vpop.permute.xlu0 %3141
      %3143 = vrot.lane.b32.xlu0 %v3052, 126
      %v3144 = vpop.permute.xlu0 %3143
      %3145 = vrot.lane.b32.xlu0 %v3053, 126
      %v3146 = vpop.permute.xlu0 %3145
      %3147 = vrot.lane.b32.xlu0 %v3054, 126
      %v3148 = vpop.permute.xlu0 %3147
      %3149 = vrot.lane.b32.xlu0 %v3055, 126
      %v3150 = vpop.permute.xlu0 %3149
      %3151 = vrot.lane.b32.xlu0 %v3056, 126
      %v3152 = vpop.permute.xlu0 %3151
      %3153 = vrot.lane.b32.xlu0 %v3057, 126
      %v3154 = vpop.permute.xlu0 %3153
      %3155 = vrot.lane.b32.xlu0 %v3058, 126
      %v3156 = vpop.permute.xlu0 %3155
      %3157 = vrot.lane.b32.xlu0 %v3059, 126
      %v3158 = vpop.permute.xlu0 %3157
      %3159 = vrot.lane.b32.xlu0 %v3060, 126
      %v3160 = vpop.permute.xlu0 %3159
      %3161 = vrot.lane.b32.xlu0 %v3061, 126
      %v3162 = vpop.permute.xlu0 %3161
      %3163 = vrot.lane.b32.xlu0 %v3062, 126
      %v3164 = vpop.permute.xlu0 %3163
      %3165 = vrot.lane.b32.xlu0 %v3063, 126
      %v3166 = vpop.permute.xlu0 %3165
      %3167 = vrot.lane.b32.xlu0 %v3064, 126
      %v3168 = vpop.permute.xlu0 %3167
      %3169 = vrot.lane.b32.xlu0 %v3065, 126
      %v3170 = vpop.permute.xlu0 %3169
      %3171 = vrot.lane.b32.xlu0 %v3066, 126
      %v3172 = vpop.permute.xlu0 %3171
      %3173 = vrot.lane.b32.xlu0 %v3067, 126
      %v3174 = vpop.permute.xlu0 %3173
      %3175 = vrot.lane.b32.xlu0 %v3068, 126
      %v3176 = vpop.permute.xlu0 %3175
      %vm3177 = vcmask 1031168
      %v3178 = vsel %vm3177, %v3106, %v3108
      %v3179 = vsel %vm3177, %v3108, %v3110
      %v3180 = vsel %vm3177, %v3112, %v3114
      %v3181 = vsel %vm3177, %v3114, %v3116
      %v3182 = vsel %vm3177, %v3118, %v3120
      %v3183 = vsel %vm3177, %v3120, %v3122
      %v3184 = vsel %vm3177, %v3124, %v3126
      %v3185 = vsel %vm3177, %v3126, %v3128
      %v3186 = vsel %vm3177, %v3130, %v3132
      %v3187 = vsel %vm3177, %v3132, %v3134
      %v3188 = vsel %vm3177, %v3136, %v3138
      %v3189 = vsel %vm3177, %v3138, %v3140
      %v3190 = vsel %vm3177, %v3142, %v3144
      %v3191 = vsel %vm3177, %v3144, %v3146
      %v3192 = vsel %vm3177, %v3148, %v3150
      %v3193 = vsel %vm3177, %v3150, %v3152
      %v3194 = vsel %vm3177, %v3154, %v3156
      %v3195 = vsel %vm3177, %v3156, %v3158
      %v3196 = vsel %vm3177, %v3160, %v3162
      %v3197 = vsel %vm3177, %v3162, %v3164
      %v3198 = vsel %vm3177, %v3166, %v3168
      %v3199 = vsel %vm3177, %v3168, %v3170
      %v3200 = vsel %vm3177, %v3172, %v3174
      %v3201 = vsel %vm3177, %v3174, %v3176
      %v3226 = vmul.f32 %v391, %v3178
      %v3227 = vmul.f32 %v392, %v3179
      %v3228 = vmul.f32 %v391, %v3180
      %v3229 = vmul.f32 %v392, %v3181
      %v3230 = vmul.f32 %v391, %v3182
      %v3231 = vmul.f32 %v392, %v3183
      %v3232 = vmul.f32 %v391, %v3184
      %v3233 = vmul.f32 %v392, %v3185
      %v3234 = vmul.f32 %v391, %v3186
      %v3235 = vmul.f32 %v392, %v3187
      %v3236 = vmul.f32 %v391, %v3188
      %v3237 = vmul.f32 %v392, %v3189
      %v3238 = vmul.f32 %v391, %v3190
      %v3239 = vmul.f32 %v392, %v3191
      %v3240 = vmul.f32 %v391, %v3192
      %v3241 = vmul.f32 %v392, %v3193
      %v3242 = vmul.f32 %v391, %v3194
      %v3243 = vmul.f32 %v392, %v3195
      %v3244 = vmul.f32 %v391, %v3196
      %v3245 = vmul.f32 %v392, %v3197
      %v3246 = vmul.f32 %v391, %v3198
      %v3247 = vmul.f32 %v392, %v3199
      %v3248 = vmul.f32 %v391, %v3200
      %v3249 = vmul.f32 %v392, %v3201
      %3274 = vrot.lane.b32.xlu0 %v3226, 1
      %v3275 = vpop.permute.xlu0 %3274
      %3276 = vrot.lane.b32.xlu0 %v3227, 1
      %v3277 = vpop.permute.xlu0 %3276
      %3278 = vrot.lane.b32.xlu0 %v3228, 1
      %v3279 = vpop.permute.xlu0 %3278
      %3280 = vrot.lane.b32.xlu0 %v3229, 1
      %v3281 = vpop.permute.xlu0 %3280
      %3282 = vrot.lane.b32.xlu0 %v3230, 1
      %v3283 = vpop.permute.xlu0 %3282
      %3284 = vrot.lane.b32.xlu0 %v3231, 1
      %v3285 = vpop.permute.xlu0 %3284
      %3286 = vrot.lane.b32.xlu0 %v3232, 1
      %v3287 = vpop.permute.xlu0 %3286
      %3288 = vrot.lane.b32.xlu0 %v3233, 1
      %v3289 = vpop.permute.xlu0 %3288
      %3290 = vrot.lane.b32.xlu0 %v3234, 1
      %v3291 = vpop.permute.xlu0 %3290
      %3292 = vrot.lane.b32.xlu0 %v3235, 1
      %v3293 = vpop.permute.xlu0 %3292
      %3294 = vrot.lane.b32.xlu0 %v3236, 1
      %v3295 = vpop.permute.xlu0 %3294
      %3296 = vrot.lane.b32.xlu0 %v3237, 1
      %v3297 = vpop.permute.xlu0 %3296
      %3298 = vrot.lane.b32.xlu0 %v3238, 1
      %v3299 = vpop.permute.xlu0 %3298
      %3300 = vrot.lane.b32.xlu0 %v3239, 1
      %v3301 = vpop.permute.xlu0 %3300
      %3302 = vrot.lane.b32.xlu0 %v3240, 1
      %v3303 = vpop.permute.xlu0 %3302
      %3304 = vrot.lane.b32.xlu0 %v3241, 1
      %v3305 = vpop.permute.xlu0 %3304
      %3306 = vrot.lane.b32.xlu0 %v3242, 1
      %v3307 = vpop.permute.xlu0 %3306
      %3308 = vrot.lane.b32.xlu0 %v3243, 1
      %v3309 = vpop.permute.xlu0 %3308
      %3310 = vrot.lane.b32.xlu0 %v3244, 1
      %v3311 = vpop.permute.xlu0 %3310
      %3312 = vrot.lane.b32.xlu0 %v3245, 1
      %v3313 = vpop.permute.xlu0 %3312
      %3314 = vrot.lane.b32.xlu0 %v3246, 1
      %v3315 = vpop.permute.xlu0 %3314
      %3316 = vrot.lane.b32.xlu0 %v3247, 1
      %v3317 = vpop.permute.xlu0 %3316
      %3318 = vrot.lane.b32.xlu0 %v3248, 1
      %v3319 = vpop.permute.xlu0 %3318
      %3320 = vrot.lane.b32.xlu0 %v3249, 1
      %v3321 = vpop.permute.xlu0 %3320
      %v3322 = vsel %vm2249, %v3275, %v3277
      %v3323 = vsel %vm2249, %v3279, %v3281
      %v3324 = vsel %vm2249, %v3283, %v3285
      %v3325 = vsel %vm2249, %v3287, %v3289
      %v3326 = vsel %vm2249, %v3291, %v3293
      %v3327 = vsel %vm2249, %v3295, %v3297
      %v3328 = vsel %vm2249, %v3299, %v3301
      %v3329 = vsel %vm2249, %v3303, %v3305
      %v3330 = vsel %vm2249, %v3307, %v3309
      %v3331 = vsel %vm2249, %v3311, %v3313
      %v3332 = vsel %vm2249, %v3315, %v3317
      %v3333 = vsel %vm2249, %v3319, %v3321
      %v3370 = vadd.f32 %v2298, %v3275
      %v3371 = vadd.f32 %v2299, %v3322
      %v3372 = vadd.f32 %v2300, %v3277
      %v3373 = vadd.f32 %v2301, %v3279
      %v3374 = vadd.f32 %v2302, %v3323
      %v3375 = vadd.f32 %v2303, %v3281
      %v3376 = vadd.f32 %v2304, %v3283
      %v3377 = vadd.f32 %v2305, %v3324
      %v3378 = vadd.f32 %v2306, %v3285
      %v3379 = vadd.f32 %v2307, %v3287
      %v3380 = vadd.f32 %v2308, %v3325
      %v3381 = vadd.f32 %v2309, %v3289
      %v3382 = vadd.f32 %v2310, %v3291
      %v3383 = vadd.f32 %v2311, %v3326
      %v3384 = vadd.f32 %v2312, %v3293
      %v3385 = vadd.f32 %v2313, %v3295
      %v3386 = vadd.f32 %v2314, %v3327
      %v3387 = vadd.f32 %v2315, %v3297
      %v3388 = vadd.f32 %v2316, %v3299
      %v3389 = vadd.f32 %v2317, %v3328
      %v3390 = vadd.f32 %v2318, %v3301
      %v3391 = vadd.f32 %v2319, %v3303
      %v3392 = vadd.f32 %v2320, %v3329
      %v3393 = vadd.f32 %v2321, %v3305
      %v3394 = vadd.f32 %v2322, %v3307
      %v3395 = vadd.f32 %v2323, %v3330
      %v3396 = vadd.f32 %v2324, %v3309
      %v3397 = vadd.f32 %v2325, %v3311
      %v3398 = vadd.f32 %v2326, %v3331
      %v3399 = vadd.f32 %v2327, %v3313
      %v3400 = vadd.f32 %v2328, %v3315
      %v3401 = vadd.f32 %v2329, %v3332
      %v3402 = vadd.f32 %v2330, %v3317
      %v3403 = vadd.f32 %v2331, %v3319
      %v3404 = vadd.f32 %v2332, %v3333
      %v3405 = vadd.f32 %v2333, %v3321
      %3442 = vrot.lane.b32.xlu0 %v3370, 127
      %v3443 = vpop.permute.xlu0 %3442
      %3444 = vrot.lane.b32.xlu0 %v3371, 127
      %v3445 = vpop.permute.xlu0 %3444
      %3446 = vrot.lane.b32.xlu0 %v3372, 127
      %v3447 = vpop.permute.xlu0 %3446
      %3448 = vrot.lane.b32.xlu0 %v3373, 127
      %v3449 = vpop.permute.xlu0 %3448
      %3450 = vrot.lane.b32.xlu0 %v3374, 127
      %v3451 = vpop.permute.xlu0 %3450
      %3452 = vrot.lane.b32.xlu0 %v3375, 127
      %v3453 = vpop.permute.xlu0 %3452
      %3454 = vrot.lane.b32.xlu0 %v3376, 127
      %v3455 = vpop.permute.xlu0 %3454
      %3456 = vrot.lane.b32.xlu0 %v3377, 127
      %v3457 = vpop.permute.xlu0 %3456
      %3458 = vrot.lane.b32.xlu0 %v3378, 127
      %v3459 = vpop.permute.xlu0 %3458
      %3460 = vrot.lane.b32.xlu0 %v3379, 127
      %v3461 = vpop.permute.xlu0 %3460
      %3462 = vrot.lane.b32.xlu0 %v3380, 127
      %v3463 = vpop.permute.xlu0 %3462
      %3464 = vrot.lane.b32.xlu0 %v3381, 127
      %v3465 = vpop.permute.xlu0 %3464
      %3466 = vrot.lane.b32.xlu0 %v3382, 127
      %v3467 = vpop.permute.xlu0 %3466
      %3468 = vrot.lane.b32.xlu0 %v3383, 127
      %v3469 = vpop.permute.xlu0 %3468
      %3470 = vrot.lane.b32.xlu0 %v3384, 127
      %v3471 = vpop.permute.xlu0 %3470
      %3472 = vrot.lane.b32.xlu0 %v3385, 127
      %v3473 = vpop.permute.xlu0 %3472
      %3474 = vrot.lane.b32.xlu0 %v3386, 127
      %v3475 = vpop.permute.xlu0 %3474
      %3476 = vrot.lane.b32.xlu0 %v3387, 127
      %v3477 = vpop.permute.xlu0 %3476
      %3478 = vrot.lane.b32.xlu0 %v3388, 127
      %v3479 = vpop.permute.xlu0 %3478
      %3480 = vrot.lane.b32.xlu0 %v3389, 127
      %v3481 = vpop.permute.xlu0 %3480
      %3482 = vrot.lane.b32.xlu0 %v3390, 127
      %v3483 = vpop.permute.xlu0 %3482
      %3484 = vrot.lane.b32.xlu0 %v3391, 127
      %v3485 = vpop.permute.xlu0 %3484
      %3486 = vrot.lane.b32.xlu0 %v3392, 127
      %v3487 = vpop.permute.xlu0 %3486
      %3488 = vrot.lane.b32.xlu0 %v3393, 127
      %v3489 = vpop.permute.xlu0 %3488
      %3490 = vrot.lane.b32.xlu0 %v3394, 127
      %v3491 = vpop.permute.xlu0 %3490
      %3492 = vrot.lane.b32.xlu0 %v3395, 127
      %v3493 = vpop.permute.xlu0 %3492
      %3494 = vrot.lane.b32.xlu0 %v3396, 127
      %v3495 = vpop.permute.xlu0 %3494
      %3496 = vrot.lane.b32.xlu0 %v3397, 127
      %v3497 = vpop.permute.xlu0 %3496
      %3498 = vrot.lane.b32.xlu0 %v3398, 127
      %v3499 = vpop.permute.xlu0 %3498
      %3500 = vrot.lane.b32.xlu0 %v3399, 127
      %v3501 = vpop.permute.xlu0 %3500
      %3502 = vrot.lane.b32.xlu0 %v3400, 127
      %v3503 = vpop.permute.xlu0 %3502
      %3504 = vrot.lane.b32.xlu0 %v3401, 127
      %v3505 = vpop.permute.xlu0 %3504
      %3506 = vrot.lane.b32.xlu0 %v3402, 127
      %v3507 = vpop.permute.xlu0 %3506
      %3508 = vrot.lane.b32.xlu0 %v3403, 127
      %v3509 = vpop.permute.xlu0 %3508
      %3510 = vrot.lane.b32.xlu0 %v3404, 127
      %v3511 = vpop.permute.xlu0 %3510
      %3512 = vrot.lane.b32.xlu0 %v3405, 127
      %v3513 = vpop.permute.xlu0 %3512
      %vm3514 = vcmask 1039360
      %v3515 = vsel %vm3514, %v3443, %v3445
      %v3516 = vsel %vm3514, %v3445, %v3447
      %v3517 = vsel %vm3514, %v3449, %v3451
      %v3518 = vsel %vm3514, %v3451, %v3453
      %v3519 = vsel %vm3514, %v3455, %v3457
      %v3520 = vsel %vm3514, %v3457, %v3459
      %v3521 = vsel %vm3514, %v3461, %v3463
      %v3522 = vsel %vm3514, %v3463, %v3465
      %v3523 = vsel %vm3514, %v3467, %v3469
      %v3524 = vsel %vm3514, %v3469, %v3471
      %v3525 = vsel %vm3514, %v3473, %v3475
      %v3526 = vsel %vm3514, %v3475, %v3477
      %v3527 = vsel %vm3514, %v3479, %v3481
      %v3528 = vsel %vm3514, %v3481, %v3483
      %v3529 = vsel %vm3514, %v3485, %v3487
      %v3530 = vsel %vm3514, %v3487, %v3489
      %v3531 = vsel %vm3514, %v3491, %v3493
      %v3532 = vsel %vm3514, %v3493, %v3495
      %v3533 = vsel %vm3514, %v3497, %v3499
      %v3534 = vsel %vm3514, %v3499, %v3501
      %v3535 = vsel %vm3514, %v3503, %v3505
      %v3536 = vsel %vm3514, %v3505, %v3507
      %v3537 = vsel %vm3514, %v3509, %v3511
      %v3538 = vsel %vm3514, %v3511, %v3513
      %3563 = vst [vmem:[#allocation3] sm:$0xff] %v3515
      %3564 = vst [vmem:[#allocation3 + $0x8] sm:$0xff] %v3516
      %3565 = vst [vmem:[#allocation3 + $0x10] sm:$0xff] %v3517
      %3566 = vst [vmem:[#allocation3 + $0x18] sm:$0xff] %v3518
      %3567 = vst [vmem:[#allocation3 + $0x20] sm:$0xff] %v3519
      %3568 = vst [vmem:[#allocation3 + $0x28] sm:$0xff] %v3520
      %3569 = vst [vmem:[#allocation3 + $0x30] sm:$0xff] %v3521
      %3570 = vst [vmem:[#allocation3 + $0x38] sm:$0xff] %v3522
      %3571 = vst [vmem:[#allocation3 + $0x40] sm:$0xff] %v3523
      %3572 = vst [vmem:[#allocation3 + $0x48] sm:$0xff] %v3524
      %3573 = vst [vmem:[#allocation3 + $0x50] sm:$0xff] %v3525
      %3574 = vst [vmem:[#allocation3 + $0x58] sm:$0xff] %v3526
      %3575 = vst [vmem:[#allocation3 + $0x60] sm:$0xff] %v3527
      %3576 = vst [vmem:[#allocation3 + $0x68] sm:$0xff] %v3528
      %3577 = vst [vmem:[#allocation3 + $0x70] sm:$0xff] %v3529
      %3578 = vst [vmem:[#allocation3 + $0x78] sm:$0xff] %v3530
      %3579 = vst [vmem:[#allocation3 + $0x80] sm:$0xff] %v3531
      %3580 = vst [vmem:[#allocation3 + $0x88] sm:$0xff] %v3532
      %3581 = vst [vmem:[#allocation3 + $0x90] sm:$0xff] %v3533
      %3582 = vst [vmem:[#allocation3 + $0x98] sm:$0xff] %v3534
      %3583 = vst [vmem:[#allocation3 + $0xa0] sm:$0xff] %v3535
      %3584 = vst [vmem:[#allocation3 + $0xa8] sm:$0xff] %v3536
      %3585 = vst [vmem:[#allocation3 + $0xb0] sm:$0xff] %v3537
      %3586 = vst [vmem:[#allocation3 + $0xb8] sm:$0xff] %v3538
      %v3587 = vld [vmem:[%s2] sm:$0xf]
      %v3588 = vld [vmem:[%s2 + $0x4] sm:$0xf]
      %v3589 = vld [vmem:[%s2 + $0x8] sm:$0xf]
      %v3590 = vld [vmem:[%s2 + $0xc] sm:$0xf]
      %v3591 = vld [vmem:[%s2 + $0x10] sm:$0xf]
      %v3592 = vld [vmem:[%s2 + $0x14] sm:$0xf]
      %v3593 = vld [vmem:[%s2 + $0x18] sm:$0xf]
      %v3594 = vld [vmem:[%s2 + $0x1c] sm:$0xf]
      %v3595 = vld [vmem:[%s2 + $0x20] sm:$0xf]
      %v3596 = vld [vmem:[%s2 + $0x24] sm:$0xf]
      %v3597 = vld [vmem:[%s2 + $0x28] sm:$0xf]
      %v3598 = vld [vmem:[%s2 + $0x2c] sm:$0xf]
      %v3599 = vld [vmem:[%s347] sm:$0xff]
      %v3600 = vld [vmem:[%s347 + $0x8] sm:$0xff]
      %v3601 = vld [vmem:[%s347 + $0x10] sm:$0xff]
      %v3602 = vld [vmem:[%s347 + $0x18] sm:$0xff]
      %v3603 = vld [vmem:[%s347 + $0x20] sm:$0xff]
      %v3604 = vld [vmem:[%s347 + $0x28] sm:$0xff]
      %v3605 = vld [vmem:[%s347 + $0x30] sm:$0xff]
      %v3606 = vld [vmem:[%s347 + $0x38] sm:$0xff]
      %v3607 = vld [vmem:[%s347 + $0x40] sm:$0xff]
      %v3608 = vld [vmem:[%s347 + $0x48] sm:$0xff]
      %v3609 = vld [vmem:[%s347 + $0x50] sm:$0xff]
      %v3610 = vld [vmem:[%s347 + $0x58] sm:$0xff]
      %v3611 = vpack.c.bf16 %v3602, %v3599
      %v3612 = vpack.c.bf16 %v3603, %v3600
      %v3613 = vpack.c.bf16 %v3604, %v3601
      %v3614 = vpack.c.bf16 %v3608, %v3605
      %v3615 = vpack.c.bf16 %v3609, %v3606
      %v3616 = vpack.c.bf16 %v3610, %v3607
      %v3629 = vunpack.c.l.b16 %v3587
      %v3630 = vunpack.c.l.b16 %v3588
      %v3631 = vunpack.c.l.b16 %v3589
      %v3632 = vunpack.c.l.b16 %v3590
      %v3633 = vunpack.c.l.b16 %v3591
      %v3634 = vunpack.c.l.b16 %v3592
      %v3635 = vunpack.c.l.b16 %v3593
      %v3636 = vunpack.c.l.b16 %v3594
      %v3637 = vunpack.c.l.b16 %v3595
      %v3638 = vunpack.c.l.b16 %v3596
      %v3639 = vunpack.c.l.b16 %v3597
      %v3640 = vunpack.c.l.b16 %v3598
      %v3641 = vpack.c.b16 %v3630, %v3629
      %v3642 = vpack.c.b16 %v3632, %v3631
      %v3643 = vpack.c.b16 %v3634, %v3633
      %v3644 = vpack.c.b16 %v3636, %v3635
      %v3645 = vpack.c.b16 %v3638, %v3637
      %v3646 = vpack.c.b16 %v3640, %v3639
      %v3648 = vsel %vm453, %v3641, 0
      %v3651 = vsel %vm453, %v3642, 0
      %v3654 = vsel %vm453, %v3643, 0
      %v3657 = vsel %vm453, %v3644, 0
      %v3660 = vsel %vm453, %v3645, 0
      %v3663 = vsel %vm453, %v3646, 0
      %3665 = vmatprep.subr.bf16.mxu0 %v3612
      %3666 = vmatpush1.bf16.msra.mxu0 %v3611
      %3667 = vmatprep.subr.bf16.mxu0 %v3615
      %3668 = vmatpush1.bf16.msra.mxu0 %v3614
      %3669 = vmatprep.subr.bf16.mxu0 0
      %3670 = vmatpush1.bf16.msra.mxu0 0
      %3671 = vmatprep.subr.bf16.mxu0 0
      %3672 = vmatpush1.bf16.msra.mxu0 0
      %3673 = vmatprep.subr.bf16.mxu0 0
      %3674 = vmatpush1.bf16.msra.mxu0 0
      %3675 = vmatprep.subr.bf16.mxu0 0
      %3676 = vmatpush1.bf16.msra.mxu0 0
      %3677 = vmatprep.subr.bf16.mxu0 0
      %3678 = vmatpush1.bf16.msra.mxu0 0
      %3679 = vmatprep.subr.bf16.mxu0 0
      %3680 = vmatpush1.bf16.msra.mxu0 0
      %3681 = vmatprep.subr.bf16.mxu0 0
      %3682 = vmatpush1.bf16.msra.mxu0 0
      %3683 = vmatprep.subr.bf16.mxu0 0
      %3684 = vmatpush1.bf16.msra.mxu0 0
      %3685 = vmatprep.subr.bf16.mxu0 0
      %3686 = vmatpush1.bf16.msra.mxu0 0
      %3687 = vmatprep.subr.bf16.mxu0 0
      %3688 = vmatpush1.bf16.msra.mxu0 0
      %3689 = vmatprep.subr.bf16.mxu0 0
      %3690 = vmatpush1.bf16.msra.mxu0 0
      %3691 = vmatprep.subr.bf16.mxu0 0
      %3692 = vmatpush1.bf16.msra.mxu0 0
      %3693 = vmatprep.subr.bf16.mxu0 0
      %3694 = vmatpush1.bf16.msra.mxu0 0
      %3695 = vmatprep.subr.bf16.mxu0 0
      %3696 = vmatpush1.bf16.msra.mxu0 0
      %3697 = vmatprep.mubr.bf16.mxu0 0
      %3698 = vmatmul.mubr.bf16.gmra.mrb[0].mxu0 %v3648
      %v3699 = vpop.f32.mrb[0].mxu0
      %v3700 = vadd.f32 0.0, %v3699
      %v3701 = vpop.f32.mrb[0].mxu0
      %v3702 = vadd.f32 0.0, %v3701
      %v3703 = vpop.f32.mrb[0].mxu0
      %v3704 = vadd.f32 0.0, %v3703
      %v3705 = vpop.f32.mrb[0].mxu0
      %v3706 = vadd.f32 0.0, %v3705
      %3707 = vmatprep.mubr.bf16.mxu0 0
      %3708 = vmatmul.mubr.bf16.gmra.mrb[0].mxu0 %v3651
      %v3709 = vpop.f32.mrb[0].mxu0
      %v3710 = vadd.f32 0.0, %v3709
      %v3711 = vpop.f32.mrb[0].mxu0
      %v3712 = vadd.f32 0.0, %v3711
      %v3713 = vpop.f32.mrb[0].mxu0
      %v3714 = vadd.f32 0.0, %v3713
      %v3715 = vpop.f32.mrb[0].mxu0
      %v3716 = vadd.f32 0.0, %v3715
      %3717 = vmatprep.mubr.bf16.mxu0 0
      %3718 = vmatmul.mubr.bf16.gmra.mrb[0].mxu0 %v3654
      %v3719 = vpop.f32.mrb[0].mxu0
      %v3720 = vadd.f32 0.0, %v3719
      %v3721 = vpop.f32.mrb[0].mxu0
      %v3722 = vadd.f32 0.0, %v3721
      %v3723 = vpop.f32.mrb[0].mxu0
      %v3724 = vadd.f32 0.0, %v3723
      %v3725 = vpop.f32.mrb[0].mxu0
      %v3726 = vadd.f32 0.0, %v3725
      %3727 = vmatprep.mubr.bf16.mxu0 0
      %3728 = vmatmul.mubr.bf16.gmra.mrb[0].mxu0 %v3657
      %v3729 = vpop.f32.mrb[0].mxu0
      %v3730 = vadd.f32 0.0, %v3729
      %v3731 = vpop.f32.mrb[0].mxu0
      %v3732 = vadd.f32 0.0, %v3731
      %v3733 = vpop.f32.mrb[0].mxu0
      %v3734 = vadd.f32 0.0, %v3733
      %v3735 = vpop.f32.mrb[0].mxu0
      %v3736 = vadd.f32 0.0, %v3735
      %3737 = vmatprep.mubr.bf16.mxu0 0
      %3738 = vmatmul.mubr.bf16.gmra.mrb[0].mxu0 %v3660
      %v3739 = vpop.f32.mrb[0].mxu0
      %v3740 = vadd.f32 0.0, %v3739
      %v3741 = vpop.f32.mrb[0].mxu0
      %v3742 = vadd.f32 0.0, %v3741
      %v3743 = vpop.f32.mrb[0].mxu0
      %v3744 = vadd.f32 0.0, %v3743
      %v3745 = vpop.f32.mrb[0].mxu0
      %v3746 = vadd.f32 0.0, %v3745
      %3747 = vmatprep.mubr.bf16.mxu0 0
      %3748 = vmatmul.mubr.bf16.gmra.mrb[0].mxu0 %v3663
      %v3749 = vpop.f32.mrb[0].mxu0
      %v3750 = vadd.f32 0.0, %v3749
      %v3751 = vpop.f32.mrb[0].mxu0
      %v3752 = vadd.f32 0.0, %v3751
      %v3753 = vpop.f32.mrb[0].mxu0
      %v3754 = vadd.f32 0.0, %v3753
      %v3755 = vpop.f32.mrb[0].mxu0
      %v3756 = vadd.f32 0.0, %v3755
      %3757 = vdwg.mxu0
      %3758 = vmatprep.subr.bf16.mxu0 0
      %3759 = vmatpush1.bf16.msra.mxu0 %v3613
      %3760 = vmatprep.subr.bf16.mxu0 0
      %3761 = vmatpush1.bf16.msra.mxu0 %v3616
      %3762 = vmatprep.subr.bf16.mxu0 0
      %3763 = vmatpush1.bf16.msra.mxu0 0
      %3764 = vmatprep.subr.bf16.mxu0 0
      %3765 = vmatpush1.bf16.msra.mxu0 0
      %3766 = vmatprep.subr.bf16.mxu0 0
      %3767 = vmatpush1.bf16.msra.mxu0 0
      %3768 = vmatprep.subr.bf16.mxu0 0
      %3769 = vmatpush1.bf16.msra.mxu0 0
      %3770 = vmatprep.subr.bf16.mxu0 0
      %3771 = vmatpush1.bf16.msra.mxu0 0
      %3772 = vmatprep.subr.bf16.mxu0 0
      %3773 = vmatpush1.bf16.msra.mxu0 0
      %3774 = vmatprep.subr.bf16.mxu0 0
      %3775 = vmatpush1.bf16.msra.mxu0 0
      %3776 = vmatprep.subr.bf16.mxu0 0
      %3777 = vmatpush1.bf16.msra.mxu0 0
      %3778 = vmatprep.subr.bf16.mxu0 0
      %3779 = vmatpush1.bf16.msra.mxu0 0
      %3780 = vmatprep.subr.bf16.mxu0 0
      %3781 = vmatpush1.bf16.msra.mxu0 0
      %3782 = vmatprep.subr.bf16.mxu0 0
      %3783 = vmatpush1.bf16.msra.mxu0 0
      %3784 = vmatprep.subr.bf16.mxu0 0
      %3785 = vmatpush1.bf16.msra.mxu0 0
      %3786 = vmatprep.subr.bf16.mxu0 0
      %3787 = vmatpush1.bf16.msra.mxu0 0
      %3788 = vmatprep.subr.bf16.mxu0 0
      %3789 = vmatpush1.bf16.msra.mxu0 0
      %3790 = vmatprep.mubr.bf16.mxu0 0
      %3791 = vmatmul.mubr.bf16.gmra.mrb[0].mxu0 %v3648
      %v3792 = vpop.f32.mrb[0].mxu0
      %v3793 = vadd.f32 0.0, %v3792
      %v3794 = vpop.f32.mrb[0].mxu0
      %v3795 = vpop.f32.mrb[0].mxu0
      %v3796 = vadd.f32 0.0, %v3795
      %v3797 = vpop.f32.mrb[0].mxu0
      %3798 = vmatprep.mubr.bf16.mxu0 0
      %3799 = vmatmul.mubr.bf16.gmra.mrb[0].mxu0 %v3651
      %v3800 = vpop.f32.mrb[0].mxu0
      %v3801 = vadd.f32 0.0, %v3800
      %v3802 = vpop.f32.mrb[0].mxu0
      %v3803 = vpop.f32.mrb[0].mxu0
      %v3804 = vadd.f32 0.0, %v3803
      %v3805 = vpop.f32.mrb[0].mxu0
      %3806 = vmatprep.mubr.bf16.mxu0 0
      %3807 = vmatmul.mubr.bf16.gmra.mrb[0].mxu0 %v3654
      %v3808 = vpop.f32.mrb[0].mxu0
      %v3809 = vadd.f32 0.0, %v3808
      %v3810 = vpop.f32.mrb[0].mxu0
      %v3811 = vpop.f32.mrb[0].mxu0
      %v3812 = vadd.f32 0.0, %v3811
      %v3813 = vpop.f32.mrb[0].mxu0
      %3814 = vmatprep.mubr.bf16.mxu0 0
      %3815 = vmatmul.mubr.bf16.gmra.mrb[0].mxu0 %v3657
      %v3816 = vpop.f32.mrb[0].mxu0
      %v3817 = vadd.f32 0.0, %v3816
      %v3818 = vpop.f32.mrb[0].mxu0
      %v3819 = vpop.f32.mrb[0].mxu0
      %v3820 = vadd.f32 0.0, %v3819
      %v3821 = vpop.f32.mrb[0].mxu0
      %3822 = vmatprep.mubr.bf16.mxu0 0
      %3823 = vmatmul.mubr.bf16.gmra.mrb[0].mxu0 %v3660
      %v3824 = vpop.f32.mrb[0].mxu0
      %v3825 = vadd.f32 0.0, %v3824
      %v3826 = vpop.f32.mrb[0].mxu0
      %v3827 = vpop.f32.mrb[0].mxu0
      %v3828 = vadd.f32 0.0, %v3827
      %v3829 = vpop.f32.mrb[0].mxu0
      %3830 = vmatprep.mubr.bf16.mxu0 0
      %3831 = vmatmul.mubr.bf16.gmra.mrb[0].mxu0 %v3663
      %v3832 = vpop.f32.mrb[0].mxu0
      %v3833 = vadd.f32 0.0, %v3832
      %v3834 = vpop.f32.mrb[0].mxu0
      %v3835 = vpop.f32.mrb[0].mxu0
      %v3836 = vadd.f32 0.0, %v3835
      %v3837 = vpop.f32.mrb[0].mxu0
      %3838 = vdwg.mxu0
      %3839 = vst [vmem:[#allocation2] sm:$0xff] %v3700
      %3840 = vst [vmem:[#allocation2 + $0x8] sm:$0xff] %v3702
      %3841 = vst [vmem:[#allocation2 + $0x10] sm:$0xff] %v3793
      %3842 = vst [vmem:[#allocation2 + $0x18] sm:$0xff] %v3704
      %3843 = vst [vmem:[#allocation2 + $0x20] sm:$0xff] %v3706
      %3844 = vst [vmem:[#allocation2 + $0x28] sm:$0xff] %v3796
      %3845 = vst [vmem:[#allocation2 + $0x30] sm:$0xff] %v3710
      %3846 = vst [vmem:[#allocation2 + $0x38] sm:$0xff] %v3712
      %3847 = vst [vmem:[#allocation2 + $0x40] sm:$0xff] %v3801
      %3848 = vst [vmem:[#allocation2 + $0x48] sm:$0xff] %v3714
      %3849 = vst [vmem:[#allocation2 + $0x50] sm:$0xff] %v3716
      %3850 = vst [vmem:[#allocation2 + $0x58] sm:$0xff] %v3804
      %3851 = vst [vmem:[#allocation2 + $0x60] sm:$0xff] %v3720
      %3852 = vst [vmem:[#allocation2 + $0x68] sm:$0xff] %v3722
      %3853 = vst [vmem:[#allocation2 + $0x70] sm:$0xff] %v3809
      %3854 = vst [vmem:[#allocation2 + $0x78] sm:$0xff] %v3724
      %3855 = vst [vmem:[#allocation2 + $0x80] sm:$0xff] %v3726
      %3856 = vst [vmem:[#allocation2 + $0x88] sm:$0xff] %v3812
      %3857 = vst [vmem:[#allocation2 + $0x90] sm:$0xff] %v3730
      %3858 = vst [vmem:[#allocation2 + $0x98] sm:$0xff] %v3732
      %3859 = vst [vmem:[#allocation2 + $0xa0] sm:$0xff] %v3817
      %3860 = vst [vmem:[#allocation2 + $0xa8] sm:$0xff] %v3734
      %3861 = vst [vmem:[#allocation2 + $0xb0] sm:$0xff] %v3736
      %3862 = vst [vmem:[#allocation2 + $0xb8] sm:$0xff] %v3820
      %3863 = vst [vmem:[#allocation2 + $0xc0] sm:$0xff] %v3740
      %3864 = vst [vmem:[#allocation2 + $0xc8] sm:$0xff] %v3742
      %3865 = vst [vmem:[#allocation2 + $0xd0] sm:$0xff] %v3825
      %3866 = vst [vmem:[#allocation2 + $0xd8] sm:$0xff] %v3744
      %3867 = vst [vmem:[#allocation2 + $0xe0] sm:$0xff] %v3746
      %3868 = vst [vmem:[#allocation2 + $0xe8] sm:$0xff] %v3828
      %3869 = vst [vmem:[#allocation2 + $0xf0] sm:$0xff] %v3750
      %3870 = vst [vmem:[#allocation2 + $0xf8] sm:$0xff] %v3752
      %3871 = vst [vmem:[#allocation2 + $0x100] sm:$0xff] %v3833
      %3872 = vst [vmem:[#allocation2 + $0x108] sm:$0xff] %v3754
      %3873 = vst [vmem:[#allocation2 + $0x110] sm:$0xff] %v3756
      %3874 = vst [vmem:[#allocation2 + $0x118] sm:$0xff] %v3836
      %v3875 = vld [vmem:[%s682] sm:$0xff]
      %v3876 = vld [vmem:[%s682 + $0x8] sm:$0xff]
      %v3877 = vld [vmem:[%s682 + $0x10] sm:$0xff]
      %v3878 = vld [vmem:[%s682 + $0x18] sm:$0xff]
      %v3879 = vld [vmem:[%s682 + $0x20] sm:$0xff]
      %v3880 = vld [vmem:[%s682 + $0x28] sm:$0xff]
      %v3881 = vld [vmem:[%s682 + $0x30] sm:$0xff]
      %v3882 = vld [vmem:[%s682 + $0x38] sm:$0xff]
      %v3883 = vld [vmem:[%s682 + $0x40] sm:$0xff]
      %v3884 = vld [vmem:[%s682 + $0x48] sm:$0xff]
      %v3885 = vld [vmem:[%s682 + $0x50] sm:$0xff]
      %v3886 = vld [vmem:[%s682 + $0x58] sm:$0xff]
      %v3887 = vld [vmem:[#allocation2] sm:$0xff]
      %v3888 = vld [vmem:[#allocation2 + $0x8] sm:$0xff]
      %v3889 = vld [vmem:[#allocation2 + $0x10] sm:$0xff]
      %v3890 = vld [vmem:[#allocation2 + $0x18] sm:$0xff]
      %v3891 = vld [vmem:[#allocation2 + $0x20] sm:$0xff]
      %v3892 = vld [vmem:[#allocation2 + $0x28] sm:$0xff]
      %v3893 = vld [vmem:[#allocation2 + $0x30] sm:$0xff]
      %v3894 = vld [vmem:[#allocation2 + $0x38] sm:$0xff]
      %v3895 = vld [vmem:[#allocation2 + $0x40] sm:$0xff]
      %v3896 = vld [vmem:[#allocation2 + $0x48] sm:$0xff]
      %v3897 = vld [vmem:[#allocation2 + $0x50] sm:$0xff]
      %v3898 = vld [vmem:[#allocation2 + $0x58] sm:$0xff]
      %v3899 = vld [vmem:[#allocation2 + $0x60] sm:$0xff]
      %v3900 = vld [vmem:[#allocation2 + $0x68] sm:$0xff]
      %v3901 = vld [vmem:[#allocation2 + $0x70] sm:$0xff]
      %v3902 = vld [vmem:[#allocation2 + $0x78] sm:$0xff]
      %v3903 = vld [vmem:[#allocation2 + $0x80] sm:$0xff]
      %v3904 = vld [vmem:[#allocation2 + $0x88] sm:$0xff]
      %v3905 = vld [vmem:[#allocation2 + $0x90] sm:$0xff]
      %v3906 = vld [vmem:[#allocation2 + $0x98] sm:$0xff]
      %v3907 = vld [vmem:[#allocation2 + $0xa0] sm:$0xff]
      %v3908 = vld [vmem:[#allocation2 + $0xa8] sm:$0xff]
      %v3909 = vld [vmem:[#allocation2 + $0xb0] sm:$0xff]
      %v3910 = vld [vmem:[#allocation2 + $0xb8] sm:$0xff]
      %v3911 = vld [vmem:[#allocation2 + $0xc0] sm:$0xff]
      %v3912 = vld [vmem:[#allocation2 + $0xc8] sm:$0xff]
      %v3913 = vld [vmem:[#allocation2 + $0xd0] sm:$0xff]
      %v3914 = vld [vmem:[#allocation2 + $0xd8] sm:$0xff]
      %v3915 = vld [vmem:[#allocation2 + $0xe0] sm:$0xff]
      %v3916 = vld [vmem:[#allocation2 + $0xe8] sm:$0xff]
      %v3917 = vld [vmem:[#allocation2 + $0xf0] sm:$0xff]
      %v3918 = vld [vmem:[#allocation2 + $0xf8] sm:$0xff]
      %v3919 = vld [vmem:[#allocation2 + $0x100] sm:$0xff]
      %v3920 = vld [vmem:[#allocation2 + $0x108] sm:$0xff]
      %v3921 = vld [vmem:[#allocation2 + $0x110] sm:$0xff]
      %v3922 = vld [vmem:[#allocation2 + $0x118] sm:$0xff]
      %3924 = vset.pattern.permute.xlu0 0
      %3925 = vperm.xlu0 %3924, %v3875
      %v3926 = vpop.permute.xlu0 %3925
      %3929 = vset.pattern.permute.xlu0 0
      %3930 = vperm.xlu0 %3929, %v3876
      %v3931 = vpop.permute.xlu0 %3930
      %3934 = vset.pattern.permute.xlu0 0
      %3935 = vperm.xlu0 %3934, %v3877
      %v3936 = vpop.permute.xlu0 %3935
      %3939 = vset.pattern.permute.xlu0 0
      %3940 = vperm.xlu0 %3939, %v3878
      %v3941 = vpop.permute.xlu0 %3940
      %3944 = vset.pattern.permute.xlu0 0
      %3945 = vperm.xlu0 %3944, %v3879
      %v3946 = vpop.permute.xlu0 %3945
      %3949 = vset.pattern.permute.xlu0 0
      %3950 = vperm.xlu0 %3949, %v3880
      %v3951 = vpop.permute.xlu0 %3950
      %3954 = vset.pattern.permute.xlu0 0
      %3955 = vperm.xlu0 %3954, %v3881
      %v3956 = vpop.permute.xlu0 %3955
      %3959 = vset.pattern.permute.xlu0 0
      %3960 = vperm.xlu0 %3959, %v3882
      %v3961 = vpop.permute.xlu0 %3960
      %3964 = vset.pattern.permute.xlu0 0
      %3965 = vperm.xlu0 %3964, %v3883
      %v3966 = vpop.permute.xlu0 %3965
      %3969 = vset.pattern.permute.xlu0 0
      %3970 = vperm.xlu0 %3969, %v3884
      %v3971 = vpop.permute.xlu0 %3970
      %3974 = vset.pattern.permute.xlu0 0
      %3975 = vperm.xlu0 %3974, %v3885
      %v3976 = vpop.permute.xlu0 %3975
      %3979 = vset.pattern.permute.xlu0 0
      %3980 = vperm.xlu0 %3979, %v3886
      %v3981 = vpop.permute.xlu0 %3980
      %v3983 = vmul.f32 %v3926, %v3887
      %v3984 = vmul.f32 %v3926, %v3888
      %v3985 = vmul.f32 %v3926, %v3889
      %v3986 = vmul.f32 %v3931, %v3890
      %v3987 = vmul.f32 %v3931, %v3891
      %v3988 = vmul.f32 %v3931, %v3892
      %v3989 = vmul.f32 %v3936, %v3893
      %v3990 = vmul.f32 %v3936, %v3894
      %v3991 = vmul.f32 %v3936, %v3895
      %v3992 = vmul.f32 %v3941, %v3896
      %v3993 = vmul.f32 %v3941, %v3897
      %v3994 = vmul.f32 %v3941, %v3898
      %v3995 = vmul.f32 %v3946, %v3899
      %v3996 = vmul.f32 %v3946, %v3900
      %v3997 = vmul.f32 %v3946, %v3901
      %v3998 = vmul.f32 %v3951, %v3902
      %v3999 = vmul.f32 %v3951, %v3903
      %v4000 = vmul.f32 %v3951, %v3904
      %v4001 = vmul.f32 %v3956, %v3905
      %v4002 = vmul.f32 %v3956, %v3906
      %v4003 = vmul.f32 %v3956, %v3907
      %v4004 = vmul.f32 %v3961, %v3908
      %v4005 = vmul.f32 %v3961, %v3909
      %v4006 = vmul.f32 %v3961, %v3910
      %v4007 = vmul.f32 %v3966, %v3911
      %v4008 = vmul.f32 %v3966, %v3912
      %v4009 = vmul.f32 %v3966, %v3913
      %v4010 = vmul.f32 %v3971, %v3914
      %v4011 = vmul.f32 %v3971, %v3915
      %v4012 = vmul.f32 %v3971, %v3916
      %v4013 = vmul.f32 %v3976, %v3917
      %v4014 = vmul.f32 %v3976, %v3918
      %v4015 = vmul.f32 %v3976, %v3919
      %v4016 = vmul.f32 %v3981, %v3920
      %v4017 = vmul.f32 %v3981, %v3921
      %v4018 = vmul.f32 %v3981, %v3922
      %v4019 = vld [vmem:[%s827] sm:$0xff]
      %v4020 = vld [vmem:[%s827 + $0x8] sm:$0xff]
      %v4021 = vld [vmem:[%s827 + $0x10] sm:$0xff]
      %v4022 = vld [vmem:[%s827 + $0x18] sm:$0xff]
      %v4023 = vld [vmem:[%s827 + $0x20] sm:$0xff]
      %v4024 = vld [vmem:[%s827 + $0x28] sm:$0xff]
      %v4025 = vld [vmem:[%s827 + $0x30] sm:$0xff]
      %v4026 = vld [vmem:[%s827 + $0x38] sm:$0xff]
      %v4027 = vld [vmem:[%s827 + $0x40] sm:$0xff]
      %v4028 = vld [vmem:[%s827 + $0x48] sm:$0xff]
      %v4029 = vld [vmem:[%s827 + $0x50] sm:$0xff]
      %v4030 = vld [vmem:[%s827 + $0x58] sm:$0xff]
      %4032 = vset.pattern.permute.xlu0 0
      %4033 = vperm.xlu0 %4032, %v4019
      %v4034 = vpop.permute.xlu0 %4033
      %4037 = vset.pattern.permute.xlu0 0
      %4038 = vperm.xlu0 %4037, %v4020
      %v4039 = vpop.permute.xlu0 %4038
      %4042 = vset.pattern.permute.xlu0 0
      %4043 = vperm.xlu0 %4042, %v4021
      %v4044 = vpop.permute.xlu0 %4043
      %4047 = vset.pattern.permute.xlu0 0
      %4048 = vperm.xlu0 %4047, %v4022
      %v4049 = vpop.permute.xlu0 %4048
      %4052 = vset.pattern.permute.xlu0 0
      %4053 = vperm.xlu0 %4052, %v4023
      %v4054 = vpop.permute.xlu0 %4053
      %4057 = vset.pattern.permute.xlu0 0
      %4058 = vperm.xlu0 %4057, %v4024
      %v4059 = vpop.permute.xlu0 %4058
      %4062 = vset.pattern.permute.xlu0 0
      %4063 = vperm.xlu0 %4062, %v4025
      %v4064 = vpop.permute.xlu0 %4063
      %4067 = vset.pattern.permute.xlu0 0
      %4068 = vperm.xlu0 %4067, %v4026
      %v4069 = vpop.permute.xlu0 %4068
      %4072 = vset.pattern.permute.xlu0 0
      %4073 = vperm.xlu0 %4072, %v4027
      %v4074 = vpop.permute.xlu0 %4073
      %4077 = vset.pattern.permute.xlu0 0
      %4078 = vperm.xlu0 %4077, %v4028
      %v4079 = vpop.permute.xlu0 %4078
      %4082 = vset.pattern.permute.xlu0 0
      %4083 = vperm.xlu0 %4082, %v4029
      %v4084 = vpop.permute.xlu0 %4083
      %4087 = vset.pattern.permute.xlu0 0
      %4088 = vperm.xlu0 %4087, %v4030
      %v4089 = vpop.permute.xlu0 %4088
      %v4091 = vmul.f32 %v4034, %v3887
      %v4092 = vmul.f32 %v4034, %v3888
      %v4093 = vmul.f32 %v4034, %v3889
      %v4094 = vmul.f32 %v4039, %v3890
      %v4095 = vmul.f32 %v4039, %v3891
      %v4096 = vmul.f32 %v4039, %v3892
      %v4097 = vmul.f32 %v4044, %v3893
      %v4098 = vmul.f32 %v4044, %v3894
      %v4099 = vmul.f32 %v4044, %v3895
      %v4100 = vmul.f32 %v4049, %v3896
      %v4101 = vmul.f32 %v4049, %v3897
      %v4102 = vmul.f32 %v4049, %v3898
      %v4103 = vmul.f32 %v4054, %v3899
      %v4104 = vmul.f32 %v4054, %v3900
      %v4105 = vmul.f32 %v4054, %v3901
      %v4106 = vmul.f32 %v4059, %v3902
      %v4107 = vmul.f32 %v4059, %v3903
      %v4108 = vmul.f32 %v4059, %v3904
      %v4109 = vmul.f32 %v4064, %v3905
      %v4110 = vmul.f32 %v4064, %v3906
      %v4111 = vmul.f32 %v4064, %v3907
      %v4112 = vmul.f32 %v4069, %v3908
      %v4113 = vmul.f32 %v4069, %v3909
      %v4114 = vmul.f32 %v4069, %v3910
      %v4115 = vmul.f32 %v4074, %v3911
      %v4116 = vmul.f32 %v4074, %v3912
      %v4117 = vmul.f32 %v4074, %v3913
      %v4118 = vmul.f32 %v4079, %v3914
      %v4119 = vmul.f32 %v4079, %v3915
      %v4120 = vmul.f32 %v4079, %v3916
      %v4121 = vmul.f32 %v4084, %v3917
      %v4122 = vmul.f32 %v4084, %v3918
      %v4123 = vmul.f32 %v4084, %v3919
      %v4124 = vmul.f32 %v4089, %v3920
      %v4125 = vmul.f32 %v4089, %v3921
      %v4126 = vmul.f32 %v4089, %v3922
      %4163 = vrot.lane.b32.xlu0 %v4091, 112
      %v4164 = vpop.permute.xlu0 %4163
      %4165 = vrot.lane.b32.xlu0 %v4092, 112
      %v4166 = vpop.permute.xlu0 %4165
      %4167 = vrot.lane.b32.xlu0 %v4093, 112
      %v4168 = vpop.permute.xlu0 %4167
      %4169 = vrot.lane.b32.xlu0 %v4094, 112
      %v4170 = vpop.permute.xlu0 %4169
      %4171 = vrot.lane.b32.xlu0 %v4095, 112
      %v4172 = vpop.permute.xlu0 %4171
      %4173 = vrot.lane.b32.xlu0 %v4096, 112
      %v4174 = vpop.permute.xlu0 %4173
      %4175 = vrot.lane.b32.xlu0 %v4097, 112
      %v4176 = vpop.permute.xlu0 %4175
      %4177 = vrot.lane.b32.xlu0 %v4098, 112
      %v4178 = vpop.permute.xlu0 %4177
      %4179 = vrot.lane.b32.xlu0 %v4099, 112
      %v4180 = vpop.permute.xlu0 %4179
      %4181 = vrot.lane.b32.xlu0 %v4100, 112
      %v4182 = vpop.permute.xlu0 %4181
      %4183 = vrot.lane.b32.xlu0 %v4101, 112
      %v4184 = vpop.permute.xlu0 %4183
      %4185 = vrot.lane.b32.xlu0 %v4102, 112
      %v4186 = vpop.permute.xlu0 %4185
      %4187 = vrot.lane.b32.xlu0 %v4103, 112
      %v4188 = vpop.permute.xlu0 %4187
      %4189 = vrot.lane.b32.xlu0 %v4104, 112
      %v4190 = vpop.permute.xlu0 %4189
      %4191 = vrot.lane.b32.xlu0 %v4105, 112
      %v4192 = vpop.permute.xlu0 %4191
      %4193 = vrot.lane.b32.xlu0 %v4106, 112
      %v4194 = vpop.permute.xlu0 %4193
      %4195 = vrot.lane.b32.xlu0 %v4107, 112
      %v4196 = vpop.permute.xlu0 %4195
      %4197 = vrot.lane.b32.xlu0 %v4108, 112
      %v4198 = vpop.permute.xlu0 %4197
      %4199 = vrot.lane.b32.xlu0 %v4109, 112
      %v4200 = vpop.permute.xlu0 %4199
      %4201 = vrot.lane.b32.xlu0 %v4110, 112
      %v4202 = vpop.permute.xlu0 %4201
      %4203 = vrot.lane.b32.xlu0 %v4111, 112
      %v4204 = vpop.permute.xlu0 %4203
      %4205 = vrot.lane.b32.xlu0 %v4112, 112
      %v4206 = vpop.permute.xlu0 %4205
      %4207 = vrot.lane.b32.xlu0 %v4113, 112
      %v4208 = vpop.permute.xlu0 %4207
      %4209 = vrot.lane.b32.xlu0 %v4114, 112
      %v4210 = vpop.permute.xlu0 %4209
      %4211 = vrot.lane.b32.xlu0 %v4115, 112
      %v4212 = vpop.permute.xlu0 %4211
      %4213 = vrot.lane.b32.xlu0 %v4116, 112
      %v4214 = vpop.permute.xlu0 %4213
      %4215 = vrot.lane.b32.xlu0 %v4117, 112
      %v4216 = vpop.permute.xlu0 %4215
      %4217 = vrot.lane.b32.xlu0 %v4118, 112
      %v4218 = vpop.permute.xlu0 %4217
      %4219 = vrot.lane.b32.xlu0 %v4119, 112
      %v4220 = vpop.permute.xlu0 %4219
      %4221 = vrot.lane.b32.xlu0 %v4120, 112
      %v4222 = vpop.permute.xlu0 %4221
      %4223 = vrot.lane.b32.xlu0 %v4121, 112
      %v4224 = vpop.permute.xlu0 %4223
      %4225 = vrot.lane.b32.xlu0 %v4122, 112
      %v4226 = vpop.permute.xlu0 %4225
      %4227 = vrot.lane.b32.xlu0 %v4123, 112
      %v4228 = vpop.permute.xlu0 %4227
      %4229 = vrot.lane.b32.xlu0 %v4124, 112
      %v4230 = vpop.permute.xlu0 %4229
      %4231 = vrot.lane.b32.xlu0 %v4125, 112
      %v4232 = vpop.permute.xlu0 %4231
      %4233 = vrot.lane.b32.xlu0 %v4126, 112
      %v4234 = vpop.permute.xlu0 %4233
      %v4235 = vsel %vm1044, %v4164, %v4166
      %v4236 = vsel %vm1044, %v4166, %v4168
      %v4237 = vsel %vm1044, %v4170, %v4172
      %v4238 = vsel %vm1044, %v4172, %v4174
      %v4239 = vsel %vm1044, %v4176, %v4178
      %v4240 = vsel %vm1044, %v4178, %v4180
      %v4241 = vsel %vm1044, %v4182, %v4184
      %v4242 = vsel %vm1044, %v4184, %v4186
      %v4243 = vsel %vm1044, %v4188, %v4190
      %v4244 = vsel %vm1044, %v4190, %v4192
      %v4245 = vsel %vm1044, %v4194, %v4196
      %v4246 = vsel %vm1044, %v4196, %v4198
      %v4247 = vsel %vm1044, %v4200, %v4202
      %v4248 = vsel %vm1044, %v4202, %v4204
      %v4249 = vsel %vm1044, %v4206, %v4208
      %v4250 = vsel %vm1044, %v4208, %v4210
      %v4251 = vsel %vm1044, %v4212, %v4214
      %v4252 = vsel %vm1044, %v4214, %v4216
      %v4253 = vsel %vm1044, %v4218, %v4220
      %v4254 = vsel %vm1044, %v4220, %v4222
      %v4255 = vsel %vm1044, %v4224, %v4226
      %v4256 = vsel %vm1044, %v4226, %v4228
      %v4257 = vsel %vm1044, %v4230, %v4232
      %v4258 = vsel %vm1044, %v4232, %v4234
      %v4295 = vadd.f32 %v3983, %v4235
      %v4296 = vadd.f32 %v3984, %v4236
      %v4297 = vadd.f32 %v3985, %v4168
      %v4298 = vadd.f32 %v3986, %v4237
      %v4299 = vadd.f32 %v3987, %v4238
      %v4300 = vadd.f32 %v3988, %v4174
      %v4301 = vadd.f32 %v3989, %v4239
      %v4302 = vadd.f32 %v3990, %v4240
      %v4303 = vadd.f32 %v3991, %v4180
      %v4304 = vadd.f32 %v3992, %v4241
      %v4305 = vadd.f32 %v3993, %v4242
      %v4306 = vadd.f32 %v3994, %v4186
      %v4307 = vadd.f32 %v3995, %v4243
      %v4308 = vadd.f32 %v3996, %v4244
      %v4309 = vadd.f32 %v3997, %v4192
      %v4310 = vadd.f32 %v3998, %v4245
      %v4311 = vadd.f32 %v3999, %v4246
      %v4312 = vadd.f32 %v4000, %v4198
      %v4313 = vadd.f32 %v4001, %v4247
      %v4314 = vadd.f32 %v4002, %v4248
      %v4315 = vadd.f32 %v4003, %v4204
      %v4316 = vadd.f32 %v4004, %v4249
      %v4317 = vadd.f32 %v4005, %v4250
      %v4318 = vadd.f32 %v4006, %v4210
      %v4319 = vadd.f32 %v4007, %v4251
      %v4320 = vadd.f32 %v4008, %v4252
      %v4321 = vadd.f32 %v4009, %v4216
      %v4322 = vadd.f32 %v4010, %v4253
      %v4323 = vadd.f32 %v4011, %v4254
      %v4324 = vadd.f32 %v4012, %v4222
      %v4325 = vadd.f32 %v4013, %v4255
      %v4326 = vadd.f32 %v4014, %v4256
      %v4327 = vadd.f32 %v4015, %v4228
      %v4328 = vadd.f32 %v4016, %v4257
      %v4329 = vadd.f32 %v4017, %v4258
      %v4330 = vadd.f32 %v4018, %v4234
      %v4331 = vld [vmem:[%s1141] sm:$0xff]
      %v4332 = vld [vmem:[%s1141 + $0x8] sm:$0xff]
      %v4333 = vld [vmem:[%s1141 + $0x10] sm:$0xff]
      %v4334 = vld [vmem:[%s1141 + $0x18] sm:$0xff]
      %v4335 = vld [vmem:[%s1141 + $0x20] sm:$0xff]
      %v4336 = vld [vmem:[%s1141 + $0x28] sm:$0xff]
      %v4337 = vld [vmem:[%s1141 + $0x30] sm:$0xff]
      %v4338 = vld [vmem:[%s1141 + $0x38] sm:$0xff]
      %v4339 = vld [vmem:[%s1141 + $0x40] sm:$0xff]
      %v4340 = vld [vmem:[%s1141 + $0x48] sm:$0xff]
      %v4341 = vld [vmem:[%s1141 + $0x50] sm:$0xff]
      %v4342 = vld [vmem:[%s1141 + $0x58] sm:$0xff]
      %4344 = vset.pattern.permute.xlu0 0
      %4345 = vperm.xlu0 %4344, %v4331
      %v4346 = vpop.permute.xlu0 %4345
      %4349 = vset.pattern.permute.xlu0 0
      %4350 = vperm.xlu0 %4349, %v4332
      %v4351 = vpop.permute.xlu0 %4350
      %4354 = vset.pattern.permute.xlu0 0
      %4355 = vperm.xlu0 %4354, %v4333
      %v4356 = vpop.permute.xlu0 %4355
      %4359 = vset.pattern.permute.xlu0 0
      %4360 = vperm.xlu0 %4359, %v4334
      %v4361 = vpop.permute.xlu0 %4360
      %4364 = vset.pattern.permute.xlu0 0
      %4365 = vperm.xlu0 %4364, %v4335
      %v4366 = vpop.permute.xlu0 %4365
      %4369 = vset.pattern.permute.xlu0 0
      %4370 = vperm.xlu0 %4369, %v4336
      %v4371 = vpop.permute.xlu0 %4370
      %4374 = vset.pattern.permute.xlu0 0
      %4375 = vperm.xlu0 %4374, %v4337
      %v4376 = vpop.permute.xlu0 %4375
      %4379 = vset.pattern.permute.xlu0 0
      %4380 = vperm.xlu0 %4379, %v4338
      %v4381 = vpop.permute.xlu0 %4380
      %4384 = vset.pattern.permute.xlu0 0
      %4385 = vperm.xlu0 %4384, %v4339
      %v4386 = vpop.permute.xlu0 %4385
      %4389 = vset.pattern.permute.xlu0 0
      %4390 = vperm.xlu0 %4389, %v4340
      %v4391 = vpop.permute.xlu0 %4390
      %4394 = vset.pattern.permute.xlu0 0
      %4395 = vperm.xlu0 %4394, %v4341
      %v4396 = vpop.permute.xlu0 %4395
      %4399 = vset.pattern.permute.xlu0 0
      %4400 = vperm.xlu0 %4399, %v4342
      %v4401 = vpop.permute.xlu0 %4400
      %v4403 = vmul.f32 %v4346, %v3887
      %v4404 = vmul.f32 %v4346, %v3888
      %v4405 = vmul.f32 %v4346, %v3889
      %v4406 = vmul.f32 %v4351, %v3890
      %v4407 = vmul.f32 %v4351, %v3891
      %v4408 = vmul.f32 %v4351, %v3892
      %v4409 = vmul.f32 %v4356, %v3893
      %v4410 = vmul.f32 %v4356, %v3894
      %v4411 = vmul.f32 %v4356, %v3895
      %v4412 = vmul.f32 %v4361, %v3896
      %v4413 = vmul.f32 %v4361, %v3897
      %v4414 = vmul.f32 %v4361, %v3898
      %v4415 = vmul.f32 %v4366, %v3899
      %v4416 = vmul.f32 %v4366, %v3900
      %v4417 = vmul.f32 %v4366, %v3901
      %v4418 = vmul.f32 %v4371, %v3902
      %v4419 = vmul.f32 %v4371, %v3903
      %v4420 = vmul.f32 %v4371, %v3904
      %v4421 = vmul.f32 %v4376, %v3905
      %v4422 = vmul.f32 %v4376, %v3906
      %v4423 = vmul.f32 %v4376, %v3907
      %v4424 = vmul.f32 %v4381, %v3908
      %v4425 = vmul.f32 %v4381, %v3909
      %v4426 = vmul.f32 %v4381, %v3910
      %v4427 = vmul.f32 %v4386, %v3911
      %v4428 = vmul.f32 %v4386, %v3912
      %v4429 = vmul.f32 %v4386, %v3913
      %v4430 = vmul.f32 %v4391, %v3914
      %v4431 = vmul.f32 %v4391, %v3915
      %v4432 = vmul.f32 %v4391, %v3916
      %v4433 = vmul.f32 %v4396, %v3917
      %v4434 = vmul.f32 %v4396, %v3918
      %v4435 = vmul.f32 %v4396, %v3919
      %v4436 = vmul.f32 %v4401, %v3920
      %v4437 = vmul.f32 %v4401, %v3921
      %v4438 = vmul.f32 %v4401, %v3922
      %4475 = vrot.lane.b32.xlu0 %v4403, 96
      %v4476 = vpop.permute.xlu0 %4475
      %4477 = vrot.lane.b32.xlu0 %v4404, 96
      %v4478 = vpop.permute.xlu0 %4477
      %4479 = vrot.lane.b32.xlu0 %v4405, 96
      %v4480 = vpop.permute.xlu0 %4479
      %4481 = vrot.lane.b32.xlu0 %v4406, 96
      %v4482 = vpop.permute.xlu0 %4481
      %4483 = vrot.lane.b32.xlu0 %v4407, 96
      %v4484 = vpop.permute.xlu0 %4483
      %4485 = vrot.lane.b32.xlu0 %v4408, 96
      %v4486 = vpop.permute.xlu0 %4485
      %4487 = vrot.lane.b32.xlu0 %v4409, 96
      %v4488 = vpop.permute.xlu0 %4487
      %4489 = vrot.lane.b32.xlu0 %v4410, 96
      %v4490 = vpop.permute.xlu0 %4489
      %4491 = vrot.lane.b32.xlu0 %v4411, 96
      %v4492 = vpop.permute.xlu0 %4491
      %4493 = vrot.lane.b32.xlu0 %v4412, 96
      %v4494 = vpop.permute.xlu0 %4493
      %4495 = vrot.lane.b32.xlu0 %v4413, 96
      %v4496 = vpop.permute.xlu0 %4495
      %4497 = vrot.lane.b32.xlu0 %v4414, 96
      %v4498 = vpop.permute.xlu0 %4497
      %4499 = vrot.lane.b32.xlu0 %v4415, 96
      %v4500 = vpop.permute.xlu0 %4499
      %4501 = vrot.lane.b32.xlu0 %v4416, 96
      %v4502 = vpop.permute.xlu0 %4501
      %4503 = vrot.lane.b32.xlu0 %v4417, 96
      %v4504 = vpop.permute.xlu0 %4503
      %4505 = vrot.lane.b32.xlu0 %v4418, 96
      %v4506 = vpop.permute.xlu0 %4505
      %4507 = vrot.lane.b32.xlu0 %v4419, 96
      %v4508 = vpop.permute.xlu0 %4507
      %4509 = vrot.lane.b32.xlu0 %v4420, 96
      %v4510 = vpop.permute.xlu0 %4509
      %4511 = vrot.lane.b32.xlu0 %v4421, 96
      %v4512 = vpop.permute.xlu0 %4511
      %4513 = vrot.lane.b32.xlu0 %v4422, 96
      %v4514 = vpop.permute.xlu0 %4513
      %4515 = vrot.lane.b32.xlu0 %v4423, 96
      %v4516 = vpop.permute.xlu0 %4515
      %4517 = vrot.lane.b32.xlu0 %v4424, 96
      %v4518 = vpop.permute.xlu0 %4517
      %4519 = vrot.lane.b32.xlu0 %v4425, 96
      %v4520 = vpop.permute.xlu0 %4519
      %4521 = vrot.lane.b32.xlu0 %v4426, 96
      %v4522 = vpop.permute.xlu0 %4521
      %4523 = vrot.lane.b32.xlu0 %v4427, 96
      %v4524 = vpop.permute.xlu0 %4523
      %4525 = vrot.lane.b32.xlu0 %v4428, 96
      %v4526 = vpop.permute.xlu0 %4525
      %4527 = vrot.lane.b32.xlu0 %v4429, 96
      %v4528 = vpop.permute.xlu0 %4527
      %4529 = vrot.lane.b32.xlu0 %v4430, 96
      %v4530 = vpop.permute.xlu0 %4529
      %4531 = vrot.lane.b32.xlu0 %v4431, 96
      %v4532 = vpop.permute.xlu0 %4531
      %4533 = vrot.lane.b32.xlu0 %v4432, 96
      %v4534 = vpop.permute.xlu0 %4533
      %4535 = vrot.lane.b32.xlu0 %v4433, 96
      %v4536 = vpop.permute.xlu0 %4535
      %4537 = vrot.lane.b32.xlu0 %v4434, 96
      %v4538 = vpop.permute.xlu0 %4537
      %4539 = vrot.lane.b32.xlu0 %v4435, 96
      %v4540 = vpop.permute.xlu0 %4539
      %4541 = vrot.lane.b32.xlu0 %v4436, 96
      %v4542 = vpop.permute.xlu0 %4541
      %4543 = vrot.lane.b32.xlu0 %v4437, 96
      %v4544 = vpop.permute.xlu0 %4543
      %4545 = vrot.lane.b32.xlu0 %v4438, 96
      %v4546 = vpop.permute.xlu0 %4545
      %v4547 = vsel %vm1358, %v4476, %v4478
      %v4548 = vsel %vm1358, %v4478, %v4480
      %v4549 = vsel %vm1358, %v4482, %v4484
      %v4550 = vsel %vm1358, %v4484, %v4486
      %v4551 = vsel %vm1358, %v4488, %v4490
      %v4552 = vsel %vm1358, %v4490, %v4492
      %v4553 = vsel %vm1358, %v4494, %v4496
      %v4554 = vsel %vm1358, %v4496, %v4498
      %v4555 = vsel %vm1358, %v4500, %v4502
      %v4556 = vsel %vm1358, %v4502, %v4504
      %v4557 = vsel %vm1358, %v4506, %v4508
      %v4558 = vsel %vm1358, %v4508, %v4510
      %v4559 = vsel %vm1358, %v4512, %v4514
      %v4560 = vsel %vm1358, %v4514, %v4516
      %v4561 = vsel %vm1358, %v4518, %v4520
      %v4562 = vsel %vm1358, %v4520, %v4522
      %v4563 = vsel %vm1358, %v4524, %v4526
      %v4564 = vsel %vm1358, %v4526, %v4528
      %v4565 = vsel %vm1358, %v4530, %v4532
      %v4566 = vsel %vm1358, %v4532, %v4534
      %v4567 = vsel %vm1358, %v4536, %v4538
      %v4568 = vsel %vm1358, %v4538, %v4540
      %v4569 = vsel %vm1358, %v4542, %v4544
      %v4570 = vsel %vm1358, %v4544, %v4546
      %v4607 = vadd.f32 %v4295, %v4547
      %v4608 = vadd.f32 %v4296, %v4548
      %v4609 = vadd.f32 %v4297, %v4480
      %v4610 = vadd.f32 %v4298, %v4549
      %v4611 = vadd.f32 %v4299, %v4550
      %v4612 = vadd.f32 %v4300, %v4486
      %v4613 = vadd.f32 %v4301, %v4551
      %v4614 = vadd.f32 %v4302, %v4552
      %v4615 = vadd.f32 %v4303, %v4492
      %v4616 = vadd.f32 %v4304, %v4553
      %v4617 = vadd.f32 %v4305, %v4554
      %v4618 = vadd.f32 %v4306, %v4498
      %v4619 = vadd.f32 %v4307, %v4555
      %v4620 = vadd.f32 %v4308, %v4556
      %v4621 = vadd.f32 %v4309, %v4504
      %v4622 = vadd.f32 %v4310, %v4557
      %v4623 = vadd.f32 %v4311, %v4558
      %v4624 = vadd.f32 %v4312, %v4510
      %v4625 = vadd.f32 %v4313, %v4559
      %v4626 = vadd.f32 %v4314, %v4560
      %v4627 = vadd.f32 %v4315, %v4516
      %v4628 = vadd.f32 %v4316, %v4561
      %v4629 = vadd.f32 %v4317, %v4562
      %v4630 = vadd.f32 %v4318, %v4522
      %v4631 = vadd.f32 %v4319, %v4563
      %v4632 = vadd.f32 %v4320, %v4564
      %v4633 = vadd.f32 %v4321, %v4528
      %v4634 = vadd.f32 %v4322, %v4565
      %v4635 = vadd.f32 %v4323, %v4566
      %v4636 = vadd.f32 %v4324, %v4534
      %v4637 = vadd.f32 %v4325, %v4567
      %v4638 = vadd.f32 %v4326, %v4568
      %v4639 = vadd.f32 %v4327, %v4540
      %v4640 = vadd.f32 %v4328, %v4569
      %v4641 = vadd.f32 %v4329, %v4570
      %v4642 = vadd.f32 %v4330, %v4546
      %v4643 = vld [vmem:[%s3] sm:$0xff]
      %v4644 = vld [vmem:[%s3 + $0x8] sm:$0xff]
      %v4645 = vld [vmem:[%s3 + $0x10] sm:$0xff]
      %v4646 = vld [vmem:[%s3 + $0x18] sm:$0xff]
      %v4647 = vld [vmem:[%s3 + $0x20] sm:$0xff]
      %v4648 = vld [vmem:[%s3 + $0x28] sm:$0xff]
      %v4649 = vld [vmem:[%s3 + $0x30] sm:$0xff]
      %v4650 = vld [vmem:[%s3 + $0x38] sm:$0xff]
      %v4651 = vld [vmem:[%s3 + $0x40] sm:$0xff]
      %v4652 = vld [vmem:[%s3 + $0x48] sm:$0xff]
      %v4653 = vld [vmem:[%s3 + $0x50] sm:$0xff]
      %v4654 = vld [vmem:[%s3 + $0x58] sm:$0xff]
      %v4655 = vld [vmem:[#allocation2] sm:$0xff]
      %v4656 = vld [vmem:[#allocation2 + $0x8] sm:$0xff]
      %v4657 = vld [vmem:[#allocation2 + $0x18] sm:$0xff]
      %v4658 = vld [vmem:[#allocation2 + $0x20] sm:$0xff]
      %v4659 = vld [vmem:[#allocation2 + $0x30] sm:$0xff]
      %v4660 = vld [vmem:[#allocation2 + $0x38] sm:$0xff]
      %v4661 = vld [vmem:[#allocation2 + $0x48] sm:$0xff]
      %v4662 = vld [vmem:[#allocation2 + $0x50] sm:$0xff]
      %v4663 = vld [vmem:[#allocation2 + $0x60] sm:$0xff]
      %v4664 = vld [vmem:[#allocation2 + $0x68] sm:$0xff]
      %v4665 = vld [vmem:[#allocation2 + $0x78] sm:$0xff]
      %v4666 = vld [vmem:[#allocation2 + $0x80] sm:$0xff]
      %v4667 = vld [vmem:[#allocation2 + $0x90] sm:$0xff]
      %v4668 = vld [vmem:[#allocation2 + $0x98] sm:$0xff]
      %v4669 = vld [vmem:[#allocation2 + $0xa8] sm:$0xff]
      %v4670 = vld [vmem:[#allocation2 + $0xb0] sm:$0xff]
      %v4671 = vld [vmem:[#allocation2 + $0xc0] sm:$0xff]
      %v4672 = vld [vmem:[#allocation2 + $0xc8] sm:$0xff]
      %v4673 = vld [vmem:[#allocation2 + $0xd8] sm:$0xff]
      %v4674 = vld [vmem:[#allocation2 + $0xe0] sm:$0xff]
      %v4675 = vld [vmem:[#allocation2 + $0xf0] sm:$0xff]
      %v4676 = vld [vmem:[#allocation2 + $0xf8] sm:$0xff]
      %v4677 = vld [vmem:[#allocation2 + $0x108] sm:$0xff]
      %v4678 = vld [vmem:[#allocation2 + $0x110] sm:$0xff]
      %4680 = vset.pattern.permute.xlu0 0
      %4681 = vperm.xlu0 %4680, %v4643
      %v4682 = vpop.permute.xlu0 %4681
      %4685 = vset.pattern.permute.xlu0 0
      %4686 = vperm.xlu0 %4685, %v4644
      %v4687 = vpop.permute.xlu0 %4686
      %4690 = vset.pattern.permute.xlu0 0
      %4691 = vperm.xlu0 %4690, %v4645
      %v4692 = vpop.permute.xlu0 %4691
      %4695 = vset.pattern.permute.xlu0 0
      %4696 = vperm.xlu0 %4695, %v4646
      %v4697 = vpop.permute.xlu0 %4696
      %4700 = vset.pattern.permute.xlu0 0
      %4701 = vperm.xlu0 %4700, %v4647
      %v4702 = vpop.permute.xlu0 %4701
      %4705 = vset.pattern.permute.xlu0 0
      %4706 = vperm.xlu0 %4705, %v4648
      %v4707 = vpop.permute.xlu0 %4706
      %4710 = vset.pattern.permute.xlu0 0
      %4711 = vperm.xlu0 %4710, %v4649
      %v4712 = vpop.permute.xlu0 %4711
      %4715 = vset.pattern.permute.xlu0 0
      %4716 = vperm.xlu0 %4715, %v4650
      %v4717 = vpop.permute.xlu0 %4716
      %4720 = vset.pattern.permute.xlu0 0
      %4721 = vperm.xlu0 %4720, %v4651
      %v4722 = vpop.permute.xlu0 %4721
      %4725 = vset.pattern.permute.xlu0 0
      %4726 = vperm.xlu0 %4725, %v4652
      %v4727 = vpop.permute.xlu0 %4726
      %4730 = vset.pattern.permute.xlu0 0
      %4731 = vperm.xlu0 %4730, %v4653
      %v4732 = vpop.permute.xlu0 %4731
      %4735 = vset.pattern.permute.xlu0 0
      %4736 = vperm.xlu0 %4735, %v4654
      %v4737 = vpop.permute.xlu0 %4736
      %v4739 = vmul.f32 %v4682, %v4655
      %v4740 = vmul.f32 %v4682, %v4656
      %v4741 = vmul.f32 %v4687, %v4657
      %v4742 = vmul.f32 %v4687, %v4658
      %v4743 = vmul.f32 %v4692, %v4659
      %v4744 = vmul.f32 %v4692, %v4660
      %v4745 = vmul.f32 %v4697, %v4661
      %v4746 = vmul.f32 %v4697, %v4662
      %v4747 = vmul.f32 %v4702, %v4663
      %v4748 = vmul.f32 %v4702, %v4664
      %v4749 = vmul.f32 %v4707, %v4665
      %v4750 = vmul.f32 %v4707, %v4666
      %v4751 = vmul.f32 %v4712, %v4667
      %v4752 = vmul.f32 %v4712, %v4668
      %v4753 = vmul.f32 %v4717, %v4669
      %v4754 = vmul.f32 %v4717, %v4670
      %v4755 = vmul.f32 %v4722, %v4671
      %v4756 = vmul.f32 %v4722, %v4672
      %v4757 = vmul.f32 %v4727, %v4673
      %v4758 = vmul.f32 %v4727, %v4674
      %v4759 = vmul.f32 %v4732, %v4675
      %v4760 = vmul.f32 %v4732, %v4676
      %v4761 = vmul.f32 %v4737, %v4677
      %v4762 = vmul.f32 %v4737, %v4678
      %v4763 = vld [vmem:[%s1575] sm:$0xff]
      %v4764 = vld [vmem:[%s1575 + $0x8] sm:$0xff]
      %v4765 = vld [vmem:[%s1575 + $0x10] sm:$0xff]
      %v4766 = vld [vmem:[%s1575 + $0x18] sm:$0xff]
      %v4767 = vld [vmem:[%s1575 + $0x20] sm:$0xff]
      %v4768 = vld [vmem:[%s1575 + $0x28] sm:$0xff]
      %v4769 = vld [vmem:[%s1575 + $0x30] sm:$0xff]
      %v4770 = vld [vmem:[%s1575 + $0x38] sm:$0xff]
      %v4771 = vld [vmem:[%s1575 + $0x40] sm:$0xff]
      %v4772 = vld [vmem:[%s1575 + $0x48] sm:$0xff]
      %v4773 = vld [vmem:[%s1575 + $0x50] sm:$0xff]
      %v4774 = vld [vmem:[%s1575 + $0x58] sm:$0xff]
      %4776 = vset.pattern.permute.xlu0 0
      %4777 = vperm.xlu0 %4776, %v4763
      %v4778 = vpop.permute.xlu0 %4777
      %4781 = vset.pattern.permute.xlu0 0
      %4782 = vperm.xlu0 %4781, %v4764
      %v4783 = vpop.permute.xlu0 %4782
      %4786 = vset.pattern.permute.xlu0 0
      %4787 = vperm.xlu0 %4786, %v4765
      %v4788 = vpop.permute.xlu0 %4787
      %4791 = vset.pattern.permute.xlu0 0
      %4792 = vperm.xlu0 %4791, %v4766
      %v4793 = vpop.permute.xlu0 %4792
      %4796 = vset.pattern.permute.xlu0 0
      %4797 = vperm.xlu0 %4796, %v4767
      %v4798 = vpop.permute.xlu0 %4797
      %4801 = vset.pattern.permute.xlu0 0
      %4802 = vperm.xlu0 %4801, %v4768
      %v4803 = vpop.permute.xlu0 %4802
      %4806 = vset.pattern.permute.xlu0 0
      %4807 = vperm.xlu0 %4806, %v4769
      %v4808 = vpop.permute.xlu0 %4807
      %4811 = vset.pattern.permute.xlu0 0
      %4812 = vperm.xlu0 %4811, %v4770
      %v4813 = vpop.permute.xlu0 %4812
      %4816 = vset.pattern.permute.xlu0 0
      %4817 = vperm.xlu0 %4816, %v4771
      %v4818 = vpop.permute.xlu0 %4817
      %4821 = vset.pattern.permute.xlu0 0
      %4822 = vperm.xlu0 %4821, %v4772
      %v4823 = vpop.permute.xlu0 %4822
      %4826 = vset.pattern.permute.xlu0 0
      %4827 = vperm.xlu0 %4826, %v4773
      %v4828 = vpop.permute.xlu0 %4827
      %4831 = vset.pattern.permute.xlu0 0
      %4832 = vperm.xlu0 %4831, %v4774
      %v4833 = vpop.permute.xlu0 %4832
      %v4835 = vmul.f32 %v4778, %v3887
      %v4836 = vmul.f32 %v4778, %v3888
      %v4837 = vmul.f32 %v4778, %v3889
      %v4838 = vmul.f32 %v4783, %v3890
      %v4839 = vmul.f32 %v4783, %v3891
      %v4840 = vmul.f32 %v4783, %v3892
      %v4841 = vmul.f32 %v4788, %v3893
      %v4842 = vmul.f32 %v4788, %v3894
      %v4843 = vmul.f32 %v4788, %v3895
      %v4844 = vmul.f32 %v4793, %v3896
      %v4845 = vmul.f32 %v4793, %v3897
      %v4846 = vmul.f32 %v4793, %v3898
      %v4847 = vmul.f32 %v4798, %v3899
      %v4848 = vmul.f32 %v4798, %v3900
      %v4849 = vmul.f32 %v4798, %v3901
      %v4850 = vmul.f32 %v4803, %v3902
      %v4851 = vmul.f32 %v4803, %v3903
      %v4852 = vmul.f32 %v4803, %v3904
      %v4853 = vmul.f32 %v4808, %v3905
      %v4854 = vmul.f32 %v4808, %v3906
      %v4855 = vmul.f32 %v4808, %v3907
      %v4856 = vmul.f32 %v4813, %v3908
      %v4857 = vmul.f32 %v4813, %v3909
      %v4858 = vmul.f32 %v4813, %v3910
      %v4859 = vmul.f32 %v4818, %v3911
      %v4860 = vmul.f32 %v4818, %v3912
      %v4861 = vmul.f32 %v4818, %v3913
      %v4862 = vmul.f32 %v4823, %v3914
      %v4863 = vmul.f32 %v4823, %v3915
      %v4864 = vmul.f32 %v4823, %v3916
      %v4865 = vmul.f32 %v4828, %v3917
      %v4866 = vmul.f32 %v4828, %v3918
      %v4867 = vmul.f32 %v4828, %v3919
      %v4868 = vmul.f32 %v4833, %v3920
      %v4869 = vmul.f32 %v4833, %v3921
      %v4870 = vmul.f32 %v4833, %v3922
      %4907 = vrot.lane.b32.xlu0 %v4835, 112
      %v4908 = vpop.permute.xlu0 %4907
      %4909 = vrot.lane.b32.xlu0 %v4836, 112
      %v4910 = vpop.permute.xlu0 %4909
      %4911 = vrot.lane.b32.xlu0 %v4837, 112
      %v4912 = vpop.permute.xlu0 %4911
      %4913 = vrot.lane.b32.xlu0 %v4838, 112
      %v4914 = vpop.permute.xlu0 %4913
      %4915 = vrot.lane.b32.xlu0 %v4839, 112
      %v4916 = vpop.permute.xlu0 %4915
      %4917 = vrot.lane.b32.xlu0 %v4840, 112
      %v4918 = vpop.permute.xlu0 %4917
      %4919 = vrot.lane.b32.xlu0 %v4841, 112
      %v4920 = vpop.permute.xlu0 %4919
      %4921 = vrot.lane.b32.xlu0 %v4842, 112
      %v4922 = vpop.permute.xlu0 %4921
      %4923 = vrot.lane.b32.xlu0 %v4843, 112
      %v4924 = vpop.permute.xlu0 %4923
      %4925 = vrot.lane.b32.xlu0 %v4844, 112
      %v4926 = vpop.permute.xlu0 %4925
      %4927 = vrot.lane.b32.xlu0 %v4845, 112
      %v4928 = vpop.permute.xlu0 %4927
      %4929 = vrot.lane.b32.xlu0 %v4846, 112
      %v4930 = vpop.permute.xlu0 %4929
      %4931 = vrot.lane.b32.xlu0 %v4847, 112
      %v4932 = vpop.permute.xlu0 %4931
      %4933 = vrot.lane.b32.xlu0 %v4848, 112
      %v4934 = vpop.permute.xlu0 %4933
      %4935 = vrot.lane.b32.xlu0 %v4849, 112
      %v4936 = vpop.permute.xlu0 %4935
      %4937 = vrot.lane.b32.xlu0 %v4850, 112
      %v4938 = vpop.permute.xlu0 %4937
      %4939 = vrot.lane.b32.xlu0 %v4851, 112
      %v4940 = vpop.permute.xlu0 %4939
      %4941 = vrot.lane.b32.xlu0 %v4852, 112
      %v4942 = vpop.permute.xlu0 %4941
      %4943 = vrot.lane.b32.xlu0 %v4853, 112
      %v4944 = vpop.permute.xlu0 %4943
      %4945 = vrot.lane.b32.xlu0 %v4854, 112
      %v4946 = vpop.permute.xlu0 %4945
      %4947 = vrot.lane.b32.xlu0 %v4855, 112
      %v4948 = vpop.permute.xlu0 %4947
      %4949 = vrot.lane.b32.xlu0 %v4856, 112
      %v4950 = vpop.permute.xlu0 %4949
      %4951 = vrot.lane.b32.xlu0 %v4857, 112
      %v4952 = vpop.permute.xlu0 %4951
      %4953 = vrot.lane.b32.xlu0 %v4858, 112
      %v4954 = vpop.permute.xlu0 %4953
      %4955 = vrot.lane.b32.xlu0 %v4859, 112
      %v4956 = vpop.permute.xlu0 %4955
      %4957 = vrot.lane.b32.xlu0 %v4860, 112
      %v4958 = vpop.permute.xlu0 %4957
      %4959 = vrot.lane.b32.xlu0 %v4861, 112
      %v4960 = vpop.permute.xlu0 %4959
      %4961 = vrot.lane.b32.xlu0 %v4862, 112
      %v4962 = vpop.permute.xlu0 %4961
      %4963 = vrot.lane.b32.xlu0 %v4863, 112
      %v4964 = vpop.permute.xlu0 %4963
      %4965 = vrot.lane.b32.xlu0 %v4864, 112
      %v4966 = vpop.permute.xlu0 %4965
      %4967 = vrot.lane.b32.xlu0 %v4865, 112
      %v4968 = vpop.permute.xlu0 %4967
      %4969 = vrot.lane.b32.xlu0 %v4866, 112
      %v4970 = vpop.permute.xlu0 %4969
      %4971 = vrot.lane.b32.xlu0 %v4867, 112
      %v4972 = vpop.permute.xlu0 %4971
      %4973 = vrot.lane.b32.xlu0 %v4868, 112
      %v4974 = vpop.permute.xlu0 %4973
      %4975 = vrot.lane.b32.xlu0 %v4869, 112
      %v4976 = vpop.permute.xlu0 %4975
      %4977 = vrot.lane.b32.xlu0 %v4870, 112
      %v4978 = vpop.permute.xlu0 %4977
      %v4979 = vsel %vm1044, %v4908, %v4910
      %v4980 = vsel %vm1044, %v4910, %v4912
      %v4981 = vsel %vm1044, %v4914, %v4916
      %v4982 = vsel %vm1044, %v4916, %v4918
      %v4983 = vsel %vm1044, %v4920, %v4922
      %v4984 = vsel %vm1044, %v4922, %v4924
      %v4985 = vsel %vm1044, %v4926, %v4928
      %v4986 = vsel %vm1044, %v4928, %v4930
      %v4987 = vsel %vm1044, %v4932, %v4934
      %v4988 = vsel %vm1044, %v4934, %v4936
      %v4989 = vsel %vm1044, %v4938, %v4940
      %v4990 = vsel %vm1044, %v4940, %v4942
      %v4991 = vsel %vm1044, %v4944, %v4946
      %v4992 = vsel %vm1044, %v4946, %v4948
      %v4993 = vsel %vm1044, %v4950, %v4952
      %v4994 = vsel %vm1044, %v4952, %v4954
      %v4995 = vsel %vm1044, %v4956, %v4958
      %v4996 = vsel %vm1044, %v4958, %v4960
      %v4997 = vsel %vm1044, %v4962, %v4964
      %v4998 = vsel %vm1044, %v4964, %v4966
      %v4999 = vsel %vm1044, %v4968, %v4970
      %v5000 = vsel %vm1044, %v4970, %v4972
      %v5001 = vsel %vm1044, %v4974, %v4976
      %v5002 = vsel %vm1044, %v4976, %v4978
      %v5027 = vadd.f32 %v4739, %v4979
      %v5028 = vadd.f32 %v4740, %v4980
      %v5029 = vadd.f32 %v4741, %v4981
      %v5030 = vadd.f32 %v4742, %v4982
      %v5031 = vadd.f32 %v4743, %v4983
      %v5032 = vadd.f32 %v4744, %v4984
      %v5033 = vadd.f32 %v4745, %v4985
      %v5034 = vadd.f32 %v4746, %v4986
      %v5035 = vadd.f32 %v4747, %v4987
      %v5036 = vadd.f32 %v4748, %v4988
      %v5037 = vadd.f32 %v4749, %v4989
      %v5038 = vadd.f32 %v4750, %v4990
      %v5039 = vadd.f32 %v4751, %v4991
      %v5040 = vadd.f32 %v4752, %v4992
      %v5041 = vadd.f32 %v4753, %v4993
      %v5042 = vadd.f32 %v4754, %v4994
      %v5043 = vadd.f32 %v4755, %v4995
      %v5044 = vadd.f32 %v4756, %v4996
      %v5045 = vadd.f32 %v4757, %v4997
      %v5046 = vadd.f32 %v4758, %v4998
      %v5047 = vadd.f32 %v4759, %v4999
      %v5048 = vadd.f32 %v4760, %v5000
      %v5049 = vadd.f32 %v4761, %v5001
      %v5050 = vadd.f32 %v4762, %v5002
      %v5051 = vld [vmem:[%s1864] sm:$0xff]
      %v5052 = vld [vmem:[%s1864 + $0x8] sm:$0xff]
      %v5053 = vld [vmem:[%s1864 + $0x10] sm:$0xff]
      %v5054 = vld [vmem:[%s1864 + $0x18] sm:$0xff]
      %v5055 = vld [vmem:[%s1864 + $0x20] sm:$0xff]
      %v5056 = vld [vmem:[%s1864 + $0x28] sm:$0xff]
      %v5057 = vld [vmem:[%s1864 + $0x30] sm:$0xff]
      %v5058 = vld [vmem:[%s1864 + $0x38] sm:$0xff]
      %v5059 = vld [vmem:[%s1864 + $0x40] sm:$0xff]
      %v5060 = vld [vmem:[%s1864 + $0x48] sm:$0xff]
      %v5061 = vld [vmem:[%s1864 + $0x50] sm:$0xff]
      %v5062 = vld [vmem:[%s1864 + $0x58] sm:$0xff]
      %5064 = vset.pattern.permute.xlu0 0
      %5065 = vperm.xlu0 %5064, %v5051
      %v5066 = vpop.permute.xlu0 %5065
      %5069 = vset.pattern.permute.xlu0 0
      %5070 = vperm.xlu0 %5069, %v5052
      %v5071 = vpop.permute.xlu0 %5070
      %5074 = vset.pattern.permute.xlu0 0
      %5075 = vperm.xlu0 %5074, %v5053
      %v5076 = vpop.permute.xlu0 %5075
      %5079 = vset.pattern.permute.xlu0 0
      %5080 = vperm.xlu0 %5079, %v5054
      %v5081 = vpop.permute.xlu0 %5080
      %5084 = vset.pattern.permute.xlu0 0
      %5085 = vperm.xlu0 %5084, %v5055
      %v5086 = vpop.permute.xlu0 %5085
      %5089 = vset.pattern.permute.xlu0 0
      %5090 = vperm.xlu0 %5089, %v5056
      %v5091 = vpop.permute.xlu0 %5090
      %5094 = vset.pattern.permute.xlu0 0
      %5095 = vperm.xlu0 %5094, %v5057
      %v5096 = vpop.permute.xlu0 %5095
      %5099 = vset.pattern.permute.xlu0 0
      %5100 = vperm.xlu0 %5099, %v5058
      %v5101 = vpop.permute.xlu0 %5100
      %5104 = vset.pattern.permute.xlu0 0
      %5105 = vperm.xlu0 %5104, %v5059
      %v5106 = vpop.permute.xlu0 %5105
      %5109 = vset.pattern.permute.xlu0 0
      %5110 = vperm.xlu0 %5109, %v5060
      %v5111 = vpop.permute.xlu0 %5110
      %5114 = vset.pattern.permute.xlu0 0
      %5115 = vperm.xlu0 %5114, %v5061
      %v5116 = vpop.permute.xlu0 %5115
      %5119 = vset.pattern.permute.xlu0 0
      %5120 = vperm.xlu0 %5119, %v5062
      %v5121 = vpop.permute.xlu0 %5120
      %v5123 = vmul.f32 %v5066, %v3887
      %v5124 = vmul.f32 %v5066, %v3888
      %v5125 = vmul.f32 %v5066, %v3889
      %v5126 = vmul.f32 %v5071, %v3890
      %v5127 = vmul.f32 %v5071, %v3891
      %v5128 = vmul.f32 %v5071, %v3892
      %v5129 = vmul.f32 %v5076, %v3893
      %v5130 = vmul.f32 %v5076, %v3894
      %v5131 = vmul.f32 %v5076, %v3895
      %v5132 = vmul.f32 %v5081, %v3896
      %v5133 = vmul.f32 %v5081, %v3897
      %v5134 = vmul.f32 %v5081, %v3898
      %v5135 = vmul.f32 %v5086, %v3899
      %v5136 = vmul.f32 %v5086, %v3900
      %v5137 = vmul.f32 %v5086, %v3901
      %v5138 = vmul.f32 %v5091, %v3902
      %v5139 = vmul.f32 %v5091, %v3903
      %v5140 = vmul.f32 %v5091, %v3904
      %v5141 = vmul.f32 %v5096, %v3905
      %v5142 = vmul.f32 %v5096, %v3906
      %v5143 = vmul.f32 %v5096, %v3907
      %v5144 = vmul.f32 %v5101, %v3908
      %v5145 = vmul.f32 %v5101, %v3909
      %v5146 = vmul.f32 %v5101, %v3910
      %v5147 = vmul.f32 %v5106, %v3911
      %v5148 = vmul.f32 %v5106, %v3912
      %v5149 = vmul.f32 %v5106, %v3913
      %v5150 = vmul.f32 %v5111, %v3914
      %v5151 = vmul.f32 %v5111, %v3915
      %v5152 = vmul.f32 %v5111, %v3916
      %v5153 = vmul.f32 %v5116, %v3917
      %v5154 = vmul.f32 %v5116, %v3918
      %v5155 = vmul.f32 %v5116, %v3919
      %v5156 = vmul.f32 %v5121, %v3920
      %v5157 = vmul.f32 %v5121, %v3921
      %v5158 = vmul.f32 %v5121, %v3922
      %5195 = vrot.lane.b32.xlu0 %v5123, 96
      %v5196 = vpop.permute.xlu0 %5195
      %5197 = vrot.lane.b32.xlu0 %v5124, 96
      %v5198 = vpop.permute.xlu0 %5197
      %5199 = vrot.lane.b32.xlu0 %v5125, 96
      %v5200 = vpop.permute.xlu0 %5199
      %5201 = vrot.lane.b32.xlu0 %v5126, 96
      %v5202 = vpop.permute.xlu0 %5201
      %5203 = vrot.lane.b32.xlu0 %v5127, 96
      %v5204 = vpop.permute.xlu0 %5203
      %5205 = vrot.lane.b32.xlu0 %v5128, 96
      %v5206 = vpop.permute.xlu0 %5205
      %5207 = vrot.lane.b32.xlu0 %v5129, 96
      %v5208 = vpop.permute.xlu0 %5207
      %5209 = vrot.lane.b32.xlu0 %v5130, 96
      %v5210 = vpop.permute.xlu0 %5209
      %5211 = vrot.lane.b32.xlu0 %v5131, 96
      %v5212 = vpop.permute.xlu0 %5211
      %5213 = vrot.lane.b32.xlu0 %v5132, 96
      %v5214 = vpop.permute.xlu0 %5213
      %5215 = vrot.lane.b32.xlu0 %v5133, 96
      %v5216 = vpop.permute.xlu0 %5215
      %5217 = vrot.lane.b32.xlu0 %v5134, 96
      %v5218 = vpop.permute.xlu0 %5217
      %5219 = vrot.lane.b32.xlu0 %v5135, 96
      %v5220 = vpop.permute.xlu0 %5219
      %5221 = vrot.lane.b32.xlu0 %v5136, 96
      %v5222 = vpop.permute.xlu0 %5221
      %5223 = vrot.lane.b32.xlu0 %v5137, 96
      %v5224 = vpop.permute.xlu0 %5223
      %5225 = vrot.lane.b32.xlu0 %v5138, 96
      %v5226 = vpop.permute.xlu0 %5225
      %5227 = vrot.lane.b32.xlu0 %v5139, 96
      %v5228 = vpop.permute.xlu0 %5227
      %5229 = vrot.lane.b32.xlu0 %v5140, 96
      %v5230 = vpop.permute.xlu0 %5229
      %5231 = vrot.lane.b32.xlu0 %v5141, 96
      %v5232 = vpop.permute.xlu0 %5231
      %5233 = vrot.lane.b32.xlu0 %v5142, 96
      %v5234 = vpop.permute.xlu0 %5233
      %5235 = vrot.lane.b32.xlu0 %v5143, 96
      %v5236 = vpop.permute.xlu0 %5235
      %5237 = vrot.lane.b32.xlu0 %v5144, 96
      %v5238 = vpop.permute.xlu0 %5237
      %5239 = vrot.lane.b32.xlu0 %v5145, 96
      %v5240 = vpop.permute.xlu0 %5239
      %5241 = vrot.lane.b32.xlu0 %v5146, 96
      %v5242 = vpop.permute.xlu0 %5241
      %5243 = vrot.lane.b32.xlu0 %v5147, 96
      %v5244 = vpop.permute.xlu0 %5243
      %5245 = vrot.lane.b32.xlu0 %v5148, 96
      %v5246 = vpop.permute.xlu0 %5245
      %5247 = vrot.lane.b32.xlu0 %v5149, 96
      %v5248 = vpop.permute.xlu0 %5247
      %5249 = vrot.lane.b32.xlu0 %v5150, 96
      %v5250 = vpop.permute.xlu0 %5249
      %5251 = vrot.lane.b32.xlu0 %v5151, 96
      %v5252 = vpop.permute.xlu0 %5251
      %5253 = vrot.lane.b32.xlu0 %v5152, 96
      %v5254 = vpop.permute.xlu0 %5253
      %5255 = vrot.lane.b32.xlu0 %v5153, 96
      %v5256 = vpop.permute.xlu0 %5255
      %5257 = vrot.lane.b32.xlu0 %v5154, 96
      %v5258 = vpop.permute.xlu0 %5257
      %5259 = vrot.lane.b32.xlu0 %v5155, 96
      %v5260 = vpop.permute.xlu0 %5259
      %5261 = vrot.lane.b32.xlu0 %v5156, 96
      %v5262 = vpop.permute.xlu0 %5261
      %5263 = vrot.lane.b32.xlu0 %v5157, 96
      %v5264 = vpop.permute.xlu0 %5263
      %5265 = vrot.lane.b32.xlu0 %v5158, 96
      %v5266 = vpop.permute.xlu0 %5265
      %v5267 = vsel %vm1358, %v5196, %v5198
      %v5268 = vsel %vm1358, %v5198, %v5200
      %v5269 = vsel %vm1358, %v5202, %v5204
      %v5270 = vsel %vm1358, %v5204, %v5206
      %v5271 = vsel %vm1358, %v5208, %v5210
      %v5272 = vsel %vm1358, %v5210, %v5212
      %v5273 = vsel %vm1358, %v5214, %v5216
      %v5274 = vsel %vm1358, %v5216, %v5218
      %v5275 = vsel %vm1358, %v5220, %v5222
      %v5276 = vsel %vm1358, %v5222, %v5224
      %v5277 = vsel %vm1358, %v5226, %v5228
      %v5278 = vsel %vm1358, %v5228, %v5230
      %v5279 = vsel %vm1358, %v5232, %v5234
      %v5280 = vsel %vm1358, %v5234, %v5236
      %v5281 = vsel %vm1358, %v5238, %v5240
      %v5282 = vsel %vm1358, %v5240, %v5242
      %v5283 = vsel %vm1358, %v5244, %v5246
      %v5284 = vsel %vm1358, %v5246, %v5248
      %v5285 = vsel %vm1358, %v5250, %v5252
      %v5286 = vsel %vm1358, %v5252, %v5254
      %v5287 = vsel %vm1358, %v5256, %v5258
      %v5288 = vsel %vm1358, %v5258, %v5260
      %v5289 = vsel %vm1358, %v5262, %v5264
      %v5290 = vsel %vm1358, %v5264, %v5266
      %v5315 = vadd.f32 %v5027, %v5267
      %v5316 = vadd.f32 %v5028, %v5268
      %v5317 = vadd.f32 %v5029, %v5269
      %v5318 = vadd.f32 %v5030, %v5270
      %v5319 = vadd.f32 %v5031, %v5271
      %v5320 = vadd.f32 %v5032, %v5272
      %v5321 = vadd.f32 %v5033, %v5273
      %v5322 = vadd.f32 %v5034, %v5274
      %v5323 = vadd.f32 %v5035, %v5275
      %v5324 = vadd.f32 %v5036, %v5276
      %v5325 = vadd.f32 %v5037, %v5277
      %v5326 = vadd.f32 %v5038, %v5278
      %v5327 = vadd.f32 %v5039, %v5279
      %v5328 = vadd.f32 %v5040, %v5280
      %v5329 = vadd.f32 %v5041, %v5281
      %v5330 = vadd.f32 %v5042, %v5282
      %v5331 = vadd.f32 %v5043, %v5283
      %v5332 = vadd.f32 %v5044, %v5284
      %v5333 = vadd.f32 %v5045, %v5285
      %v5334 = vadd.f32 %v5046, %v5286
      %v5335 = vadd.f32 %v5047, %v5287
      %v5336 = vadd.f32 %v5048, %v5288
      %v5337 = vadd.f32 %v5049, %v5289
      %v5338 = vadd.f32 %v5050, %v5290
      %v5339 = vmul.f32 %v385, %v5315
      %v5340 = vmul.f32 %v386, %v5316
      %v5341 = vmul.f32 %v385, %v5317
      %v5342 = vmul.f32 %v386, %v5318
      %v5343 = vmul.f32 %v385, %v5319
      %v5344 = vmul.f32 %v386, %v5320
      %v5345 = vmul.f32 %v385, %v5321
      %v5346 = vmul.f32 %v386, %v5322
      %v5347 = vmul.f32 %v385, %v5323
      %v5348 = vmul.f32 %v386, %v5324
      %v5349 = vmul.f32 %v385, %v5325
      %v5350 = vmul.f32 %v386, %v5326
      %v5351 = vmul.f32 %v385, %v5327
      %v5352 = vmul.f32 %v386, %v5328
      %v5353 = vmul.f32 %v385, %v5329
      %v5354 = vmul.f32 %v386, %v5330
      %v5355 = vmul.f32 %v385, %v5331
      %v5356 = vmul.f32 %v386, %v5332
      %v5357 = vmul.f32 %v385, %v5333
      %v5358 = vmul.f32 %v386, %v5334
      %v5359 = vmul.f32 %v385, %v5335
      %v5360 = vmul.f32 %v386, %v5336
      %v5361 = vmul.f32 %v385, %v5337
      %v5362 = vmul.f32 %v386, %v5338
      %5387 = vrot.lane.b32.xlu0 %v5339, 1
      %v5388 = vpop.permute.xlu0 %5387
      %5389 = vrot.lane.b32.xlu0 %v5340, 1
      %v5390 = vpop.permute.xlu0 %5389
      %5391 = vrot.lane.b32.xlu0 %v5341, 1
      %v5392 = vpop.permute.xlu0 %5391
      %5393 = vrot.lane.b32.xlu0 %v5342, 1
      %v5394 = vpop.permute.xlu0 %5393
      %5395 = vrot.lane.b32.xlu0 %v5343, 1
      %v5396 = vpop.permute.xlu0 %5395
      %5397 = vrot.lane.b32.xlu0 %v5344, 1
      %v5398 = vpop.permute.xlu0 %5397
      %5399 = vrot.lane.b32.xlu0 %v5345, 1
      %v5400 = vpop.permute.xlu0 %5399
      %5401 = vrot.lane.b32.xlu0 %v5346, 1
      %v5402 = vpop.permute.xlu0 %5401
      %5403 = vrot.lane.b32.xlu0 %v5347, 1
      %v5404 = vpop.permute.xlu0 %5403
      %5405 = vrot.lane.b32.xlu0 %v5348, 1
      %v5406 = vpop.permute.xlu0 %5405
      %5407 = vrot.lane.b32.xlu0 %v5349, 1
      %v5408 = vpop.permute.xlu0 %5407
      %5409 = vrot.lane.b32.xlu0 %v5350, 1
      %v5410 = vpop.permute.xlu0 %5409
      %5411 = vrot.lane.b32.xlu0 %v5351, 1
      %v5412 = vpop.permute.xlu0 %5411
      %5413 = vrot.lane.b32.xlu0 %v5352, 1
      %v5414 = vpop.permute.xlu0 %5413
      %5415 = vrot.lane.b32.xlu0 %v5353, 1
      %v5416 = vpop.permute.xlu0 %5415
      %5417 = vrot.lane.b32.xlu0 %v5354, 1
      %v5418 = vpop.permute.xlu0 %5417
      %5419 = vrot.lane.b32.xlu0 %v5355, 1
      %v5420 = vpop.permute.xlu0 %5419
      %5421 = vrot.lane.b32.xlu0 %v5356, 1
      %v5422 = vpop.permute.xlu0 %5421
      %5423 = vrot.lane.b32.xlu0 %v5357, 1
      %v5424 = vpop.permute.xlu0 %5423
      %5425 = vrot.lane.b32.xlu0 %v5358, 1
      %v5426 = vpop.permute.xlu0 %5425
      %5427 = vrot.lane.b32.xlu0 %v5359, 1
      %v5428 = vpop.permute.xlu0 %5427
      %5429 = vrot.lane.b32.xlu0 %v5360, 1
      %v5430 = vpop.permute.xlu0 %5429
      %5431 = vrot.lane.b32.xlu0 %v5361, 1
      %v5432 = vpop.permute.xlu0 %5431
      %5433 = vrot.lane.b32.xlu0 %v5362, 1
      %v5434 = vpop.permute.xlu0 %5433
      %v5435 = vsel %vm2249, %v5388, %v5390
      %v5436 = vsel %vm2249, %v5392, %v5394
      %v5437 = vsel %vm2249, %v5396, %v5398
      %v5438 = vsel %vm2249, %v5400, %v5402
      %v5439 = vsel %vm2249, %v5404, %v5406
      %v5440 = vsel %vm2249, %v5408, %v5410
      %v5441 = vsel %vm2249, %v5412, %v5414
      %v5442 = vsel %vm2249, %v5416, %v5418
      %v5443 = vsel %vm2249, %v5420, %v5422
      %v5444 = vsel %vm2249, %v5424, %v5426
      %v5445 = vsel %vm2249, %v5428, %v5430
      %v5446 = vsel %vm2249, %v5432, %v5434
      %v5483 = vadd.f32 %v4607, %v5388
      %v5484 = vadd.f32 %v4608, %v5435
      %v5485 = vadd.f32 %v4609, %v5390
      %v5486 = vadd.f32 %v4610, %v5392
      %v5487 = vadd.f32 %v4611, %v5436
      %v5488 = vadd.f32 %v4612, %v5394
      %v5489 = vadd.f32 %v4613, %v5396
      %v5490 = vadd.f32 %v4614, %v5437
      %v5491 = vadd.f32 %v4615, %v5398
      %v5492 = vadd.f32 %v4616, %v5400
      %v5493 = vadd.f32 %v4617, %v5438
      %v5494 = vadd.f32 %v4618, %v5402
      %v5495 = vadd.f32 %v4619, %v5404
      %v5496 = vadd.f32 %v4620, %v5439
      %v5497 = vadd.f32 %v4621, %v5406
      %v5498 = vadd.f32 %v4622, %v5408
      %v5499 = vadd.f32 %v4623, %v5440
      %v5500 = vadd.f32 %v4624, %v5410
      %v5501 = vadd.f32 %v4625, %v5412
      %v5502 = vadd.f32 %v4626, %v5441
      %v5503 = vadd.f32 %v4627, %v5414
      %v5504 = vadd.f32 %v4628, %v5416
      %v5505 = vadd.f32 %v4629, %v5442
      %v5506 = vadd.f32 %v4630, %v5418
      %v5507 = vadd.f32 %v4631, %v5420
      %v5508 = vadd.f32 %v4632, %v5443
      %v5509 = vadd.f32 %v4633, %v5422
      %v5510 = vadd.f32 %v4634, %v5424
      %v5511 = vadd.f32 %v4635, %v5444
      %v5512 = vadd.f32 %v4636, %v5426
      %v5513 = vadd.f32 %v4637, %v5428
      %v5514 = vadd.f32 %v4638, %v5445
      %v5515 = vadd.f32 %v4639, %v5430
      %v5516 = vadd.f32 %v4640, %v5432
      %v5517 = vadd.f32 %v4641, %v5446
      %v5518 = vadd.f32 %v4642, %v5434
      %v5519 = vld [vmem:[%s2334] sm:$0xff]
      %v5520 = vld [vmem:[%s2334 + $0x8] sm:$0xff]
      %v5521 = vld [vmem:[%s2334 + $0x10] sm:$0xff]
      %v5522 = vld [vmem:[%s2334 + $0x18] sm:$0xff]
      %v5523 = vld [vmem:[%s2334 + $0x20] sm:$0xff]
      %v5524 = vld [vmem:[%s2334 + $0x28] sm:$0xff]
      %v5525 = vld [vmem:[%s2334 + $0x30] sm:$0xff]
      %v5526 = vld [vmem:[%s2334 + $0x38] sm:$0xff]
      %v5527 = vld [vmem:[%s2334 + $0x40] sm:$0xff]
      %v5528 = vld [vmem:[%s2334 + $0x48] sm:$0xff]
      %v5529 = vld [vmem:[%s2334 + $0x50] sm:$0xff]
      %v5530 = vld [vmem:[%s2334 + $0x58] sm:$0xff]
      %5532 = vset.pattern.permute.xlu0 0
      %5533 = vperm.xlu0 %5532, %v5519
      %v5534 = vpop.permute.xlu0 %5533
      %5537 = vset.pattern.permute.xlu0 0
      %5538 = vperm.xlu0 %5537, %v5520
      %v5539 = vpop.permute.xlu0 %5538
      %5542 = vset.pattern.permute.xlu0 0
      %5543 = vperm.xlu0 %5542, %v5521
      %v5544 = vpop.permute.xlu0 %5543
      %5547 = vset.pattern.permute.xlu0 0
      %5548 = vperm.xlu0 %5547, %v5522
      %v5549 = vpop.permute.xlu0 %5548
      %5552 = vset.pattern.permute.xlu0 0
      %5553 = vperm.xlu0 %5552, %v5523
      %v5554 = vpop.permute.xlu0 %5553
      %5557 = vset.pattern.permute.xlu0 0
      %5558 = vperm.xlu0 %5557, %v5524
      %v5559 = vpop.permute.xlu0 %5558
      %5562 = vset.pattern.permute.xlu0 0
      %5563 = vperm.xlu0 %5562, %v5525
      %v5564 = vpop.permute.xlu0 %5563
      %5567 = vset.pattern.permute.xlu0 0
      %5568 = vperm.xlu0 %5567, %v5526
      %v5569 = vpop.permute.xlu0 %5568
      %5572 = vset.pattern.permute.xlu0 0
      %5573 = vperm.xlu0 %5572, %v5527
      %v5574 = vpop.permute.xlu0 %5573
      %5577 = vset.pattern.permute.xlu0 0
      %5578 = vperm.xlu0 %5577, %v5528
      %v5579 = vpop.permute.xlu0 %5578
      %5582 = vset.pattern.permute.xlu0 0
      %5583 = vperm.xlu0 %5582, %v5529
      %v5584 = vpop.permute.xlu0 %5583
      %5587 = vset.pattern.permute.xlu0 0
      %5588 = vperm.xlu0 %5587, %v5530
      %v5589 = vpop.permute.xlu0 %5588
      %v5591 = vmul.f32 %v5534, %v3887
      %v5592 = vmul.f32 %v5534, %v3888
      %v5593 = vmul.f32 %v5534, %v3889
      %v5594 = vmul.f32 %v5539, %v3890
      %v5595 = vmul.f32 %v5539, %v3891
      %v5596 = vmul.f32 %v5539, %v3892
      %v5597 = vmul.f32 %v5544, %v3893
      %v5598 = vmul.f32 %v5544, %v3894
      %v5599 = vmul.f32 %v5544, %v3895
      %v5600 = vmul.f32 %v5549, %v3896
      %v5601 = vmul.f32 %v5549, %v3897
      %v5602 = vmul.f32 %v5549, %v3898
      %v5603 = vmul.f32 %v5554, %v3899
      %v5604 = vmul.f32 %v5554, %v3900
      %v5605 = vmul.f32 %v5554, %v3901
      %v5606 = vmul.f32 %v5559, %v3902
      %v5607 = vmul.f32 %v5559, %v3903
      %v5608 = vmul.f32 %v5559, %v3904
      %v5609 = vmul.f32 %v5564, %v3905
      %v5610 = vmul.f32 %v5564, %v3906
      %v5611 = vmul.f32 %v5564, %v3907
      %v5612 = vmul.f32 %v5569, %v3908
      %v5613 = vmul.f32 %v5569, %v3909
      %v5614 = vmul.f32 %v5569, %v3910
      %v5615 = vmul.f32 %v5574, %v3911
      %v5616 = vmul.f32 %v5574, %v3912
      %v5617 = vmul.f32 %v5574, %v3913
      %v5618 = vmul.f32 %v5579, %v3914
      %v5619 = vmul.f32 %v5579, %v3915
      %v5620 = vmul.f32 %v5579, %v3916
      %v5621 = vmul.f32 %v5584, %v3917
      %v5622 = vmul.f32 %v5584, %v3918
      %v5623 = vmul.f32 %v5584, %v3919
      %v5624 = vmul.f32 %v5589, %v3920
      %v5625 = vmul.f32 %v5589, %v3921
      %v5626 = vmul.f32 %v5589, %v3922
      %v5627 = vld [vmem:[%s2443] sm:$0xff]
      %v5628 = vld [vmem:[%s2443 + $0x8] sm:$0xff]
      %v5629 = vld [vmem:[%s2443 + $0x10] sm:$0xff]
      %v5630 = vld [vmem:[%s2443 + $0x18] sm:$0xff]
      %v5631 = vld [vmem:[%s2443 + $0x20] sm:$0xff]
      %v5632 = vld [vmem:[%s2443 + $0x28] sm:$0xff]
      %v5633 = vld [vmem:[%s2443 + $0x30] sm:$0xff]
      %v5634 = vld [vmem:[%s2443 + $0x38] sm:$0xff]
      %v5635 = vld [vmem:[%s2443 + $0x40] sm:$0xff]
      %v5636 = vld [vmem:[%s2443 + $0x48] sm:$0xff]
      %v5637 = vld [vmem:[%s2443 + $0x50] sm:$0xff]
      %v5638 = vld [vmem:[%s2443 + $0x58] sm:$0xff]
      %5640 = vset.pattern.permute.xlu0 0
      %5641 = vperm.xlu0 %5640, %v5627
      %v5642 = vpop.permute.xlu0 %5641
      %5645 = vset.pattern.permute.xlu0 0
      %5646 = vperm.xlu0 %5645, %v5628
      %v5647 = vpop.permute.xlu0 %5646
      %5650 = vset.pattern.permute.xlu0 0
      %5651 = vperm.xlu0 %5650, %v5629
      %v5652 = vpop.permute.xlu0 %5651
      %5655 = vset.pattern.permute.xlu0 0
      %5656 = vperm.xlu0 %5655, %v5630
      %v5657 = vpop.permute.xlu0 %5656
      %5660 = vset.pattern.permute.xlu0 0
      %5661 = vperm.xlu0 %5660, %v5631
      %v5662 = vpop.permute.xlu0 %5661
      %5665 = vset.pattern.permute.xlu0 0
      %5666 = vperm.xlu0 %5665, %v5632
      %v5667 = vpop.permute.xlu0 %5666
      %5670 = vset.pattern.permute.xlu0 0
      %5671 = vperm.xlu0 %5670, %v5633
      %v5672 = vpop.permute.xlu0 %5671
      %5675 = vset.pattern.permute.xlu0 0
      %5676 = vperm.xlu0 %5675, %v5634
      %v5677 = vpop.permute.xlu0 %5676
      %5680 = vset.pattern.permute.xlu0 0
      %5681 = vperm.xlu0 %5680, %v5635
      %v5682 = vpop.permute.xlu0 %5681
      %5685 = vset.pattern.permute.xlu0 0
      %5686 = vperm.xlu0 %5685, %v5636
      %v5687 = vpop.permute.xlu0 %5686
      %5690 = vset.pattern.permute.xlu0 0
      %5691 = vperm.xlu0 %5690, %v5637
      %v5692 = vpop.permute.xlu0 %5691
      %5695 = vset.pattern.permute.xlu0 0
      %5696 = vperm.xlu0 %5695, %v5638
      %v5697 = vpop.permute.xlu0 %5696
      %v5699 = vmul.f32 %v5642, %v3887
      %v5700 = vmul.f32 %v5642, %v3888
      %v5701 = vmul.f32 %v5642, %v3889
      %v5702 = vmul.f32 %v5647, %v3890
      %v5703 = vmul.f32 %v5647, %v3891
      %v5704 = vmul.f32 %v5647, %v3892
      %v5705 = vmul.f32 %v5652, %v3893
      %v5706 = vmul.f32 %v5652, %v3894
      %v5707 = vmul.f32 %v5652, %v3895
      %v5708 = vmul.f32 %v5657, %v3896
      %v5709 = vmul.f32 %v5657, %v3897
      %v5710 = vmul.f32 %v5657, %v3898
      %v5711 = vmul.f32 %v5662, %v3899
      %v5712 = vmul.f32 %v5662, %v3900
      %v5713 = vmul.f32 %v5662, %v3901
      %v5714 = vmul.f32 %v5667, %v3902
      %v5715 = vmul.f32 %v5667, %v3903
      %v5716 = vmul.f32 %v5667, %v3904
      %v5717 = vmul.f32 %v5672, %v3905
      %v5718 = vmul.f32 %v5672, %v3906
      %v5719 = vmul.f32 %v5672, %v3907
      %v5720 = vmul.f32 %v5677, %v3908
      %v5721 = vmul.f32 %v5677, %v3909
      %v5722 = vmul.f32 %v5677, %v3910
      %v5723 = vmul.f32 %v5682, %v3911
      %v5724 = vmul.f32 %v5682, %v3912
      %v5725 = vmul.f32 %v5682, %v3913
      %v5726 = vmul.f32 %v5687, %v3914
      %v5727 = vmul.f32 %v5687, %v3915
      %v5728 = vmul.f32 %v5687, %v3916
      %v5729 = vmul.f32 %v5692, %v3917
      %v5730 = vmul.f32 %v5692, %v3918
      %v5731 = vmul.f32 %v5692, %v3919
      %v5732 = vmul.f32 %v5697, %v3920
      %v5733 = vmul.f32 %v5697, %v3921
      %v5734 = vmul.f32 %v5697, %v3922
      %5771 = vrot.lane.b32.xlu0 %v5699, 112
      %v5772 = vpop.permute.xlu0 %5771
      %5773 = vrot.lane.b32.xlu0 %v5700, 112
      %v5774 = vpop.permute.xlu0 %5773
      %5775 = vrot.lane.b32.xlu0 %v5701, 112
      %v5776 = vpop.permute.xlu0 %5775
      %5777 = vrot.lane.b32.xlu0 %v5702, 112
      %v5778 = vpop.permute.xlu0 %5777
      %5779 = vrot.lane.b32.xlu0 %v5703, 112
      %v5780 = vpop.permute.xlu0 %5779
      %5781 = vrot.lane.b32.xlu0 %v5704, 112
      %v5782 = vpop.permute.xlu0 %5781
      %5783 = vrot.lane.b32.xlu0 %v5705, 112
      %v5784 = vpop.permute.xlu0 %5783
      %5785 = vrot.lane.b32.xlu0 %v5706, 112
      %v5786 = vpop.permute.xlu0 %5785
      %5787 = vrot.lane.b32.xlu0 %v5707, 112
      %v5788 = vpop.permute.xlu0 %5787
      %5789 = vrot.lane.b32.xlu0 %v5708, 112
      %v5790 = vpop.permute.xlu0 %5789
      %5791 = vrot.lane.b32.xlu0 %v5709, 112
      %v5792 = vpop.permute.xlu0 %5791
      %5793 = vrot.lane.b32.xlu0 %v5710, 112
      %v5794 = vpop.permute.xlu0 %5793
      %5795 = vrot.lane.b32.xlu0 %v5711, 112
      %v5796 = vpop.permute.xlu0 %5795
      %5797 = vrot.lane.b32.xlu0 %v5712, 112
      %v5798 = vpop.permute.xlu0 %5797
      %5799 = vrot.lane.b32.xlu0 %v5713, 112
      %v5800 = vpop.permute.xlu0 %5799
      %5801 = vrot.lane.b32.xlu0 %v5714, 112
      %v5802 = vpop.permute.xlu0 %5801
      %5803 = vrot.lane.b32.xlu0 %v5715, 112
      %v5804 = vpop.permute.xlu0 %5803
      %5805 = vrot.lane.b32.xlu0 %v5716, 112
      %v5806 = vpop.permute.xlu0 %5805
      %5807 = vrot.lane.b32.xlu0 %v5717, 112
      %v5808 = vpop.permute.xlu0 %5807
      %5809 = vrot.lane.b32.xlu0 %v5718, 112
      %v5810 = vpop.permute.xlu0 %5809
      %5811 = vrot.lane.b32.xlu0 %v5719, 112
      %v5812 = vpop.permute.xlu0 %5811
      %5813 = vrot.lane.b32.xlu0 %v5720, 112
      %v5814 = vpop.permute.xlu0 %5813
      %5815 = vrot.lane.b32.xlu0 %v5721, 112
      %v5816 = vpop.permute.xlu0 %5815
      %5817 = vrot.lane.b32.xlu0 %v5722, 112
      %v5818 = vpop.permute.xlu0 %5817
      %5819 = vrot.lane.b32.xlu0 %v5723, 112
      %v5820 = vpop.permute.xlu0 %5819
      %5821 = vrot.lane.b32.xlu0 %v5724, 112
      %v5822 = vpop.permute.xlu0 %5821
      %5823 = vrot.lane.b32.xlu0 %v5725, 112
      %v5824 = vpop.permute.xlu0 %5823
      %5825 = vrot.lane.b32.xlu0 %v5726, 112
      %v5826 = vpop.permute.xlu0 %5825
      %5827 = vrot.lane.b32.xlu0 %v5727, 112
      %v5828 = vpop.permute.xlu0 %5827
      %5829 = vrot.lane.b32.xlu0 %v5728, 112
      %v5830 = vpop.permute.xlu0 %5829
      %5831 = vrot.lane.b32.xlu0 %v5729, 112
      %v5832 = vpop.permute.xlu0 %5831
      %5833 = vrot.lane.b32.xlu0 %v5730, 112
      %v5834 = vpop.permute.xlu0 %5833
      %5835 = vrot.lane.b32.xlu0 %v5731, 112
      %v5836 = vpop.permute.xlu0 %5835
      %5837 = vrot.lane.b32.xlu0 %v5732, 112
      %v5838 = vpop.permute.xlu0 %5837
      %5839 = vrot.lane.b32.xlu0 %v5733, 112
      %v5840 = vpop.permute.xlu0 %5839
      %5841 = vrot.lane.b32.xlu0 %v5734, 112
      %v5842 = vpop.permute.xlu0 %5841
      %v5843 = vsel %vm1044, %v5772, %v5774
      %v5844 = vsel %vm1044, %v5774, %v5776
      %v5845 = vsel %vm1044, %v5778, %v5780
      %v5846 = vsel %vm1044, %v5780, %v5782
      %v5847 = vsel %vm1044, %v5784, %v5786
      %v5848 = vsel %vm1044, %v5786, %v5788
      %v5849 = vsel %vm1044, %v5790, %v5792
      %v5850 = vsel %vm1044, %v5792, %v5794
      %v5851 = vsel %vm1044, %v5796, %v5798
      %v5852 = vsel %vm1044, %v5798, %v5800
      %v5853 = vsel %vm1044, %v5802, %v5804
      %v5854 = vsel %vm1044, %v5804, %v5806
      %v5855 = vsel %vm1044, %v5808, %v5810
      %v5856 = vsel %vm1044, %v5810, %v5812
      %v5857 = vsel %vm1044, %v5814, %v5816
      %v5858 = vsel %vm1044, %v5816, %v5818
      %v5859 = vsel %vm1044, %v5820, %v5822
      %v5860 = vsel %vm1044, %v5822, %v5824
      %v5861 = vsel %vm1044, %v5826, %v5828
      %v5862 = vsel %vm1044, %v5828, %v5830
      %v5863 = vsel %vm1044, %v5832, %v5834
      %v5864 = vsel %vm1044, %v5834, %v5836
      %v5865 = vsel %vm1044, %v5838, %v5840
      %v5866 = vsel %vm1044, %v5840, %v5842
      %v5903 = vadd.f32 %v5591, %v5843
      %v5904 = vadd.f32 %v5592, %v5844
      %v5905 = vadd.f32 %v5593, %v5776
      %v5906 = vadd.f32 %v5594, %v5845
      %v5907 = vadd.f32 %v5595, %v5846
      %v5908 = vadd.f32 %v5596, %v5782
      %v5909 = vadd.f32 %v5597, %v5847
      %v5910 = vadd.f32 %v5598, %v5848
      %v5911 = vadd.f32 %v5599, %v5788
      %v5912 = vadd.f32 %v5600, %v5849
      %v5913 = vadd.f32 %v5601, %v5850
      %v5914 = vadd.f32 %v5602, %v5794
      %v5915 = vadd.f32 %v5603, %v5851
      %v5916 = vadd.f32 %v5604, %v5852
      %v5917 = vadd.f32 %v5605, %v5800
      %v5918 = vadd.f32 %v5606, %v5853
      %v5919 = vadd.f32 %v5607, %v5854
      %v5920 = vadd.f32 %v5608, %v5806
      %v5921 = vadd.f32 %v5609, %v5855
      %v5922 = vadd.f32 %v5610, %v5856
      %v5923 = vadd.f32 %v5611, %v5812
      %v5924 = vadd.f32 %v5612, %v5857
      %v5925 = vadd.f32 %v5613, %v5858
      %v5926 = vadd.f32 %v5614, %v5818
      %v5927 = vadd.f32 %v5615, %v5859
      %v5928 = vadd.f32 %v5616, %v5860
      %v5929 = vadd.f32 %v5617, %v5824
      %v5930 = vadd.f32 %v5618, %v5861
      %v5931 = vadd.f32 %v5619, %v5862
      %v5932 = vadd.f32 %v5620, %v5830
      %v5933 = vadd.f32 %v5621, %v5863
      %v5934 = vadd.f32 %v5622, %v5864
      %v5935 = vadd.f32 %v5623, %v5836
      %v5936 = vadd.f32 %v5624, %v5865
      %v5937 = vadd.f32 %v5625, %v5866
      %v5938 = vadd.f32 %v5626, %v5842
      %v5939 = vld [vmem:[%s2756] sm:$0xff]
      %v5940 = vld [vmem:[%s2756 + $0x8] sm:$0xff]
      %v5941 = vld [vmem:[%s2756 + $0x10] sm:$0xff]
      %v5942 = vld [vmem:[%s2756 + $0x18] sm:$0xff]
      %v5943 = vld [vmem:[%s2756 + $0x20] sm:$0xff]
      %v5944 = vld [vmem:[%s2756 + $0x28] sm:$0xff]
      %v5945 = vld [vmem:[%s2756 + $0x30] sm:$0xff]
      %v5946 = vld [vmem:[%s2756 + $0x38] sm:$0xff]
      %v5947 = vld [vmem:[%s2756 + $0x40] sm:$0xff]
      %v5948 = vld [vmem:[%s2756 + $0x48] sm:$0xff]
      %v5949 = vld [vmem:[%s2756 + $0x50] sm:$0xff]
      %v5950 = vld [vmem:[%s2756 + $0x58] sm:$0xff]
      %5952 = vset.pattern.permute.xlu0 0
      %5953 = vperm.xlu0 %5952, %v5939
      %v5954 = vpop.permute.xlu0 %5953
      %5957 = vset.pattern.permute.xlu0 0
      %5958 = vperm.xlu0 %5957, %v5940
      %v5959 = vpop.permute.xlu0 %5958
      %5962 = vset.pattern.permute.xlu0 0
      %5963 = vperm.xlu0 %5962, %v5941
      %v5964 = vpop.permute.xlu0 %5963
      %5967 = vset.pattern.permute.xlu0 0
      %5968 = vperm.xlu0 %5967, %v5942
      %v5969 = vpop.permute.xlu0 %5968
      %5972 = vset.pattern.permute.xlu0 0
      %5973 = vperm.xlu0 %5972, %v5943
      %v5974 = vpop.permute.xlu0 %5973
      %5977 = vset.pattern.permute.xlu0 0
      %5978 = vperm.xlu0 %5977, %v5944
      %v5979 = vpop.permute.xlu0 %5978
      %5982 = vset.pattern.permute.xlu0 0
      %5983 = vperm.xlu0 %5982, %v5945
      %v5984 = vpop.permute.xlu0 %5983
      %5987 = vset.pattern.permute.xlu0 0
      %5988 = vperm.xlu0 %5987, %v5946
      %v5989 = vpop.permute.xlu0 %5988
      %5992 = vset.pattern.permute.xlu0 0
      %5993 = vperm.xlu0 %5992, %v5947
      %v5994 = vpop.permute.xlu0 %5993
      %5997 = vset.pattern.permute.xlu0 0
      %5998 = vperm.xlu0 %5997, %v5948
      %v5999 = vpop.permute.xlu0 %5998
      %6002 = vset.pattern.permute.xlu0 0
      %6003 = vperm.xlu0 %6002, %v5949
      %v6004 = vpop.permute.xlu0 %6003
      %6007 = vset.pattern.permute.xlu0 0
      %6008 = vperm.xlu0 %6007, %v5950
      %v6009 = vpop.permute.xlu0 %6008
      %v6011 = vmul.f32 %v5954, %v3887
      %v6012 = vmul.f32 %v5954, %v3888
      %v6013 = vmul.f32 %v5954, %v3889
      %v6014 = vmul.f32 %v5959, %v3890
      %v6015 = vmul.f32 %v5959, %v3891
      %v6016 = vmul.f32 %v5959, %v3892
      %v6017 = vmul.f32 %v5964, %v3893
      %v6018 = vmul.f32 %v5964, %v3894
      %v6019 = vmul.f32 %v5964, %v3895
      %v6020 = vmul.f32 %v5969, %v3896
      %v6021 = vmul.f32 %v5969, %v3897
      %v6022 = vmul.f32 %v5969, %v3898
      %v6023 = vmul.f32 %v5974, %v3899
      %v6024 = vmul.f32 %v5974, %v3900
      %v6025 = vmul.f32 %v5974, %v3901
      %v6026 = vmul.f32 %v5979, %v3902
      %v6027 = vmul.f32 %v5979, %v3903
      %v6028 = vmul.f32 %v5979, %v3904
      %v6029 = vmul.f32 %v5984, %v3905
      %v6030 = vmul.f32 %v5984, %v3906
      %v6031 = vmul.f32 %v5984, %v3907
      %v6032 = vmul.f32 %v5989, %v3908
      %v6033 = vmul.f32 %v5989, %v3909
      %v6034 = vmul.f32 %v5989, %v3910
      %v6035 = vmul.f32 %v5994, %v3911
      %v6036 = vmul.f32 %v5994, %v3912
      %v6037 = vmul.f32 %v5994, %v3913
      %v6038 = vmul.f32 %v5999, %v3914
      %v6039 = vmul.f32 %v5999, %v3915
      %v6040 = vmul.f32 %v5999, %v3916
      %v6041 = vmul.f32 %v6004, %v3917
      %v6042 = vmul.f32 %v6004, %v3918
      %v6043 = vmul.f32 %v6004, %v3919
      %v6044 = vmul.f32 %v6009, %v3920
      %v6045 = vmul.f32 %v6009, %v3921
      %v6046 = vmul.f32 %v6009, %v3922
      %6083 = vrot.lane.b32.xlu0 %v6011, 96
      %v6084 = vpop.permute.xlu0 %6083
      %6085 = vrot.lane.b32.xlu0 %v6012, 96
      %v6086 = vpop.permute.xlu0 %6085
      %6087 = vrot.lane.b32.xlu0 %v6013, 96
      %v6088 = vpop.permute.xlu0 %6087
      %6089 = vrot.lane.b32.xlu0 %v6014, 96
      %v6090 = vpop.permute.xlu0 %6089
      %6091 = vrot.lane.b32.xlu0 %v6015, 96
      %v6092 = vpop.permute.xlu0 %6091
      %6093 = vrot.lane.b32.xlu0 %v6016, 96
      %v6094 = vpop.permute.xlu0 %6093
      %6095 = vrot.lane.b32.xlu0 %v6017, 96
      %v6096 = vpop.permute.xlu0 %6095
      %6097 = vrot.lane.b32.xlu0 %v6018, 96
      %v6098 = vpop.permute.xlu0 %6097
      %6099 = vrot.lane.b32.xlu0 %v6019, 96
      %v6100 = vpop.permute.xlu0 %6099
      %6101 = vrot.lane.b32.xlu0 %v6020, 96
      %v6102 = vpop.permute.xlu0 %6101
      %6103 = vrot.lane.b32.xlu0 %v6021, 96
      %v6104 = vpop.permute.xlu0 %6103
      %6105 = vrot.lane.b32.xlu0 %v6022, 96
      %v6106 = vpop.permute.xlu0 %6105
      %6107 = vrot.lane.b32.xlu0 %v6023, 96
      %v6108 = vpop.permute.xlu0 %6107
      %6109 = vrot.lane.b32.xlu0 %v6024, 96
      %v6110 = vpop.permute.xlu0 %6109
      %6111 = vrot.lane.b32.xlu0 %v6025, 96
      %v6112 = vpop.permute.xlu0 %6111
      %6113 = vrot.lane.b32.xlu0 %v6026, 96
      %v6114 = vpop.permute.xlu0 %6113
      %6115 = vrot.lane.b32.xlu0 %v6027, 96
      %v6116 = vpop.permute.xlu0 %6115
      %6117 = vrot.lane.b32.xlu0 %v6028, 96
      %v6118 = vpop.permute.xlu0 %6117
      %6119 = vrot.lane.b32.xlu0 %v6029, 96
      %v6120 = vpop.permute.xlu0 %6119
      %6121 = vrot.lane.b32.xlu0 %v6030, 96
      %v6122 = vpop.permute.xlu0 %6121
      %6123 = vrot.lane.b32.xlu0 %v6031, 96
      %v6124 = vpop.permute.xlu0 %6123
      %6125 = vrot.lane.b32.xlu0 %v6032, 96
      %v6126 = vpop.permute.xlu0 %6125
      %6127 = vrot.lane.b32.xlu0 %v6033, 96
      %v6128 = vpop.permute.xlu0 %6127
      %6129 = vrot.lane.b32.xlu0 %v6034, 96
      %v6130 = vpop.permute.xlu0 %6129
      %6131 = vrot.lane.b32.xlu0 %v6035, 96
      %v6132 = vpop.permute.xlu0 %6131
      %6133 = vrot.lane.b32.xlu0 %v6036, 96
      %v6134 = vpop.permute.xlu0 %6133
      %6135 = vrot.lane.b32.xlu0 %v6037, 96
      %v6136 = vpop.permute.xlu0 %6135
      %6137 = vrot.lane.b32.xlu0 %v6038, 96
      %v6138 = vpop.permute.xlu0 %6137
      %6139 = vrot.lane.b32.xlu0 %v6039, 96
      %v6140 = vpop.permute.xlu0 %6139
      %6141 = vrot.lane.b32.xlu0 %v6040, 96
      %v6142 = vpop.permute.xlu0 %6141
      %6143 = vrot.lane.b32.xlu0 %v6041, 96
      %v6144 = vpop.permute.xlu0 %6143
      %6145 = vrot.lane.b32.xlu0 %v6042, 96
      %v6146 = vpop.permute.xlu0 %6145
      %6147 = vrot.lane.b32.xlu0 %v6043, 96
      %v6148 = vpop.permute.xlu0 %6147
      %6149 = vrot.lane.b32.xlu0 %v6044, 96
      %v6150 = vpop.permute.xlu0 %6149
      %6151 = vrot.lane.b32.xlu0 %v6045, 96
      %v6152 = vpop.permute.xlu0 %6151
      %6153 = vrot.lane.b32.xlu0 %v6046, 96
      %v6154 = vpop.permute.xlu0 %6153
      %v6155 = vsel %vm1358, %v6084, %v6086
      %v6156 = vsel %vm1358, %v6086, %v6088
      %v6157 = vsel %vm1358, %v6090, %v6092
      %v6158 = vsel %vm1358, %v6092, %v6094
      %v6159 = vsel %vm1358, %v6096, %v6098
      %v6160 = vsel %vm1358, %v6098, %v6100
      %v6161 = vsel %vm1358, %v6102, %v6104
      %v6162 = vsel %vm1358, %v6104, %v6106
      %v6163 = vsel %vm1358, %v6108, %v6110
      %v6164 = vsel %vm1358, %v6110, %v6112
      %v6165 = vsel %vm1358, %v6114, %v6116
      %v6166 = vsel %vm1358, %v6116, %v6118
      %v6167 = vsel %vm1358, %v6120, %v6122
      %v6168 = vsel %vm1358, %v6122, %v6124
      %v6169 = vsel %vm1358, %v6126, %v6128
      %v6170 = vsel %vm1358, %v6128, %v6130
      %v6171 = vsel %vm1358, %v6132, %v6134
      %v6172 = vsel %vm1358, %v6134, %v6136
      %v6173 = vsel %vm1358, %v6138, %v6140
      %v6174 = vsel %vm1358, %v6140, %v6142
      %v6175 = vsel %vm1358, %v6144, %v6146
      %v6176 = vsel %vm1358, %v6146, %v6148
      %v6177 = vsel %vm1358, %v6150, %v6152
      %v6178 = vsel %vm1358, %v6152, %v6154
      %v6215 = vadd.f32 %v5903, %v6155
      %v6216 = vadd.f32 %v5904, %v6156
      %v6217 = vadd.f32 %v5905, %v6088
      %v6218 = vadd.f32 %v5906, %v6157
      %v6219 = vadd.f32 %v5907, %v6158
      %v6220 = vadd.f32 %v5908, %v6094
      %v6221 = vadd.f32 %v5909, %v6159
      %v6222 = vadd.f32 %v5910, %v6160
      %v6223 = vadd.f32 %v5911, %v6100
      %v6224 = vadd.f32 %v5912, %v6161
      %v6225 = vadd.f32 %v5913, %v6162
      %v6226 = vadd.f32 %v5914, %v6106
      %v6227 = vadd.f32 %v5915, %v6163
      %v6228 = vadd.f32 %v5916, %v6164
      %v6229 = vadd.f32 %v5917, %v6112
      %v6230 = vadd.f32 %v5918, %v6165
      %v6231 = vadd.f32 %v5919, %v6166
      %v6232 = vadd.f32 %v5920, %v6118
      %v6233 = vadd.f32 %v5921, %v6167
      %v6234 = vadd.f32 %v5922, %v6168
      %v6235 = vadd.f32 %v5923, %v6124
      %v6236 = vadd.f32 %v5924, %v6169
      %v6237 = vadd.f32 %v5925, %v6170
      %v6238 = vadd.f32 %v5926, %v6130
      %v6239 = vadd.f32 %v5927, %v6171
      %v6240 = vadd.f32 %v5928, %v6172
      %v6241 = vadd.f32 %v5929, %v6136
      %v6242 = vadd.f32 %v5930, %v6173
      %v6243 = vadd.f32 %v5931, %v6174
      %v6244 = vadd.f32 %v5932, %v6142
      %v6245 = vadd.f32 %v5933, %v6175
      %v6246 = vadd.f32 %v5934, %v6176
      %v6247 = vadd.f32 %v5935, %v6148
      %v6248 = vadd.f32 %v5936, %v6177
      %v6249 = vadd.f32 %v5937, %v6178
      %v6250 = vadd.f32 %v5938, %v6154
      %6287 = vrot.lane.b32.xlu0 %v6215, 126
      %v6288 = vpop.permute.xlu0 %6287
      %6289 = vrot.lane.b32.xlu0 %v6216, 126
      %v6290 = vpop.permute.xlu0 %6289
      %6291 = vrot.lane.b32.xlu0 %v6217, 126
      %v6292 = vpop.permute.xlu0 %6291
      %6293 = vrot.lane.b32.xlu0 %v6218, 126
      %v6294 = vpop.permute.xlu0 %6293
      %6295 = vrot.lane.b32.xlu0 %v6219, 126
      %v6296 = vpop.permute.xlu0 %6295
      %6297 = vrot.lane.b32.xlu0 %v6220, 126
      %v6298 = vpop.permute.xlu0 %6297
      %6299 = vrot.lane.b32.xlu0 %v6221, 126
      %v6300 = vpop.permute.xlu0 %6299
      %6301 = vrot.lane.b32.xlu0 %v6222, 126
      %v6302 = vpop.permute.xlu0 %6301
      %6303 = vrot.lane.b32.xlu0 %v6223, 126
      %v6304 = vpop.permute.xlu0 %6303
      %6305 = vrot.lane.b32.xlu0 %v6224, 126
      %v6306 = vpop.permute.xlu0 %6305
      %6307 = vrot.lane.b32.xlu0 %v6225, 126
      %v6308 = vpop.permute.xlu0 %6307
      %6309 = vrot.lane.b32.xlu0 %v6226, 126
      %v6310 = vpop.permute.xlu0 %6309
      %6311 = vrot.lane.b32.xlu0 %v6227, 126
      %v6312 = vpop.permute.xlu0 %6311
      %6313 = vrot.lane.b32.xlu0 %v6228, 126
      %v6314 = vpop.permute.xlu0 %6313
      %6315 = vrot.lane.b32.xlu0 %v6229, 126
      %v6316 = vpop.permute.xlu0 %6315
      %6317 = vrot.lane.b32.xlu0 %v6230, 126
      %v6318 = vpop.permute.xlu0 %6317
      %6319 = vrot.lane.b32.xlu0 %v6231, 126
      %v6320 = vpop.permute.xlu0 %6319
      %6321 = vrot.lane.b32.xlu0 %v6232, 126
      %v6322 = vpop.permute.xlu0 %6321
      %6323 = vrot.lane.b32.xlu0 %v6233, 126
      %v6324 = vpop.permute.xlu0 %6323
      %6325 = vrot.lane.b32.xlu0 %v6234, 126
      %v6326 = vpop.permute.xlu0 %6325
      %6327 = vrot.lane.b32.xlu0 %v6235, 126
      %v6328 = vpop.permute.xlu0 %6327
      %6329 = vrot.lane.b32.xlu0 %v6236, 126
      %v6330 = vpop.permute.xlu0 %6329
      %6331 = vrot.lane.b32.xlu0 %v6237, 126
      %v6332 = vpop.permute.xlu0 %6331
      %6333 = vrot.lane.b32.xlu0 %v6238, 126
      %v6334 = vpop.permute.xlu0 %6333
      %6335 = vrot.lane.b32.xlu0 %v6239, 126
      %v6336 = vpop.permute.xlu0 %6335
      %6337 = vrot.lane.b32.xlu0 %v6240, 126
      %v6338 = vpop.permute.xlu0 %6337
      %6339 = vrot.lane.b32.xlu0 %v6241, 126
      %v6340 = vpop.permute.xlu0 %6339
      %6341 = vrot.lane.b32.xlu0 %v6242, 126
      %v6342 = vpop.permute.xlu0 %6341
      %6343 = vrot.lane.b32.xlu0 %v6243, 126
      %v6344 = vpop.permute.xlu0 %6343
      %6345 = vrot.lane.b32.xlu0 %v6244, 126
      %v6346 = vpop.permute.xlu0 %6345
      %6347 = vrot.lane.b32.xlu0 %v6245, 126
      %v6348 = vpop.permute.xlu0 %6347
      %6349 = vrot.lane.b32.xlu0 %v6246, 126
      %v6350 = vpop.permute.xlu0 %6349
      %6351 = vrot.lane.b32.xlu0 %v6247, 126
      %v6352 = vpop.permute.xlu0 %6351
      %6353 = vrot.lane.b32.xlu0 %v6248, 126
      %v6354 = vpop.permute.xlu0 %6353
      %6355 = vrot.lane.b32.xlu0 %v6249, 126
      %v6356 = vpop.permute.xlu0 %6355
      %6357 = vrot.lane.b32.xlu0 %v6250, 126
      %v6358 = vpop.permute.xlu0 %6357
      %v6359 = vsel %vm3177, %v6288, %v6290
      %v6360 = vsel %vm3177, %v6290, %v6292
      %v6361 = vsel %vm3177, %v6294, %v6296
      %v6362 = vsel %vm3177, %v6296, %v6298
      %v6363 = vsel %vm3177, %v6300, %v6302
      %v6364 = vsel %vm3177, %v6302, %v6304
      %v6365 = vsel %vm3177, %v6306, %v6308
      %v6366 = vsel %vm3177, %v6308, %v6310
      %v6367 = vsel %vm3177, %v6312, %v6314
      %v6368 = vsel %vm3177, %v6314, %v6316
      %v6369 = vsel %vm3177, %v6318, %v6320
      %v6370 = vsel %vm3177, %v6320, %v6322
      %v6371 = vsel %vm3177, %v6324, %v6326
      %v6372 = vsel %vm3177, %v6326, %v6328
      %v6373 = vsel %vm3177, %v6330, %v6332
      %v6374 = vsel %vm3177, %v6332, %v6334
      %v6375 = vsel %vm3177, %v6336, %v6338
      %v6376 = vsel %vm3177, %v6338, %v6340
      %v6377 = vsel %vm3177, %v6342, %v6344
      %v6378 = vsel %vm3177, %v6344, %v6346
      %v6379 = vsel %vm3177, %v6348, %v6350
      %v6380 = vsel %vm3177, %v6350, %v6352
      %v6381 = vsel %vm3177, %v6354, %v6356
      %v6382 = vsel %vm3177, %v6356, %v6358
      %v6407 = vmul.f32 %v391, %v6359
      %v6408 = vmul.f32 %v392, %v6360
      %v6409 = vmul.f32 %v391, %v6361
      %v6410 = vmul.f32 %v392, %v6362
      %v6411 = vmul.f32 %v391, %v6363
      %v6412 = vmul.f32 %v392, %v6364
      %v6413 = vmul.f32 %v391, %v6365
      %v6414 = vmul.f32 %v392, %v6366
      %v6415 = vmul.f32 %v391, %v6367
      %v6416 = vmul.f32 %v392, %v6368
      %v6417 = vmul.f32 %v391, %v6369
      %v6418 = vmul.f32 %v392, %v6370
      %v6419 = vmul.f32 %v391, %v6371
      %v6420 = vmul.f32 %v392, %v6372
      %v6421 = vmul.f32 %v391, %v6373
      %v6422 = vmul.f32 %v392, %v6374
      %v6423 = vmul.f32 %v391, %v6375
      %v6424 = vmul.f32 %v392, %v6376
      %v6425 = vmul.f32 %v391, %v6377
      %v6426 = vmul.f32 %v392, %v6378
      %v6427 = vmul.f32 %v391, %v6379
      %v6428 = vmul.f32 %v392, %v6380
      %v6429 = vmul.f32 %v391, %v6381
      %v6430 = vmul.f32 %v392, %v6382
      %6455 = vrot.lane.b32.xlu0 %v6407, 1
      %v6456 = vpop.permute.xlu0 %6455
      %6457 = vrot.lane.b32.xlu0 %v6408, 1
      %v6458 = vpop.permute.xlu0 %6457
      %6459 = vrot.lane.b32.xlu0 %v6409, 1
      %v6460 = vpop.permute.xlu0 %6459
      %6461 = vrot.lane.b32.xlu0 %v6410, 1
      %v6462 = vpop.permute.xlu0 %6461
      %6463 = vrot.lane.b32.xlu0 %v6411, 1
      %v6464 = vpop.permute.xlu0 %6463
      %6465 = vrot.lane.b32.xlu0 %v6412, 1
      %v6466 = vpop.permute.xlu0 %6465
      %6467 = vrot.lane.b32.xlu0 %v6413, 1
      %v6468 = vpop.permute.xlu0 %6467
      %6469 = vrot.lane.b32.xlu0 %v6414, 1
      %v6470 = vpop.permute.xlu0 %6469
      %6471 = vrot.lane.b32.xlu0 %v6415, 1
      %v6472 = vpop.permute.xlu0 %6471
      %6473 = vrot.lane.b32.xlu0 %v6416, 1
      %v6474 = vpop.permute.xlu0 %6473
      %6475 = vrot.lane.b32.xlu0 %v6417, 1
      %v6476 = vpop.permute.xlu0 %6475
      %6477 = vrot.lane.b32.xlu0 %v6418, 1
      %v6478 = vpop.permute.xlu0 %6477
      %6479 = vrot.lane.b32.xlu0 %v6419, 1
      %v6480 = vpop.permute.xlu0 %6479
      %6481 = vrot.lane.b32.xlu0 %v6420, 1
      %v6482 = vpop.permute.xlu0 %6481
      %6483 = vrot.lane.b32.xlu0 %v6421, 1
      %v6484 = vpop.permute.xlu0 %6483
      %6485 = vrot.lane.b32.xlu0 %v6422, 1
      %v6486 = vpop.permute.xlu0 %6485
      %6487 = vrot.lane.b32.xlu0 %v6423, 1
      %v6488 = vpop.permute.xlu0 %6487
      %6489 = vrot.lane.b32.xlu0 %v6424, 1
      %v6490 = vpop.permute.xlu0 %6489
      %6491 = vrot.lane.b32.xlu0 %v6425, 1
      %v6492 = vpop.permute.xlu0 %6491
      %6493 = vrot.lane.b32.xlu0 %v6426, 1
      %v6494 = vpop.permute.xlu0 %6493
      %6495 = vrot.lane.b32.xlu0 %v6427, 1
      %v6496 = vpop.permute.xlu0 %6495
      %6497 = vrot.lane.b32.xlu0 %v6428, 1
      %v6498 = vpop.permute.xlu0 %6497
      %6499 = vrot.lane.b32.xlu0 %v6429, 1
      %v6500 = vpop.permute.xlu0 %6499
      %6501 = vrot.lane.b32.xlu0 %v6430, 1
      %v6502 = vpop.permute.xlu0 %6501
      %v6503 = vsel %vm2249, %v6456, %v6458
      %v6504 = vsel %vm2249, %v6460, %v6462
      %v6505 = vsel %vm2249, %v6464, %v6466
      %v6506 = vsel %vm2249, %v6468, %v6470
      %v6507 = vsel %vm2249, %v6472, %v6474
      %v6508 = vsel %vm2249, %v6476, %v6478
      %v6509 = vsel %vm2249, %v6480, %v6482
      %v6510 = vsel %vm2249, %v6484, %v6486
      %v6511 = vsel %vm2249, %v6488, %v6490
      %v6512 = vsel %vm2249, %v6492, %v6494
      %v6513 = vsel %vm2249, %v6496, %v6498
      %v6514 = vsel %vm2249, %v6500, %v6502
      %v6551 = vadd.f32 %v5483, %v6456
      %v6552 = vadd.f32 %v5484, %v6503
      %v6553 = vadd.f32 %v5485, %v6458
      %v6554 = vadd.f32 %v5486, %v6460
      %v6555 = vadd.f32 %v5487, %v6504
      %v6556 = vadd.f32 %v5488, %v6462
      %v6557 = vadd.f32 %v5489, %v6464
      %v6558 = vadd.f32 %v5490, %v6505
      %v6559 = vadd.f32 %v5491, %v6466
      %v6560 = vadd.f32 %v5492, %v6468
      %v6561 = vadd.f32 %v5493, %v6506
      %v6562 = vadd.f32 %v5494, %v6470
      %v6563 = vadd.f32 %v5495, %v6472
      %v6564 = vadd.f32 %v5496, %v6507
      %v6565 = vadd.f32 %v5497, %v6474
      %v6566 = vadd.f32 %v5498, %v6476
      %v6567 = vadd.f32 %v5499, %v6508
      %v6568 = vadd.f32 %v5500, %v6478
      %v6569 = vadd.f32 %v5501, %v6480
      %v6570 = vadd.f32 %v5502, %v6509
      %v6571 = vadd.f32 %v5503, %v6482
      %v6572 = vadd.f32 %v5504, %v6484
      %v6573 = vadd.f32 %v5505, %v6510
      %v6574 = vadd.f32 %v5506, %v6486
      %v6575 = vadd.f32 %v5507, %v6488
      %v6576 = vadd.f32 %v5508, %v6511
      %v6577 = vadd.f32 %v5509, %v6490
      %v6578 = vadd.f32 %v5510, %v6492
      %v6579 = vadd.f32 %v5511, %v6512
      %v6580 = vadd.f32 %v5512, %v6494
      %v6581 = vadd.f32 %v5513, %v6496
      %v6582 = vadd.f32 %v5514, %v6513
      %v6583 = vadd.f32 %v5515, %v6498
      %v6584 = vadd.f32 %v5516, %v6500
      %v6585 = vadd.f32 %v5517, %v6514
      %v6586 = vadd.f32 %v5518, %v6502
      %6623 = vrot.lane.b32.xlu0 %v6551, 127
      %v6624 = vpop.permute.xlu0 %6623
      %6625 = vrot.lane.b32.xlu0 %v6552, 127
      %v6626 = vpop.permute.xlu0 %6625
      %6627 = vrot.lane.b32.xlu0 %v6553, 127
      %v6628 = vpop.permute.xlu0 %6627
      %6629 = vrot.lane.b32.xlu0 %v6554, 127
      %v6630 = vpop.permute.xlu0 %6629
      %6631 = vrot.lane.b32.xlu0 %v6555, 127
      %v6632 = vpop.permute.xlu0 %6631
      %6633 = vrot.lane.b32.xlu0 %v6556, 127
      %v6634 = vpop.permute.xlu0 %6633
      %6635 = vrot.lane.b32.xlu0 %v6557, 127
      %v6636 = vpop.permute.xlu0 %6635
      %6637 = vrot.lane.b32.xlu0 %v6558, 127
      %v6638 = vpop.permute.xlu0 %6637
      %6639 = vrot.lane.b32.xlu0 %v6559, 127
      %v6640 = vpop.permute.xlu0 %6639
      %6641 = vrot.lane.b32.xlu0 %v6560, 127
      %v6642 = vpop.permute.xlu0 %6641
      %6643 = vrot.lane.b32.xlu0 %v6561, 127
      %v6644 = vpop.permute.xlu0 %6643
      %6645 = vrot.lane.b32.xlu0 %v6562, 127
      %v6646 = vpop.permute.xlu0 %6645
      %6647 = vrot.lane.b32.xlu0 %v6563, 127
      %v6648 = vpop.permute.xlu0 %6647
      %6649 = vrot.lane.b32.xlu0 %v6564, 127
      %v6650 = vpop.permute.xlu0 %6649
      %6651 = vrot.lane.b32.xlu0 %v6565, 127
      %v6652 = vpop.permute.xlu0 %6651
      %6653 = vrot.lane.b32.xlu0 %v6566, 127
      %v6654 = vpop.permute.xlu0 %6653
      %6655 = vrot.lane.b32.xlu0 %v6567, 127
      %v6656 = vpop.permute.xlu0 %6655
      %6657 = vrot.lane.b32.xlu0 %v6568, 127
      %v6658 = vpop.permute.xlu0 %6657
      %6659 = vrot.lane.b32.xlu0 %v6569, 127
      %v6660 = vpop.permute.xlu0 %6659
      %6661 = vrot.lane.b32.xlu0 %v6570, 127
      %v6662 = vpop.permute.xlu0 %6661
      %6663 = vrot.lane.b32.xlu0 %v6571, 127
      %v6664 = vpop.permute.xlu0 %6663
      %6665 = vrot.lane.b32.xlu0 %v6572, 127
      %v6666 = vpop.permute.xlu0 %6665
      %6667 = vrot.lane.b32.xlu0 %v6573, 127
      %v6668 = vpop.permute.xlu0 %6667
      %6669 = vrot.lane.b32.xlu0 %v6574, 127
      %v6670 = vpop.permute.xlu0 %6669
      %6671 = vrot.lane.b32.xlu0 %v6575, 127
      %v6672 = vpop.permute.xlu0 %6671
      %6673 = vrot.lane.b32.xlu0 %v6576, 127
      %v6674 = vpop.permute.xlu0 %6673
      %6675 = vrot.lane.b32.xlu0 %v6577, 127
      %v6676 = vpop.permute.xlu0 %6675
      %6677 = vrot.lane.b32.xlu0 %v6578, 127
      %v6678 = vpop.permute.xlu0 %6677
      %6679 = vrot.lane.b32.xlu0 %v6579, 127
      %v6680 = vpop.permute.xlu0 %6679
      %6681 = vrot.lane.b32.xlu0 %v6580, 127
      %v6682 = vpop.permute.xlu0 %6681
      %6683 = vrot.lane.b32.xlu0 %v6581, 127
      %v6684 = vpop.permute.xlu0 %6683
      %6685 = vrot.lane.b32.xlu0 %v6582, 127
      %v6686 = vpop.permute.xlu0 %6685
      %6687 = vrot.lane.b32.xlu0 %v6583, 127
      %v6688 = vpop.permute.xlu0 %6687
      %6689 = vrot.lane.b32.xlu0 %v6584, 127
      %v6690 = vpop.permute.xlu0 %6689
      %6691 = vrot.lane.b32.xlu0 %v6585, 127
      %v6692 = vpop.permute.xlu0 %6691
      %6693 = vrot.lane.b32.xlu0 %v6586, 127
      %v6694 = vpop.permute.xlu0 %6693
      %v6695 = vsel %vm3514, %v6624, %v6626
      %v6696 = vsel %vm3514, %v6626, %v6628
      %v6697 = vsel %vm3514, %v6630, %v6632
      %v6698 = vsel %vm3514, %v6632, %v6634
      %v6699 = vsel %vm3514, %v6636, %v6638
      %v6700 = vsel %vm3514, %v6638, %v6640
      %v6701 = vsel %vm3514, %v6642, %v6644
      %v6702 = vsel %vm3514, %v6644, %v6646
      %v6703 = vsel %vm3514, %v6648, %v6650
      %v6704 = vsel %vm3514, %v6650, %v6652
      %v6705 = vsel %vm3514, %v6654, %v6656
      %v6706 = vsel %vm3514, %v6656, %v6658
      %v6707 = vsel %vm3514, %v6660, %v6662
      %v6708 = vsel %vm3514, %v6662, %v6664
      %v6709 = vsel %vm3514, %v6666, %v6668
      %v6710 = vsel %vm3514, %v6668, %v6670
      %v6711 = vsel %vm3514, %v6672, %v6674
      %v6712 = vsel %vm3514, %v6674, %v6676
      %v6713 = vsel %vm3514, %v6678, %v6680
      %v6714 = vsel %vm3514, %v6680, %v6682
      %v6715 = vsel %vm3514, %v6684, %v6686
      %v6716 = vsel %vm3514, %v6686, %v6688
      %v6717 = vsel %vm3514, %v6690, %v6692
      %v6718 = vsel %vm3514, %v6692, %v6694
      %6743 = vst [vmem:[#allocation4] sm:$0xff] %v6695
      %6744 = vst [vmem:[#allocation4 + $0x8] sm:$0xff] %v6696
      %6745 = vst [vmem:[#allocation4 + $0x10] sm:$0xff] %v6697
      %6746 = vst [vmem:[#allocation4 + $0x18] sm:$0xff] %v6698
      %6747 = vst [vmem:[#allocation4 + $0x20] sm:$0xff] %v6699
      %6748 = vst [vmem:[#allocation4 + $0x28] sm:$0xff] %v6700
      %6749 = vst [vmem:[#allocation4 + $0x30] sm:$0xff] %v6701
      %6750 = vst [vmem:[#allocation4 + $0x38] sm:$0xff] %v6702
      %6751 = vst [vmem:[#allocation4 + $0x40] sm:$0xff] %v6703
      %6752 = vst [vmem:[#allocation4 + $0x48] sm:$0xff] %v6704
      %6753 = vst [vmem:[#allocation4 + $0x50] sm:$0xff] %v6705
      %6754 = vst [vmem:[#allocation4 + $0x58] sm:$0xff] %v6706
      %6755 = vst [vmem:[#allocation4 + $0x60] sm:$0xff] %v6707
      %6756 = vst [vmem:[#allocation4 + $0x68] sm:$0xff] %v6708
      %6757 = vst [vmem:[#allocation4 + $0x70] sm:$0xff] %v6709
      %6758 = vst [vmem:[#allocation4 + $0x78] sm:$0xff] %v6710
      %6759 = vst [vmem:[#allocation4 + $0x80] sm:$0xff] %v6711
      %6760 = vst [vmem:[#allocation4 + $0x88] sm:$0xff] %v6712
      %6761 = vst [vmem:[#allocation4 + $0x90] sm:$0xff] %v6713
      %6762 = vst [vmem:[#allocation4 + $0x98] sm:$0xff] %v6714
      %6763 = vst [vmem:[#allocation4 + $0xa0] sm:$0xff] %v6715
      %6764 = vst [vmem:[#allocation4 + $0xa8] sm:$0xff] %v6716
      %6765 = vst [vmem:[#allocation4 + $0xb0] sm:$0xff] %v6717
      %6766 = vst [vmem:[#allocation4 + $0xb8] sm:$0xff] %v6718
      %v6767 = vld [vmem:[#allocation3] sm:$0xff]
      %v6768 = vld [vmem:[#allocation3 + $0x8] sm:$0xff]
      %v6769 = vld [vmem:[#allocation3 + $0x10] sm:$0xff]
      %v6770 = vld [vmem:[#allocation3 + $0x18] sm:$0xff]
      %v6771 = vld [vmem:[#allocation3 + $0x20] sm:$0xff]
      %v6772 = vld [vmem:[#allocation3 + $0x28] sm:$0xff]
      %v6773 = vld [vmem:[#allocation3 + $0x30] sm:$0xff]
      %v6774 = vld [vmem:[#allocation3 + $0x38] sm:$0xff]
      %v6775 = vmul.f32 %v6767, %v6767
      %v6776 = vmul.f32 %v6768, %v6768
      %v6777 = vmul.f32 %v6769, %v6769
      %v6778 = vmul.f32 %v6770, %v6770
      %v6779 = vmul.f32 %v6771, %v6771
      %v6780 = vmul.f32 %v6772, %v6772
      %v6781 = vmul.f32 %v6773, %v6773
      %v6782 = vmul.f32 %v6774, %v6774
      %v6783 = vadd.f32 %v6775, %v6776
      %6784 = vadd.xlane.f32.xlu0 %v6783
      %v6785 = vpop.xlane.xlu0 %6784
      %v6786 = vadd.f32 %v6777, %v6778
      %6787 = vadd.xlane.f32.xlu0 %v6786
      %v6788 = vpop.xlane.xlu0 %6787
      %v6789 = vadd.f32 %v6779, %v6780
      %6790 = vadd.xlane.f32.xlu0 %v6789
      %v6791 = vpop.xlane.xlu0 %6790
      %v6792 = vadd.f32 %v6781, %v6782
      %6793 = vadd.xlane.f32.xlu0 %v6792
      %v6794 = vpop.xlane.xlu0 %6793
      %v6795 = vmax.f32 %v6785, 1e-24
      %v6796 = vmax.f32 %v6788, 1e-24
      %v6797 = vmax.f32 %v6791, 1e-24
      %v6798 = vmax.f32 %v6794, 1e-24
      %v6799 = vrsqrt.pop %v6795
      %v6800 = vrsqrt.pop %v6796
      %v6801 = vrsqrt.pop %v6797
      %v6802 = vrsqrt.pop %v6798
      %v6803 = vmul.f32 %v6767, %v6799
      %v6804 = vmul.f32 %v6768, %v6799
      %v6805 = vmul.f32 %v6769, %v6800
      %v6806 = vmul.f32 %v6770, %v6800
      %v6807 = vmul.f32 %v6771, %v6801
      %v6808 = vmul.f32 %v6772, %v6801
      %v6809 = vmul.f32 %v6773, %v6802
      %v6810 = vmul.f32 %v6774, %v6802
      %v6811 = vpack.c.bf16 %v6805, %v6803
      %v6812 = vpack.c.bf16 %v6806, %v6804
      %v6813 = vpack.c.bf16 %v6809, %v6807
      %v6814 = vpack.c.bf16 %v6810, %v6808
      %v6815 = vld [vmem:[#allocation4] sm:$0xff]
      %v6816 = vld [vmem:[#allocation4 + $0x8] sm:$0xff]
      %v6817 = vld [vmem:[#allocation4 + $0x10] sm:$0xff]
      %v6818 = vld [vmem:[#allocation4 + $0x18] sm:$0xff]
      %v6819 = vld [vmem:[#allocation4 + $0x20] sm:$0xff]
      %v6820 = vld [vmem:[#allocation4 + $0x28] sm:$0xff]
      %v6821 = vld [vmem:[#allocation4 + $0x30] sm:$0xff]
      %v6822 = vld [vmem:[#allocation4 + $0x38] sm:$0xff]
      %v6823 = vmul.f32 %v6815, %v6815
      %v6824 = vmul.f32 %v6816, %v6816
      %v6825 = vmul.f32 %v6817, %v6817
      %v6826 = vmul.f32 %v6818, %v6818
      %v6827 = vmul.f32 %v6819, %v6819
      %v6828 = vmul.f32 %v6820, %v6820
      %v6829 = vmul.f32 %v6821, %v6821
      %v6830 = vmul.f32 %v6822, %v6822
      %v6831 = vadd.f32 %v6823, %v6824
      %6832 = vadd.xlane.f32.xlu0 %v6831
      %v6833 = vpop.xlane.xlu0 %6832
      %v6834 = vadd.f32 %v6825, %v6826
      %6835 = vadd.xlane.f32.xlu0 %v6834
      %v6836 = vpop.xlane.xlu0 %6835
      %v6837 = vadd.f32 %v6827, %v6828
      %6838 = vadd.xlane.f32.xlu0 %v6837
      %v6839 = vpop.xlane.xlu0 %6838
      %v6840 = vadd.f32 %v6829, %v6830
      %6841 = vadd.xlane.f32.xlu0 %v6840
      %v6842 = vpop.xlane.xlu0 %6841
      %v6843 = vmax.f32 %v6833, 1e-24
      %v6844 = vmax.f32 %v6836, 1e-24
      %v6845 = vmax.f32 %v6839, 1e-24
      %v6846 = vmax.f32 %v6842, 1e-24
      %v6847 = vrsqrt.pop %v6843
      %v6848 = vrsqrt.pop %v6844
      %v6849 = vrsqrt.pop %v6845
      %v6850 = vrsqrt.pop %v6846
      %v6851 = vmul.f32 %v6815, %v6847
      %v6852 = vmul.f32 %v6816, %v6847
      %v6853 = vmul.f32 %v6817, %v6848
      %v6854 = vmul.f32 %v6818, %v6848
      %v6855 = vmul.f32 %v6819, %v6849
      %v6856 = vmul.f32 %v6820, %v6849
      %v6857 = vmul.f32 %v6821, %v6850
      %v6858 = vmul.f32 %v6822, %v6850
      %v6859 = vpack.c.bf16 %v6853, %v6851
      %v6860 = vpack.c.bf16 %v6854, %v6852
      %v6861 = vpack.c.bf16 %v6857, %v6855
      %v6862 = vpack.c.bf16 %v6858, %v6856
      %v6863 = vld [vmem:[#allocation3 + $0x40] sm:$0xff]
      %v6864 = vld [vmem:[#allocation3 + $0x48] sm:$0xff]
      %v6865 = vld [vmem:[#allocation3 + $0x50] sm:$0xff]
      %v6866 = vld [vmem:[#allocation3 + $0x58] sm:$0xff]
      %v6867 = vld [vmem:[#allocation3 + $0x60] sm:$0xff]
      %v6868 = vld [vmem:[#allocation3 + $0x68] sm:$0xff]
      %v6869 = vld [vmem:[#allocation3 + $0x70] sm:$0xff]
      %v6870 = vld [vmem:[#allocation3 + $0x78] sm:$0xff]
      %v6871 = vmul.f32 %v6863, %v6863
      %v6872 = vmul.f32 %v6864, %v6864
      %v6873 = vmul.f32 %v6865, %v6865
      %v6874 = vmul.f32 %v6866, %v6866
      %v6875 = vmul.f32 %v6867, %v6867
      %v6876 = vmul.f32 %v6868, %v6868
      %v6877 = vmul.f32 %v6869, %v6869
      %v6878 = vmul.f32 %v6870, %v6870
      %v6879 = vadd.f32 %v6871, %v6872
      %6880 = vadd.xlane.f32.xlu0 %v6879
      %v6881 = vpop.xlane.xlu0 %6880
      %v6882 = vadd.f32 %v6873, %v6874
      %6883 = vadd.xlane.f32.xlu0 %v6882
      %v6884 = vpop.xlane.xlu0 %6883
      %v6885 = vadd.f32 %v6875, %v6876
      %6886 = vadd.xlane.f32.xlu0 %v6885
      %v6887 = vpop.xlane.xlu0 %6886
      %v6888 = vadd.f32 %v6877, %v6878
      %6889 = vadd.xlane.f32.xlu0 %v6888
      %v6890 = vpop.xlane.xlu0 %6889
      %v6891 = vmax.f32 %v6881, 1e-24
      %v6892 = vmax.f32 %v6884, 1e-24
      %v6893 = vmax.f32 %v6887, 1e-24
      %v6894 = vmax.f32 %v6890, 1e-24
      %v6895 = vrsqrt.pop %v6891
      %v6896 = vrsqrt.pop %v6892
      %v6897 = vrsqrt.pop %v6893
      %v6898 = vrsqrt.pop %v6894
      %v6899 = vmul.f32 %v6863, %v6895
      %v6900 = vmul.f32 %v6864, %v6895
      %v6901 = vmul.f32 %v6865, %v6896
      %v6902 = vmul.f32 %v6866, %v6896
      %v6903 = vmul.f32 %v6867, %v6897
      %v6904 = vmul.f32 %v6868, %v6897
      %v6905 = vmul.f32 %v6869, %v6898
      %v6906 = vmul.f32 %v6870, %v6898
      %v6907 = vld [vmem:[#allocation4 + $0x40] sm:$0xff]
      %v6908 = vld [vmem:[#allocation4 + $0x48] sm:$0xff]
      %v6909 = vld [vmem:[#allocation4 + $0x50] sm:$0xff]
      %v6910 = vld [vmem:[#allocation4 + $0x58] sm:$0xff]
      %v6911 = vld [vmem:[#allocation4 + $0x60] sm:$0xff]
      %v6912 = vld [vmem:[#allocation4 + $0x68] sm:$0xff]
      %v6913 = vld [vmem:[#allocation4 + $0x70] sm:$0xff]
      %v6914 = vld [vmem:[#allocation4 + $0x78] sm:$0xff]
      %v6915 = vmul.f32 %v6907, %v6907
      %v6916 = vmul.f32 %v6908, %v6908
      %v6917 = vmul.f32 %v6909, %v6909
      %v6918 = vmul.f32 %v6910, %v6910
      %v6919 = vmul.f32 %v6911, %v6911
      %v6920 = vmul.f32 %v6912, %v6912
      %v6921 = vmul.f32 %v6913, %v6913
      %v6922 = vmul.f32 %v6914, %v6914
      %v6923 = vadd.f32 %v6915, %v6916
      %6924 = vadd.xlane.f32.xlu0 %v6923
      %v6925 = vpop.xlane.xlu0 %6924
      %v6926 = vadd.f32 %v6917, %v6918
      %6927 = vadd.xlane.f32.xlu0 %v6926
      %v6928 = vpop.xlane.xlu0 %6927
      %v6929 = vadd.f32 %v6919, %v6920
      %6930 = vadd.xlane.f32.xlu0 %v6929
      %v6931 = vpop.xlane.xlu0 %6930
      %v6932 = vadd.f32 %v6921, %v6922
      %6933 = vadd.xlane.f32.xlu0 %v6932
      %v6934 = vpop.xlane.xlu0 %6933
      %v6935 = vmax.f32 %v6925, 1e-24
      %v6936 = vmax.f32 %v6928, 1e-24
      %v6937 = vmax.f32 %v6931, 1e-24
      %v6938 = vmax.f32 %v6934, 1e-24
      %v6939 = vrsqrt.pop %v6935
      %v6940 = vrsqrt.pop %v6936
      %v6941 = vrsqrt.pop %v6937
      %v6942 = vrsqrt.pop %v6938
      %v6943 = vmul.f32 %v6907, %v6939
      %v6944 = vmul.f32 %v6908, %v6939
      %v6945 = vmul.f32 %v6909, %v6940
      %v6946 = vmul.f32 %v6910, %v6940
      %v6947 = vmul.f32 %v6911, %v6941
      %v6948 = vmul.f32 %v6912, %v6941
      %v6949 = vmul.f32 %v6913, %v6942
      %v6950 = vmul.f32 %v6914, %v6942
      %v6951 = vpack.c.bf16 %v6901, %v6899
      %v6952 = vpack.c.bf16 %v6902, %v6900
      %v6953 = vpack.c.bf16 %v6905, %v6903
      %v6954 = vpack.c.bf16 %v6906, %v6904
      %v6955 = vpack.c.bf16 %v6945, %v6943
      %v6956 = vpack.c.bf16 %v6946, %v6944
      %v6957 = vpack.c.bf16 %v6949, %v6947
      %v6958 = vpack.c.bf16 %v6950, %v6948
      %v6959 = vld [vmem:[#allocation3 + $0x80] sm:$0xff]
      %v6960 = vld [vmem:[#allocation3 + $0x88] sm:$0xff]
      %v6961 = vld [vmem:[#allocation3 + $0x90] sm:$0xff]
      %v6962 = vld [vmem:[#allocation3 + $0x98] sm:$0xff]
      %v6963 = vld [vmem:[#allocation3 + $0xa0] sm:$0xff]
      %v6964 = vld [vmem:[#allocation3 + $0xa8] sm:$0xff]
      %v6965 = vld [vmem:[#allocation3 + $0xb0] sm:$0xff]
      %v6966 = vld [vmem:[#allocation3 + $0xb8] sm:$0xff]
      %v6967 = vld [vmem:[#allocation4 + $0x80] sm:$0xff]
      %v6968 = vld [vmem:[#allocation4 + $0x88] sm:$0xff]
      %v6969 = vld [vmem:[#allocation4 + $0x90] sm:$0xff]
      %v6970 = vld [vmem:[#allocation4 + $0x98] sm:$0xff]
      %v6971 = vld [vmem:[#allocation4 + $0xa0] sm:$0xff]
      %v6972 = vld [vmem:[#allocation4 + $0xa8] sm:$0xff]
      %v6973 = vld [vmem:[#allocation4 + $0xb0] sm:$0xff]
      %v6974 = vld [vmem:[#allocation4 + $0xb8] sm:$0xff]
      %v6975 = vpack.c.bf16 %v6961, %v6959
      %v6976 = vpack.c.bf16 %v6962, %v6960
      %v6977 = vpack.c.bf16 %v6965, %v6963
      %v6978 = vpack.c.bf16 %v6966, %v6964
      %v6979 = vpack.c.bf16 %v6969, %v6967
      %v6980 = vpack.c.bf16 %v6970, %v6968
      %v6981 = vpack.c.bf16 %v6973, %v6971
      %v6982 = vpack.c.bf16 %v6974, %v6972
      %v6983 = vld [vmem:[%s4] sm:$0xff]
      %v6984 = vld [vmem:[%s4 + $0x8] sm:$0xff]
      %v6985 = vld [vmem:[%s4 + $0x10] sm:$0xff]
      %v6986 = vld [vmem:[%s4 + $0x18] sm:$0xff]
      %v6987 = vld [vmem:[%s5] sm:$0xff]
      %v6988 = vld [vmem:[%s5 + $0x8] sm:$0xff]
      %v6989 = vld [vmem:[%s5 + $0x10] sm:$0xff]
      %v6990 = vld [vmem:[%s5 + $0x18] sm:$0xff]
      %6991 = vmatprep.subr.bf16.mxu0 %v6952
      %6992 = vmatpush1.bf16.xpose.msra.mxu0 %v6951
      %6993 = vmatprep.subr.bf16.mxu0 %v6954
      %6994 = vmatpush1.bf16.xpose.msra.mxu0 %v6953
      %6995 = vmatprep.subr.bf16.mxu0 %v6956
      %6996 = vmatpush1.bf16.xpose.msra.mxu0 %v6955
      %6997 = vmatprep.subr.bf16.mxu0 %v6958
      %6998 = vmatpush1.bf16.xpose.msra.mxu0 %v6957
      %6999 = vmatprep.subr.bf16.mxu0 0
      %7000 = vmatpush1.bf16.xpose.msra.mxu0 0
      %7001 = vmatprep.subr.bf16.mxu0 0
      %7002 = vmatpush1.bf16.xpose.msra.mxu0 0
      %7003 = vmatprep.subr.bf16.mxu0 0
      %7004 = vmatpush1.bf16.xpose.msra.mxu0 0
      %7005 = vmatprep.subr.bf16.mxu0 0
      %7006 = vmatpush1.bf16.xpose.msra.mxu0 0
      %7007 = vmatprep.subr.bf16.mxu0 0
      %7008 = vmatpush1.bf16.xpose.msra.mxu0 0
      %7009 = vmatprep.subr.bf16.mxu0 0
      %7010 = vmatpush1.bf16.xpose.msra.mxu0 0
      %7011 = vmatprep.subr.bf16.mxu0 0
      %7012 = vmatpush1.bf16.xpose.msra.mxu0 0
      %7013 = vmatprep.subr.bf16.mxu0 0
      %7014 = vmatpush1.bf16.xpose.msra.mxu0 0
      %7015 = vmatprep.subr.bf16.mxu0 0
      %7016 = vmatpush1.bf16.xpose.msra.mxu0 0
      %7017 = vmatprep.subr.bf16.mxu0 0
      %7018 = vmatpush1.bf16.xpose.msra.mxu0 0
      %7019 = vmatprep.subr.bf16.mxu0 0
      %7020 = vmatpush1.bf16.xpose.msra.mxu0 0
      %7021 = vmatprep.subr.bf16.mxu0 0
      %7022 = vmatpush1.bf16.xpose.msra.mxu0 0
      %7023 = vmatprep.mubr.bf16.mxu0 %v6812
      %7024 = vmatmul.mubr.bf16.gmra.mrb[0].mxu0 %v6811
      %v7025 = vpop.f32.mrb[0].mxu0
      %v7026 = vadd.f32 0.0, %v7025
      %v7027 = vpop.f32.mrb[0].mxu0
      %v7028 = vpop.f32.mrb[0].mxu0
      %v7029 = vadd.f32 0.0, %v7028
      %v7030 = vpop.f32.mrb[0].mxu0
      %7031 = vmatprep.mubr.bf16.mxu0 %v6814
      %7032 = vmatmul.mubr.bf16.gmra.mrb[0].mxu0 %v6813
      %v7033 = vpop.f32.mrb[0].mxu0
      %v7034 = vadd.f32 0.0, %v7033
      %v7035 = vpop.f32.mrb[0].mxu0
      %v7036 = vpop.f32.mrb[0].mxu0
      %v7037 = vadd.f32 0.0, %v7036
      %v7038 = vpop.f32.mrb[0].mxu0
      %7039 = vdwg.mxu0
      %7041 = vset.pattern.permute.xlu0 0
      %7042 = vperm.xlu0 %7041, %v6983
      %v7043 = vpop.permute.xlu0 %7042
      %7046 = vset.pattern.permute.xlu0 0
      %7047 = vperm.xlu0 %7046, %v6984
      %v7048 = vpop.permute.xlu0 %7047
      %7051 = vset.pattern.permute.xlu0 0
      %7052 = vperm.xlu0 %7051, %v6985
      %v7053 = vpop.permute.xlu0 %7052
      %7056 = vset.pattern.permute.xlu0 0
      %7057 = vperm.xlu0 %7056, %v6986
      %v7058 = vpop.permute.xlu0 %7057
      %v7060 = vmul.f32 %v7026, %v7043
      %v7061 = vmul.f32 %v7029, %v7048
      %v7062 = vmul.f32 %v7034, %v7053
      %v7063 = vmul.f32 %v7037, %v7058
      %v7064 = vadd.f32 %v7060, %v6987
      %v7065 = vadd.f32 %v7061, %v6988
      %v7066 = vadd.f32 %v7062, %v6989
      %v7067 = vadd.f32 %v7063, %v6990
      %vm7068 = vcmask 523264
      %v7069 = vsel %vm7068, %v7064, -inf
      %7070 = vmax.xlane.f32.xlu0 %v7069
      %v7071 = vpop.xlane.xlu0 %7070
      %v7072 = vsel %vm7068, %v7065, -inf
      %7073 = vmax.xlane.f32.xlu0 %v7072
      %v7074 = vpop.xlane.xlu0 %7073
      %v7075 = vsel %vm7068, %v7066, -inf
      %7076 = vmax.xlane.f32.xlu0 %v7075
      %v7077 = vpop.xlane.xlu0 %7076
      %v7078 = vsel %vm7068, %v7067, -inf
      %7079 = vmax.xlane.f32.xlu0 %v7078
      %v7080 = vpop.xlane.xlu0 %7079
      %v7081 = vsub.f32 %v7064, %v7071
      %v7082 = vsub.f32 %v7065, %v7074
      %v7083 = vsub.f32 %v7066, %v7077
      %v7084 = vsub.f32 %v7067, %v7080
      %v7085 = vmul.f32 %v7081, 1.442695
      %v7086 = vpow.pop %v7085
      %v7087 = vmul.f32 %v7082, 1.442695
      %v7088 = vpow.pop %v7087
      %v7089 = vmul.f32 %v7083, 1.442695
      %v7090 = vpow.pop %v7089
      %v7091 = vmul.f32 %v7084, 1.442695
      %v7092 = vpow.pop %v7091
      %v7093 = vsel %vm7068, %v7086, 0.0
      %7094 = vadd.xlane.f32.xlu0 %v7093
      %v7095 = vpop.xlane.xlu0 %7094
      %v7096 = vsel %vm7068, %v7088, 0.0
      %7097 = vadd.xlane.f32.xlu0 %v7096
      %v7098 = vpop.xlane.xlu0 %7097
      %v7099 = vsel %vm7068, %v7090, 0.0
      %7100 = vadd.xlane.f32.xlu0 %v7099
      %v7101 = vpop.xlane.xlu0 %7100
      %v7102 = vsel %vm7068, %v7092, 0.0
      %7103 = vadd.xlane.f32.xlu0 %v7102
      %v7104 = vpop.xlane.xlu0 %7103
      %v7105 = vrcp.pop %v7095
      %v7106 = vrcp.pop %v7098
      %v7107 = vrcp.pop %v7101
      %v7108 = vrcp.pop %v7104
      %v7109 = vmul.f32 %v7086, %v7105
      %v7110 = vmul.f32 %v7088, %v7106
      %v7111 = vmul.f32 %v7090, %v7107
      %v7112 = vmul.f32 %v7092, %v7108
      %v7113 = vpack.c.bf16 %v7110, %v7109
      %v7114 = vpack.c.bf16 %v7112, %v7111
      %v7116 = vsel %vm7068, %v7113, 0
      %v7119 = vsel %vm7068, %v7114, 0
      %7121 = vmatprep.subr.bf16.mxu0 %v6976
      %7122 = vmatpush1.bf16.msra.mxu0 %v6975
      %7123 = vmatprep.subr.bf16.mxu0 %v6978
      %7124 = vmatpush1.bf16.msra.mxu0 %v6977
      %7125 = vmatprep.subr.bf16.mxu0 %v6980
      %7126 = vmatpush1.bf16.msra.mxu0 %v6979
      %7127 = vmatprep.subr.bf16.mxu0 %v6982
      %7128 = vmatpush1.bf16.msra.mxu0 %v6981
      %7129 = vmatprep.subr.bf16.mxu0 0
      %7130 = vmatpush1.bf16.msra.mxu0 0
      %7131 = vmatprep.subr.bf16.mxu0 0
      %7132 = vmatpush1.bf16.msra.mxu0 0
      %7133 = vmatprep.subr.bf16.mxu0 0
      %7134 = vmatpush1.bf16.msra.mxu0 0
      %7135 = vmatprep.subr.bf16.mxu0 0
      %7136 = vmatpush1.bf16.msra.mxu0 0
      %7137 = vmatprep.subr.bf16.mxu0 0
      %7138 = vmatpush1.bf16.msra.mxu0 0
      %7139 = vmatprep.subr.bf16.mxu0 0
      %7140 = vmatpush1.bf16.msra.mxu0 0
      %7141 = vmatprep.subr.bf16.mxu0 0
      %7142 = vmatpush1.bf16.msra.mxu0 0
      %7143 = vmatprep.subr.bf16.mxu0 0
      %7144 = vmatpush1.bf16.msra.mxu0 0
      %7145 = vmatprep.subr.bf16.mxu0 0
      %7146 = vmatpush1.bf16.msra.mxu0 0
      %7147 = vmatprep.subr.bf16.mxu0 0
      %7148 = vmatpush1.bf16.msra.mxu0 0
      %7149 = vmatprep.subr.bf16.mxu0 0
      %7150 = vmatpush1.bf16.msra.mxu0 0
      %7151 = vmatprep.subr.bf16.mxu0 0
      %7152 = vmatpush1.bf16.msra.mxu0 0
      %7153 = vmatprep.mubr.bf16.mxu0 0
      %7154 = vmatmul.mubr.bf16.gmra.mrb[0].mxu0 %v7116
      %v7155 = vpop.f32.mrb[0].mxu0
      %v7156 = vadd.f32 0.0, %v7155
      %v7157 = vpop.f32.mrb[0].mxu0
      %v7158 = vadd.f32 0.0, %v7157
      %v7159 = vpop.f32.mrb[0].mxu0
      %v7160 = vadd.f32 0.0, %v7159
      %v7161 = vpop.f32.mrb[0].mxu0
      %v7162 = vadd.f32 0.0, %v7161
      %7163 = vmatprep.mubr.bf16.mxu0 0
      %7164 = vmatmul.mubr.bf16.gmra.mrb[0].mxu0 %v7119
      %v7165 = vpop.f32.mrb[0].mxu0
      %v7166 = vadd.f32 0.0, %v7165
      %v7167 = vpop.f32.mrb[0].mxu0
      %v7168 = vadd.f32 0.0, %v7167
      %v7169 = vpop.f32.mrb[0].mxu0
      %v7170 = vadd.f32 0.0, %v7169
      %v7171 = vpop.f32.mrb[0].mxu0
      %v7172 = vadd.f32 0.0, %v7171
      %7173 = vdwg.mxu0
      %7174 = vmatprep.subr.bf16.mxu0 %v6952
      %7175 = vmatpush1.bf16.xpose.msra.mxu0 %v6951
      %7176 = vmatprep.subr.bf16.mxu0 %v6954
      %7177 = vmatpush1.bf16.xpose.msra.mxu0 %v6953
      %7178 = vmatprep.subr.bf16.mxu0 %v6956
      %7179 = vmatpush1.bf16.xpose.msra.mxu0 %v6955
      %7180 = vmatprep.subr.bf16.mxu0 %v6958
      %7181 = vmatpush1.bf16.xpose.msra.mxu0 %v6957
      %7182 = vmatprep.subr.bf16.mxu0 0
      %7183 = vmatpush1.bf16.xpose.msra.mxu0 0
      %7184 = vmatprep.subr.bf16.mxu0 0
      %7185 = vmatpush1.bf16.xpose.msra.mxu0 0
      %7186 = vmatprep.subr.bf16.mxu0 0
      %7187 = vmatpush1.bf16.xpose.msra.mxu0 0
      %7188 = vmatprep.subr.bf16.mxu0 0
      %7189 = vmatpush1.bf16.xpose.msra.mxu0 0
      %7190 = vmatprep.subr.bf16.mxu0 0
      %7191 = vmatpush1.bf16.xpose.msra.mxu0 0
      %7192 = vmatprep.subr.bf16.mxu0 0
      %7193 = vmatpush1.bf16.xpose.msra.mxu0 0
      %7194 = vmatprep.subr.bf16.mxu0 0
      %7195 = vmatpush1.bf16.xpose.msra.mxu0 0
      %7196 = vmatprep.subr.bf16.mxu0 0
      %7197 = vmatpush1.bf16.xpose.msra.mxu0 0
      %7198 = vmatprep.subr.bf16.mxu0 0
      %7199 = vmatpush1.bf16.xpose.msra.mxu0 0
      %7200 = vmatprep.subr.bf16.mxu0 0
      %7201 = vmatpush1.bf16.xpose.msra.mxu0 0
      %7202 = vmatprep.subr.bf16.mxu0 0
      %7203 = vmatpush1.bf16.xpose.msra.mxu0 0
      %7204 = vmatprep.subr.bf16.mxu0 0
      %7205 = vmatpush1.bf16.xpose.msra.mxu0 0
      %7206 = vmatprep.mubr.bf16.mxu0 %v6860
      %7207 = vmatmul.mubr.bf16.gmra.mrb[0].mxu0 %v6859
      %v7208 = vpop.f32.mrb[0].mxu0
      %v7209 = vadd.f32 0.0, %v7208
      %v7210 = vpop.f32.mrb[0].mxu0
      %v7211 = vpop.f32.mrb[0].mxu0
      %v7212 = vadd.f32 0.0, %v7211
      %v7213 = vpop.f32.mrb[0].mxu0
      %7214 = vmatprep.mubr.bf16.mxu0 %v6862
      %7215 = vmatmul.mubr.bf16.gmra.mrb[0].mxu0 %v6861
      %v7216 = vpop.f32.mrb[0].mxu0
      %v7217 = vadd.f32 0.0, %v7216
      %v7218 = vpop.f32.mrb[0].mxu0
      %v7219 = vpop.f32.mrb[0].mxu0
      %v7220 = vadd.f32 0.0, %v7219
      %v7221 = vpop.f32.mrb[0].mxu0
      %7222 = vdwg.mxu0
      %v7223 = vmul.f32 %v7209, %v7043
      %v7224 = vmul.f32 %v7212, %v7048
      %v7225 = vmul.f32 %v7217, %v7053
      %v7226 = vmul.f32 %v7220, %v7058
      %v7227 = vadd.f32 %v7223, %v6987
      %v7228 = vadd.f32 %v7224, %v6988
      %v7229 = vadd.f32 %v7225, %v6989
      %v7230 = vadd.f32 %v7226, %v6990
      %v7231 = vsel %vm7068, %v7227, -inf
      %7232 = vmax.xlane.f32.xlu0 %v7231
      %v7233 = vpop.xlane.xlu0 %7232
      %v7234 = vsel %vm7068, %v7228, -inf
      %7235 = vmax.xlane.f32.xlu0 %v7234
      %v7236 = vpop.xlane.xlu0 %7235
      %v7237 = vsel %vm7068, %v7229, -inf
      %7238 = vmax.xlane.f32.xlu0 %v7237
      %v7239 = vpop.xlane.xlu0 %7238
      %v7240 = vsel %vm7068, %v7230, -inf
      %7241 = vmax.xlane.f32.xlu0 %v7240
      %v7242 = vpop.xlane.xlu0 %7241
      %v7243 = vsub.f32 %v7227, %v7233
      %v7244 = vsub.f32 %v7228, %v7236
      %v7245 = vsub.f32 %v7229, %v7239
      %v7246 = vsub.f32 %v7230, %v7242
      %v7247 = vmul.f32 %v7243, 1.442695
      %v7248 = vpow.pop %v7247
      %v7249 = vmul.f32 %v7244, 1.442695
      %v7250 = vpow.pop %v7249
      %v7251 = vmul.f32 %v7245, 1.442695
      %v7252 = vpow.pop %v7251
      %v7253 = vmul.f32 %v7246, 1.442695
      %v7254 = vpow.pop %v7253
      %v7255 = vsel %vm7068, %v7248, 0.0
      %7256 = vadd.xlane.f32.xlu0 %v7255
      %v7257 = vpop.xlane.xlu0 %7256
      %v7258 = vsel %vm7068, %v7250, 0.0
      %7259 = vadd.xlane.f32.xlu0 %v7258
      %v7260 = vpop.xlane.xlu0 %7259
      %v7261 = vsel %vm7068, %v7252, 0.0
      %7262 = vadd.xlane.f32.xlu0 %v7261
      %v7263 = vpop.xlane.xlu0 %7262
      %v7264 = vsel %vm7068, %v7254, 0.0
      %7265 = vadd.xlane.f32.xlu0 %v7264
      %v7266 = vpop.xlane.xlu0 %7265
      %v7267 = vrcp.pop %v7257
      %v7268 = vrcp.pop %v7260
      %v7269 = vrcp.pop %v7263
      %v7270 = vrcp.pop %v7266
      %v7271 = vmul.f32 %v7248, %v7267
      %v7272 = vmul.f32 %v7250, %v7268
      %v7273 = vmul.f32 %v7252, %v7269
      %v7274 = vmul.f32 %v7254, %v7270
      %v7275 = vpack.c.bf16 %v7272, %v7271
      %v7276 = vpack.c.bf16 %v7274, %v7273
      %v7278 = vsel %vm7068, %v7275, 0
      %v7281 = vsel %vm7068, %v7276, 0
      %7283 = vmatprep.subr.bf16.mxu0 %v6976
      %7284 = vmatpush1.bf16.msra.mxu0 %v6975
      %7285 = vmatprep.subr.bf16.mxu0 %v6978
      %7286 = vmatpush1.bf16.msra.mxu0 %v6977
      %7287 = vmatprep.subr.bf16.mxu0 %v6980
      %7288 = vmatpush1.bf16.msra.mxu0 %v6979
      %7289 = vmatprep.subr.bf16.mxu0 %v6982
      %7290 = vmatpush1.bf16.msra.mxu0 %v6981
      %7291 = vmatprep.subr.bf16.mxu0 0
      %7292 = vmatpush1.bf16.msra.mxu0 0
      %7293 = vmatprep.subr.bf16.mxu0 0
      %7294 = vmatpush1.bf16.msra.mxu0 0
      %7295 = vmatprep.subr.bf16.mxu0 0
      %7296 = vmatpush1.bf16.msra.mxu0 0
      %7297 = vmatprep.subr.bf16.mxu0 0
      %7298 = vmatpush1.bf16.msra.mxu0 0
      %7299 = vmatprep.subr.bf16.mxu0 0
      %7300 = vmatpush1.bf16.msra.mxu0 0
      %7301 = vmatprep.subr.bf16.mxu0 0
      %7302 = vmatpush1.bf16.msra.mxu0 0
      %7303 = vmatprep.subr.bf16.mxu0 0
      %7304 = vmatpush1.bf16.msra.mxu0 0
      %7305 = vmatprep.subr.bf16.mxu0 0
      %7306 = vmatpush1.bf16.msra.mxu0 0
      %7307 = vmatprep.subr.bf16.mxu0 0
      %7308 = vmatpush1.bf16.msra.mxu0 0
      %7309 = vmatprep.subr.bf16.mxu0 0
      %7310 = vmatpush1.bf16.msra.mxu0 0
      %7311 = vmatprep.subr.bf16.mxu0 0
      %7312 = vmatpush1.bf16.msra.mxu0 0
      %7313 = vmatprep.subr.bf16.mxu0 0
      %7314 = vmatpush1.bf16.msra.mxu0 0
      %7315 = vmatprep.mubr.bf16.mxu0 0
      %7316 = vmatmul.mubr.bf16.gmra.mrb[0].mxu0 %v7278
      %v7317 = vpop.f32.mrb[0].mxu0
      %v7318 = vadd.f32 0.0, %v7317
      %v7319 = vpop.f32.mrb[0].mxu0
      %v7320 = vadd.f32 0.0, %v7319
      %v7321 = vpop.f32.mrb[0].mxu0
      %v7322 = vadd.f32 0.0, %v7321
      %v7323 = vpop.f32.mrb[0].mxu0
      %v7324 = vadd.f32 0.0, %v7323
      %7325 = vmatprep.mubr.bf16.mxu0 0
      %7326 = vmatmul.mubr.bf16.gmra.mrb[0].mxu0 %v7281
      %v7327 = vpop.f32.mrb[0].mxu0
      %v7328 = vadd.f32 0.0, %v7327
      %v7329 = vpop.f32.mrb[0].mxu0
      %v7330 = vadd.f32 0.0, %v7329
      %v7331 = vpop.f32.mrb[0].mxu0
      %v7332 = vadd.f32 0.0, %v7331
      %v7333 = vpop.f32.mrb[0].mxu0
      %v7334 = vadd.f32 0.0, %v7333
      %7335 = vdwg.mxu0
      %v7336 = vld [vmem:[%s6] sm:$0xf]
      %v7337 = vld [vmem:[%s6 + $0x4] sm:$0xf]
      %v7338 = vld [vmem:[%s6 + $0x8] sm:$0xf]
      %v7339 = vld [vmem:[%s6 + $0xc] sm:$0xf]
      %v7340 = vpack.c.bf16 %v7160, %v7156
      %v7341 = vpack.c.bf16 %v7162, %v7158
      %v7342 = vpack.c.bf16 %v7170, %v7166
      %v7343 = vpack.c.bf16 %v7172, %v7168
      %v7344 = vld [vmem:[%s7] sm:$0xf]
      %v7345 = vld [vmem:[%s7 + $0x4] sm:$0xf]
      %v7346 = vld [vmem:[%s7 + $0x8] sm:$0xf]
      %v7347 = vld [vmem:[%s7 + $0xc] sm:$0xf]
      %v7348 = vpack.c.bf16 %v7322, %v7318
      %v7349 = vpack.c.bf16 %v7324, %v7320
      %v7350 = vpack.c.bf16 %v7332, %v7328
      %v7351 = vpack.c.bf16 %v7334, %v7330
      %v7356 = vunpack.c.l.b16 %v7344
      %v7357 = vunpack.c.l.b16 %v7345
      %v7358 = vunpack.c.l.b16 %v7346
      %v7359 = vunpack.c.l.b16 %v7347
      %v7360 = vpack.c.b16 %v7357, %v7356
      %v7361 = vpack.c.b16 %v7359, %v7358
      %v7363 = vsel %vm453, %v7360, 0
      %v7366 = vsel %vm453, %v7361, 0
      %7368 = vmatprep.subr.bf16.mxu0 %v7349
      %7369 = vmatpush1.bf16.msra.mxu0 %v7348
      %7370 = vmatprep.subr.bf16.mxu0 %v7351
      %7371 = vmatpush1.bf16.msra.mxu0 %v7350
      %7372 = vmatprep.subr.bf16.mxu0 0
      %7373 = vmatpush1.bf16.msra.mxu0 0
      %7374 = vmatprep.subr.bf16.mxu0 0
      %7375 = vmatpush1.bf16.msra.mxu0 0
      %7376 = vmatprep.subr.bf16.mxu0 0
      %7377 = vmatpush1.bf16.msra.mxu0 0
      %7378 = vmatprep.subr.bf16.mxu0 0
      %7379 = vmatpush1.bf16.msra.mxu0 0
      %7380 = vmatprep.subr.bf16.mxu0 0
      %7381 = vmatpush1.bf16.msra.mxu0 0
      %7382 = vmatprep.subr.bf16.mxu0 0
      %7383 = vmatpush1.bf16.msra.mxu0 0
      %7384 = vmatprep.subr.bf16.mxu0 0
      %7385 = vmatpush1.bf16.msra.mxu0 0
      %7386 = vmatprep.subr.bf16.mxu0 0
      %7387 = vmatpush1.bf16.msra.mxu0 0
      %7388 = vmatprep.subr.bf16.mxu0 0
      %7389 = vmatpush1.bf16.msra.mxu0 0
      %7390 = vmatprep.subr.bf16.mxu0 0
      %7391 = vmatpush1.bf16.msra.mxu0 0
      %7392 = vmatprep.subr.bf16.mxu0 0
      %7393 = vmatpush1.bf16.msra.mxu0 0
      %7394 = vmatprep.subr.bf16.mxu0 0
      %7395 = vmatpush1.bf16.msra.mxu0 0
      %7396 = vmatprep.subr.bf16.mxu0 0
      %7397 = vmatpush1.bf16.msra.mxu0 0
      %7398 = vmatprep.subr.bf16.mxu0 0
      %7399 = vmatpush1.bf16.msra.mxu0 0
      %7400 = vmatprep.mubr.bf16.mxu0 0
      %7401 = vmatmul.mubr.bf16.gmra.mrb[0].mxu0 %v7363
      %v7402 = vpop.f32.mrb[0].mxu0
      %v7403 = vadd.f32 0.0, %v7402
      %v7404 = vpop.f32.mrb[0].mxu0
      %v7405 = vadd.f32 0.0, %v7404
      %v7406 = vpop.f32.mrb[0].mxu0
      %v7407 = vadd.f32 0.0, %v7406
      %v7408 = vpop.f32.mrb[0].mxu0
      %v7409 = vadd.f32 0.0, %v7408
      %7410 = vmatprep.mubr.bf16.mxu0 0
      %7411 = vmatmul.mubr.bf16.gmra.mrb[0].mxu0 %v7366
      %v7412 = vpop.f32.mrb[0].mxu0
      %v7413 = vadd.f32 0.0, %v7412
      %v7414 = vpop.f32.mrb[0].mxu0
      %v7415 = vadd.f32 0.0, %v7414
      %v7416 = vpop.f32.mrb[0].mxu0
      %v7417 = vadd.f32 0.0, %v7416
      %v7418 = vpop.f32.mrb[0].mxu0
      %v7419 = vadd.f32 0.0, %v7418
      %7420 = vdwg.mxu0
      %v7425 = vunpack.c.l.b16 %v7336
      %v7426 = vunpack.c.l.b16 %v7337
      %v7427 = vunpack.c.l.b16 %v7338
      %v7428 = vunpack.c.l.b16 %v7339
      %v7429 = vpack.c.b16 %v7426, %v7425
      %v7430 = vpack.c.b16 %v7428, %v7427
      %v7432 = vsel %vm453, %v7429, 0
      %v7435 = vsel %vm453, %v7430, 0
      %7437 = vmatprep.subr.bf16.mxu0 %v7341
      %7438 = vmatpush1.bf16.msra.mxu0 %v7340
      %7439 = vmatprep.subr.bf16.mxu0 %v7343
      %7440 = vmatpush1.bf16.msra.mxu0 %v7342
      %7441 = vmatprep.subr.bf16.mxu0 0
      %7442 = vmatpush1.bf16.msra.mxu0 0
      %7443 = vmatprep.subr.bf16.mxu0 0
      %7444 = vmatpush1.bf16.msra.mxu0 0
      %7445 = vmatprep.subr.bf16.mxu0 0
      %7446 = vmatpush1.bf16.msra.mxu0 0
      %7447 = vmatprep.subr.bf16.mxu0 0
      %7448 = vmatpush1.bf16.msra.mxu0 0
      %7449 = vmatprep.subr.bf16.mxu0 0
      %7450 = vmatpush1.bf16.msra.mxu0 0
      %7451 = vmatprep.subr.bf16.mxu0 0
      %7452 = vmatpush1.bf16.msra.mxu0 0
      %7453 = vmatprep.subr.bf16.mxu0 0
      %7454 = vmatpush1.bf16.msra.mxu0 0
      %7455 = vmatprep.subr.bf16.mxu0 0
      %7456 = vmatpush1.bf16.msra.mxu0 0
      %7457 = vmatprep.subr.bf16.mxu0 0
      %7458 = vmatpush1.bf16.msra.mxu0 0
      %7459 = vmatprep.subr.bf16.mxu0 0
      %7460 = vmatpush1.bf16.msra.mxu0 0
      %7461 = vmatprep.subr.bf16.mxu0 0
      %7462 = vmatpush1.bf16.msra.mxu0 0
      %7463 = vmatprep.subr.bf16.mxu0 0
      %7464 = vmatpush1.bf16.msra.mxu0 0
      %7465 = vmatprep.subr.bf16.mxu0 0
      %7466 = vmatpush1.bf16.msra.mxu0 0
      %7467 = vmatprep.subr.bf16.mxu0 0
      %7468 = vmatpush1.bf16.msra.mxu0 0
      %7469 = vmatprep.mubr.bf16.mxu0 0
      %7470 = vmatmul.mubr.bf16.gmra.mrb[0].mxu0 %v7432
      %v7471 = vpop.f32.mrb[0].mxu0
      %v7472 = vadd.f32 %v7403, %v7471
      %v7473 = vpop.f32.mrb[0].mxu0
      %v7474 = vadd.f32 %v7405, %v7473
      %v7475 = vpop.f32.mrb[0].mxu0
      %v7476 = vadd.f32 %v7407, %v7475
      %v7477 = vpop.f32.mrb[0].mxu0
      %v7478 = vadd.f32 %v7409, %v7477
      %7479 = vmatprep.mubr.bf16.mxu0 0
      %7480 = vmatmul.mubr.bf16.gmra.mrb[0].mxu0 %v7435
      %v7481 = vpop.f32.mrb[0].mxu0
      %v7482 = vadd.f32 %v7413, %v7481
      %v7483 = vpop.f32.mrb[0].mxu0
      %v7484 = vadd.f32 %v7415, %v7483
      %v7485 = vpop.f32.mrb[0].mxu0
      %v7486 = vadd.f32 %v7417, %v7485
      %v7487 = vpop.f32.mrb[0].mxu0
      %v7488 = vadd.f32 %v7419, %v7487
      %7489 = vdwg.mxu0
      %v7490 = vld [vmem:[%s8] sm:$0xff]
      %v7491 = vld [vmem:[%s8 + $0x8] sm:$0xff]
      %v7492 = vld [vmem:[%s8 + $0x10] sm:$0xff]
      %v7493 = vld [vmem:[%s8 + $0x18] sm:$0xff]
      %7495 = vset.pattern.permute.xlu0 0
      %7496 = vperm.xlu0 %7495, %v7490
      %v7497 = vpop.permute.xlu0 %7496
      %7500 = vset.pattern.permute.xlu0 0
      %7501 = vperm.xlu0 %7500, %v7491
      %v7502 = vpop.permute.xlu0 %7501
      %7505 = vset.pattern.permute.xlu0 0
      %7506 = vperm.xlu0 %7505, %v7492
      %v7507 = vpop.permute.xlu0 %7506
      %7510 = vset.pattern.permute.xlu0 0
      %7511 = vperm.xlu0 %7510, %v7493
      %v7512 = vpop.permute.xlu0 %7511
      %v7514 = vadd.f32 %v7472, %v7497
      %v7515 = vadd.f32 %v7474, %v7497
      %v7516 = vadd.f32 %v7476, %v7502
      %v7517 = vadd.f32 %v7478, %v7502
      %v7518 = vadd.f32 %v7482, %v7507
      %v7519 = vadd.f32 %v7484, %v7507
      %v7520 = vadd.f32 %v7486, %v7512
      %v7521 = vadd.f32 %v7488, %v7512
      %7522 = vst [vmem:[%s352] sm:$0xff] %v7514
      %7523 = vst [vmem:[%s352 + $0x8] sm:$0xff] %v7515
      %7524 = vst [vmem:[%s352 + $0x10] sm:$0xff] %v7516
      %7525 = vst [vmem:[%s352 + $0x18] sm:$0xff] %v7517
      %7526 = vst [vmem:[%s352 + $0x20] sm:$0xff] %v7518
      %7527 = vst [vmem:[%s352 + $0x28] sm:$0xff] %v7519
      %7528 = vst [vmem:[%s352 + $0x30] sm:$0xff] %v7520
      %7529 = vst [vmem:[%s352 + $0x38] sm:$0xff] %v7521
      %p7530 = scmp.lt.s32.totalorder %s20, 1
      %s7531 = scalar_select %p7530, %s20, 1
      %s7532 = smul.addr %s7531, 8
      %s7533 = smul.addr %s7532, 8
      %s7534 = scalar_lea.vmem %s9, %s7533
      // Predicated region
      $region57: #{embedding_forward.1} parent=55 // pred_check
        %p7535 = pneg %p237
      $region58: #{embedding_forward.1} parent=55 // pred_check_branch
        %7537 = sbr.rel (%p7535) target = $region60
      $region59: #{embedding_forward.1} parent=55 // pred_region
        _
      $region60: #{embedding_forward.1} parent=55 // pred_fallthru
        _
    $region56: #{embedding_forward.1} parent=5 // pred_fallthru
      _
    %p7538 = scmp.le.s32.totalorder 2, %s15
    // Predicated region
    $region61: #{embedding_forward.1} parent=5 // pred_check
      %p7539 = pneg %p7538
    $region62: #{embedding_forward.1} parent=5 // pred_check_branch
      %7541 = sbr.rel (%p7539) target = $region64
    $region63: #{embedding_forward.1} parent=5 // pred_region
      %s7542 = ssub.s32 %s15, 2
      // Predicated region
      $region65: #{embedding_forward.1} parent=63 // pred_check
        %p7543 = pneg %p243
      $region66: #{embedding_forward.1} parent=63 // pred_check_branch
        %7545 = sbr.rel (%p7543) target = $region68
      $region67: #{embedding_forward.1} parent=63 // pred_region
        %p7546 = scmp.lt.s32.totalorder %s21, 1
        %s7547 = scalar_select %p7546, %s21, 1
        %s7548 = smul.addr %s7547, 8
        %s7549 = smul.addr %s7548, 8
        %s7550 = scalar_lea.vmem %s9, %s7549
      $region68: #{embedding_forward.1} parent=63 // pred_fallthru
        _
    $region64: #{embedding_forward.1} parent=5 // pred_fallthru
      _
  $region6: #{embedding_forward.1} parent=0 // loop_footer
    %s19 = sadd.s32 1, %s15
  $region7: #{embedding_forward.1} parent=0 // loop_footer_branch
    %14 = sbr.rel target = $region3
  $region8: #{embedding_forward.1} parent=0 // loop_exit
    _

</llo_original>
